<compile_context>
chip_gen: v7x
topology: tpu7x:2x2x1
jax: 0.10.0
libtpu: 0.0.40
codegen_flags: <defaults>
</compile_context>

<pallas_src>
import functools
import math

import jax
import jax.numpy as jnp
from jax import lax
from jax.experimental import pallas as pl
from jax.experimental.pallas import tpu as pltpu


# (h, m, k) @ (h, k, n) -> (h, m, n)
_DN_BMM = (((2,), (1,)), ((0,), (0,)))
# (h, q, d) @ (h, k, d) -> (h, q, k)
_DN_QK = (((2,), (2,)), ((0,), (0,)))
_EPS = 1e-5


# ---------------------------------------------------------------------------
# Fused kernel: whole layer for `block_b` batch elements per grid step.
# ---------------------------------------------------------------------------

def _bottleneck_kernel(a_ref, b_ref, t_ref, pe_ref, bias_ref,
                       ln_g, ln_b,
                       w_dt1, b_dt1, w_ka, b_ka, w_kb, b_kb,
                       w_da, b_da, w_db, b_db, w_dt2, b_dt2,
                       wo_s, bo_s,
                       fw1, fb1, fw2, fb2,
                       a_out, b_out, t_out,
                       *, heads, block_b):
    L, D = a_ref.shape[1], a_ref.shape[2]
    hd = D // heads

    def layernorm(x, i):
        mu = jnp.mean(x, axis=-1, keepdims=True)
        xc = x - mu
        var = jnp.mean(xc * xc, axis=-1, keepdims=True)
        return xc * lax.rsqrt(var + _EPS) * ln_g[i] + ln_b[i]

    def hproj(x, w_ref, b_ref2):
        # x: (L, D) f32.  Broadcast + bf16 cast happens ONCE per distinct input;
        # w_ref: (heads, D, N) bf16 head-split, use-fused weight; f32 acc + bias.
        xb = jnp.broadcast_to(x.astype(jnp.bfloat16), (heads, L, D))
        y = lax.dot_general(xb, w_ref[...], _DN_BMM,
                            preferred_element_type=jnp.float32)
        return y + b_ref2[...]                                   # (heads, L, N)

    def attend(qh, kh, vh, bias, wo, bo):
        # qh/kh/vh: (heads, L, hd) f32 (1/sqrt(hd) already folded into q);
        # bias: (1, L) additive key-padding bias or None; wo: (heads, hd, D) bf16.
        s = lax.dot_general(qh.astype(jnp.bfloat16), kh.astype(jnp.bfloat16),
                            _DN_QK, preferred_element_type=jnp.float32)
        if bias is not None:
            s = s + bias                         # (1,L) broadcasts over (heads,q,k)
        s = s - jnp.max(s, axis=-1, keepdims=True)
        p = jnp.exp(s)
        p = p * pl.reciprocal(jnp.sum(p, axis=-1, keepdims=True), approx=True)
        ctx = lax.dot_general(p.astype(jnp.bfloat16), vh.astype(jnp.bfloat16),
                              _DN_BMM, preferred_element_type=jnp.float32)
        out = lax.dot_general(ctx.astype(jnp.bfloat16), wo, _DN_BMM,
                              preferred_element_type=jnp.float32)  # (heads, L, D)
        return jnp.sum(out, axis=0) + bo                           # (L, D)

    def ffn(x, i):
        h = jnp.dot(x.astype(jnp.bfloat16), fw1[i],
                    preferred_element_type=jnp.float32) + fb1[i]
        h = jnp.maximum(h, 0.0)                  # ReLU; dropout = identity (eval)
        return jnp.dot(h.astype(jnp.bfloat16), fw2[i],
                       preferred_element_type=jnp.float32) + fb2[i]

    for e in range(block_b):                     # small static unroll (block_b <= 8)
        a = a_ref[e].astype(jnp.float32)
        b = b_ref[e].astype(jnp.float32)
        t = t_ref[e].astype(jnp.float32)
        pe = pe_ref[e].astype(jnp.float32)
        bias = bias_ref[e]                       # (1, L) additive mask bias

        da = layernorm(a, 0)
        db = layernorm(b, 1)
        dt = layernorm(t, 2)
        ka = da + pe
        kb = db + pe

        # ---- att1(q=dt, k=ka, v=da), att2(q=dt, k=kb, v=db), masked ----
        q12 = hproj(dt, w_dt1, b_dt1)            # (heads, L, 2hd) = [q1 | q2]
        ks_a = hproj(ka, w_ka, b_ka)             # (heads, L, 2hd) = [k1 | q3]
        ks_b = hproj(kb, w_kb, b_kb)             # (heads, L, 2hd) = [k2 | q4]
        v1 = hproj(da, w_da, b_da)               # (heads, L, hd)
        v2 = hproj(db, w_db, b_db)               # (heads, L, hd)

        at = attend(q12[:, :, :hd], ks_a[:, :, :hd], v1, bias, wo_s[0], bo_s[0])
        bt = attend(q12[:, :, hd:], ks_b[:, :, :hd], v2, bias, wo_s[1], bo_s[1])

        t_new = t + at + bt                      # in-kernel residual
        t_out[e] = t_new.astype(t_out.dtype)

        # ---- att3(q=ka, k=v=dt'), att4(q=kb, k=v=dt'), unmasked ----
        dt2 = layernorm(t_new, 3)
        kv34 = hproj(dt2, w_dt2, b_dt2)          # (heads, L, 4hd) = [k3|v3|k4|v4]

        a_att = attend(ks_a[:, :, hd:], kv34[:, :, 0 * hd:1 * hd],
                       kv34[:, :, 1 * hd:2 * hd], None, wo_s[2], bo_s[2])
        b_att = attend(ks_b[:, :, hd:], kv34[:, :, 2 * hd:3 * hd],
                       kv34[:, :, 3 * hd:4 * hd], None, wo_s[3], bo_s[3])

        a_mid = a + a_att
        b_mid = b + b_att

        # ---- FFNs + residuals ----
        a_out[e] = (a_mid + ffn(layernorm(a_mid, 4), 0)).astype(a_out.dtype)
        b_out[e] = (b_mid + ffn(layernorm(b_mid, 5), 1)).astype(b_out.dtype)


# ---------------------------------------------------------------------------
# pallas_call wrapper
# ---------------------------------------------------------------------------

def _vmem_limit_bytes():
    # v7x: 64 MiB physical -> ~48 MiB scoped; v5e/v6e: 128 MiB -> capped at 100 MiB.
    try:
        cap = int(pltpu.get_tpu_info().vmem_capacity_bytes)
        return min(cap * 3 // 4, 100 * 1024 * 1024)
    except Exception:
        return 48 * 1024 * 1024


def _pick_block_b(batch):
    # Amortize the ~0.35us per-grid-step overhead, but keep >= 2 grid steps so the
    # v7x megacore can still shard the batch axis across both TensorCores.
    for cand in (8, 4, 2):
        if batch % cand == 0 and batch // cand >= 2:
            return cand
    return 1


def bottleneck_transformer_layer(params, a, b, t, pe=None, mask=None,
                                 heads=4, block_b=None):
    B, L, D = a.shape
    assert D % heads == 0
    if pe is None:
        pe = jnp.zeros_like(a)
    # PyTorch: key_padding_mask = (mask == 0), True = ignore.  Convert once to an
    # additive bias (0 keep / -1e30 drop) shared by att1/att2 (att3/att4 unmasked).
    if mask is None:
        bias = jnp.zeros((B, 1, L), jnp.float32)
    else:
        bias = jnp.where((mask != 0).reshape(B, 1, L), 0.0, -1e30).astype(jnp.float32)

    if block_b is None:
        block_b = _pick_block_b(B)
    assert B % block_b == 0

    xs = pl.BlockSpec((block_b, L, D), lambda i: (i, 0, 0))
    ms = pl.BlockSpec((block_b, 1, L), lambda i: (i, 0, 0))

    def cs(x):  # constant-index, full-array block for weights / LN params
        n = x.ndim
        return pl.BlockSpec(x.shape, lambda i, n=n: (0,) * n)

    p = params
    weight_args = (p["ln_g"], p["ln_b"],
                   p["w_dt1"], p["b_dt1"], p["w_ka"], p["b_ka"],
                   p["w_kb"], p["b_kb"], p["w_da"], p["b_da"],
                   p["w_db"], p["b_db"], p["w_dt2"], p["b_dt2"],
                   p["wo"], p["bo"],
                   p["fw1"], p["fb1"], p["fw2"], p["fb2"])

    out = jax.ShapeDtypeStruct((B, L, D), a.dtype)
    a_out, b_out, t_out = pl.pallas_call(
        functools.partial(_bottleneck_kernel, heads=heads, block_b=block_b),
        out_shape=(out, out, out),
        grid=(B // block_b,),
        in_specs=[xs, xs, xs, xs, ms] + [cs(w) for w in weight_args],
        out_specs=(xs, xs, xs),
        compiler_params=pltpu.CompilerParams(
            dimension_semantics=("parallel",),
            vmem_limit_bytes=_vmem_limit_bytes()),
    )(a, b, t, pe, bias, *weight_args)
    return a_out, b_out, t_out


# ---------------------------------------------------------------------------
# Parameters: PyTorch-native layouts + one-time host-side kernel preprocessing
# ---------------------------------------------------------------------------

def init_params(key, dims, ratio=4):
    """Random parameters in the PyTorch module's native layouts."""
    hidden = dims * ratio
    keys = iter(jax.random.split(key, 48))

    def attn():
        return {
            "wq": 0.05 * jax.random.normal(next(keys), (dims, dims), jnp.float32),
            "wk": 0.05 * jax.random.normal(next(keys), (dims, dims), jnp.float32),
            "wv": 0.05 * jax.random.normal(next(keys), (dims, dims), jnp.float32),
            "wo": 0.05 * jax.random.normal(next(keys), (dims, dims), jnp.float32),
            "bq": 0.01 * jax.random.normal(next(keys), (dims,), jnp.float32),
            "bk": 0.01 * jax.random.normal(next(keys), (dims,), jnp.float32),
            "bv": 0.01 * jax.random.normal(next(keys), (dims,), jnp.float32),
            "bo": 0.01 * jax.random.normal(next(keys), (dims,), jnp.float32),
        }

    def ffn():
        return {
            "w1": 0.05 * jax.random.normal(next(keys), (hidden, dims), jnp.float32),
            "b1": 0.01 * jax.random.normal(next(keys), (hidden,), jnp.float32),
            "w2": 0.05 * jax.random.normal(next(keys), (dims, hidden), jnp.float32),
            "b2": 0.01 * jax.random.normal(next(keys), (dims,), jnp.float32),
        }

    def ln():
        return {"gamma": jnp.ones((dims,), jnp.float32),
                "beta": jnp.zeros((dims,), jnp.float32)}

    return {
        "att1": attn(), "att2": attn(), "att3": attn(), "att4": attn(),
        "ffn1": ffn(), "ffn2": ffn(),
        "norm1": ln(), "norm2": ln(), "norm3": ln(),
        "norm4": ln(), "norm5": ln(), "norm6": ln(),
    }


def prepare_params(p, heads):
    """One-time host-side preprocessing:
       * pre-transpose every Linear weight, split attention in-projections per head,
       * fuse projections that share an input into one wider batched matmul
           dt -> [Wq1|Wq2], ka -> [Wk1|Wq3], kb -> [Wk2|Wq4], dt' -> [Wk3|Wv3|Wk4|Wv4],
       * fold 1/sqrt(hd) into every query projection,
       * cast matmul weights to bf16 (biases / LayerNorm params stay f32),
       * stack same-shape params so the kernel takes few statically-indexed refs."""
    D = p["att1"]["wq"].shape[0]
    hd = D // heads
    scale = 1.0 / math.sqrt(hd)

    def head_w(w, s=1.0):     # torch (D_out, D_in) -> head-split W.T: (heads, D_in, hd)
        return (w * s).T.reshape(D, heads, hd).transpose(1, 0, 2)

    def head_b(bv, s=1.0):    # (D,) -> (heads, 1, hd)
        return (bv * s).reshape(heads, 1, hd)

    def cat_w(parts):
        return jnp.concatenate(parts, axis=-1).astype(jnp.bfloat16)

    def cat_b(parts):
        return jnp.concatenate(parts, axis=-1).astype(jnp.float32)

    a1, a2, a3, a4 = p["att1"], p["att2"], p["att3"], p["att4"]

    return {
        "ln_g": jnp.stack([p["norm%d" % i]["gamma"].reshape(1, D)
                           for i in range(1, 7)]).astype(jnp.float32),
        "ln_b": jnp.stack([p["norm%d" % i]["beta"].reshape(1, D)
                           for i in range(1, 7)]).astype(jnp.float32),
        "w_dt1": cat_w([head_w(a1["wq"], scale), head_w(a2["wq"], scale)]),
        "b_dt1": cat_b([head_b(a1["bq"], scale), head_b(a2["bq"], scale)]),
        "w_ka":  cat_w([head_w(a1["wk"]), head_w(a3["wq"], scale)]),
        "b_ka":  cat_b([head_b(a1["bk"]), head_b(a3["bq"], scale)]),
        "w_kb":  cat_w([head_w(a2["wk"]), head_w(a4["wq"], scale)]),
        "b_kb":  cat_b([head_b(a2["bk"]), head_b(a4["bq"], scale)]),
        "w_da":  head_w(a1["wv"]).astype(jnp.bfloat16),
        "b_da":  head_b(a1["bv"]).astype(jnp.float32),
        "w_db":  head_w(a2["wv"]).astype(jnp.bfloat16),
        "b_db":  head_b(a2["bv"]).astype(jnp.float32),
        "w_dt2": cat_w([head_w(a3["wk"]), head_w(a3["wv"]),
                        head_w(a4["wk"]), head_w(a4["wv"])]),
        "b_dt2": cat_b([head_b(a3["bk"]), head_b(a3["bv"]),
                        head_b(a4["bk"]), head_b(a4["bv"])]),
        "wo": jnp.stack([ai["wo"].T.reshape(heads, hd, D)
                         for ai in (a1, a2, a3, a4)]).astype(jnp.bfloat16),
        "bo": jnp.stack([ai["bo"].reshape(1, D)
                         for ai in (a1, a2, a3, a4)]).astype(jnp.float32),
        "fw1": jnp.stack([p["ffn1"]["w1"].T, p["ffn2"]["w1"].T]).astype(jnp.bfloat16),
        "fb1": jnp.stack([p["ffn1"]["b1"].reshape(1, -1),
                          p["ffn2"]["b1"].reshape(1, -1)]).astype(jnp.float32),
        "fw2": jnp.stack([p["ffn1"]["w2"].T, p["ffn2"]["w2"].T]).astype(jnp.bfloat16),
        "fb2": jnp.stack([p["ffn1"]["b2"].reshape(1, -1),
                          p["ffn2"]["b2"].reshape(1, -1)]).astype(jnp.float32),
    }


# ---------------------------------------------------------------------------

if __name__ == "__main__":
    B, L, DIMS, HEADS, RATIO = 2, 8, 32, 4, 4

    key = jax.random.PRNGKey(0)
    k_a, k_b, k_t, k_p = jax.random.split(key, 4)
    a = jax.random.normal(k_a, (B, L, DIMS), jnp.float32)
    b = jax.random.normal(k_b, (B, L, DIMS), jnp.float32)
    t = jax.random.normal(k_t, (B, L, DIMS), jnp.float32)

    params = prepare_params(init_params(k_p, DIMS, RATIO), HEADS)

    fwd = jax.jit(lambda p_, a_, b_, t_: bottleneck_transformer_layer(
        p_, a_, b_, t_, pe=None, mask=None, heads=HEADS))
    a_out, b_out, t_out = fwd(params, a, b, t)
    jax.block_until_ready((a_out, b_out, t_out))

    assert a_out.shape == (B, L, DIMS)
    assert b_out.shape == (B, L, DIMS)
    assert t_out.shape == (B, L, DIMS)
    assert bool(jnp.all(jnp.isfinite(a_out)))
    assert bool(jnp.all(jnp.isfinite(b_out)))
    assert bool(jnp.all(jnp.isfinite(t_out)))
    print("KERNEL_OK")
</pallas_src>

<mosaic_0001>
module attributes {stable_mosaic.version = 11 : i64} {
  func.func @_bottleneck_kernel(%arg0: i32, %arg1: memref<1x8x32xf32, #tpu.memory_space<vmem>>, %arg2: memref<1x8x32xf32, #tpu.memory_space<vmem>>, %arg3: memref<1x8x32xf32, #tpu.memory_space<vmem>>, %arg4: memref<1x8x32xf32, #tpu.memory_space<vmem>>, %arg5: memref<1x1x8xf32, #tpu.memory_space<vmem>>, %arg6: memref<6x1x32xf32, #tpu.memory_space<vmem>>, %arg7: memref<6x1x32xf32, #tpu.memory_space<vmem>>, %arg8: memref<4x32x16xbf16, #tpu.memory_space<vmem>>, %arg9: memref<4x1x16xf32, #tpu.memory_space<vmem>>, %arg10: memref<4x32x16xbf16, #tpu.memory_space<vmem>>, %arg11: memref<4x1x16xf32, #tpu.memory_space<vmem>>, %arg12: memref<4x32x16xbf16, #tpu.memory_space<vmem>>, %arg13: memref<4x1x16xf32, #tpu.memory_space<vmem>>, %arg14: memref<4x32x8xbf16, #tpu.memory_space<vmem>>, %arg15: memref<4x1x8xf32, #tpu.memory_space<vmem>>, %arg16: memref<4x32x8xbf16, #tpu.memory_space<vmem>>, %arg17: memref<4x1x8xf32, #tpu.memory_space<vmem>>, %arg18: memref<4x32x32xbf16, #tpu.memory_space<vmem>>, %arg19: memref<4x1x32xf32, #tpu.memory_space<vmem>>, %arg20: memref<4x4x8x32xbf16, #tpu.memory_space<vmem>>, %arg21: memref<4x1x32xf32, #tpu.memory_space<vmem>>, %arg22: memref<2x32x128xbf16, #tpu.memory_space<vmem>>, %arg23: memref<2x1x128xf32, #tpu.memory_space<vmem>>, %arg24: memref<2x128x32xbf16, #tpu.memory_space<vmem>>, %arg25: memref<2x1x32xf32, #tpu.memory_space<vmem>>, %arg26: memref<1x8x32xf32, #tpu.memory_space<vmem>>, %arg27: memref<1x8x32xf32, #tpu.memory_space<vmem>>, %arg28: memref<1x8x32xf32, #tpu.memory_space<vmem>>) attributes {dimension_semantics = [#tpu.dimension_semantics<parallel>], iteration_bounds = array<i64: 2>, scalar_prefetch = 0 : i64, scratch_operands = 0 : i64, tpu.core_type = #tpu.core_type<tc>, window_params = [{transform_indices = @transform_0, window_bounds = array<i64: 1, 8, 32>}, {transform_indices = @transform_1, window_bounds = array<i64: 1, 8, 32>}, {transform_indices = @transform_2, window_bounds = array<i64: 1, 8, 32>}, {transform_indices = @transform_3, window_bounds = array<i64: 1, 8, 32>}, {transform_indices = @transform_4, window_bounds = array<i64: 1, 1, 8>}, {pipeline_mode = #tpu.pipeline_mode<synchronous>, transform_indices = @transform_5, window_bounds = array<i64: 6, 1, 32>}, {pipeline_mode = #tpu.pipeline_mode<synchronous>, transform_indices = @transform_6, window_bounds = array<i64: 6, 1, 32>}, {pipeline_mode = #tpu.pipeline_mode<synchronous>, transform_indices = @transform_7, window_bounds = array<i64: 4, 32, 16>}, {pipeline_mode = #tpu.pipeline_mode<synchronous>, transform_indices = @transform_8, window_bounds = array<i64: 4, 1, 16>}, {pipeline_mode = #tpu.pipeline_mode<synchronous>, transform_indices = @transform_9, window_bounds = array<i64: 4, 32, 16>}, {pipeline_mode = #tpu.pipeline_mode<synchronous>, transform_indices = @transform_10, window_bounds = array<i64: 4, 1, 16>}, {pipeline_mode = #tpu.pipeline_mode<synchronous>, transform_indices = @transform_11, window_bounds = array<i64: 4, 32, 16>}, {pipeline_mode = #tpu.pipeline_mode<synchronous>, transform_indices = @transform_12, window_bounds = array<i64: 4, 1, 16>}, {pipeline_mode = #tpu.pipeline_mode<synchronous>, transform_indices = @transform_13, window_bounds = array<i64: 4, 32, 8>}, {pipeline_mode = #tpu.pipeline_mode<synchronous>, transform_indices = @transform_14, window_bounds = array<i64: 4, 1, 8>}, {pipeline_mode = #tpu.pipeline_mode<synchronous>, transform_indices = @transform_15, window_bounds = array<i64: 4, 32, 8>}, {pipeline_mode = #tpu.pipeline_mode<synchronous>, transform_indices = @transform_16, window_bounds = array<i64: 4, 1, 8>}, {pipeline_mode = #tpu.pipeline_mode<synchronous>, transform_indices = @transform_17, window_bounds = array<i64: 4, 32, 32>}, {pipeline_mode = #tpu.pipeline_mode<synchronous>, transform_indices = @transform_18, window_bounds = array<i64: 4, 1, 32>}, {pipeline_mode = #tpu.pipeline_mode<synchronous>, transform_indices = @transform_19, window_bounds = array<i64: 4, 4, 8, 32>}, {pipeline_mode = #tpu.pipeline_mode<synchronous>, transform_indices = @transform_20, window_bounds = array<i64: 4, 1, 32>}, {pipeline_mode = #tpu.pipeline_mode<synchronous>, transform_indices = @transform_21, window_bounds = array<i64: 2, 32, 128>}, {pipeline_mode = #tpu.pipeline_mode<synchronous>, transform_indices = @transform_22, window_bounds = array<i64: 2, 1, 128>}, {pipeline_mode = #tpu.pipeline_mode<synchronous>, transform_indices = @transform_23, window_bounds = array<i64: 2, 128, 32>}, {pipeline_mode = #tpu.pipeline_mode<synchronous>, transform_indices = @transform_24, window_bounds = array<i64: 2, 1, 32>}, {transform_indices = @transform_25, window_bounds = array<i64: 1, 8, 32>}, {transform_indices = @transform_26, window_bounds = array<i64: 1, 8, 32>}, {transform_indices = @transform_27, window_bounds = array<i64: 1, 8, 32>}]} {
    %c0 = arith.constant 0 : index
    %c0_0 = arith.constant 0 : index
    %c0_1 = arith.constant 0 : index
    %0 = vector.load %arg1[%c0, %c0_0, %c0_1] : memref<1x8x32xf32, #tpu.memory_space<vmem>>, vector<1x8x32xf32>
    %1 = vector.shape_cast %0 : vector<1x8x32xf32> to vector<8x32xf32>
    %c0_2 = arith.constant 0 : index
    %c0_3 = arith.constant 0 : index
    %c0_4 = arith.constant 0 : index
    %2 = vector.load %arg2[%c0_2, %c0_3, %c0_4] : memref<1x8x32xf32, #tpu.memory_space<vmem>>, vector<1x8x32xf32>
    %3 = vector.shape_cast %2 : vector<1x8x32xf32> to vector<8x32xf32>
    %c0_5 = arith.constant 0 : index
    %c0_6 = arith.constant 0 : index
    %c0_7 = arith.constant 0 : index
    %4 = vector.load %arg3[%c0_5, %c0_6, %c0_7] : memref<1x8x32xf32, #tpu.memory_space<vmem>>, vector<1x8x32xf32>
    %5 = vector.shape_cast %4 : vector<1x8x32xf32> to vector<8x32xf32>
    %c0_8 = arith.constant 0 : index
    %c0_9 = arith.constant 0 : index
    %c0_10 = arith.constant 0 : index
    %6 = vector.load %arg4[%c0_8, %c0_9, %c0_10] : memref<1x8x32xf32, #tpu.memory_space<vmem>>, vector<1x8x32xf32>
    %7 = vector.shape_cast %6 : vector<1x8x32xf32> to vector<8x32xf32>
    %c0_11 = arith.constant 0 : index
    %c0_12 = arith.constant 0 : index
    %c0_13 = arith.constant 0 : index
    %8 = vector.load %arg5[%c0_11, %c0_12, %c0_13] : memref<1x1x8xf32, #tpu.memory_space<vmem>>, vector<1x1x8xf32>
    %9 = vector.shape_cast %8 : vector<1x1x8xf32> to vector<1x8xf32>
    %cst = arith.constant dense<0.000000e+00> : vector<8xf32>
    %10 = vector.multi_reduction <add>, %1, %cst [1] : vector<8x32xf32> to vector<8xf32>
    %11 = vector.shape_cast %10 : vector<8xf32> to vector<8x1xf32>
    %cst_14 = arith.constant 3.200000e+01 : f32
    %12 = vector.broadcast %cst_14 : f32 to vector<8x1xf32>
    %13 = arith.divf %11, %12 : vector<8x1xf32>
    %14 = vector.broadcast %13 : vector<8x1xf32> to vector<8x32xf32>
    %15 = arith.subf %1, %14 : vector<8x32xf32>
    %16 = arith.mulf %15, %15 : vector<8x32xf32>
    %cst_15 = arith.constant dense<0.000000e+00> : vector<8xf32>
    %17 = vector.multi_reduction <add>, %16, %cst_15 [1] : vector<8x32xf32> to vector<8xf32>
    %18 = vector.shape_cast %17 : vector<8xf32> to vector<8x1xf32>
    %cst_16 = arith.constant 3.200000e+01 : f32
    %19 = vector.broadcast %cst_16 : f32 to vector<8x1xf32>
    %20 = arith.divf %18, %19 : vector<8x1xf32>
    %cst_17 = arith.constant 9.99999974E-6 : f32
    %21 = vector.broadcast %cst_17 : f32 to vector<8x1xf32>
    %22 = arith.addf %20, %21 : vector<8x1xf32>
    %23 = math.rsqrt %22 : vector<8x1xf32>
    %24 = vector.broadcast %23 : vector<8x1xf32> to vector<8x32xf32>
    %25 = arith.mulf %15, %24 : vector<8x32xf32>
    %c0_18 = arith.constant 0 : index
    %c0_19 = arith.constant 0 : index
    %c0_20 = arith.constant 0 : index
    %26 = vector.load %arg6[%c0_18, %c0_19, %c0_20] : memref<6x1x32xf32, #tpu.memory_space<vmem>>, vector<1x1x32xf32>
    %27 = vector.shape_cast %26 : vector<1x1x32xf32> to vector<1x32xf32>
    %28 = vector.broadcast %27 : vector<1x32xf32> to vector<8x32xf32>
    %29 = arith.mulf %25, %28 : vector<8x32xf32>
    %c0_21 = arith.constant 0 : index
    %c0_22 = arith.constant 0 : index
    %c0_23 = arith.constant 0 : index
    %30 = vector.load %arg7[%c0_21, %c0_22, %c0_23] : memref<6x1x32xf32, #tpu.memory_space<vmem>>, vector<1x1x32xf32>
    %31 = vector.shape_cast %30 : vector<1x1x32xf32> to vector<1x32xf32>
    %32 = vector.broadcast %31 : vector<1x32xf32> to vector<8x32xf32>
    %33 = arith.addf %29, %32 : vector<8x32xf32>
    %cst_24 = arith.constant dense<0.000000e+00> : vector<8xf32>
    %34 = vector.multi_reduction <add>, %3, %cst_24 [1] : vector<8x32xf32> to vector<8xf32>
    %35 = vector.shape_cast %34 : vector<8xf32> to vector<8x1xf32>
    %cst_25 = arith.constant 3.200000e+01 : f32
    %36 = vector.broadcast %cst_25 : f32 to vector<8x1xf32>
    %37 = arith.divf %35, %36 : vector<8x1xf32>
    %38 = vector.broadcast %37 : vector<8x1xf32> to vector<8x32xf32>
    %39 = arith.subf %3, %38 : vector<8x32xf32>
    %40 = arith.mulf %39, %39 : vector<8x32xf32>
    %cst_26 = arith.constant dense<0.000000e+00> : vector<8xf32>
    %41 = vector.multi_reduction <add>, %40, %cst_26 [1] : vector<8x32xf32> to vector<8xf32>
    %42 = vector.shape_cast %41 : vector<8xf32> to vector<8x1xf32>
    %cst_27 = arith.constant 3.200000e+01 : f32
    %43 = vector.broadcast %cst_27 : f32 to vector<8x1xf32>
    %44 = arith.divf %42, %43 : vector<8x1xf32>
    %cst_28 = arith.constant 9.99999974E-6 : f32
    %45 = vector.broadcast %cst_28 : f32 to vector<8x1xf32>
    %46 = arith.addf %44, %45 : vector<8x1xf32>
    %47 = math.rsqrt %46 : vector<8x1xf32>
    %48 = vector.broadcast %47 : vector<8x1xf32> to vector<8x32xf32>
    %49 = arith.mulf %39, %48 : vector<8x32xf32>
    %c1 = arith.constant 1 : index
    %c0_29 = arith.constant 0 : index
    %c0_30 = arith.constant 0 : index
    %50 = vector.load %arg6[%c1, %c0_29, %c0_30] : memref<6x1x32xf32, #tpu.memory_space<vmem>>, vector<1x1x32xf32>
    %51 = vector.shape_cast %50 : vector<1x1x32xf32> to vector<1x32xf32>
    %52 = vector.broadcast %51 : vector<1x32xf32> to vector<8x32xf32>
    %53 = arith.mulf %49, %52 : vector<8x32xf32>
    %c1_31 = arith.constant 1 : index
    %c0_32 = arith.constant 0 : index
    %c0_33 = arith.constant 0 : index
    %54 = vector.load %arg7[%c1_31, %c0_32, %c0_33] : memref<6x1x32xf32, #tpu.memory_space<vmem>>, vector<1x1x32xf32>
    %55 = vector.shape_cast %54 : vector<1x1x32xf32> to vector<1x32xf32>
    %56 = vector.broadcast %55 : vector<1x32xf32> to vector<8x32xf32>
    %57 = arith.addf %53, %56 : vector<8x32xf32>
    %cst_34 = arith.constant dense<0.000000e+00> : vector<8xf32>
    %58 = vector.multi_reduction <add>, %5, %cst_34 [1] : vector<8x32xf32> to vector<8xf32>
    %59 = vector.shape_cast %58 : vector<8xf32> to vector<8x1xf32>
    %cst_35 = arith.constant 3.200000e+01 : f32
    %60 = vector.broadcast %cst_35 : f32 to vector<8x1xf32>
    %61 = arith.divf %59, %60 : vector<8x1xf32>
    %62 = vector.broadcast %61 : vector<8x1xf32> to vector<8x32xf32>
    %63 = arith.subf %5, %62 : vector<8x32xf32>
    %64 = arith.mulf %63, %63 : vector<8x32xf32>
    %cst_36 = arith.constant dense<0.000000e+00> : vector<8xf32>
    %65 = vector.multi_reduction <add>, %64, %cst_36 [1] : vector<8x32xf32> to vector<8xf32>
    %66 = vector.shape_cast %65 : vector<8xf32> to vector<8x1xf32>
    %cst_37 = arith.constant 3.200000e+01 : f32
    %67 = vector.broadcast %cst_37 : f32 to vector<8x1xf32>
    %68 = arith.divf %66, %67 : vector<8x1xf32>
    %cst_38 = arith.constant 9.99999974E-6 : f32
    %69 = vector.broadcast %cst_38 : f32 to vector<8x1xf32>
    %70 = arith.addf %68, %69 : vector<8x1xf32>
    %71 = math.rsqrt %70 : vector<8x1xf32>
    %72 = vector.broadcast %71 : vector<8x1xf32> to vector<8x32xf32>
    %73 = arith.mulf %63, %72 : vector<8x32xf32>
    %c2 = arith.constant 2 : index
    %c0_39 = arith.constant 0 : index
    %c0_40 = arith.constant 0 : index
    %74 = vector.load %arg6[%c2, %c0_39, %c0_40] : memref<6x1x32xf32, #tpu.memory_space<vmem>>, vector<1x1x32xf32>
    %75 = vector.shape_cast %74 : vector<1x1x32xf32> to vector<1x32xf32>
    %76 = vector.broadcast %75 : vector<1x32xf32> to vector<8x32xf32>
    %77 = arith.mulf %73, %76 : vector<8x32xf32>
    %c2_41 = arith.constant 2 : index
    %c0_42 = arith.constant 0 : index
    %c0_43 = arith.constant 0 : index
    %78 = vector.load %arg7[%c2_41, %c0_42, %c0_43] : memref<6x1x32xf32, #tpu.memory_space<vmem>>, vector<1x1x32xf32>
    %79 = vector.shape_cast %78 : vector<1x1x32xf32> to vector<1x32xf32>
    %80 = vector.broadcast %79 : vector<1x32xf32> to vector<8x32xf32>
    %81 = arith.addf %77, %80 : vector<8x32xf32>
    %82 = arith.addf %33, %7 : vector<8x32xf32>
    %83 = arith.addf %57, %7 : vector<8x32xf32>
    %84 = arith.truncf %81 : vector<8x32xf32> to vector<8x32xbf16>
    %85 = vector.shape_cast %84 : vector<8x32xbf16> to vector<1x8x32xbf16>
    %86 = vector.broadcast %85 : vector<1x8x32xbf16> to vector<4x8x32xbf16>
    %c0_44 = arith.constant 0 : index
    %c0_45 = arith.constant 0 : index
    %c0_46 = arith.constant 0 : index
    %87 = vector.load %arg8[%c0_44, %c0_45, %c0_46] : memref<4x32x16xbf16, #tpu.memory_space<vmem>>, vector<4x32x16xbf16>
    %cst_47 = arith.constant dense<0.000000e+00> : vector<4x8x16xf32>
    %88 = tpu.matmul %86, %87, %cst_47 {dimension_numbers = #tpu.dot_dimension_numbers<[2], [1], [1], [2], [0, 0, 0, 1, 1, 2], [0], [0]>} : vector<4x8x32xbf16>, vector<4x32x16xbf16>, vector<4x8x16xf32> -> vector<4x8x16xf32>
    %c0_48 = arith.constant 0 : index
    %c0_49 = arith.constant 0 : index
    %c0_50 = arith.constant 0 : index
    %89 = vector.load %arg9[%c0_48, %c0_49, %c0_50] : memref<4x1x16xf32, #tpu.memory_space<vmem>>, vector<4x1x16xf32>
    %90 = vector.broadcast %89 : vector<4x1x16xf32> to vector<4x8x16xf32>
    %91 = arith.addf %88, %90 : vector<4x8x16xf32>
    %92 = arith.truncf %82 : vector<8x32xf32> to vector<8x32xbf16>
    %93 = vector.shape_cast %92 : vector<8x32xbf16> to vector<1x8x32xbf16>
    %94 = vector.broadcast %93 : vector<1x8x32xbf16> to vector<4x8x32xbf16>
    %c0_51 = arith.constant 0 : index
    %c0_52 = arith.constant 0 : index
    %c0_53 = arith.constant 0 : index
    %95 = vector.load %arg10[%c0_51, %c0_52, %c0_53] : memref<4x32x16xbf16, #tpu.memory_space<vmem>>, vector<4x32x16xbf16>
    %cst_54 = arith.constant dense<0.000000e+00> : vector<4x8x16xf32>
    %96 = tpu.matmul %94, %95, %cst_54 {dimension_numbers = #tpu.dot_dimension_numbers<[2], [1], [1], [2], [0, 0, 0, 1, 1, 2], [0], [0]>} : vector<4x8x32xbf16>, vector<4x32x16xbf16>, vector<4x8x16xf32> -> vector<4x8x16xf32>
    %c0_55 = arith.constant 0 : index
    %c0_56 = arith.constant 0 : index
    %c0_57 = arith.constant 0 : index
    %97 = vector.load %arg11[%c0_55, %c0_56, %c0_57] : memref<4x1x16xf32, #tpu.memory_space<vmem>>, vector<4x1x16xf32>
    %98 = vector.broadcast %97 : vector<4x1x16xf32> to vector<4x8x16xf32>
    %99 = arith.addf %96, %98 : vector<4x8x16xf32>
    %100 = arith.truncf %83 : vector<8x32xf32> to vector<8x32xbf16>
    %101 = vector.shape_cast %100 : vector<8x32xbf16> to vector<1x8x32xbf16>
    %102 = vector.broadcast %101 : vector<1x8x32xbf16> to vector<4x8x32xbf16>
    %c0_58 = arith.constant 0 : index
    %c0_59 = arith.constant 0 : index
    %c0_60 = arith.constant 0 : index
    %103 = vector.load %arg12[%c0_58, %c0_59, %c0_60] : memref<4x32x16xbf16, #tpu.memory_space<vmem>>, vector<4x32x16xbf16>
    %cst_61 = arith.constant dense<0.000000e+00> : vector<4x8x16xf32>
    %104 = tpu.matmul %102, %103, %cst_61 {dimension_numbers = #tpu.dot_dimension_numbers<[2], [1], [1], [2], [0, 0, 0, 1, 1, 2], [0], [0]>} : vector<4x8x32xbf16>, vector<4x32x16xbf16>, vector<4x8x16xf32> -> vector<4x8x16xf32>
    %c0_62 = arith.constant 0 : index
    %c0_63 = arith.constant 0 : index
    %c0_64 = arith.constant 0 : index
    %105 = vector.load %arg13[%c0_62, %c0_63, %c0_64] : memref<4x1x16xf32, #tpu.memory_space<vmem>>, vector<4x1x16xf32>
    %106 = vector.broadcast %105 : vector<4x1x16xf32> to vector<4x8x16xf32>
    %107 = arith.addf %104, %106 : vector<4x8x16xf32>
    %108 = arith.truncf %33 : vector<8x32xf32> to vector<8x32xbf16>
    %109 = vector.shape_cast %108 : vector<8x32xbf16> to vector<1x8x32xbf16>
    %110 = vector.broadcast %109 : vector<1x8x32xbf16> to vector<4x8x32xbf16>
    %c0_65 = arith.constant 0 : index
    %c0_66 = arith.constant 0 : index
    %c0_67 = arith.constant 0 : index
    %111 = vector.load %arg14[%c0_65, %c0_66, %c0_67] : memref<4x32x8xbf16, #tpu.memory_space<vmem>>, vector<4x32x8xbf16>
    %cst_68 = arith.constant dense<0.000000e+00> : vector<4x8x8xf32>
    %112 = tpu.matmul %110, %111, %cst_68 {dimension_numbers = #tpu.dot_dimension_numbers<[2], [1], [1], [2], [0, 0, 0, 1, 1, 2], [0], [0]>} : vector<4x8x32xbf16>, vector<4x32x8xbf16>, vector<4x8x8xf32> -> vector<4x8x8xf32>
    %c0_69 = arith.constant 0 : index
    %c0_70 = arith.constant 0 : index
    %c0_71 = arith.constant 0 : index
    %113 = vector.load %arg15[%c0_69, %c0_70, %c0_71] : memref<4x1x8xf32, #tpu.memory_space<vmem>>, vector<4x1x8xf32>
    %114 = vector.broadcast %113 : vector<4x1x8xf32> to vector<4x8x8xf32>
    %115 = arith.addf %112, %114 : vector<4x8x8xf32>
    %116 = arith.truncf %57 : vector<8x32xf32> to vector<8x32xbf16>
    %117 = vector.shape_cast %116 : vector<8x32xbf16> to vector<1x8x32xbf16>
    %118 = vector.broadcast %117 : vector<1x8x32xbf16> to vector<4x8x32xbf16>
    %c0_72 = arith.constant 0 : index
    %c0_73 = arith.constant 0 : index
    %c0_74 = arith.constant 0 : index
    %119 = vector.load %arg16[%c0_72, %c0_73, %c0_74] : memref<4x32x8xbf16, #tpu.memory_space<vmem>>, vector<4x32x8xbf16>
    %cst_75 = arith.constant dense<0.000000e+00> : vector<4x8x8xf32>
    %120 = tpu.matmul %118, %119, %cst_75 {dimension_numbers = #tpu.dot_dimension_numbers<[2], [1], [1], [2], [0, 0, 0, 1, 1, 2], [0], [0]>} : vector<4x8x32xbf16>, vector<4x32x8xbf16>, vector<4x8x8xf32> -> vector<4x8x8xf32>
    %c0_76 = arith.constant 0 : index
    %c0_77 = arith.constant 0 : index
    %c0_78 = arith.constant 0 : index
    %121 = vector.load %arg17[%c0_76, %c0_77, %c0_78] : memref<4x1x8xf32, #tpu.memory_space<vmem>>, vector<4x1x8xf32>
    %122 = vector.broadcast %121 : vector<4x1x8xf32> to vector<4x8x8xf32>
    %123 = arith.addf %120, %122 : vector<4x8x8xf32>
    %124 = vector.extract_strided_slice %91 {offsets = [0, 0, 0], sizes = [4, 8, 8], strides = [1, 1, 1]} : vector<4x8x16xf32> to vector<4x8x8xf32>
    %125 = vector.extract_strided_slice %99 {offsets = [0, 0, 0], sizes = [4, 8, 8], strides = [1, 1, 1]} : vector<4x8x16xf32> to vector<4x8x8xf32>
    %c0_79 = arith.constant 0 : index
    %c0_80 = arith.constant 0 : index
    %c0_81 = arith.constant 0 : index
    %c0_82 = arith.constant 0 : index
    %126 = vector.load %arg20[%c0_79, %c0_80, %c0_81, %c0_82] : memref<4x4x8x32xbf16, #tpu.memory_space<vmem>>, vector<1x4x8x32xbf16>
    %127 = vector.shape_cast %126 : vector<1x4x8x32xbf16> to vector<4x8x32xbf16>
    %c0_83 = arith.constant 0 : index
    %c0_84 = arith.constant 0 : index
    %c0_85 = arith.constant 0 : index
    %128 = vector.load %arg21[%c0_83, %c0_84, %c0_85] : memref<4x1x32xf32, #tpu.memory_space<vmem>>, vector<1x1x32xf32>
    %129 = vector.shape_cast %128 : vector<1x1x32xf32> to vector<1x32xf32>
    %130 = arith.truncf %124 : vector<4x8x8xf32> to vector<4x8x8xbf16>
    %131 = arith.truncf %125 : vector<4x8x8xf32> to vector<4x8x8xbf16>
    %cst_86 = arith.constant dense<0.000000e+00> : vector<4x8x8xf32>
    %132 = tpu.matmul %130, %131, %cst_86 {dimension_numbers = #tpu.dot_dimension_numbers<[2], [2], [1], [1], [0, 0, 0, 1, 1, 1], [0], [0]>} : vector<4x8x8xbf16>, vector<4x8x8xbf16>, vector<4x8x8xf32> -> vector<4x8x8xf32>
    %133 = vector.shape_cast %9 : vector<1x8xf32> to vector<1x1x8xf32>
    %134 = vector.broadcast %133 : vector<1x1x8xf32> to vector<4x8x8xf32>
    %135 = arith.addf %132, %134 : vector<4x8x8xf32>
    %cst_87 = arith.constant dense<0xFF800000> : vector<4x8xf32>
    %136 = vector.multi_reduction <maximumf>, %135, %cst_87 [2] : vector<4x8x8xf32> to vector<4x8xf32>
    %137 = vector.shape_cast %136 : vector<4x8xf32> to vector<4x8x1xf32>
    %138 = vector.broadcast %137 : vector<4x8x1xf32> to vector<4x8x8xf32>
    %139 = arith.subf %135, %138 : vector<4x8x8xf32>
    %140 = math.exp %139 : vector<4x8x8xf32>
    %cst_88 = arith.constant dense<0.000000e+00> : vector<4x8xf32>
    %141 = vector.multi_reduction <add>, %140, %cst_88 [2] : vector<4x8x8xf32> to vector<4x8xf32>
    %142 = vector.shape_cast %141 : vector<4x8xf32> to vector<4x8x1xf32>
    %143 = tpu.reciprocal %142 {approx = true} : vector<4x8x1xf32> -> vector<4x8x1xf32>
    %144 = vector.broadcast %143 : vector<4x8x1xf32> to vector<4x8x8xf32>
    %145 = arith.mulf %140, %144 : vector<4x8x8xf32>
    %146 = arith.truncf %145 : vector<4x8x8xf32> to vector<4x8x8xbf16>
    %147 = arith.truncf %115 : vector<4x8x8xf32> to vector<4x8x8xbf16>
    %cst_89 = arith.constant dense<0.000000e+00> : vector<4x8x8xf32>
    %148 = tpu.matmul %146, %147, %cst_89 {dimension_numbers = #tpu.dot_dimension_numbers<[2], [1], [1], [2], [0, 0, 0, 1, 1, 2], [0], [0]>} : vector<4x8x8xbf16>, vector<4x8x8xbf16>, vector<4x8x8xf32> -> vector<4x8x8xf32>
    %149 = arith.truncf %148 : vector<4x8x8xf32> to vector<4x8x8xbf16>
    %cst_90 = arith.constant dense<0.000000e+00> : vector<4x8x32xf32>
    %150 = tpu.matmul %149, %127, %cst_90 {dimension_numbers = #tpu.dot_dimension_numbers<[2], [1], [1], [2], [0, 0, 0, 1, 1, 2], [0], [0]>} : vector<4x8x8xbf16>, vector<4x8x32xbf16>, vector<4x8x32xf32> -> vector<4x8x32xf32>
    %cst_91 = arith.constant dense<0.000000e+00> : vector<8x32xf32>
    %151 = vector.multi_reduction <add>, %150, %cst_91 [0] : vector<4x8x32xf32> to vector<8x32xf32>
    %152 = vector.broadcast %129 : vector<1x32xf32> to vector<8x32xf32>
    %153 = arith.addf %151, %152 : vector<8x32xf32>
    %154 = vector.extract_strided_slice %91 {offsets = [0, 0, 8], sizes = [4, 8, 8], strides = [1, 1, 1]} : vector<4x8x16xf32> to vector<4x8x8xf32>
    %155 = vector.extract_strided_slice %107 {offsets = [0, 0, 0], sizes = [4, 8, 8], strides = [1, 1, 1]} : vector<4x8x16xf32> to vector<4x8x8xf32>
    %c1_92 = arith.constant 1 : index
    %c0_93 = arith.constant 0 : index
    %c0_94 = arith.constant 0 : index
    %c0_95 = arith.constant 0 : index
    %156 = vector.load %arg20[%c1_92, %c0_93, %c0_94, %c0_95] : memref<4x4x8x32xbf16, #tpu.memory_space<vmem>>, vector<1x4x8x32xbf16>
    %157 = vector.shape_cast %156 : vector<1x4x8x32xbf16> to vector<4x8x32xbf16>
    %c1_96 = arith.constant 1 : index
    %c0_97 = arith.constant 0 : index
    %c0_98 = arith.constant 0 : index
    %158 = vector.load %arg21[%c1_96, %c0_97, %c0_98] : memref<4x1x32xf32, #tpu.memory_space<vmem>>, vector<1x1x32xf32>
    %159 = vector.shape_cast %158 : vector<1x1x32xf32> to vector<1x32xf32>
    %160 = arith.truncf %154 : vector<4x8x8xf32> to vector<4x8x8xbf16>
    %161 = arith.truncf %155 : vector<4x8x8xf32> to vector<4x8x8xbf16>
    %cst_99 = arith.constant dense<0.000000e+00> : vector<4x8x8xf32>
    %162 = tpu.matmul %160, %161, %cst_99 {dimension_numbers = #tpu.dot_dimension_numbers<[2], [2], [1], [1], [0, 0, 0, 1, 1, 1], [0], [0]>} : vector<4x8x8xbf16>, vector<4x8x8xbf16>, vector<4x8x8xf32> -> vector<4x8x8xf32>
    %163 = vector.shape_cast %9 : vector<1x8xf32> to vector<1x1x8xf32>
    %164 = vector.broadcast %163 : vector<1x1x8xf32> to vector<4x8x8xf32>
    %165 = arith.addf %162, %164 : vector<4x8x8xf32>
    %cst_100 = arith.constant dense<0xFF800000> : vector<4x8xf32>
    %166 = vector.multi_reduction <maximumf>, %165, %cst_100 [2] : vector<4x8x8xf32> to vector<4x8xf32>
    %167 = vector.shape_cast %166 : vector<4x8xf32> to vector<4x8x1xf32>
    %168 = vector.broadcast %167 : vector<4x8x1xf32> to vector<4x8x8xf32>
    %169 = arith.subf %165, %168 : vector<4x8x8xf32>
    %170 = math.exp %169 : vector<4x8x8xf32>
    %cst_101 = arith.constant dense<0.000000e+00> : vector<4x8xf32>
    %171 = vector.multi_reduction <add>, %170, %cst_101 [2] : vector<4x8x8xf32> to vector<4x8xf32>
    %172 = vector.shape_cast %171 : vector<4x8xf32> to vector<4x8x1xf32>
    %173 = tpu.reciprocal %172 {approx = true} : vector<4x8x1xf32> -> vector<4x8x1xf32>
    %174 = vector.broadcast %173 : vector<4x8x1xf32> to vector<4x8x8xf32>
    %175 = arith.mulf %170, %174 : vector<4x8x8xf32>
    %176 = arith.truncf %175 : vector<4x8x8xf32> to vector<4x8x8xbf16>
    %177 = arith.truncf %123 : vector<4x8x8xf32> to vector<4x8x8xbf16>
    %cst_102 = arith.constant dense<0.000000e+00> : vector<4x8x8xf32>
    %178 = tpu.matmul %176, %177, %cst_102 {dimension_numbers = #tpu.dot_dimension_numbers<[2], [1], [1], [2], [0, 0, 0, 1, 1, 2], [0], [0]>} : vector<4x8x8xbf16>, vector<4x8x8xbf16>, vector<4x8x8xf32> -> vector<4x8x8xf32>
    %179 = arith.truncf %178 : vector<4x8x8xf32> to vector<4x8x8xbf16>
    %cst_103 = arith.constant dense<0.000000e+00> : vector<4x8x32xf32>
    %180 = tpu.matmul %179, %157, %cst_103 {dimension_numbers = #tpu.dot_dimension_numbers<[2], [1], [1], [2], [0, 0, 0, 1, 1, 2], [0], [0]>} : vector<4x8x8xbf16>, vector<4x8x32xbf16>, vector<4x8x32xf32> -> vector<4x8x32xf32>
    %cst_104 = arith.constant dense<0.000000e+00> : vector<8x32xf32>
    %181 = vector.multi_reduction <add>, %180, %cst_104 [0] : vector<4x8x32xf32> to vector<8x32xf32>
    %182 = vector.broadcast %159 : vector<1x32xf32> to vector<8x32xf32>
    %183 = arith.addf %181, %182 : vector<8x32xf32>
    %184 = arith.addf %5, %153 : vector<8x32xf32>
    %185 = arith.addf %184, %183 : vector<8x32xf32>
    %c0_105 = arith.constant 0 : index
    %c0_106 = arith.constant 0 : index
    %c0_107 = arith.constant 0 : index
    %186 = vector.load %arg28[%c0_105, %c0_106, %c0_107] : memref<1x8x32xf32, #tpu.memory_space<vmem>>, vector<1x8x32xf32>
    %187 = vector.shape_cast %186 : vector<1x8x32xf32> to vector<8x32xf32>
    %188 = vector.shape_cast %185 : vector<8x32xf32> to vector<1x8x32xf32>
    tpu.vector_store %arg28[%c0_105, %c0_106, %c0_107], %188 {strides = array<i32>} : memref<1x8x32xf32, #tpu.memory_space<vmem>>, vector<1x8x32xf32>,
    %cst_108 = arith.constant dense<0.000000e+00> : vector<8xf32>
    %189 = vector.multi_reduction <add>, %185, %cst_108 [1] : vector<8x32xf32> to vector<8xf32>
    %190 = vector.shape_cast %189 : vector<8xf32> to vector<8x1xf32>
    %cst_109 = arith.constant 3.200000e+01 : f32
    %191 = vector.broadcast %cst_109 : f32 to vector<8x1xf32>
    %192 = arith.divf %190, %191 : vector<8x1xf32>
    %193 = vector.broadcast %192 : vector<8x1xf32> to vector<8x32xf32>
    %194 = arith.subf %185, %193 : vector<8x32xf32>
    %195 = arith.mulf %194, %194 : vector<8x32xf32>
    %cst_110 = arith.constant dense<0.000000e+00> : vector<8xf32>
    %196 = vector.multi_reduction <add>, %195, %cst_110 [1] : vector<8x32xf32> to vector<8xf32>
    %197 = vector.shape_cast %196 : vector<8xf32> to vector<8x1xf32>
    %cst_111 = arith.constant 3.200000e+01 : f32
    %198 = vector.broadcast %cst_111 : f32 to vector<8x1xf32>
    %199 = arith.divf %197, %198 : vector<8x1xf32>
    %cst_112 = arith.constant 9.99999974E-6 : f32
    %200 = vector.broadcast %cst_112 : f32 to vector<8x1xf32>
    %201 = arith.addf %199, %200 : vector<8x1xf32>
    %202 = math.rsqrt %201 : vector<8x1xf32>
    %203 = vector.broadcast %202 : vector<8x1xf32> to vector<8x32xf32>
    %204 = arith.mulf %194, %203 : vector<8x32xf32>
    %c3 = arith.constant 3 : index
    %c0_113 = arith.constant 0 : index
    %c0_114 = arith.constant 0 : index
    %205 = vector.load %arg6[%c3, %c0_113, %c0_114] : memref<6x1x32xf32, #tpu.memory_space<vmem>>, vector<1x1x32xf32>
    %206 = vector.shape_cast %205 : vector<1x1x32xf32> to vector<1x32xf32>
    %207 = vector.broadcast %206 : vector<1x32xf32> to vector<8x32xf32>
    %208 = arith.mulf %204, %207 : vector<8x32xf32>
    %c3_115 = arith.constant 3 : index
    %c0_116 = arith.constant 0 : index
    %c0_117 = arith.constant 0 : index
    %209 = vector.load %arg7[%c3_115, %c0_116, %c0_117] : memref<6x1x32xf32, #tpu.memory_space<vmem>>, vector<1x1x32xf32>
    %210 = vector.shape_cast %209 : vector<1x1x32xf32> to vector<1x32xf32>
    %211 = vector.broadcast %210 : vector<1x32xf32> to vector<8x32xf32>
    %212 = arith.addf %208, %211 : vector<8x32xf32>
    %213 = arith.truncf %212 : vector<8x32xf32> to vector<8x32xbf16>
    %214 = vector.shape_cast %213 : vector<8x32xbf16> to vector<1x8x32xbf16>
    %215 = vector.broadcast %214 : vector<1x8x32xbf16> to vector<4x8x32xbf16>
    %c0_118 = arith.constant 0 : index
    %c0_119 = arith.constant 0 : index
    %c0_120 = arith.constant 0 : index
    %216 = vector.load %arg18[%c0_118, %c0_119, %c0_120] : memref<4x32x32xbf16, #tpu.memory_space<vmem>>, vector<4x32x32xbf16>
    %cst_121 = arith.constant dense<0.000000e+00> : vector<4x8x32xf32>
    %217 = tpu.matmul %215, %216, %cst_121 {dimension_numbers = #tpu.dot_dimension_numbers<[2], [1], [1], [2], [0, 0, 0, 1, 1, 2], [0], [0]>} : vector<4x8x32xbf16>, vector<4x32x32xbf16>, vector<4x8x32xf32> -> vector<4x8x32xf32>
    %c0_122 = arith.constant 0 : index
    %c0_123 = arith.constant 0 : index
    %c0_124 = arith.constant 0 : index
    %218 = vector.load %arg19[%c0_122, %c0_123, %c0_124] : memref<4x1x32xf32, #tpu.memory_space<vmem>>, vector<4x1x32xf32>
    %219 = vector.broadcast %218 : vector<4x1x32xf32> to vector<4x8x32xf32>
    %220 = arith.addf %217, %219 : vector<4x8x32xf32>
    %221 = vector.extract_strided_slice %99 {offsets = [0, 0, 8], sizes = [4, 8, 8], strides = [1, 1, 1]} : vector<4x8x16xf32> to vector<4x8x8xf32>
    %222 = vector.extract_strided_slice %220 {offsets = [0, 0, 0], sizes = [4, 8, 8], strides = [1, 1, 1]} : vector<4x8x32xf32> to vector<4x8x8xf32>
    %223 = vector.extract_strided_slice %220 {offsets = [0, 0, 8], sizes = [4, 8, 8], strides = [1, 1, 1]} : vector<4x8x32xf32> to vector<4x8x8xf32>
    %c2_125 = arith.constant 2 : index
    %c0_126 = arith.constant 0 : index
    %c0_127 = arith.constant 0 : index
    %c0_128 = arith.constant 0 : index
    %224 = vector.load %arg20[%c2_125, %c0_126, %c0_127, %c0_128] : memref<4x4x8x32xbf16, #tpu.memory_space<vmem>>, vector<1x4x8x32xbf16>
    %225 = vector.shape_cast %224 : vector<1x4x8x32xbf16> to vector<4x8x32xbf16>
    %c2_129 = arith.constant 2 : index
    %c0_130 = arith.constant 0 : index
    %c0_131 = arith.constant 0 : index
    %226 = vector.load %arg21[%c2_129, %c0_130, %c0_131] : memref<4x1x32xf32, #tpu.memory_space<vmem>>, vector<1x1x32xf32>
    %227 = vector.shape_cast %226 : vector<1x1x32xf32> to vector<1x32xf32>
    %228 = arith.truncf %221 : vector<4x8x8xf32> to vector<4x8x8xbf16>
    %229 = arith.truncf %222 : vector<4x8x8xf32> to vector<4x8x8xbf16>
    %cst_132 = arith.constant dense<0.000000e+00> : vector<4x8x8xf32>
    %230 = tpu.matmul %228, %229, %cst_132 {dimension_numbers = #tpu.dot_dimension_numbers<[2], [2], [1], [1], [0, 0, 0, 1, 1, 1], [0], [0]>} : vector<4x8x8xbf16>, vector<4x8x8xbf16>, vector<4x8x8xf32> -> vector<4x8x8xf32>
    %cst_133 = arith.constant dense<0xFF800000> : vector<4x8xf32>
    %231 = vector.multi_reduction <maximumf>, %230, %cst_133 [2] : vector<4x8x8xf32> to vector<4x8xf32>
    %232 = vector.shape_cast %231 : vector<4x8xf32> to vector<4x8x1xf32>
    %233 = vector.broadcast %232 : vector<4x8x1xf32> to vector<4x8x8xf32>
    %234 = arith.subf %230, %233 : vector<4x8x8xf32>
    %235 = math.exp %234 : vector<4x8x8xf32>
    %cst_134 = arith.constant dense<0.000000e+00> : vector<4x8xf32>
    %236 = vector.multi_reduction <add>, %235, %cst_134 [2] : vector<4x8x8xf32> to vector<4x8xf32>
    %237 = vector.shape_cast %236 : vector<4x8xf32> to vector<4x8x1xf32>
    %238 = tpu.reciprocal %237 {approx = true} : vector<4x8x1xf32> -> vector<4x8x1xf32>
    %239 = vector.broadcast %238 : vector<4x8x1xf32> to vector<4x8x8xf32>
    %240 = arith.mulf %235, %239 : vector<4x8x8xf32>
    %241 = arith.truncf %240 : vector<4x8x8xf32> to vector<4x8x8xbf16>
    %242 = arith.truncf %223 : vector<4x8x8xf32> to vector<4x8x8xbf16>
    %cst_135 = arith.constant dense<0.000000e+00> : vector<4x8x8xf32>
    %243 = tpu.matmul %241, %242, %cst_135 {dimension_numbers = #tpu.dot_dimension_numbers<[2], [1], [1], [2], [0, 0, 0, 1, 1, 2], [0], [0]>} : vector<4x8x8xbf16>, vector<4x8x8xbf16>, vector<4x8x8xf32> -> vector<4x8x8xf32>
    %244 = arith.truncf %243 : vector<4x8x8xf32> to vector<4x8x8xbf16>
    %cst_136 = arith.constant dense<0.000000e+00> : vector<4x8x32xf32>
    %245 = tpu.matmul %244, %225, %cst_136 {dimension_numbers = #tpu.dot_dimension_numbers<[2], [1], [1], [2], [0, 0, 0, 1, 1, 2], [0], [0]>} : vector<4x8x8xbf16>, vector<4x8x32xbf16>, vector<4x8x32xf32> -> vector<4x8x32xf32>
    %cst_137 = arith.constant dense<0.000000e+00> : vector<8x32xf32>
    %246 = vector.multi_reduction <add>, %245, %cst_137 [0] : vector<4x8x32xf32> to vector<8x32xf32>
    %247 = vector.broadcast %227 : vector<1x32xf32> to vector<8x32xf32>
    %248 = arith.addf %246, %247 : vector<8x32xf32>
    %249 = vector.extract_strided_slice %107 {offsets = [0, 0, 8], sizes = [4, 8, 8], strides = [1, 1, 1]} : vector<4x8x16xf32> to vector<4x8x8xf32>
    %250 = vector.extract_strided_slice %220 {offsets = [0, 0, 16], sizes = [4, 8, 8], strides = [1, 1, 1]} : vector<4x8x32xf32> to vector<4x8x8xf32>
    %251 = vector.extract_strided_slice %220 {offsets = [0, 0, 24], sizes = [4, 8, 8], strides = [1, 1, 1]} : vector<4x8x32xf32> to vector<4x8x8xf32>
    %c3_138 = arith.constant 3 : index
    %c0_139 = arith.constant 0 : index
    %c0_140 = arith.constant 0 : index
    %c0_141 = arith.constant 0 : index
    %252 = vector.load %arg20[%c3_138, %c0_139, %c0_140, %c0_141] : memref<4x4x8x32xbf16, #tpu.memory_space<vmem>>, vector<1x4x8x32xbf16>
    %253 = vector.shape_cast %252 : vector<1x4x8x32xbf16> to vector<4x8x32xbf16>
    %c3_142 = arith.constant 3 : index
    %c0_143 = arith.constant 0 : index
    %c0_144 = arith.constant 0 : index
    %254 = vector.load %arg21[%c3_142, %c0_143, %c0_144] : memref<4x1x32xf32, #tpu.memory_space<vmem>>, vector<1x1x32xf32>
    %255 = vector.shape_cast %254 : vector<1x1x32xf32> to vector<1x32xf32>
    %256 = arith.truncf %249 : vector<4x8x8xf32> to vector<4x8x8xbf16>
    %257 = arith.truncf %250 : vector<4x8x8xf32> to vector<4x8x8xbf16>
    %cst_145 = arith.constant dense<0.000000e+00> : vector<4x8x8xf32>
    %258 = tpu.matmul %256, %257, %cst_145 {dimension_numbers = #tpu.dot_dimension_numbers<[2], [2], [1], [1], [0, 0, 0, 1, 1, 1], [0], [0]>} : vector<4x8x8xbf16>, vector<4x8x8xbf16>, vector<4x8x8xf32> -> vector<4x8x8xf32>
    %cst_146 = arith.constant dense<0xFF800000> : vector<4x8xf32>
    %259 = vector.multi_reduction <maximumf>, %258, %cst_146 [2] : vector<4x8x8xf32> to vector<4x8xf32>
    %260 = vector.shape_cast %259 : vector<4x8xf32> to vector<4x8x1xf32>
    %261 = vector.broadcast %260 : vector<4x8x1xf32> to vector<4x8x8xf32>
    %262 = arith.subf %258, %261 : vector<4x8x8xf32>
    %263 = math.exp %262 : vector<4x8x8xf32>
    %cst_147 = arith.constant dense<0.000000e+00> : vector<4x8xf32>
    %264 = vector.multi_reduction <add>, %263, %cst_147 [2] : vector<4x8x8xf32> to vector<4x8xf32>
    %265 = vector.shape_cast %264 : vector<4x8xf32> to vector<4x8x1xf32>
    %266 = tpu.reciprocal %265 {approx = true} : vector<4x8x1xf32> -> vector<4x8x1xf32>
    %267 = vector.broadcast %266 : vector<4x8x1xf32> to vector<4x8x8xf32>
    %268 = arith.mulf %263, %267 : vector<4x8x8xf32>
    %269 = arith.truncf %268 : vector<4x8x8xf32> to vector<4x8x8xbf16>
    %270 = arith.truncf %251 : vector<4x8x8xf32> to vector<4x8x8xbf16>
    %cst_148 = arith.constant dense<0.000000e+00> : vector<4x8x8xf32>
    %271 = tpu.matmul %269, %270, %cst_148 {dimension_numbers = #tpu.dot_dimension_numbers<[2], [1], [1], [2], [0, 0, 0, 1, 1, 2], [0], [0]>} : vector<4x8x8xbf16>, vector<4x8x8xbf16>, vector<4x8x8xf32> -> vector<4x8x8xf32>
    %272 = arith.truncf %271 : vector<4x8x8xf32> to vector<4x8x8xbf16>
    %cst_149 = arith.constant dense<0.000000e+00> : vector<4x8x32xf32>
    %273 = tpu.matmul %272, %253, %cst_149 {dimension_numbers = #tpu.dot_dimension_numbers<[2], [1], [1], [2], [0, 0, 0, 1, 1, 2], [0], [0]>} : vector<4x8x8xbf16>, vector<4x8x32xbf16>, vector<4x8x32xf32> -> vector<4x8x32xf32>
    %cst_150 = arith.constant dense<0.000000e+00> : vector<8x32xf32>
    %274 = vector.multi_reduction <add>, %273, %cst_150 [0] : vector<4x8x32xf32> to vector<8x32xf32>
    %275 = vector.broadcast %255 : vector<1x32xf32> to vector<8x32xf32>
    %276 = arith.addf %274, %275 : vector<8x32xf32>
    %277 = arith.addf %1, %248 : vector<8x32xf32>
    %278 = arith.addf %3, %276 : vector<8x32xf32>
    %cst_151 = arith.constant dense<0.000000e+00> : vector<8xf32>
    %279 = vector.multi_reduction <add>, %277, %cst_151 [1] : vector<8x32xf32> to vector<8xf32>
    %280 = vector.shape_cast %279 : vector<8xf32> to vector<8x1xf32>
    %cst_152 = arith.constant 3.200000e+01 : f32
    %281 = vector.broadcast %cst_152 : f32 to vector<8x1xf32>
    %282 = arith.divf %280, %281 : vector<8x1xf32>
    %283 = vector.broadcast %282 : vector<8x1xf32> to vector<8x32xf32>
    %284 = arith.subf %277, %283 : vector<8x32xf32>
    %285 = arith.mulf %284, %284 : vector<8x32xf32>
    %cst_153 = arith.constant dense<0.000000e+00> : vector<8xf32>
    %286 = vector.multi_reduction <add>, %285, %cst_153 [1] : vector<8x32xf32> to vector<8xf32>
    %287 = vector.shape_cast %286 : vector<8xf32> to vector<8x1xf32>
    %cst_154 = arith.constant 3.200000e+01 : f32
    %288 = vector.broadcast %cst_154 : f32 to vector<8x1xf32>
    %289 = arith.divf %287, %288 : vector<8x1xf32>
    %cst_155 = arith.constant 9.99999974E-6 : f32
    %290 = vector.broadcast %cst_155 : f32 to vector<8x1xf32>
    %291 = arith.addf %289, %290 : vector<8x1xf32>
    %292 = math.rsqrt %291 : vector<8x1xf32>
    %293 = vector.broadcast %292 : vector<8x1xf32> to vector<8x32xf32>
    %294 = arith.mulf %284, %293 : vector<8x32xf32>
    %c4 = arith.constant 4 : index
    %c0_156 = arith.constant 0 : index
    %c0_157 = arith.constant 0 : index
    %295 = vector.load %arg6[%c4, %c0_156, %c0_157] : memref<6x1x32xf32, #tpu.memory_space<vmem>>, vector<1x1x32xf32>
    %296 = vector.shape_cast %295 : vector<1x1x32xf32> to vector<1x32xf32>
    %297 = vector.broadcast %296 : vector<1x32xf32> to vector<8x32xf32>
    %298 = arith.mulf %294, %297 : vector<8x32xf32>
    %c4_158 = arith.constant 4 : index
    %c0_159 = arith.constant 0 : index
    %c0_160 = arith.constant 0 : index
    %299 = vector.load %arg7[%c4_158, %c0_159, %c0_160] : memref<6x1x32xf32, #tpu.memory_space<vmem>>, vector<1x1x32xf32>
    %300 = vector.shape_cast %299 : vector<1x1x32xf32> to vector<1x32xf32>
    %301 = vector.broadcast %300 : vector<1x32xf32> to vector<8x32xf32>
    %302 = arith.addf %298, %301 : vector<8x32xf32>
    %303 = arith.truncf %302 : vector<8x32xf32> to vector<8x32xbf16>
    %c0_161 = arith.constant 0 : index
    %c0_162 = arith.constant 0 : index
    %c0_163 = arith.constant 0 : index
    %304 = vector.load %arg22[%c0_161, %c0_162, %c0_163] : memref<2x32x128xbf16, #tpu.memory_space<vmem>>, vector<1x32x128xbf16>
    %305 = vector.shape_cast %304 : vector<1x32x128xbf16> to vector<32x128xbf16>
    %cst_164 = arith.constant dense<0.000000e+00> : vector<8x128xf32>
    %306 = tpu.matmul %303, %305, %cst_164 {dimension_numbers = #tpu.dot_dimension_numbers<[1], [0], [0], [1], [0, 0, 1, 1], [], []>} : vector<8x32xbf16>, vector<32x128xbf16>, vector<8x128xf32> -> vector<8x128xf32>
    %c0_165 = arith.constant 0 : index
    %c0_166 = arith.constant 0 : index
    %c0_167 = arith.constant 0 : index
    %307 = vector.load %arg23[%c0_165, %c0_166, %c0_167] : memref<2x1x128xf32, #tpu.memory_space<vmem>>, vector<1x1x128xf32>
    %308 = vector.shape_cast %307 : vector<1x1x128xf32> to vector<1x128xf32>
    %309 = vector.broadcast %308 : vector<1x128xf32> to vector<8x128xf32>
    %310 = arith.addf %306, %309 : vector<8x128xf32>
    %cst_168 = arith.constant 0.000000e+00 : f32
    %311 = vector.broadcast %cst_168 : f32 to vector<8x128xf32>
    %312 = arith.maximumf %310, %311 : vector<8x128xf32>
    %313 = arith.truncf %312 : vector<8x128xf32> to vector<8x128xbf16>
    %c0_169 = arith.constant 0 : index
    %c0_170 = arith.constant 0 : index
    %c0_171 = arith.constant 0 : index
    %314 = vector.load %arg24[%c0_169, %c0_170, %c0_171] : memref<2x128x32xbf16, #tpu.memory_space<vmem>>, vector<1x128x32xbf16>
    %315 = vector.shape_cast %314 : vector<1x128x32xbf16> to vector<128x32xbf16>
    %cst_172 = arith.constant dense<0.000000e+00> : vector<8x32xf32>
    %316 = tpu.matmul %313, %315, %cst_172 {dimension_numbers = #tpu.dot_dimension_numbers<[1], [0], [0], [1], [0, 0, 1, 1], [], []>} : vector<8x128xbf16>, vector<128x32xbf16>, vector<8x32xf32> -> vector<8x32xf32>
    %c0_173 = arith.constant 0 : index
    %c0_174 = arith.constant 0 : index
    %c0_175 = arith.constant 0 : index
    %317 = vector.load %arg25[%c0_173, %c0_174, %c0_175] : memref<2x1x32xf32, #tpu.memory_space<vmem>>, vector<1x1x32xf32>
    %318 = vector.shape_cast %317 : vector<1x1x32xf32> to vector<1x32xf32>
    %319 = vector.broadcast %318 : vector<1x32xf32> to vector<8x32xf32>
    %320 = arith.addf %316, %319 : vector<8x32xf32>
    %321 = arith.addf %277, %320 : vector<8x32xf32>
    %c0_176 = arith.constant 0 : index
    %c0_177 = arith.constant 0 : index
    %c0_178 = arith.constant 0 : index
    %322 = vector.load %arg26[%c0_176, %c0_177, %c0_178] : memref<1x8x32xf32, #tpu.memory_space<vmem>>, vector<1x8x32xf32>
    %323 = vector.shape_cast %322 : vector<1x8x32xf32> to vector<8x32xf32>
    %324 = vector.shape_cast %321 : vector<8x32xf32> to vector<1x8x32xf32>
    tpu.vector_store %arg26[%c0_176, %c0_177, %c0_178], %324 {strides = array<i32>} : memref<1x8x32xf32, #tpu.memory_space<vmem>>, vector<1x8x32xf32>,
    %cst_179 = arith.constant dense<0.000000e+00> : vector<8xf32>
    %325 = vector.multi_reduction <add>, %278, %cst_179 [1] : vector<8x32xf32> to vector<8xf32>
    %326 = vector.shape_cast %325 : vector<8xf32> to vector<8x1xf32>
    %cst_180 = arith.constant 3.200000e+01 : f32
    %327 = vector.broadcast %cst_180 : f32 to vector<8x1xf32>
    %328 = arith.divf %326, %327 : vector<8x1xf32>
    %329 = vector.broadcast %328 : vector<8x1xf32> to vector<8x32xf32>
    %330 = arith.subf %278, %329 : vector<8x32xf32>
    %331 = arith.mulf %330, %330 : vector<8x32xf32>
    %cst_181 = arith.constant dense<0.000000e+00> : vector<8xf32>
    %332 = vector.multi_reduction <add>, %331, %cst_181 [1] : vector<8x32xf32> to vector<8xf32>
    %333 = vector.shape_cast %332 : vector<8xf32> to vector<8x1xf32>
    %cst_182 = arith.constant 3.200000e+01 : f32
    %334 = vector.broadcast %cst_182 : f32 to vector<8x1xf32>
    %335 = arith.divf %333, %334 : vector<8x1xf32>
    %cst_183 = arith.constant 9.99999974E-6 : f32
    %336 = vector.broadcast %cst_183 : f32 to vector<8x1xf32>
    %337 = arith.addf %335, %336 : vector<8x1xf32>
    %338 = math.rsqrt %337 : vector<8x1xf32>
    %339 = vector.broadcast %338 : vector<8x1xf32> to vector<8x32xf32>
    %340 = arith.mulf %330, %339 : vector<8x32xf32>
    %c5 = arith.constant 5 : index
    %c0_184 = arith.constant 0 : index
    %c0_185 = arith.constant 0 : index
    %341 = vector.load %arg6[%c5, %c0_184, %c0_185] : memref<6x1x32xf32, #tpu.memory_space<vmem>>, vector<1x1x32xf32>
    %342 = vector.shape_cast %341 : vector<1x1x32xf32> to vector<1x32xf32>
    %343 = vector.broadcast %342 : vector<1x32xf32> to vector<8x32xf32>
    %344 = arith.mulf %340, %343 : vector<8x32xf32>
    %c5_186 = arith.constant 5 : index
    %c0_187 = arith.constant 0 : index
    %c0_188 = arith.constant 0 : index
    %345 = vector.load %arg7[%c5_186, %c0_187, %c0_188] : memref<6x1x32xf32, #tpu.memory_space<vmem>>, vector<1x1x32xf32>
    %346 = vector.shape_cast %345 : vector<1x1x32xf32> to vector<1x32xf32>
    %347 = vector.broadcast %346 : vector<1x32xf32> to vector<8x32xf32>
    %348 = arith.addf %344, %347 : vector<8x32xf32>
    %349 = arith.truncf %348 : vector<8x32xf32> to vector<8x32xbf16>
    %c1_189 = arith.constant 1 : index
    %c0_190 = arith.constant 0 : index
    %c0_191 = arith.constant 0 : index
    %350 = vector.load %arg22[%c1_189, %c0_190, %c0_191] : memref<2x32x128xbf16, #tpu.memory_space<vmem>>, vector<1x32x128xbf16>
    %351 = vector.shape_cast %350 : vector<1x32x128xbf16> to vector<32x128xbf16>
    %cst_192 = arith.constant dense<0.000000e+00> : vector<8x128xf32>
    %352 = tpu.matmul %349, %351, %cst_192 {dimension_numbers = #tpu.dot_dimension_numbers<[1], [0], [0], [1], [0, 0, 1, 1], [], []>} : vector<8x32xbf16>, vector<32x128xbf16>, vector<8x128xf32> -> vector<8x128xf32>
    %c1_193 = arith.constant 1 : index
    %c0_194 = arith.constant 0 : index
    %c0_195 = arith.constant 0 : index
    %353 = vector.load %arg23[%c1_193, %c0_194, %c0_195] : memref<2x1x128xf32, #tpu.memory_space<vmem>>, vector<1x1x128xf32>
    %354 = vector.shape_cast %353 : vector<1x1x128xf32> to vector<1x128xf32>
    %355 = vector.broadcast %354 : vector<1x128xf32> to vector<8x128xf32>
    %356 = arith.addf %352, %355 : vector<8x128xf32>
    %cst_196 = arith.constant 0.000000e+00 : f32
    %357 = vector.broadcast %cst_196 : f32 to vector<8x128xf32>
    %358 = arith.maximumf %356, %357 : vector<8x128xf32>
    %359 = arith.truncf %358 : vector<8x128xf32> to vector<8x128xbf16>
    %c1_197 = arith.constant 1 : index
    %c0_198 = arith.constant 0 : index
    %c0_199 = arith.constant 0 : index
    %360 = vector.load %arg24[%c1_197, %c0_198, %c0_199] : memref<2x128x32xbf16, #tpu.memory_space<vmem>>, vector<1x128x32xbf16>
    %361 = vector.shape_cast %360 : vector<1x128x32xbf16> to vector<128x32xbf16>
    %cst_200 = arith.constant dense<0.000000e+00> : vector<8x32xf32>
    %362 = tpu.matmul %359, %361, %cst_200 {dimension_numbers = #tpu.dot_dimension_numbers<[1], [0], [0], [1], [0, 0, 1, 1], [], []>} : vector<8x128xbf16>, vector<128x32xbf16>, vector<8x32xf32> -> vector<8x32xf32>
    %c1_201 = arith.constant 1 : index
    %c0_202 = arith.constant 0 : index
    %c0_203 = arith.constant 0 : index
    %363 = vector.load %arg25[%c1_201, %c0_202, %c0_203] : memref<2x1x32xf32, #tpu.memory_space<vmem>>, vector<1x1x32xf32>
    %364 = vector.shape_cast %363 : vector<1x1x32xf32> to vector<1x32xf32>
    %365 = vector.broadcast %364 : vector<1x32xf32> to vector<8x32xf32>
    %366 = arith.addf %362, %365 : vector<8x32xf32>
    %367 = arith.addf %278, %366 : vector<8x32xf32>
    %c0_204 = arith.constant 0 : index
    %c0_205 = arith.constant 0 : index
    %c0_206 = arith.constant 0 : index
    %368 = vector.load %arg27[%c0_204, %c0_205, %c0_206] : memref<1x8x32xf32, #tpu.memory_space<vmem>>, vector<1x8x32xf32>
    %369 = vector.shape_cast %368 : vector<1x8x32xf32> to vector<8x32xf32>
    %370 = vector.shape_cast %367 : vector<8x32xf32> to vector<1x8x32xf32>
    tpu.vector_store %arg27[%c0_204, %c0_205, %c0_206], %370 {strides = array<i32>} : memref<1x8x32xf32, #tpu.memory_space<vmem>>, vector<1x8x32xf32>,
    return
  }
  func.func @transform_0(%arg0: i32) -> (i32, i32, i32) {
    %c0_i32 = arith.constant 0 : i32
    %c0_i32_0 = arith.constant 0 : i32
    %c0_i32_1 = arith.constant 0 : i32
    return %arg0, %c0_i32, %c0_i32_0 : i32, i32, i32
  }
  func.func @transform_1(%arg0: i32) -> (i32, i32, i32) {
    %c0_i32 = arith.constant 0 : i32
    %c0_i32_0 = arith.constant 0 : i32
    %c0_i32_1 = arith.constant 0 : i32
    return %arg0, %c0_i32, %c0_i32_0 : i32, i32, i32
  }
  func.func @transform_2(%arg0: i32) -> (i32, i32, i32) {
    %c0_i32 = arith.constant 0 : i32
    %c0_i32_0 = arith.constant 0 : i32
    %c0_i32_1 = arith.constant 0 : i32
    return %arg0, %c0_i32, %c0_i32_0 : i32, i32, i32
  }
  func.func @transform_3(%arg0: i32) -> (i32, i32, i32) {
    %c0_i32 = arith.constant 0 : i32
    %c0_i32_0 = arith.constant 0 : i32
    %c0_i32_1 = arith.constant 0 : i32
    return %arg0, %c0_i32, %c0_i32_0 : i32, i32, i32
  }
  func.func @transform_4(%arg0: i32) -> (i32, i32, i32) {
    %c0_i32 = arith.constant 0 : i32
    %c0_i32_0 = arith.constant 0 : i32
    %c0_i32_1 = arith.constant 0 : i32
    return %arg0, %c0_i32, %c0_i32_0 : i32, i32, i32
  }
  func.func @transform_5(%arg0: i32) -> (i32, i32, i32) {
    %c0_i32 = arith.constant 0 : i32
    %c0_i32_0 = arith.constant 0 : i32
    %c0_i32_1 = arith.constant 0 : i32
    %c0_i32_2 = arith.constant 0 : i32
    return %c0_i32, %c0_i32_0, %c0_i32_1 : i32, i32, i32
  }
  func.func @transform_6(%arg0: i32) -> (i32, i32, i32) {
    %c0_i32 = arith.constant 0 : i32
    %c0_i32_0 = arith.constant 0 : i32
    %c0_i32_1 = arith.constant 0 : i32
    %c0_i32_2 = arith.constant 0 : i32
    return %c0_i32, %c0_i32_0, %c0_i32_1 : i32, i32, i32
  }
  func.func @transform_7(%arg0: i32) -> (i32, i32, i32) {
    %c0_i32 = arith.constant 0 : i32
    %c0_i32_0 = arith.constant 0 : i32
    %c0_i32_1 = arith.constant 0 : i32
    %c0_i32_2 = arith.constant 0 : i32
    return %c0_i32, %c0_i32_0, %c0_i32_1 : i32, i32, i32
  }
  func.func @transform_8(%arg0: i32) -> (i32, i32, i32) {
    %c0_i32 = arith.constant 0 : i32
    %c0_i32_0 = arith.constant 0 : i32
    %c0_i32_1 = arith.constant 0 : i32
    %c0_i32_2 = arith.constant 0 : i32
    return %c0_i32, %c0_i32_0, %c0_i32_1 : i32, i32, i32
  }
  func.func @transform_9(%arg0: i32) -> (i32, i32, i32) {
    %c0_i32 = arith.constant 0 : i32
    %c0_i32_0 = arith.constant 0 : i32
    %c0_i32_1 = arith.constant 0 : i32
    %c0_i32_2 = arith.constant 0 : i32
    return %c0_i32, %c0_i32_0, %c0_i32_1 : i32, i32, i32
  }
  func.func @transform_10(%arg0: i32) -> (i32, i32, i32) {
    %c0_i32 = arith.constant 0 : i32
    %c0_i32_0 = arith.constant 0 : i32
    %c0_i32_1 = arith.constant 0 : i32
    %c0_i32_2 = arith.constant 0 : i32
    return %c0_i32, %c0_i32_0, %c0_i32_1 : i32, i32, i32
  }
  func.func @transform_11(%arg0: i32) -> (i32, i32, i32) {
    %c0_i32 = arith.constant 0 : i32
    %c0_i32_0 = arith.constant 0 : i32
    %c0_i32_1 = arith.constant 0 : i32
    %c0_i32_2 = arith.constant 0 : i32
    return %c0_i32, %c0_i32_0, %c0_i32_1 : i32, i32, i32
  }
  func.func @transform_12(%arg0: i32) -> (i32, i32, i32) {
    %c0_i32 = arith.constant 0 : i32
    %c0_i32_0 = arith.constant 0 : i32
    %c0_i32_1 = arith.constant 0 : i32
    %c0_i32_2 = arith.constant 0 : i32
    return %c0_i32, %c0_i32_0, %c0_i32_1 : i32, i32, i32
  }
  func.func @transform_13(%arg0: i32) -> (i32, i32, i32) {
    %c0_i32 = arith.constant 0 : i32
    %c0_i32_0 = arith.constant 0 : i32
    %c0_i32_1 = arith.constant 0 : i32
    %c0_i32_2 = arith.constant 0 : i32
    return %c0_i32, %c0_i32_0, %c0_i32_1 : i32, i32, i32
  }
  func.func @transform_14(%arg0: i32) -> (i32, i32, i32) {
    %c0_i32 = arith.constant 0 : i32
    %c0_i32_0 = arith.constant 0 : i32
    %c0_i32_1 = arith.constant 0 : i32
    %c0_i32_2 = arith.constant 0 : i32
    return %c0_i32, %c0_i32_0, %c0_i32_1 : i32, i32, i32
  }
  func.func @transform_15(%arg0: i32) -> (i32, i32, i32) {
    %c0_i32 = arith.constant 0 : i32
    %c0_i32_0 = arith.constant 0 : i32
    %c0_i32_1 = arith.constant 0 : i32
    %c0_i32_2 = arith.constant 0 : i32
    return %c0_i32, %c0_i32_0, %c0_i32_1 : i32, i32, i32
  }
  func.func @transform_16(%arg0: i32) -> (i32, i32, i32) {
    %c0_i32 = arith.constant 0 : i32
    %c0_i32_0 = arith.constant 0 : i32
    %c0_i32_1 = arith.constant 0 : i32
    %c0_i32_2 = arith.constant 0 : i32
    return %c0_i32, %c0_i32_0, %c0_i32_1 : i32, i32, i32
  }
  func.func @transform_17(%arg0: i32) -> (i32, i32, i32) {
    %c0_i32 = arith.constant 0 : i32
    %c0_i32_0 = arith.constant 0 : i32
    %c0_i32_1 = arith.constant 0 : i32
    %c0_i32_2 = arith.constant 0 : i32
    return %c0_i32, %c0_i32_0, %c0_i32_1 : i32, i32, i32
  }
  func.func @transform_18(%arg0: i32) -> (i32, i32, i32) {
    %c0_i32 = arith.constant 0 : i32
    %c0_i32_0 = arith.constant 0 : i32
    %c0_i32_1 = arith.constant 0 : i32
    %c0_i32_2 = arith.constant 0 : i32
    return %c0_i32, %c0_i32_0, %c0_i32_1 : i32, i32, i32
  }
  func.func @transform_19(%arg0: i32) -> (i32, i32, i32, i32) {
    %c0_i32 = arith.constant 0 : i32
    %c0_i32_0 = arith.constant 0 : i32
    %c0_i32_1 = arith.constant 0 : i32
    %c0_i32_2 = arith.constant 0 : i32
    %c0_i32_3 = arith.constant 0 : i32
    return %c0_i32, %c0_i32_0, %c0_i32_1, %c0_i32_2 : i32, i32, i32, i32
  }
  func.func @transform_20(%arg0: i32) -> (i32, i32, i32) {
    %c0_i32 = arith.constant 0 : i32
    %c0_i32_0 = arith.constant 0 : i32
    %c0_i32_1 = arith.constant 0 : i32
    %c0_i32_2 = arith.constant 0 : i32
    return %c0_i32, %c0_i32_0, %c0_i32_1 : i32, i32, i32
  }
  func.func @transform_21(%arg0: i32) -> (i32, i32, i32) {
    %c0_i32 = arith.constant 0 : i32
    %c0_i32_0 = arith.constant 0 : i32
    %c0_i32_1 = arith.constant 0 : i32
    %c0_i32_2 = arith.constant 0 : i32
    return %c0_i32, %c0_i32_0, %c0_i32_1 : i32, i32, i32
  }
  func.func @transform_22(%arg0: i32) -> (i32, i32, i32) {
    %c0_i32 = arith.constant 0 : i32
    %c0_i32_0 = arith.constant 0 : i32
    %c0_i32_1 = arith.constant 0 : i32
    %c0_i32_2 = arith.constant 0 : i32
    return %c0_i32, %c0_i32_0, %c0_i32_1 : i32, i32, i32
  }
  func.func @transform_23(%arg0: i32) -> (i32, i32, i32) {
    %c0_i32 = arith.constant 0 : i32
    %c0_i32_0 = arith.constant 0 : i32
    %c0_i32_1 = arith.constant 0 : i32
    %c0_i32_2 = arith.constant 0 : i32
    return %c0_i32, %c0_i32_0, %c0_i32_1 : i32, i32, i32
  }
  func.func @transform_24(%arg0: i32) -> (i32, i32, i32) {
    %c0_i32 = arith.constant 0 : i32
    %c0_i32_0 = arith.constant 0 : i32
    %c0_i32_1 = arith.constant 0 : i32
    %c0_i32_2 = arith.constant 0 : i32
    return %c0_i32, %c0_i32_0, %c0_i32_1 : i32, i32, i32
  }
  func.func @transform_25(%arg0: i32) -> (i32, i32, i32) {
    %c0_i32 = arith.constant 0 : i32
    %c0_i32_0 = arith.constant 0 : i32
    %c0_i32_1 = arith.constant 0 : i32
    return %arg0, %c0_i32, %c0_i32_0 : i32, i32, i32
  }
  func.func @transform_26(%arg0: i32) -> (i32, i32, i32) {
    %c0_i32 = arith.constant 0 : i32
    %c0_i32_0 = arith.constant 0 : i32
    %c0_i32_1 = arith.constant 0 : i32
    return %arg0, %c0_i32, %c0_i32_0 : i32, i32, i32
  }
  func.func @transform_27(%arg0: i32) -> (i32, i32, i32) {
    %c0_i32 = arith.constant 0 : i32
    %c0_i32_0 = arith.constant 0 : i32
    %c0_i32_1 = arith.constant 0 : i32
    return %arg0, %c0_i32, %c0_i32_0 : i32, i32, i32
  }
}

</mosaic_0001>

<llo_original>
// kernel: _lambda_.1
$region0: #{_lambda_.1}
  #allocation0 [shape = 'u32[]', space=smem, size = 0x4, offset = 0x4, fixed_abs, tag = 'smem constant byte address 0x4 - core index']
  #allocation1 [shape = 'u32[144,128]{1,0:T(1,128)}', space=vmem, size = 0x12000, scoped, tag = 'internal scratch']
  %s0 = inlined_call_operand.vmem [shape: f32[2,8,32], index: 0, kind: input, shape index: {}]
  %s1 = inlined_call_operand.vmem [shape: f32[2,8,32], index: 1, kind: input, shape index: {}]
  %s2 = inlined_call_operand.vmem [shape: f32[2,8,32], index: 2, kind: input, shape index: {}]
  %s3 = inlined_call_operand.vmem [shape: f32[2,8,32], index: 3, kind: input, shape index: {}]
  %s4 = inlined_call_operand.vmem [shape: f32[2,1,8], index: 4, kind: input, shape index: {}]
  %s5 = inlined_call_operand.vmem [shape: f32[6,1,32], index: 5, kind: input, shape index: {}]
  %s6 = inlined_call_operand.vmem [shape: f32[6,1,32], index: 6, kind: input, shape index: {}]
  %s7 = inlined_call_operand.vmem [shape: bf16[4,32,16], index: 7, kind: input, shape index: {}]
  %s8 = inlined_call_operand.vmem [shape: f32[4,1,16], index: 8, kind: input, shape index: {}]
  %s9 = inlined_call_operand.vmem [shape: bf16[4,32,16], index: 9, kind: input, shape index: {}]
  %s10 = inlined_call_operand.vmem [shape: f32[4,1,16], index: 10, kind: input, shape index: {}]
  %s11 = inlined_call_operand.vmem [shape: bf16[4,32,16], index: 11, kind: input, shape index: {}]
  %s12 = inlined_call_operand.vmem [shape: f32[4,1,16], index: 12, kind: input, shape index: {}]
  %s13 = inlined_call_operand.vmem [shape: bf16[4,32,8], index: 13, kind: input, shape index: {}]
  %s14 = inlined_call_operand.vmem [shape: f32[4,1,8], index: 14, kind: input, shape index: {}]
  %s15 = inlined_call_operand.vmem [shape: bf16[4,32,8], index: 15, kind: input, shape index: {}]
  %s16 = inlined_call_operand.vmem [shape: f32[4,1,8], index: 16, kind: input, shape index: {}]
  %s17 = inlined_call_operand.vmem [shape: bf16[4,32,32], index: 17, kind: input, shape index: {}]
  %s18 = inlined_call_operand.vmem [shape: f32[4,1,32], index: 18, kind: input, shape index: {}]
  %s19 = inlined_call_operand.vmem [shape: bf16[4,4,8,32], index: 19, kind: input, shape index: {}]
  %s20 = inlined_call_operand.vmem [shape: f32[4,1,32], index: 20, kind: input, shape index: {}]
  %s21 = inlined_call_operand.vmem [shape: bf16[2,32,128], index: 21, kind: input, shape index: {}]
  %s22 = inlined_call_operand.vmem [shape: f32[2,1,128], index: 22, kind: input, shape index: {}]
  %s23 = inlined_call_operand.vmem [shape: bf16[2,128,32], index: 23, kind: input, shape index: {}]
  %s24 = inlined_call_operand.vmem [shape: f32[2,1,32], index: 24, kind: input, shape index: {}]
  %s25 = inlined_call_operand.hbm [shape: f32[2,8,32], index: 25, kind: output, shape index: {0}]
  %s26 = inlined_call_operand.hbm [shape: f32[2,8,32], index: 26, kind: output, shape index: {1}]
  %s27 = inlined_call_operand.hbm [shape: f32[2,8,32], index: 27, kind: output, shape index: {2}]
  %28 = xla_tuple %s25, %s26, %s27
  %s29 = sld [smem:[#allocation0]]
  $region149: #{_lambda_.1} parent=0
    _
  %s31 = ssub.s32 1, %s29
  %s32 = scalar_select 0, %s31, %s29
  $region1: #{_lambda_.1} parent=0
    #allocation2 [shape = 'u8[8192]{0}', space=vmem, size = 0x2000, scoped, tag = 'output window, operand 0']
    #allocation3 [shape = 's32[2]{0}', space=sflag, size = 0x8, scoped, tag = 'scoped memory for _lambda_.1']
    #allocation4 [shape = 'u8[8192]{0}', space=vmem, size = 0x2000, scoped, tag = 'output window, operand 1']
    #allocation5 [shape = 's32[2]{0}', space=sflag, size = 0x8, scoped, tag = 'scoped memory for _lambda_.1']
    #allocation6 [shape = 'u8[8192]{0}', space=vmem, size = 0x2000, scoped, tag = 'output window, operand 2']
    %33 = vsyncpa [#allocation3], 0
    %s34 = scalar_lea.sflag [#allocation3], 1
    %35 = vsyncpa %s34, 0
    %36 = vsyncpa [#allocation5], 0
    %s37 = scalar_lea.sflag [#allocation5], 1
    %38 = vsyncpa %s37, 0
    loop: start=0, step=1, limit=4
    $region2: #{_lambda_.1} parent=1 // loop_pre_header
      _
    $region3: #{_lambda_.1} parent=1 // loop_header
      %s40 = sphi 0, %s44
      %p41 = scmp.ge.s32.totalorder %s40, 4
      %s50 = sphi 0, %s52
      %s53 = sphi 0, %s50
      %s54 = sphi 0, %s53
      %s70 = sphi 0, %s54
      %s76 = sphi 0, %s78
      %s79 = sphi 0, %s76
      %s80 = sphi 0, %s79
      %s96 = sphi 0, %s80
      %s102 = sphi 0, %s104
      %s105 = sphi 0, %s102
      %s106 = sphi 0, %s105
      %s122 = sphi 0, %s106
      %s128 = sphi 0, %s130
      %s131 = sphi 0, %s128
      %s132 = sphi 0, %s131
      %s148 = sphi 0, %s132
      %s154 = sphi 0, %s156
      %s157 = sphi 0, %s154
      %s158 = sphi 0, %s157
      %s174 = sphi 0, %s158
      %s178 = sphi 0, %s178
      %s180 = sphi 0, %s178
      %s181 = sphi 0, %s180
      %s195 = sphi 0, %s181
      %s199 = sphi 0, %s199
      %s201 = sphi 0, %s199
      %s202 = sphi 0, %s201
      %s216 = sphi 0, %s202
      %s220 = sphi 0, %s220
      %s222 = sphi 0, %s220
      %s223 = sphi 0, %s222
      %s237 = sphi 0, %s223
      %s241 = sphi 0, %s241
      %s243 = sphi 0, %s241
      %s244 = sphi 0, %s243
      %s258 = sphi 0, %s244
      %s262 = sphi 0, %s262
      %s264 = sphi 0, %s262
      %s265 = sphi 0, %s264
      %s279 = sphi 0, %s265
      %s283 = sphi 0, %s283
      %s285 = sphi 0, %s283
      %s286 = sphi 0, %s285
      %s300 = sphi 0, %s286
      %s304 = sphi 0, %s304
      %s306 = sphi 0, %s304
      %s307 = sphi 0, %s306
      %s321 = sphi 0, %s307
      %s325 = sphi 0, %s325
      %s327 = sphi 0, %s325
      %s328 = sphi 0, %s327
      %s342 = sphi 0, %s328
      %s346 = sphi 0, %s346
      %s348 = sphi 0, %s346
      %s349 = sphi 0, %s348
      %s363 = sphi 0, %s349
      %s367 = sphi 0, %s367
      %s369 = sphi 0, %s367
      %s370 = sphi 0, %s369
      %s384 = sphi 0, %s370
      %s388 = sphi 0, %s388
      %s390 = sphi 0, %s388
      %s391 = sphi 0, %s390
      %s405 = sphi 0, %s391
      %s409 = sphi 0, %s409
      %s411 = sphi 0, %s409
      %s412 = sphi 0, %s411
      %s426 = sphi 0, %s412
      %s430 = sphi 0, %s430
      %s432 = sphi 0, %s430
      %s433 = sphi 0, %s432
      %s447 = sphi 0, %s433
      %s451 = sphi 0, %s451
      %s453 = sphi 0, %s451
      %s454 = sphi 0, %s453
      %s468 = sphi 0, %s454
      %s472 = sphi 0, %s472
      %s474 = sphi 0, %s472
      %s475 = sphi 0, %s474
      %s489 = sphi 0, %s475
      %s493 = sphi 0, %s493
      %s495 = sphi 0, %s493
      %s496 = sphi 0, %s495
      %s510 = sphi 0, %s496
      %s514 = sphi 0, %s514
      %s516 = sphi 0, %s514
      %s517 = sphi 0, %s516
      %s531 = sphi 0, %s517
      %s535 = sphi 0, %s535
      %s537 = sphi 0, %s535
      %s538 = sphi 0, %s537
      %s552 = sphi 0, %s538
      %s556 = sphi 0, %s556
      %s558 = sphi 0, %s556
      %s559 = sphi 0, %s558
      %s573 = sphi 0, %s559
      %s577 = sphi 0, %s577
      %s579 = sphi 0, %s577
      %s580 = sphi 0, %s579
      %s594 = sphi 0, %s580
      %s600 = sphi 0, %s602
      %s603 = sphi 0, %s600
      %s604 = sphi 0, %s603
      %s620 = sphi 0, %s604
      %s626 = sphi 0, %s628
      %s629 = sphi 0, %s626
      %s630 = sphi 0, %s629
      %s646 = sphi 0, %s630
      %s652 = sphi 0, %s654
      %s655 = sphi 0, %s652
      %s656 = sphi 0, %s655
      %s672 = sphi 0, %s656
    $region4: #{_lambda_.1} parent=1 // loop_header_branch
      %43 = sbr.rel (%p41) target = $region8
    $region5: #{_lambda_.1} parent=1 // loop_body
      %s45 = ssub.s32 %s40, 1
      %s46 = ssub.s32 %s40, 2
      %s47 = sadd.s32 %s40, 1
      %s48 = ssub.s32 %s40, %s47
      %p49 = scmp.eq.s32.totalorder %s48, 0
      %s51 = sadd.s32 %s50, 1
      %s52 = scalar_select %p49, %s50, %s51
      %p55 = pneg %p49
      %p56 = scmp.eq.s32.totalorder %s40, 1
      %p57 = por %p55, %p56
      %p58 = scmp.ne.s32.totalorder %s50, %s53
      %p59 = scmp.eq.s32.totalorder %s40, 0
      %p60 = por %p58, %p59
      %p61 = scmp.ne.s32.totalorder %s50, %s53
      %p62 = scmp.eq.s32.totalorder %s45, 1
      %p63 = por %p61, %p62
      %p64 = scmp.ne.s32.totalorder %s53, %s54
      %p65 = scmp.eq.s32.totalorder %s45, 0
      %p66 = por %p64, %p65
      %p67 = scmp.ne.s32.totalorder %s53, %s54
      %p68 = scmp.eq.s32.totalorder %s46, 1
      %p69 = por %p67, %p68
      %p71 = scmp.ne.s32.totalorder %s54, %s70
      %p72 = scmp.eq.s32.totalorder %s46, 0
      %p73 = por %p71, %p72
      %s74 = ssub.s32 %s40, %s47
      %p75 = scmp.eq.s32.totalorder %s74, 0
      %s77 = sadd.s32 %s76, 1
      %s78 = scalar_select %p75, %s76, %s77
      %p81 = pneg %p75
      %p82 = scmp.eq.s32.totalorder %s40, 1
      %p83 = por %p81, %p82
      %p84 = scmp.ne.s32.totalorder %s76, %s79
      %p85 = scmp.eq.s32.totalorder %s40, 0
      %p86 = por %p84, %p85
      %p87 = scmp.ne.s32.totalorder %s76, %s79
      %p88 = scmp.eq.s32.totalorder %s45, 1
      %p89 = por %p87, %p88
      %p90 = scmp.ne.s32.totalorder %s79, %s80
      %p91 = scmp.eq.s32.totalorder %s45, 0
      %p92 = por %p90, %p91
      %p93 = scmp.ne.s32.totalorder %s79, %s80
      %p94 = scmp.eq.s32.totalorder %s46, 1
      %p95 = por %p93, %p94
      %p97 = scmp.ne.s32.totalorder %s80, %s96
      %p98 = scmp.eq.s32.totalorder %s46, 0
      %p99 = por %p97, %p98
      %s100 = ssub.s32 %s40, %s47
      %p101 = scmp.eq.s32.totalorder %s100, 0
      %s103 = sadd.s32 %s102, 1
      %s104 = scalar_select %p101, %s102, %s103
      %p107 = pneg %p101
      %p108 = scmp.eq.s32.totalorder %s40, 1
      %p109 = por %p107, %p108
      %p110 = scmp.ne.s32.totalorder %s102, %s105
      %p111 = scmp.eq.s32.totalorder %s40, 0
      %p112 = por %p110, %p111
      %p113 = scmp.ne.s32.totalorder %s102, %s105
      %p114 = scmp.eq.s32.totalorder %s45, 1
      %p115 = por %p113, %p114
      %p116 = scmp.ne.s32.totalorder %s105, %s106
      %p117 = scmp.eq.s32.totalorder %s45, 0
      %p118 = por %p116, %p117
      %p119 = scmp.ne.s32.totalorder %s105, %s106
      %p120 = scmp.eq.s32.totalorder %s46, 1
      %p121 = por %p119, %p120
      %p123 = scmp.ne.s32.totalorder %s106, %s122
      %p124 = scmp.eq.s32.totalorder %s46, 0
      %p125 = por %p123, %p124
      %s126 = ssub.s32 %s40, %s47
      %p127 = scmp.eq.s32.totalorder %s126, 0
      %s129 = sadd.s32 %s128, 1
      %s130 = scalar_select %p127, %s128, %s129
      %p133 = pneg %p127
      %p134 = scmp.eq.s32.totalorder %s40, 1
      %p135 = por %p133, %p134
      %p136 = scmp.ne.s32.totalorder %s128, %s131
      %p137 = scmp.eq.s32.totalorder %s40, 0
      %p138 = por %p136, %p137
      %p139 = scmp.ne.s32.totalorder %s128, %s131
      %p140 = scmp.eq.s32.totalorder %s45, 1
      %p141 = por %p139, %p140
      %p142 = scmp.ne.s32.totalorder %s131, %s132
      %p143 = scmp.eq.s32.totalorder %s45, 0
      %p144 = por %p142, %p143
      %p145 = scmp.ne.s32.totalorder %s131, %s132
      %p146 = scmp.eq.s32.totalorder %s46, 1
      %p147 = por %p145, %p146
      %p149 = scmp.ne.s32.totalorder %s132, %s148
      %p150 = scmp.eq.s32.totalorder %s46, 0
      %p151 = por %p149, %p150
      %s152 = ssub.s32 %s40, %s47
      %p153 = scmp.eq.s32.totalorder %s152, 0
      %s155 = sadd.s32 %s154, 1
      %s156 = scalar_select %p153, %s154, %s155
      %p159 = pneg %p153
      %p160 = scmp.eq.s32.totalorder %s40, 1
      %p161 = por %p159, %p160
      %p162 = scmp.ne.s32.totalorder %s154, %s157
      %p163 = scmp.eq.s32.totalorder %s40, 0
      %p164 = por %p162, %p163
      %p165 = scmp.ne.s32.totalorder %s154, %s157
      %p166 = scmp.eq.s32.totalorder %s45, 1
      %p167 = por %p165, %p166
      %p168 = scmp.ne.s32.totalorder %s157, %s158
      %p169 = scmp.eq.s32.totalorder %s45, 0
      %p170 = por %p168, %p169
      %p171 = scmp.ne.s32.totalorder %s157, %s158
      %p172 = scmp.eq.s32.totalorder %s46, 1
      %p173 = por %p171, %p172
      %p175 = scmp.ne.s32.totalorder %s158, %s174
      %p176 = scmp.eq.s32.totalorder %s46, 0
      %p177 = por %p175, %p176
      %s179 = sadd.s32 %s178, 1
      %p182 = scmp.eq.s32.totalorder %s40, 1
      %p183 = scmp.ne.s32.totalorder %s178, %s180
      %p184 = scmp.eq.s32.totalorder %s40, 0
      %p185 = por %p183, %p184
      %p186 = scmp.ne.s32.totalorder %s178, %s180
      %p187 = scmp.eq.s32.totalorder %s45, 1
      %p188 = por %p186, %p187
      %p189 = scmp.ne.s32.totalorder %s180, %s181
      %p190 = scmp.eq.s32.totalorder %s45, 0
      %p191 = por %p189, %p190
      %p192 = scmp.ne.s32.totalorder %s180, %s181
      %p193 = scmp.eq.s32.totalorder %s46, 1
      %p194 = por %p192, %p193
      %p196 = scmp.ne.s32.totalorder %s181, %s195
      %p197 = scmp.eq.s32.totalorder %s46, 0
      %p198 = por %p196, %p197
      %s200 = sadd.s32 %s199, 1
      %p203 = scmp.eq.s32.totalorder %s40, 1
      %p204 = scmp.ne.s32.totalorder %s199, %s201
      %p205 = scmp.eq.s32.totalorder %s40, 0
      %p206 = por %p204, %p205
      %p207 = scmp.ne.s32.totalorder %s199, %s201
      %p208 = scmp.eq.s32.totalorder %s45, 1
      %p209 = por %p207, %p208
      %p210 = scmp.ne.s32.totalorder %s201, %s202
      %p211 = scmp.eq.s32.totalorder %s45, 0
      %p212 = por %p210, %p211
      %p213 = scmp.ne.s32.totalorder %s201, %s202
      %p214 = scmp.eq.s32.totalorder %s46, 1
      %p215 = por %p213, %p214
      %p217 = scmp.ne.s32.totalorder %s202, %s216
      %p218 = scmp.eq.s32.totalorder %s46, 0
      %p219 = por %p217, %p218
      %s221 = sadd.s32 %s220, 1
      %p224 = scmp.eq.s32.totalorder %s40, 1
      %p225 = scmp.ne.s32.totalorder %s220, %s222
      %p226 = scmp.eq.s32.totalorder %s40, 0
      %p227 = por %p225, %p226
      %p228 = scmp.ne.s32.totalorder %s220, %s222
      %p229 = scmp.eq.s32.totalorder %s45, 1
      %p230 = por %p228, %p229
      %p231 = scmp.ne.s32.totalorder %s222, %s223
      %p232 = scmp.eq.s32.totalorder %s45, 0
      %p233 = por %p231, %p232
      %p234 = scmp.ne.s32.totalorder %s222, %s223
      %p235 = scmp.eq.s32.totalorder %s46, 1
      %p236 = por %p234, %p235
      %p238 = scmp.ne.s32.totalorder %s223, %s237
      %p239 = scmp.eq.s32.totalorder %s46, 0
      %p240 = por %p238, %p239
      %s242 = sadd.s32 %s241, 1
      %p245 = scmp.eq.s32.totalorder %s40, 1
      %p246 = scmp.ne.s32.totalorder %s241, %s243
      %p247 = scmp.eq.s32.totalorder %s40, 0
      %p248 = por %p246, %p247
      %p249 = scmp.ne.s32.totalorder %s241, %s243
      %p250 = scmp.eq.s32.totalorder %s45, 1
      %p251 = por %p249, %p250
      %p252 = scmp.ne.s32.totalorder %s243, %s244
      %p253 = scmp.eq.s32.totalorder %s45, 0
      %p254 = por %p252, %p253
      %p255 = scmp.ne.s32.totalorder %s243, %s244
      %p256 = scmp.eq.s32.totalorder %s46, 1
      %p257 = por %p255, %p256
      %p259 = scmp.ne.s32.totalorder %s244, %s258
      %p260 = scmp.eq.s32.totalorder %s46, 0
      %p261 = por %p259, %p260
      %s263 = sadd.s32 %s262, 1
      %p266 = scmp.eq.s32.totalorder %s40, 1
      %p267 = scmp.ne.s32.totalorder %s262, %s264
      %p268 = scmp.eq.s32.totalorder %s40, 0
      %p269 = por %p267, %p268
      %p270 = scmp.ne.s32.totalorder %s262, %s264
      %p271 = scmp.eq.s32.totalorder %s45, 1
      %p272 = por %p270, %p271
      %p273 = scmp.ne.s32.totalorder %s264, %s265
      %p274 = scmp.eq.s32.totalorder %s45, 0
      %p275 = por %p273, %p274
      %p276 = scmp.ne.s32.totalorder %s264, %s265
      %p277 = scmp.eq.s32.totalorder %s46, 1
      %p278 = por %p276, %p277
      %p280 = scmp.ne.s32.totalorder %s265, %s279
      %p281 = scmp.eq.s32.totalorder %s46, 0
      %p282 = por %p280, %p281
      %s284 = sadd.s32 %s283, 1
      %p287 = scmp.eq.s32.totalorder %s40, 1
      %p288 = scmp.ne.s32.totalorder %s283, %s285
      %p289 = scmp.eq.s32.totalorder %s40, 0
      %p290 = por %p288, %p289
      %p291 = scmp.ne.s32.totalorder %s283, %s285
      %p292 = scmp.eq.s32.totalorder %s45, 1
      %p293 = por %p291, %p292
      %p294 = scmp.ne.s32.totalorder %s285, %s286
      %p295 = scmp.eq.s32.totalorder %s45, 0
      %p296 = por %p294, %p295
      %p297 = scmp.ne.s32.totalorder %s285, %s286
      %p298 = scmp.eq.s32.totalorder %s46, 1
      %p299 = por %p297, %p298
      %p301 = scmp.ne.s32.totalorder %s286, %s300
      %p302 = scmp.eq.s32.totalorder %s46, 0
      %p303 = por %p301, %p302
      %s305 = sadd.s32 %s304, 1
      %p308 = scmp.eq.s32.totalorder %s40, 1
      %p309 = scmp.ne.s32.totalorder %s304, %s306
      %p310 = scmp.eq.s32.totalorder %s40, 0
      %p311 = por %p309, %p310
      %p312 = scmp.ne.s32.totalorder %s304, %s306
      %p313 = scmp.eq.s32.totalorder %s45, 1
      %p314 = por %p312, %p313
      %p315 = scmp.ne.s32.totalorder %s306, %s307
      %p316 = scmp.eq.s32.totalorder %s45, 0
      %p317 = por %p315, %p316
      %p318 = scmp.ne.s32.totalorder %s306, %s307
      %p319 = scmp.eq.s32.totalorder %s46, 1
      %p320 = por %p318, %p319
      %p322 = scmp.ne.s32.totalorder %s307, %s321
      %p323 = scmp.eq.s32.totalorder %s46, 0
      %p324 = por %p322, %p323
      %s326 = sadd.s32 %s325, 1
      %p329 = scmp.eq.s32.totalorder %s40, 1
      %p330 = scmp.ne.s32.totalorder %s325, %s327
      %p331 = scmp.eq.s32.totalorder %s40, 0
      %p332 = por %p330, %p331
      %p333 = scmp.ne.s32.totalorder %s325, %s327
      %p334 = scmp.eq.s32.totalorder %s45, 1
      %p335 = por %p333, %p334
      %p336 = scmp.ne.s32.totalorder %s327, %s328
      %p337 = scmp.eq.s32.totalorder %s45, 0
      %p338 = por %p336, %p337
      %p339 = scmp.ne.s32.totalorder %s327, %s328
      %p340 = scmp.eq.s32.totalorder %s46, 1
      %p341 = por %p339, %p340
      %p343 = scmp.ne.s32.totalorder %s328, %s342
      %p344 = scmp.eq.s32.totalorder %s46, 0
      %p345 = por %p343, %p344
      %s347 = sadd.s32 %s346, 1
      %p350 = scmp.eq.s32.totalorder %s40, 1
      %p351 = scmp.ne.s32.totalorder %s346, %s348
      %p352 = scmp.eq.s32.totalorder %s40, 0
      %p353 = por %p351, %p352
      %p354 = scmp.ne.s32.totalorder %s346, %s348
      %p355 = scmp.eq.s32.totalorder %s45, 1
      %p356 = por %p354, %p355
      %p357 = scmp.ne.s32.totalorder %s348, %s349
      %p358 = scmp.eq.s32.totalorder %s45, 0
      %p359 = por %p357, %p358
      %p360 = scmp.ne.s32.totalorder %s348, %s349
      %p361 = scmp.eq.s32.totalorder %s46, 1
      %p362 = por %p360, %p361
      %p364 = scmp.ne.s32.totalorder %s349, %s363
      %p365 = scmp.eq.s32.totalorder %s46, 0
      %p366 = por %p364, %p365
      %s368 = sadd.s32 %s367, 1
      %p371 = scmp.eq.s32.totalorder %s40, 1
      %p372 = scmp.ne.s32.totalorder %s367, %s369
      %p373 = scmp.eq.s32.totalorder %s40, 0
      %p374 = por %p372, %p373
      %p375 = scmp.ne.s32.totalorder %s367, %s369
      %p376 = scmp.eq.s32.totalorder %s45, 1
      %p377 = por %p375, %p376
      %p378 = scmp.ne.s32.totalorder %s369, %s370
      %p379 = scmp.eq.s32.totalorder %s45, 0
      %p380 = por %p378, %p379
      %p381 = scmp.ne.s32.totalorder %s369, %s370
      %p382 = scmp.eq.s32.totalorder %s46, 1
      %p383 = por %p381, %p382
      %p385 = scmp.ne.s32.totalorder %s370, %s384
      %p386 = scmp.eq.s32.totalorder %s46, 0
      %p387 = por %p385, %p386
      %s389 = sadd.s32 %s388, 1
      %p392 = scmp.eq.s32.totalorder %s40, 1
      %p393 = scmp.ne.s32.totalorder %s388, %s390
      %p394 = scmp.eq.s32.totalorder %s40, 0
      %p395 = por %p393, %p394
      %p396 = scmp.ne.s32.totalorder %s388, %s390
      %p397 = scmp.eq.s32.totalorder %s45, 1
      %p398 = por %p396, %p397
      %p399 = scmp.ne.s32.totalorder %s390, %s391
      %p400 = scmp.eq.s32.totalorder %s45, 0
      %p401 = por %p399, %p400
      %p402 = scmp.ne.s32.totalorder %s390, %s391
      %p403 = scmp.eq.s32.totalorder %s46, 1
      %p404 = por %p402, %p403
      %p406 = scmp.ne.s32.totalorder %s391, %s405
      %p407 = scmp.eq.s32.totalorder %s46, 0
      %p408 = por %p406, %p407
      %s410 = sadd.s32 %s409, 1
      %p413 = scmp.eq.s32.totalorder %s40, 1
      %p414 = scmp.ne.s32.totalorder %s409, %s411
      %p415 = scmp.eq.s32.totalorder %s40, 0
      %p416 = por %p414, %p415
      %p417 = scmp.ne.s32.totalorder %s409, %s411
      %p418 = scmp.eq.s32.totalorder %s45, 1
      %p419 = por %p417, %p418
      %p420 = scmp.ne.s32.totalorder %s411, %s412
      %p421 = scmp.eq.s32.totalorder %s45, 0
      %p422 = por %p420, %p421
      %p423 = scmp.ne.s32.totalorder %s411, %s412
      %p424 = scmp.eq.s32.totalorder %s46, 1
      %p425 = por %p423, %p424
      %p427 = scmp.ne.s32.totalorder %s412, %s426
      %p428 = scmp.eq.s32.totalorder %s46, 0
      %p429 = por %p427, %p428
      %s431 = sadd.s32 %s430, 1
      %p434 = scmp.eq.s32.totalorder %s40, 1
      %p435 = scmp.ne.s32.totalorder %s430, %s432
      %p436 = scmp.eq.s32.totalorder %s40, 0
      %p437 = por %p435, %p436
      %p438 = scmp.ne.s32.totalorder %s430, %s432
      %p439 = scmp.eq.s32.totalorder %s45, 1
      %p440 = por %p438, %p439
      %p441 = scmp.ne.s32.totalorder %s432, %s433
      %p442 = scmp.eq.s32.totalorder %s45, 0
      %p443 = por %p441, %p442
      %p444 = scmp.ne.s32.totalorder %s432, %s433
      %p445 = scmp.eq.s32.totalorder %s46, 1
      %p446 = por %p444, %p445
      %p448 = scmp.ne.s32.totalorder %s433, %s447
      %p449 = scmp.eq.s32.totalorder %s46, 0
      %p450 = por %p448, %p449
      %s452 = sadd.s32 %s451, 1
      %p455 = scmp.eq.s32.totalorder %s40, 1
      %p456 = scmp.ne.s32.totalorder %s451, %s453
      %p457 = scmp.eq.s32.totalorder %s40, 0
      %p458 = por %p456, %p457
      %p459 = scmp.ne.s32.totalorder %s451, %s453
      %p460 = scmp.eq.s32.totalorder %s45, 1
      %p461 = por %p459, %p460
      %p462 = scmp.ne.s32.totalorder %s453, %s454
      %p463 = scmp.eq.s32.totalorder %s45, 0
      %p464 = por %p462, %p463
      %p465 = scmp.ne.s32.totalorder %s453, %s454
      %p466 = scmp.eq.s32.totalorder %s46, 1
      %p467 = por %p465, %p466
      %p469 = scmp.ne.s32.totalorder %s454, %s468
      %p470 = scmp.eq.s32.totalorder %s46, 0
      %p471 = por %p469, %p470
      %s473 = sadd.s32 %s472, 1
      %p476 = scmp.eq.s32.totalorder %s40, 1
      %p477 = scmp.ne.s32.totalorder %s472, %s474
      %p478 = scmp.eq.s32.totalorder %s40, 0
      %p479 = por %p477, %p478
      %p480 = scmp.ne.s32.totalorder %s472, %s474
      %p481 = scmp.eq.s32.totalorder %s45, 1
      %p482 = por %p480, %p481
      %p483 = scmp.ne.s32.totalorder %s474, %s475
      %p484 = scmp.eq.s32.totalorder %s45, 0
      %p485 = por %p483, %p484
      %p486 = scmp.ne.s32.totalorder %s474, %s475
      %p487 = scmp.eq.s32.totalorder %s46, 1
      %p488 = por %p486, %p487
      %p490 = scmp.ne.s32.totalorder %s475, %s489
      %p491 = scmp.eq.s32.totalorder %s46, 0
      %p492 = por %p490, %p491
      %s494 = sadd.s32 %s493, 1
      %p497 = scmp.eq.s32.totalorder %s40, 1
      %p498 = scmp.ne.s32.totalorder %s493, %s495
      %p499 = scmp.eq.s32.totalorder %s40, 0
      %p500 = por %p498, %p499
      %p501 = scmp.ne.s32.totalorder %s493, %s495
      %p502 = scmp.eq.s32.totalorder %s45, 1
      %p503 = por %p501, %p502
      %p504 = scmp.ne.s32.totalorder %s495, %s496
      %p505 = scmp.eq.s32.totalorder %s45, 0
      %p506 = por %p504, %p505
      %p507 = scmp.ne.s32.totalorder %s495, %s496
      %p508 = scmp.eq.s32.totalorder %s46, 1
      %p509 = por %p507, %p508
      %p511 = scmp.ne.s32.totalorder %s496, %s510
      %p512 = scmp.eq.s32.totalorder %s46, 0
      %p513 = por %p511, %p512
      %s515 = sadd.s32 %s514, 1
      %p518 = scmp.eq.s32.totalorder %s40, 1
      %p519 = scmp.ne.s32.totalorder %s514, %s516
      %p520 = scmp.eq.s32.totalorder %s40, 0
      %p521 = por %p519, %p520
      %p522 = scmp.ne.s32.totalorder %s514, %s516
      %p523 = scmp.eq.s32.totalorder %s45, 1
      %p524 = por %p522, %p523
      %p525 = scmp.ne.s32.totalorder %s516, %s517
      %p526 = scmp.eq.s32.totalorder %s45, 0
      %p527 = por %p525, %p526
      %p528 = scmp.ne.s32.totalorder %s516, %s517
      %p529 = scmp.eq.s32.totalorder %s46, 1
      %p530 = por %p528, %p529
      %p532 = scmp.ne.s32.totalorder %s517, %s531
      %p533 = scmp.eq.s32.totalorder %s46, 0
      %p534 = por %p532, %p533
      %s536 = sadd.s32 %s535, 1
      %p539 = scmp.eq.s32.totalorder %s40, 1
      %p540 = scmp.ne.s32.totalorder %s535, %s537
      %p541 = scmp.eq.s32.totalorder %s40, 0
      %p542 = por %p540, %p541
      %p543 = scmp.ne.s32.totalorder %s535, %s537
      %p544 = scmp.eq.s32.totalorder %s45, 1
      %p545 = por %p543, %p544
      %p546 = scmp.ne.s32.totalorder %s537, %s538
      %p547 = scmp.eq.s32.totalorder %s45, 0
      %p548 = por %p546, %p547
      %p549 = scmp.ne.s32.totalorder %s537, %s538
      %p550 = scmp.eq.s32.totalorder %s46, 1
      %p551 = por %p549, %p550
      %p553 = scmp.ne.s32.totalorder %s538, %s552
      %p554 = scmp.eq.s32.totalorder %s46, 0
      %p555 = por %p553, %p554
      %s557 = sadd.s32 %s556, 1
      %p560 = scmp.eq.s32.totalorder %s40, 1
      %p561 = scmp.ne.s32.totalorder %s556, %s558
      %p562 = scmp.eq.s32.totalorder %s40, 0
      %p563 = por %p561, %p562
      %p564 = scmp.ne.s32.totalorder %s556, %s558
      %p565 = scmp.eq.s32.totalorder %s45, 1
      %p566 = por %p564, %p565
      %p567 = scmp.ne.s32.totalorder %s558, %s559
      %p568 = scmp.eq.s32.totalorder %s45, 0
      %p569 = por %p567, %p568
      %p570 = scmp.ne.s32.totalorder %s558, %s559
      %p571 = scmp.eq.s32.totalorder %s46, 1
      %p572 = por %p570, %p571
      %p574 = scmp.ne.s32.totalorder %s559, %s573
      %p575 = scmp.eq.s32.totalorder %s46, 0
      %p576 = por %p574, %p575
      %s578 = sadd.s32 %s577, 1
      %p581 = scmp.eq.s32.totalorder %s40, 1
      %p582 = scmp.ne.s32.totalorder %s577, %s579
      %p583 = scmp.eq.s32.totalorder %s40, 0
      %p584 = por %p582, %p583
      %p585 = scmp.ne.s32.totalorder %s577, %s579
      %p586 = scmp.eq.s32.totalorder %s45, 1
      %p587 = por %p585, %p586
      %p588 = scmp.ne.s32.totalorder %s579, %s580
      %p589 = scmp.eq.s32.totalorder %s45, 0
      %p590 = por %p588, %p589
      %p591 = scmp.ne.s32.totalorder %s579, %s580
      %p592 = scmp.eq.s32.totalorder %s46, 1
      %p593 = por %p591, %p592
      %p595 = scmp.ne.s32.totalorder %s580, %s594
      %p596 = scmp.eq.s32.totalorder %s46, 0
      %p597 = por %p595, %p596
      %s598 = ssub.s32 %s40, %s47
      %p599 = scmp.eq.s32.totalorder %s598, 0
      %s601 = sadd.s32 %s600, 1
      %s602 = scalar_select %p599, %s600, %s601
      %p605 = pneg %p599
      %p606 = scmp.eq.s32.totalorder %s40, 1
      %p607 = por %p605, %p606
      %p608 = scmp.ne.s32.totalorder %s600, %s603
      %p609 = scmp.eq.s32.totalorder %s40, 0
      %p610 = por %p608, %p609
      %p611 = scmp.ne.s32.totalorder %s600, %s603
      %p612 = scmp.eq.s32.totalorder %s45, 1
      %p613 = por %p611, %p612
      %p614 = scmp.ne.s32.totalorder %s603, %s604
      %p615 = scmp.eq.s32.totalorder %s45, 0
      %p616 = por %p614, %p615
      %p617 = scmp.ne.s32.totalorder %s603, %s604
      %p618 = scmp.eq.s32.totalorder %s46, 1
      %p619 = por %p617, %p618
      %p621 = scmp.ne.s32.totalorder %s604, %s620
      %p622 = scmp.eq.s32.totalorder %s46, 0
      %p623 = por %p621, %p622
      %s624 = ssub.s32 %s40, %s47
      %p625 = scmp.eq.s32.totalorder %s624, 0
      %s627 = sadd.s32 %s626, 1
      %s628 = scalar_select %p625, %s626, %s627
      %p631 = pneg %p625
      %p632 = scmp.eq.s32.totalorder %s40, 1
      %p633 = por %p631, %p632
      %p634 = scmp.ne.s32.totalorder %s626, %s629
      %p635 = scmp.eq.s32.totalorder %s40, 0
      %p636 = por %p634, %p635
      %p637 = scmp.ne.s32.totalorder %s626, %s629
      %p638 = scmp.eq.s32.totalorder %s45, 1
      %p639 = por %p637, %p638
      %p640 = scmp.ne.s32.totalorder %s629, %s630
      %p641 = scmp.eq.s32.totalorder %s45, 0
      %p642 = por %p640, %p641
      %p643 = scmp.ne.s32.totalorder %s629, %s630
      %p644 = scmp.eq.s32.totalorder %s46, 1
      %p645 = por %p643, %p644
      %p647 = scmp.ne.s32.totalorder %s630, %s646
      %p648 = scmp.eq.s32.totalorder %s46, 0
      %p649 = por %p647, %p648
      %s650 = ssub.s32 %s40, %s47
      %p651 = scmp.eq.s32.totalorder %s650, 0
      %s653 = sadd.s32 %s652, 1
      %s654 = scalar_select %p651, %s652, %s653
      %p657 = pneg %p651
      %p658 = scmp.eq.s32.totalorder %s40, 1
      %p659 = por %p657, %p658
      %p660 = scmp.ne.s32.totalorder %s652, %s655
      %p661 = scmp.eq.s32.totalorder %s40, 0
      %p662 = por %p660, %p661
      %p663 = scmp.ne.s32.totalorder %s652, %s655
      %p664 = scmp.eq.s32.totalorder %s45, 1
      %p665 = por %p663, %p664
      %p666 = scmp.ne.s32.totalorder %s655, %s656
      %p667 = scmp.eq.s32.totalorder %s45, 0
      %p668 = por %p666, %p667
      %p669 = scmp.ne.s32.totalorder %s655, %s656
      %p670 = scmp.eq.s32.totalorder %s46, 1
      %p671 = por %p669, %p670
      %p673 = scmp.ne.s32.totalorder %s656, %s672
      %p674 = scmp.eq.s32.totalorder %s46, 0
      %p675 = por %p673, %p674
      %p676 = scmp.le.s32.totalorder 1, %s40
      %p677 = scmp.lt.s32.totalorder %s40, 3
      %p678 = pnand %p676, %p677
      %p679 = pneg %p678
      // Predicated region
      $region9: #{_lambda_.1} parent=5 // pred_check
        _
      $region10: #{_lambda_.1} parent=5 // pred_check_branch
        %681 = sbr.rel (%p678) target = $region12
      $region11: #{_lambda_.1} parent=5 // pred_region
        %s682 = ssub.s32 %s40, 1
        // Predicated region
        $region13: #{_lambda_.1} parent=11 // pred_check
          %p683 = pneg %p191
        $region14: #{_lambda_.1} parent=11 // pred_check_branch
          %685 = sbr.rel (%p683) target = $region16
        $region15: #{_lambda_.1} parent=11 // pred_region
          _
        $region16: #{_lambda_.1} parent=11 // pred_fallthru
          _
        // Predicated region
        $region17: #{_lambda_.1} parent=11 // pred_check
          %p686 = pneg %p212
        $region18: #{_lambda_.1} parent=11 // pred_check_branch
          %688 = sbr.rel (%p686) target = $region20
        $region19: #{_lambda_.1} parent=11 // pred_region
          _
        $region20: #{_lambda_.1} parent=11 // pred_fallthru
          _
        // Predicated region
        $region21: #{_lambda_.1} parent=11 // pred_check
          %p689 = pneg %p233
        $region22: #{_lambda_.1} parent=11 // pred_check_branch
          %691 = sbr.rel (%p689) target = $region24
        $region23: #{_lambda_.1} parent=11 // pred_region
          _
        $region24: #{_lambda_.1} parent=11 // pred_fallthru
          _
        // Predicated region
        $region25: #{_lambda_.1} parent=11 // pred_check
          %p692 = pneg %p254
        $region26: #{_lambda_.1} parent=11 // pred_check_branch
          %694 = sbr.rel (%p692) target = $region28
        $region27: #{_lambda_.1} parent=11 // pred_region
          _
        $region28: #{_lambda_.1} parent=11 // pred_fallthru
          _
        // Predicated region
        $region29: #{_lambda_.1} parent=11 // pred_check
          %p695 = pneg %p275
        $region30: #{_lambda_.1} parent=11 // pred_check_branch
          %697 = sbr.rel (%p695) target = $region32
        $region31: #{_lambda_.1} parent=11 // pred_region
          _
        $region32: #{_lambda_.1} parent=11 // pred_fallthru
          _
        // Predicated region
        $region33: #{_lambda_.1} parent=11 // pred_check
          %p698 = pneg %p296
        $region34: #{_lambda_.1} parent=11 // pred_check_branch
          %700 = sbr.rel (%p698) target = $region36
        $region35: #{_lambda_.1} parent=11 // pred_region
          _
        $region36: #{_lambda_.1} parent=11 // pred_fallthru
          _
        // Predicated region
        $region37: #{_lambda_.1} parent=11 // pred_check
          %p701 = pneg %p317
        $region38: #{_lambda_.1} parent=11 // pred_check_branch
          %703 = sbr.rel (%p701) target = $region40
        $region39: #{_lambda_.1} parent=11 // pred_region
          _
        $region40: #{_lambda_.1} parent=11 // pred_fallthru
          _
        // Predicated region
        $region41: #{_lambda_.1} parent=11 // pred_check
          %p704 = pneg %p338
        $region42: #{_lambda_.1} parent=11 // pred_check_branch
          %706 = sbr.rel (%p704) target = $region44
        $region43: #{_lambda_.1} parent=11 // pred_region
          _
        $region44: #{_lambda_.1} parent=11 // pred_fallthru
          _
        // Predicated region
        $region45: #{_lambda_.1} parent=11 // pred_check
          %p707 = pneg %p359
        $region46: #{_lambda_.1} parent=11 // pred_check_branch
          %709 = sbr.rel (%p707) target = $region48
        $region47: #{_lambda_.1} parent=11 // pred_region
          _
        $region48: #{_lambda_.1} parent=11 // pred_fallthru
          _
        // Predicated region
        $region49: #{_lambda_.1} parent=11 // pred_check
          %p710 = pneg %p380
        $region50: #{_lambda_.1} parent=11 // pred_check_branch
          %712 = sbr.rel (%p710) target = $region52
        $region51: #{_lambda_.1} parent=11 // pred_region
          _
        $region52: #{_lambda_.1} parent=11 // pred_fallthru
          _
        // Predicated region
        $region53: #{_lambda_.1} parent=11 // pred_check
          %p713 = pneg %p401
        $region54: #{_lambda_.1} parent=11 // pred_check_branch
          %715 = sbr.rel (%p713) target = $region56
        $region55: #{_lambda_.1} parent=11 // pred_region
          _
        $region56: #{_lambda_.1} parent=11 // pred_fallthru
          _
        // Predicated region
        $region57: #{_lambda_.1} parent=11 // pred_check
          %p716 = pneg %p422
        $region58: #{_lambda_.1} parent=11 // pred_check_branch
          %718 = sbr.rel (%p716) target = $region60
        $region59: #{_lambda_.1} parent=11 // pred_region
          _
        $region60: #{_lambda_.1} parent=11 // pred_fallthru
          _
        // Predicated region
        $region61: #{_lambda_.1} parent=11 // pred_check
          %p719 = pneg %p443
        $region62: #{_lambda_.1} parent=11 // pred_check_branch
          %721 = sbr.rel (%p719) target = $region64
        $region63: #{_lambda_.1} parent=11 // pred_region
          _
        $region64: #{_lambda_.1} parent=11 // pred_fallthru
          _
        // Predicated region
        $region65: #{_lambda_.1} parent=11 // pred_check
          %p722 = pneg %p464
        $region66: #{_lambda_.1} parent=11 // pred_check_branch
          %724 = sbr.rel (%p722) target = $region68
        $region67: #{_lambda_.1} parent=11 // pred_region
          _
        $region68: #{_lambda_.1} parent=11 // pred_fallthru
          _
        // Predicated region
        $region69: #{_lambda_.1} parent=11 // pred_check
          %p725 = pneg %p485
        $region70: #{_lambda_.1} parent=11 // pred_check_branch
          %727 = sbr.rel (%p725) target = $region72
        $region71: #{_lambda_.1} parent=11 // pred_region
          _
        $region72: #{_lambda_.1} parent=11 // pred_fallthru
          _
        // Predicated region
        $region73: #{_lambda_.1} parent=11 // pred_check
          %p728 = pneg %p506
        $region74: #{_lambda_.1} parent=11 // pred_check_branch
          %730 = sbr.rel (%p728) target = $region76
        $region75: #{_lambda_.1} parent=11 // pred_region
          _
        $region76: #{_lambda_.1} parent=11 // pred_fallthru
          _
        // Predicated region
        $region77: #{_lambda_.1} parent=11 // pred_check
          %p731 = pneg %p527
        $region78: #{_lambda_.1} parent=11 // pred_check_branch
          %733 = sbr.rel (%p731) target = $region80
        $region79: #{_lambda_.1} parent=11 // pred_region
          _
        $region80: #{_lambda_.1} parent=11 // pred_fallthru
          _
        // Predicated region
        $region81: #{_lambda_.1} parent=11 // pred_check
          %p734 = pneg %p548
        $region82: #{_lambda_.1} parent=11 // pred_check_branch
          %736 = sbr.rel (%p734) target = $region84
        $region83: #{_lambda_.1} parent=11 // pred_region
          _
        $region84: #{_lambda_.1} parent=11 // pred_fallthru
          _
        // Predicated region
        $region85: #{_lambda_.1} parent=11 // pred_check
          %p737 = pneg %p569
        $region86: #{_lambda_.1} parent=11 // pred_check_branch
          %739 = sbr.rel (%p737) target = $region88
        $region87: #{_lambda_.1} parent=11 // pred_region
          _
        $region88: #{_lambda_.1} parent=11 // pred_fallthru
          _
        // Predicated region
        $region89: #{_lambda_.1} parent=11 // pred_check
          %p740 = pneg %p590
        $region90: #{_lambda_.1} parent=11 // pred_check_branch
          %742 = sbr.rel (%p740) target = $region92
        $region91: #{_lambda_.1} parent=11 // pred_region
          _
        $region92: #{_lambda_.1} parent=11 // pred_fallthru
          _
      $region12: #{_lambda_.1} parent=5 // pred_fallthru
        _
      %p743 = scmp.lt.s32.totalorder %s40, 2
      // Predicated region
      $region93: #{_lambda_.1} parent=5 // pred_check
        %p744 = pneg %p743
      $region94: #{_lambda_.1} parent=5 // pred_check_branch
        %746 = sbr.rel (%p744) target = $region96
      $region95: #{_lambda_.1} parent=5 // pred_region
        // Predicated region
        $region97: #{_lambda_.1} parent=95 // pred_check
          %p747 = pneg %p60
        $region98: #{_lambda_.1} parent=95 // pred_check_branch
          %749 = sbr.rel (%p747) target = $region100
        $region99: #{_lambda_.1} parent=95 // pred_region
          %p750 = scmp.lt.s32.totalorder %s40, 1
          %s751 = scalar_select %p750, %s40, 1
          %s752 = smul.addr %s751, 8
          %s753 = scalar_lea.vmem %s0, %s752
        $region100: #{_lambda_.1} parent=95 // pred_fallthru
          _
        // Predicated region
        $region101: #{_lambda_.1} parent=95 // pred_check
          %p754 = pneg %p86
        $region102: #{_lambda_.1} parent=95 // pred_check_branch
          %756 = sbr.rel (%p754) target = $region104
        $region103: #{_lambda_.1} parent=95 // pred_region
          %p757 = scmp.lt.s32.totalorder %s40, 1
          %s758 = scalar_select %p757, %s40, 1
          %s759 = smul.addr %s758, 8
          %s760 = scalar_lea.vmem %s1, %s759
        $region104: #{_lambda_.1} parent=95 // pred_fallthru
          _
        // Predicated region
        $region105: #{_lambda_.1} parent=95 // pred_check
          %p761 = pneg %p112
        $region106: #{_lambda_.1} parent=95 // pred_check_branch
          %763 = sbr.rel (%p761) target = $region108
        $region107: #{_lambda_.1} parent=95 // pred_region
          %p764 = scmp.lt.s32.totalorder %s40, 1
          %s765 = scalar_select %p764, %s40, 1
          %s766 = smul.addr %s765, 8
          %s767 = scalar_lea.vmem %s2, %s766
        $region108: #{_lambda_.1} parent=95 // pred_fallthru
          _
        // Predicated region
        $region109: #{_lambda_.1} parent=95 // pred_check
          %p768 = pneg %p138
        $region110: #{_lambda_.1} parent=95 // pred_check_branch
          %770 = sbr.rel (%p768) target = $region112
        $region111: #{_lambda_.1} parent=95 // pred_region
          %p771 = scmp.lt.s32.totalorder %s40, 1
          %s772 = scalar_select %p771, %s40, 1
          %s773 = smul.addr %s772, 8
          %s774 = scalar_lea.vmem %s3, %s773
        $region112: #{_lambda_.1} parent=95 // pred_fallthru
          _
        // Predicated region
        $region113: #{_lambda_.1} parent=95 // pred_check
          %p775 = pneg %p164
        $region114: #{_lambda_.1} parent=95 // pred_check_branch
          %777 = sbr.rel (%p775) target = $region116
        $region115: #{_lambda_.1} parent=95 // pred_region
          %p778 = scmp.lt.s32.totalorder %s40, 1
          %s779 = scalar_select %p778, %s40, 1
          %s780 = scalar_lea.vmem %s4, %s779
        $region116: #{_lambda_.1} parent=95 // pred_fallthru
          _
      $region96: #{_lambda_.1} parent=5 // pred_fallthru
        _
      %p781 = scmp.le.s32.totalorder 1, %s40
      %p782 = scmp.lt.s32.totalorder %s40, 3
      %p783 = pnand %p781, %p782
      %p784 = pneg %p783
      // Predicated region
      $region117: #{_lambda_.1} parent=5 // pred_check
        _
      $region118: #{_lambda_.1} parent=5 // pred_check_branch
        %786 = sbr.rel (%p783) target = $region120
      $region119: #{_lambda_.1} parent=5 // pred_region
        %s787 = ssub.s32 %s40, 1
        %p788 = scmp.lt.s32.totalorder %s45, 1
        %s789 = scalar_select %p788, %s45, 1
        %s790 = smul.addr %s789, 8
        %s791 = scalar_lea.vmem %s0, %s790
        %p792 = pneg %p66
        %p793 = pneg %p63
        %p794 = scmp.lt.s32.totalorder %s45, 1
        %s795 = scalar_select %p794, %s45, 1
        %s796 = smul.addr %s795, 8
        %s797 = scalar_lea.vmem %s1, %s796
        %p798 = pneg %p92
        %p799 = pneg %p89
        %p800 = scmp.lt.s32.totalorder %s45, 1
        %s801 = scalar_select %p800, %s45, 1
        %s802 = smul.addr %s801, 8
        %s803 = scalar_lea.vmem %s2, %s802
        %p804 = pneg %p118
        %p805 = pneg %p115
        %p806 = scmp.lt.s32.totalorder %s45, 1
        %s807 = scalar_select %p806, %s45, 1
        %s808 = smul.addr %s807, 8
        %s809 = scalar_lea.vmem %s3, %s808
        %p810 = pneg %p144
        %p811 = pneg %p141
        %p812 = scmp.lt.s32.totalorder %s45, 1
        %s813 = scalar_select %p812, %s45, 1
        %s814 = scalar_lea.vmem %s4, %s813
        %p815 = pneg %p170
        %p816 = pneg %p167
        %p817 = pneg %p191
        %p818 = pneg %p188
        %p819 = pneg %p212
        %p820 = pneg %p209
        %p821 = pneg %p233
        %p822 = pneg %p230
        %p823 = pneg %p254
        %p824 = pneg %p251
        %p825 = pneg %p275
        %p826 = pneg %p272
        %p827 = pneg %p296
        %p828 = pneg %p293
        %p829 = pneg %p317
        %p830 = pneg %p314
        %p831 = pneg %p338
        %p832 = pneg %p335
        %p833 = pneg %p359
        %p834 = pneg %p356
        %p835 = pneg %p380
        %p836 = pneg %p377
        %p837 = pneg %p401
        %p838 = pneg %p398
        %p839 = pneg %p422
        %p840 = pneg %p419
        %p841 = pneg %p443
        %p842 = pneg %p440
        %p843 = pneg %p464
        %p844 = pneg %p461
        %p845 = pneg %p485
        %p846 = pneg %p482
        %p847 = pneg %p506
        %p848 = pneg %p503
        %p849 = pneg %p527
        %p850 = pneg %p524
        %p851 = pneg %p548
        %p852 = pneg %p545
        %p853 = pneg %p569
        %p854 = pneg %p566
        %p855 = pneg %p590
        %p856 = pneg %p587
        %p857 = pneg %p616
        %p858 = pneg %p613
        %s859 = sand.u32 %s603, 1
        %s860 = scalar_lea.sflag [#allocation3], %s859
        %s861 = sand.u32 %s603, 1
        %s862 = smul.addr %s861, 8
        %s863 = scalar_lea.vmem [#allocation2], %s862
        %p864 = pneg %p642
        %p865 = pneg %p639
        %s866 = sand.u32 %s45, 1
        %s867 = scalar_lea.sflag [#allocation5], %s866
        %s868 = sand.u32 %s629, 1
        %s869 = smul.addr %s868, 8
        %s870 = scalar_lea.vmem [#allocation4], %s869
        %p871 = pneg %p668
        %p872 = pneg %p665
        %s873 = sand.u32 %s45, 1
        %s874 = scalar_lea.sflag [#allocation5], %s873
        %s875 = sand.u32 %s655, 1
        %s876 = smul.addr %s875, 8
        %s877 = scalar_lea.vmem [#allocation6], %s876
        %p878 = scmp.lt.s32.totalorder %s45, 1
        %s879 = scalar_select %p878, %s45, 1
        %s880 = smul.addr %s879, 8
        %s881 = scalar_lea.vmem %s0, %s880
        %p882 = scmp.lt.s32.totalorder %s45, 1
        %s883 = scalar_select %p882, %s45, 1
        %s884 = smul.addr %s883, 8
        %s885 = scalar_lea.vmem %s1, %s884
        %p886 = scmp.lt.s32.totalorder %s45, 1
        %s887 = scalar_select %p886, %s45, 1
        %s888 = smul.addr %s887, 8
        %s889 = scalar_lea.vmem %s2, %s888
        %p890 = scmp.lt.s32.totalorder %s45, 1
        %s891 = scalar_select %p890, %s45, 1
        %s892 = smul.addr %s891, 8
        %s893 = scalar_lea.vmem %s3, %s892
        %p894 = scmp.lt.s32.totalorder %s45, 1
        %s895 = scalar_select %p894, %s45, 1
        %s896 = scalar_lea.vmem %s4, %s895
        %v898 = vld [vmem:[%s881] sm:$0xff]
        %v899 = vld [vmem:[%s885] sm:$0xff]
        %v900 = vld [vmem:[%s889] sm:$0xff]
        %v901 = vld [vmem:[%s893] sm:$0xff]
        %v902 = vld [vmem:[%s896] sm:$0x1]
        %vm903 = vcmask 261120
        %v904 = vsel %vm903, %v898, 0.0
        %905 = vadd.xlane.f32.xlu0 %v904
        %v906 = vpop.xlane.xlu0 %905
        %v907 = vrcp.pop 32.0
        %v908 = vmul.f32 %v906, %v907
        %v909 = vsub.f32 %v898, %v908
        %v910 = vmul.f32 %v909, %v909
        %v911 = vsel %vm903, %v910, 0.0
        %912 = vadd.xlane.f32.xlu0 %v911
        %v913 = vpop.xlane.xlu0 %912
        %v914 = vmul.f32 %v913, %v907
        %v915 = vadd.f32 %v914, 1e-05
        %v916 = vrsqrt.pop %v915
        %v917 = vmul.f32 %v909, %v916
        %v918 = vld [vmem:[%s5] sm:$0x1]
        %v920 = vlaneseq
        %v921 = vshrl.u32 %v920, 7
        %v922 = vsub.s32 0, %v921
        %v923 = vrot.slane %v918, %v922
        %v925 = vmul.f32 %v917, %v923
        %v926 = vld [vmem:[%s6] sm:$0x1]
        %v928 = vlaneseq
        %v929 = vshrl.u32 %v928, 7
        %v930 = vsub.s32 0, %v929
        %v931 = vrot.slane %v926, %v930
        %v933 = vadd.f32 %v925, %v931
        %v934 = vsel %vm903, %v899, 0.0
        %935 = vadd.xlane.f32.xlu0 %v934
        %v936 = vpop.xlane.xlu0 %935
        %v937 = vmul.f32 %v936, %v907
        %v938 = vsub.f32 %v899, %v937
        %v939 = vmul.f32 %v938, %v938
        %v940 = vsel %vm903, %v939, 0.0
        %941 = vadd.xlane.f32.xlu0 %v940
        %v942 = vpop.xlane.xlu0 %941
        %v943 = vmul.f32 %v942, %v907
        %v944 = vadd.f32 %v943, 1e-05
        %v945 = vrsqrt.pop %v944
        %v946 = vmul.f32 %v938, %v945
        %s947 = scalar_lea.vmem %s5, 1
        %v948 = vld [vmem:[%s947] sm:$0x1]
        %v950 = vlaneseq
        %v951 = vshrl.u32 %v950, 7
        %v952 = vsub.s32 0, %v951
        %v953 = vrot.slane %v948, %v952
        %v955 = vmul.f32 %v946, %v953
        %s956 = scalar_lea.vmem %s6, 1
        %v957 = vld [vmem:[%s956] sm:$0x1]
        %v959 = vlaneseq
        %v960 = vshrl.u32 %v959, 7
        %v961 = vsub.s32 0, %v960
        %v962 = vrot.slane %v957, %v961
        %v964 = vadd.f32 %v955, %v962
        %v965 = vsel %vm903, %v900, 0.0
        %966 = vadd.xlane.f32.xlu0 %v965
        %v967 = vpop.xlane.xlu0 %966
        %v968 = vmul.f32 %v967, %v907
        %v969 = vsub.f32 %v900, %v968
        %v970 = vmul.f32 %v969, %v969
        %v971 = vsel %vm903, %v970, 0.0
        %972 = vadd.xlane.f32.xlu0 %v971
        %v973 = vpop.xlane.xlu0 %972
        %v974 = vmul.f32 %v973, %v907
        %v975 = vadd.f32 %v974, 1e-05
        %v976 = vrsqrt.pop %v975
        %v977 = vmul.f32 %v969, %v976
        %s978 = scalar_lea.vmem %s5, 2
        %v979 = vld [vmem:[%s978] sm:$0x1]
        %v981 = vlaneseq
        %v982 = vshrl.u32 %v981, 7
        %v983 = vsub.s32 0, %v982
        %v984 = vrot.slane %v979, %v983
        %v986 = vmul.f32 %v977, %v984
        %s987 = scalar_lea.vmem %s6, 2
        %v988 = vld [vmem:[%s987] sm:$0x1]
        %v990 = vlaneseq
        %v991 = vshrl.u32 %v990, 7
        %v992 = vsub.s32 0, %v991
        %v993 = vrot.slane %v988, %v992
        %v995 = vadd.f32 %v986, %v993
        %v996 = vadd.f32 %v933, %v901
        %v997 = vadd.f32 %v964, %v901
        %v998 = vpack.c.bf16 %v995, %v995
        %v999 = vld [vmem:[%s7] sm:$0xf]
        %v1000 = vld [vmem:[%s7 + $0x4] sm:$0xf]
        %v1001 = vld [vmem:[%s7 + $0x8] sm:$0xf]
        %v1002 = vld [vmem:[%s7 + $0xc] sm:$0xf]
        %v1003 = vld [vmem:[%s7 + $0x10] sm:$0xf]
        %v1004 = vld [vmem:[%s7 + $0x14] sm:$0xf]
        %v1005 = vld [vmem:[%s7 + $0x18] sm:$0xf]
        %v1006 = vld [vmem:[%s7 + $0x1c] sm:$0xf]
        %v1007 = vld [vmem:[%s7 + $0x20] sm:$0xf]
        %v1008 = vld [vmem:[%s7 + $0x24] sm:$0xf]
        %v1009 = vld [vmem:[%s7 + $0x28] sm:$0xf]
        %v1010 = vld [vmem:[%s7 + $0x2c] sm:$0xf]
        %v1011 = vld [vmem:[%s7 + $0x30] sm:$0xf]
        %v1012 = vld [vmem:[%s7 + $0x34] sm:$0xf]
        %v1013 = vld [vmem:[%s7 + $0x38] sm:$0xf]
        %v1014 = vld [vmem:[%s7 + $0x3c] sm:$0xf]
        %v1015 = vld [vmem:[%s8] sm:$0x1]
        %v1016 = vld [vmem:[%s8 + $0x1] sm:$0x1]
        %v1017 = vld [vmem:[%s8 + $0x2] sm:$0x1]
        %v1018 = vld [vmem:[%s8 + $0x3] sm:$0x1]
        %v1023 = vlaneseq
        %v1024 = vshrl.u32 %v1023, 7
        %v1025 = vsub.s32 0, %v1024
        %v1026 = vrot.slane %v1015, %v1025
        %v1027 = vlaneseq
        %v1028 = vshrl.u32 %v1027, 7
        %v1029 = vsub.s32 0, %v1028
        %v1030 = vrot.slane %v1016, %v1029
        %v1031 = vlaneseq
        %v1032 = vshrl.u32 %v1031, 7
        %v1033 = vsub.s32 0, %v1032
        %v1034 = vrot.slane %v1017, %v1033
        %v1035 = vlaneseq
        %v1036 = vshrl.u32 %v1035, 7
        %v1037 = vsub.s32 0, %v1036
        %v1038 = vrot.slane %v1018, %v1037
        %v1047 = vunpack.c.l.b16 %v999
        %v1048 = vunpack.c.l.b16 %v1000
        %v1049 = vunpack.c.l.b16 %v1001
        %v1050 = vunpack.c.l.b16 %v1002
        %v1051 = vpack.c.b16 %v1048, %v1047
        %v1052 = vpack.c.b16 %v1050, %v1049
        %v1056 = vsel %vm903, %v998, 0
        %1058 = vmatprep.subr.bf16.mxu0 0
        %1059 = vmatpush1.bf16.msra.mxu0 %v1051
        %1060 = vmatprep.subr.bf16.mxu0 0
        %1061 = vmatpush1.bf16.msra.mxu0 %v1052
        %1062 = vmatprep.subr.bf16.mxu0 0
        %1063 = vmatpush1.bf16.msra.mxu0 0
        %1064 = vmatprep.subr.bf16.mxu0 0
        %1065 = vmatpush1.bf16.msra.mxu0 0
        %1066 = vmatprep.subr.bf16.mxu0 0
        %1067 = vmatpush1.bf16.msra.mxu0 0
        %1068 = vmatprep.subr.bf16.mxu0 0
        %1069 = vmatpush1.bf16.msra.mxu0 0
        %1070 = vmatprep.subr.bf16.mxu0 0
        %1071 = vmatpush1.bf16.msra.mxu0 0
        %1072 = vmatprep.subr.bf16.mxu0 0
        %1073 = vmatpush1.bf16.msra.mxu0 0
        %1074 = vmatprep.subr.bf16.mxu0 0
        %1075 = vmatpush1.bf16.msra.mxu0 0
        %1076 = vmatprep.subr.bf16.mxu0 0
        %1077 = vmatpush1.bf16.msra.mxu0 0
        %1078 = vmatprep.subr.bf16.mxu0 0
        %1079 = vmatpush1.bf16.msra.mxu0 0
        %1080 = vmatprep.subr.bf16.mxu0 0
        %1081 = vmatpush1.bf16.msra.mxu0 0
        %1082 = vmatprep.subr.bf16.mxu0 0
        %1083 = vmatpush1.bf16.msra.mxu0 0
        %1084 = vmatprep.subr.bf16.mxu0 0
        %1085 = vmatpush1.bf16.msra.mxu0 0
        %1086 = vmatprep.subr.bf16.mxu0 0
        %1087 = vmatpush1.bf16.msra.mxu0 0
        %1088 = vmatprep.subr.bf16.mxu0 0
        %1089 = vmatpush1.bf16.msra.mxu0 0
        %1090 = vmatprep.mubr.bf16.mxu0 0
        %1091 = vmatmul.mubr.bf16.gmra.mrb[0].mxu0 %v1056
        %v1092 = vpop.f32.mrb[0].mxu0
        %v1093 = vadd.f32 %v1026, %v1092
        %v1094 = vpop.f32.mrb[0].mxu0
        %v1095 = vpop.f32.mrb[0].mxu0
        %v1096 = vpop.f32.mrb[0].mxu0
        %1097 = vdwg.mxu0
        %v1102 = vunpack.c.l.b16 %v1003
        %v1103 = vunpack.c.l.b16 %v1004
        %v1104 = vunpack.c.l.b16 %v1005
        %v1105 = vunpack.c.l.b16 %v1006
        %v1106 = vpack.c.b16 %v1103, %v1102
        %v1107 = vpack.c.b16 %v1105, %v1104
        %1110 = vmatprep.subr.bf16.mxu0 0
        %1111 = vmatpush1.bf16.msra.mxu0 %v1106
        %1112 = vmatprep.subr.bf16.mxu0 0
        %1113 = vmatpush1.bf16.msra.mxu0 %v1107
        %1114 = vmatprep.subr.bf16.mxu0 0
        %1115 = vmatpush1.bf16.msra.mxu0 0
        %1116 = vmatprep.subr.bf16.mxu0 0
        %1117 = vmatpush1.bf16.msra.mxu0 0
        %1118 = vmatprep.subr.bf16.mxu0 0
        %1119 = vmatpush1.bf16.msra.mxu0 0
        %1120 = vmatprep.subr.bf16.mxu0 0
        %1121 = vmatpush1.bf16.msra.mxu0 0
        %1122 = vmatprep.subr.bf16.mxu0 0
        %1123 = vmatpush1.bf16.msra.mxu0 0
        %1124 = vmatprep.subr.bf16.mxu0 0
        %1125 = vmatpush1.bf16.msra.mxu0 0
        %1126 = vmatprep.subr.bf16.mxu0 0
        %1127 = vmatpush1.bf16.msra.mxu0 0
        %1128 = vmatprep.subr.bf16.mxu0 0
        %1129 = vmatpush1.bf16.msra.mxu0 0
        %1130 = vmatprep.subr.bf16.mxu0 0
        %1131 = vmatpush1.bf16.msra.mxu0 0
        %1132 = vmatprep.subr.bf16.mxu0 0
        %1133 = vmatpush1.bf16.msra.mxu0 0
        %1134 = vmatprep.subr.bf16.mxu0 0
        %1135 = vmatpush1.bf16.msra.mxu0 0
        %1136 = vmatprep.subr.bf16.mxu0 0
        %1137 = vmatpush1.bf16.msra.mxu0 0
        %1138 = vmatprep.subr.bf16.mxu0 0
        %1139 = vmatpush1.bf16.msra.mxu0 0
        %1140 = vmatprep.subr.bf16.mxu0 0
        %1141 = vmatpush1.bf16.msra.mxu0 0
        %1142 = vmatprep.mubr.bf16.mxu0 0
        %1143 = vmatmul.mubr.bf16.gmra.mrb[0].mxu0 %v1056
        %v1144 = vpop.f32.mrb[0].mxu0
        %v1145 = vadd.f32 %v1030, %v1144
        %v1146 = vpop.f32.mrb[0].mxu0
        %v1147 = vpop.f32.mrb[0].mxu0
        %v1148 = vpop.f32.mrb[0].mxu0
        %1149 = vdwg.mxu0
        %v1154 = vunpack.c.l.b16 %v1007
        %v1155 = vunpack.c.l.b16 %v1008
        %v1156 = vunpack.c.l.b16 %v1009
        %v1157 = vunpack.c.l.b16 %v1010
        %v1158 = vpack.c.b16 %v1155, %v1154
        %v1159 = vpack.c.b16 %v1157, %v1156
        %1162 = vmatprep.subr.bf16.mxu0 0
        %1163 = vmatpush1.bf16.msra.mxu0 %v1158
        %1164 = vmatprep.subr.bf16.mxu0 0
        %1165 = vmatpush1.bf16.msra.mxu0 %v1159
        %1166 = vmatprep.subr.bf16.mxu0 0
        %1167 = vmatpush1.bf16.msra.mxu0 0
        %1168 = vmatprep.subr.bf16.mxu0 0
        %1169 = vmatpush1.bf16.msra.mxu0 0
        %1170 = vmatprep.subr.bf16.mxu0 0
        %1171 = vmatpush1.bf16.msra.mxu0 0
        %1172 = vmatprep.subr.bf16.mxu0 0
        %1173 = vmatpush1.bf16.msra.mxu0 0
        %1174 = vmatprep.subr.bf16.mxu0 0
        %1175 = vmatpush1.bf16.msra.mxu0 0
        %1176 = vmatprep.subr.bf16.mxu0 0
        %1177 = vmatpush1.bf16.msra.mxu0 0
        %1178 = vmatprep.subr.bf16.mxu0 0
        %1179 = vmatpush1.bf16.msra.mxu0 0
        %1180 = vmatprep.subr.bf16.mxu0 0
        %1181 = vmatpush1.bf16.msra.mxu0 0
        %1182 = vmatprep.subr.bf16.mxu0 0
        %1183 = vmatpush1.bf16.msra.mxu0 0
        %1184 = vmatprep.subr.bf16.mxu0 0
        %1185 = vmatpush1.bf16.msra.mxu0 0
        %1186 = vmatprep.subr.bf16.mxu0 0
        %1187 = vmatpush1.bf16.msra.mxu0 0
        %1188 = vmatprep.subr.bf16.mxu0 0
        %1189 = vmatpush1.bf16.msra.mxu0 0
        %1190 = vmatprep.subr.bf16.mxu0 0
        %1191 = vmatpush1.bf16.msra.mxu0 0
        %1192 = vmatprep.subr.bf16.mxu0 0
        %1193 = vmatpush1.bf16.msra.mxu0 0
        %1194 = vmatprep.mubr.bf16.mxu0 0
        %1195 = vmatmul.mubr.bf16.gmra.mrb[0].mxu0 %v1056
        %v1196 = vpop.f32.mrb[0].mxu0
        %v1197 = vadd.f32 %v1034, %v1196
        %v1198 = vpop.f32.mrb[0].mxu0
        %v1199 = vpop.f32.mrb[0].mxu0
        %v1200 = vpop.f32.mrb[0].mxu0
        %1201 = vdwg.mxu0
        %v1206 = vunpack.c.l.b16 %v1011
        %v1207 = vunpack.c.l.b16 %v1012
        %v1208 = vunpack.c.l.b16 %v1013
        %v1209 = vunpack.c.l.b16 %v1014
        %v1210 = vpack.c.b16 %v1207, %v1206
        %v1211 = vpack.c.b16 %v1209, %v1208
        %1214 = vmatprep.subr.bf16.mxu0 0
        %1215 = vmatpush1.bf16.msra.mxu0 %v1210
        %1216 = vmatprep.subr.bf16.mxu0 0
        %1217 = vmatpush1.bf16.msra.mxu0 %v1211
        %1218 = vmatprep.subr.bf16.mxu0 0
        %1219 = vmatpush1.bf16.msra.mxu0 0
        %1220 = vmatprep.subr.bf16.mxu0 0
        %1221 = vmatpush1.bf16.msra.mxu0 0
        %1222 = vmatprep.subr.bf16.mxu0 0
        %1223 = vmatpush1.bf16.msra.mxu0 0
        %1224 = vmatprep.subr.bf16.mxu0 0
        %1225 = vmatpush1.bf16.msra.mxu0 0
        %1226 = vmatprep.subr.bf16.mxu0 0
        %1227 = vmatpush1.bf16.msra.mxu0 0
        %1228 = vmatprep.subr.bf16.mxu0 0
        %1229 = vmatpush1.bf16.msra.mxu0 0
        %1230 = vmatprep.subr.bf16.mxu0 0
        %1231 = vmatpush1.bf16.msra.mxu0 0
        %1232 = vmatprep.subr.bf16.mxu0 0
        %1233 = vmatpush1.bf16.msra.mxu0 0
        %1234 = vmatprep.subr.bf16.mxu0 0
        %1235 = vmatpush1.bf16.msra.mxu0 0
        %1236 = vmatprep.subr.bf16.mxu0 0
        %1237 = vmatpush1.bf16.msra.mxu0 0
        %1238 = vmatprep.subr.bf16.mxu0 0
        %1239 = vmatpush1.bf16.msra.mxu0 0
        %1240 = vmatprep.subr.bf16.mxu0 0
        %1241 = vmatpush1.bf16.msra.mxu0 0
        %1242 = vmatprep.subr.bf16.mxu0 0
        %1243 = vmatpush1.bf16.msra.mxu0 0
        %1244 = vmatprep.subr.bf16.mxu0 0
        %1245 = vmatpush1.bf16.msra.mxu0 0
        %1246 = vmatprep.mubr.bf16.mxu0 0
        %1247 = vmatmul.mubr.bf16.gmra.mrb[0].mxu0 %v1056
        %v1248 = vpop.f32.mrb[0].mxu0
        %v1249 = vadd.f32 %v1038, %v1248
        %v1250 = vpop.f32.mrb[0].mxu0
        %v1251 = vpop.f32.mrb[0].mxu0
        %v1252 = vpop.f32.mrb[0].mxu0
        %1253 = vdwg.mxu0
        %v1254 = vpack.c.bf16 %v996, %v996
        %v1255 = vld [vmem:[%s9] sm:$0xf]
        %v1256 = vld [vmem:[%s9 + $0x4] sm:$0xf]
        %v1257 = vld [vmem:[%s9 + $0x8] sm:$0xf]
        %v1258 = vld [vmem:[%s9 + $0xc] sm:$0xf]
        %v1259 = vld [vmem:[%s9 + $0x10] sm:$0xf]
        %v1260 = vld [vmem:[%s9 + $0x14] sm:$0xf]
        %v1261 = vld [vmem:[%s9 + $0x18] sm:$0xf]
        %v1262 = vld [vmem:[%s9 + $0x1c] sm:$0xf]
        %v1263 = vld [vmem:[%s9 + $0x20] sm:$0xf]
        %v1264 = vld [vmem:[%s9 + $0x24] sm:$0xf]
        %v1265 = vld [vmem:[%s9 + $0x28] sm:$0xf]
        %v1266 = vld [vmem:[%s9 + $0x2c] sm:$0xf]
        %v1267 = vld [vmem:[%s9 + $0x30] sm:$0xf]
        %v1268 = vld [vmem:[%s9 + $0x34] sm:$0xf]
        %v1269 = vld [vmem:[%s9 + $0x38] sm:$0xf]
        %v1270 = vld [vmem:[%s9 + $0x3c] sm:$0xf]
        %v1271 = vld [vmem:[%s10] sm:$0x1]
        %v1272 = vld [vmem:[%s10 + $0x1] sm:$0x1]
        %v1273 = vld [vmem:[%s10 + $0x2] sm:$0x1]
        %v1274 = vld [vmem:[%s10 + $0x3] sm:$0x1]
        %v1279 = vlaneseq
        %v1280 = vshrl.u32 %v1279, 7
        %v1281 = vsub.s32 0, %v1280
        %v1282 = vrot.slane %v1271, %v1281
        %v1283 = vlaneseq
        %v1284 = vshrl.u32 %v1283, 7
        %v1285 = vsub.s32 0, %v1284
        %v1286 = vrot.slane %v1272, %v1285
        %v1287 = vlaneseq
        %v1288 = vshrl.u32 %v1287, 7
        %v1289 = vsub.s32 0, %v1288
        %v1290 = vrot.slane %v1273, %v1289
        %v1291 = vlaneseq
        %v1292 = vshrl.u32 %v1291, 7
        %v1293 = vsub.s32 0, %v1292
        %v1294 = vrot.slane %v1274, %v1293
        %v1303 = vunpack.c.l.b16 %v1255
        %v1304 = vunpack.c.l.b16 %v1256
        %v1305 = vunpack.c.l.b16 %v1257
        %v1306 = vunpack.c.l.b16 %v1258
        %v1307 = vpack.c.b16 %v1304, %v1303
        %v1308 = vpack.c.b16 %v1306, %v1305
        %v1312 = vsel %vm903, %v1254, 0
        %1314 = vmatprep.subr.bf16.mxu0 0
        %1315 = vmatpush1.bf16.msra.mxu0 %v1307
        %1316 = vmatprep.subr.bf16.mxu0 0
        %1317 = vmatpush1.bf16.msra.mxu0 %v1308
        %1318 = vmatprep.subr.bf16.mxu0 0
        %1319 = vmatpush1.bf16.msra.mxu0 0
        %1320 = vmatprep.subr.bf16.mxu0 0
        %1321 = vmatpush1.bf16.msra.mxu0 0
        %1322 = vmatprep.subr.bf16.mxu0 0
        %1323 = vmatpush1.bf16.msra.mxu0 0
        %1324 = vmatprep.subr.bf16.mxu0 0
        %1325 = vmatpush1.bf16.msra.mxu0 0
        %1326 = vmatprep.subr.bf16.mxu0 0
        %1327 = vmatpush1.bf16.msra.mxu0 0
        %1328 = vmatprep.subr.bf16.mxu0 0
        %1329 = vmatpush1.bf16.msra.mxu0 0
        %1330 = vmatprep.subr.bf16.mxu0 0
        %1331 = vmatpush1.bf16.msra.mxu0 0
        %1332 = vmatprep.subr.bf16.mxu0 0
        %1333 = vmatpush1.bf16.msra.mxu0 0
        %1334 = vmatprep.subr.bf16.mxu0 0
        %1335 = vmatpush1.bf16.msra.mxu0 0
        %1336 = vmatprep.subr.bf16.mxu0 0
        %1337 = vmatpush1.bf16.msra.mxu0 0
        %1338 = vmatprep.subr.bf16.mxu0 0
        %1339 = vmatpush1.bf16.msra.mxu0 0
        %1340 = vmatprep.subr.bf16.mxu0 0
        %1341 = vmatpush1.bf16.msra.mxu0 0
        %1342 = vmatprep.subr.bf16.mxu0 0
        %1343 = vmatpush1.bf16.msra.mxu0 0
        %1344 = vmatprep.subr.bf16.mxu0 0
        %1345 = vmatpush1.bf16.msra.mxu0 0
        %1346 = vmatprep.mubr.bf16.mxu0 0
        %1347 = vmatmul.mubr.bf16.gmra.mrb[0].mxu0 %v1312
        %v1348 = vpop.f32.mrb[0].mxu0
        %v1349 = vadd.f32 %v1282, %v1348
        %v1350 = vpop.f32.mrb[0].mxu0
        %v1351 = vpop.f32.mrb[0].mxu0
        %v1352 = vpop.f32.mrb[0].mxu0
        %1353 = vdwg.mxu0
        %v1358 = vunpack.c.l.b16 %v1259
        %v1359 = vunpack.c.l.b16 %v1260
        %v1360 = vunpack.c.l.b16 %v1261
        %v1361 = vunpack.c.l.b16 %v1262
        %v1362 = vpack.c.b16 %v1359, %v1358
        %v1363 = vpack.c.b16 %v1361, %v1360
        %1366 = vmatprep.subr.bf16.mxu0 0
        %1367 = vmatpush1.bf16.msra.mxu0 %v1362
        %1368 = vmatprep.subr.bf16.mxu0 0
        %1369 = vmatpush1.bf16.msra.mxu0 %v1363
        %1370 = vmatprep.subr.bf16.mxu0 0
        %1371 = vmatpush1.bf16.msra.mxu0 0
        %1372 = vmatprep.subr.bf16.mxu0 0
        %1373 = vmatpush1.bf16.msra.mxu0 0
        %1374 = vmatprep.subr.bf16.mxu0 0
        %1375 = vmatpush1.bf16.msra.mxu0 0
        %1376 = vmatprep.subr.bf16.mxu0 0
        %1377 = vmatpush1.bf16.msra.mxu0 0
        %1378 = vmatprep.subr.bf16.mxu0 0
        %1379 = vmatpush1.bf16.msra.mxu0 0
        %1380 = vmatprep.subr.bf16.mxu0 0
        %1381 = vmatpush1.bf16.msra.mxu0 0
        %1382 = vmatprep.subr.bf16.mxu0 0
        %1383 = vmatpush1.bf16.msra.mxu0 0
        %1384 = vmatprep.subr.bf16.mxu0 0
        %1385 = vmatpush1.bf16.msra.mxu0 0
        %1386 = vmatprep.subr.bf16.mxu0 0
        %1387 = vmatpush1.bf16.msra.mxu0 0
        %1388 = vmatprep.subr.bf16.mxu0 0
        %1389 = vmatpush1.bf16.msra.mxu0 0
        %1390 = vmatprep.subr.bf16.mxu0 0
        %1391 = vmatpush1.bf16.msra.mxu0 0
        %1392 = vmatprep.subr.bf16.mxu0 0
        %1393 = vmatpush1.bf16.msra.mxu0 0
        %1394 = vmatprep.subr.bf16.mxu0 0
        %1395 = vmatpush1.bf16.msra.mxu0 0
        %1396 = vmatprep.subr.bf16.mxu0 0
        %1397 = vmatpush1.bf16.msra.mxu0 0
        %1398 = vmatprep.mubr.bf16.mxu0 0
        %1399 = vmatmul.mubr.bf16.gmra.mrb[0].mxu0 %v1312
        %v1400 = vpop.f32.mrb[0].mxu0
        %v1401 = vadd.f32 %v1286, %v1400
        %v1402 = vpop.f32.mrb[0].mxu0
        %v1403 = vpop.f32.mrb[0].mxu0
        %v1404 = vpop.f32.mrb[0].mxu0
        %1405 = vdwg.mxu0
        %v1410 = vunpack.c.l.b16 %v1263
        %v1411 = vunpack.c.l.b16 %v1264
        %v1412 = vunpack.c.l.b16 %v1265
        %v1413 = vunpack.c.l.b16 %v1266
        %v1414 = vpack.c.b16 %v1411, %v1410
        %v1415 = vpack.c.b16 %v1413, %v1412
        %1418 = vmatprep.subr.bf16.mxu0 0
        %1419 = vmatpush1.bf16.msra.mxu0 %v1414
        %1420 = vmatprep.subr.bf16.mxu0 0
        %1421 = vmatpush1.bf16.msra.mxu0 %v1415
        %1422 = vmatprep.subr.bf16.mxu0 0
        %1423 = vmatpush1.bf16.msra.mxu0 0
        %1424 = vmatprep.subr.bf16.mxu0 0
        %1425 = vmatpush1.bf16.msra.mxu0 0
        %1426 = vmatprep.subr.bf16.mxu0 0
        %1427 = vmatpush1.bf16.msra.mxu0 0
        %1428 = vmatprep.subr.bf16.mxu0 0
        %1429 = vmatpush1.bf16.msra.mxu0 0
        %1430 = vmatprep.subr.bf16.mxu0 0
        %1431 = vmatpush1.bf16.msra.mxu0 0
        %1432 = vmatprep.subr.bf16.mxu0 0
        %1433 = vmatpush1.bf16.msra.mxu0 0
        %1434 = vmatprep.subr.bf16.mxu0 0
        %1435 = vmatpush1.bf16.msra.mxu0 0
        %1436 = vmatprep.subr.bf16.mxu0 0
        %1437 = vmatpush1.bf16.msra.mxu0 0
        %1438 = vmatprep.subr.bf16.mxu0 0
        %1439 = vmatpush1.bf16.msra.mxu0 0
        %1440 = vmatprep.subr.bf16.mxu0 0
        %1441 = vmatpush1.bf16.msra.mxu0 0
        %1442 = vmatprep.subr.bf16.mxu0 0
        %1443 = vmatpush1.bf16.msra.mxu0 0
        %1444 = vmatprep.subr.bf16.mxu0 0
        %1445 = vmatpush1.bf16.msra.mxu0 0
        %1446 = vmatprep.subr.bf16.mxu0 0
        %1447 = vmatpush1.bf16.msra.mxu0 0
        %1448 = vmatprep.subr.bf16.mxu0 0
        %1449 = vmatpush1.bf16.msra.mxu0 0
        %1450 = vmatprep.mubr.bf16.mxu0 0
        %1451 = vmatmul.mubr.bf16.gmra.mrb[0].mxu0 %v1312
        %v1452 = vpop.f32.mrb[0].mxu0
        %v1453 = vadd.f32 %v1290, %v1452
        %v1454 = vpop.f32.mrb[0].mxu0
        %v1455 = vpop.f32.mrb[0].mxu0
        %v1456 = vpop.f32.mrb[0].mxu0
        %1457 = vdwg.mxu0
        %v1462 = vunpack.c.l.b16 %v1267
        %v1463 = vunpack.c.l.b16 %v1268
        %v1464 = vunpack.c.l.b16 %v1269
        %v1465 = vunpack.c.l.b16 %v1270
        %v1466 = vpack.c.b16 %v1463, %v1462
        %v1467 = vpack.c.b16 %v1465, %v1464
        %1470 = vmatprep.subr.bf16.mxu0 0
        %1471 = vmatpush1.bf16.msra.mxu0 %v1466
        %1472 = vmatprep.subr.bf16.mxu0 0
        %1473 = vmatpush1.bf16.msra.mxu0 %v1467
        %1474 = vmatprep.subr.bf16.mxu0 0
        %1475 = vmatpush1.bf16.msra.mxu0 0
        %1476 = vmatprep.subr.bf16.mxu0 0
        %1477 = vmatpush1.bf16.msra.mxu0 0
        %1478 = vmatprep.subr.bf16.mxu0 0
        %1479 = vmatpush1.bf16.msra.mxu0 0
        %1480 = vmatprep.subr.bf16.mxu0 0
        %1481 = vmatpush1.bf16.msra.mxu0 0
        %1482 = vmatprep.subr.bf16.mxu0 0
        %1483 = vmatpush1.bf16.msra.mxu0 0
        %1484 = vmatprep.subr.bf16.mxu0 0
        %1485 = vmatpush1.bf16.msra.mxu0 0
        %1486 = vmatprep.subr.bf16.mxu0 0
        %1487 = vmatpush1.bf16.msra.mxu0 0
        %1488 = vmatprep.subr.bf16.mxu0 0
        %1489 = vmatpush1.bf16.msra.mxu0 0
        %1490 = vmatprep.subr.bf16.mxu0 0
        %1491 = vmatpush1.bf16.msra.mxu0 0
        %1492 = vmatprep.subr.bf16.mxu0 0
        %1493 = vmatpush1.bf16.msra.mxu0 0
        %1494 = vmatprep.subr.bf16.mxu0 0
        %1495 = vmatpush1.bf16.msra.mxu0 0
        %1496 = vmatprep.subr.bf16.mxu0 0
        %1497 = vmatpush1.bf16.msra.mxu0 0
        %1498 = vmatprep.subr.bf16.mxu0 0
        %1499 = vmatpush1.bf16.msra.mxu0 0
        %1500 = vmatprep.subr.bf16.mxu0 0
        %1501 = vmatpush1.bf16.msra.mxu0 0
        %1502 = vmatprep.mubr.bf16.mxu0 0
        %1503 = vmatmul.mubr.bf16.gmra.mrb[0].mxu0 %v1312
        %v1504 = vpop.f32.mrb[0].mxu0
        %v1505 = vadd.f32 %v1294, %v1504
        %v1506 = vpop.f32.mrb[0].mxu0
        %v1507 = vpop.f32.mrb[0].mxu0
        %v1508 = vpop.f32.mrb[0].mxu0
        %1509 = vdwg.mxu0
        %v1510 = vpack.c.bf16 %v997, %v997
        %v1511 = vld [vmem:[%s11] sm:$0xf]
        %v1512 = vld [vmem:[%s11 + $0x4] sm:$0xf]
        %v1513 = vld [vmem:[%s11 + $0x8] sm:$0xf]
        %v1514 = vld [vmem:[%s11 + $0xc] sm:$0xf]
        %v1515 = vld [vmem:[%s11 + $0x10] sm:$0xf]
        %v1516 = vld [vmem:[%s11 + $0x14] sm:$0xf]
        %v1517 = vld [vmem:[%s11 + $0x18] sm:$0xf]
        %v1518 = vld [vmem:[%s11 + $0x1c] sm:$0xf]
        %v1519 = vld [vmem:[%s11 + $0x20] sm:$0xf]
        %v1520 = vld [vmem:[%s11 + $0x24] sm:$0xf]
        %v1521 = vld [vmem:[%s11 + $0x28] sm:$0xf]
        %v1522 = vld [vmem:[%s11 + $0x2c] sm:$0xf]
        %v1523 = vld [vmem:[%s11 + $0x30] sm:$0xf]
        %v1524 = vld [vmem:[%s11 + $0x34] sm:$0xf]
        %v1525 = vld [vmem:[%s11 + $0x38] sm:$0xf]
        %v1526 = vld [vmem:[%s11 + $0x3c] sm:$0xf]
        %v1527 = vld [vmem:[%s12] sm:$0x1]
        %v1528 = vld [vmem:[%s12 + $0x1] sm:$0x1]
        %v1529 = vld [vmem:[%s12 + $0x2] sm:$0x1]
        %v1530 = vld [vmem:[%s12 + $0x3] sm:$0x1]
        %v1535 = vlaneseq
        %v1536 = vshrl.u32 %v1535, 7
        %v1537 = vsub.s32 0, %v1536
        %v1538 = vrot.slane %v1527, %v1537
        %v1539 = vlaneseq
        %v1540 = vshrl.u32 %v1539, 7
        %v1541 = vsub.s32 0, %v1540
        %v1542 = vrot.slane %v1528, %v1541
        %v1543 = vlaneseq
        %v1544 = vshrl.u32 %v1543, 7
        %v1545 = vsub.s32 0, %v1544
        %v1546 = vrot.slane %v1529, %v1545
        %v1547 = vlaneseq
        %v1548 = vshrl.u32 %v1547, 7
        %v1549 = vsub.s32 0, %v1548
        %v1550 = vrot.slane %v1530, %v1549
        %v1559 = vunpack.c.l.b16 %v1511
        %v1560 = vunpack.c.l.b16 %v1512
        %v1561 = vunpack.c.l.b16 %v1513
        %v1562 = vunpack.c.l.b16 %v1514
        %v1563 = vpack.c.b16 %v1560, %v1559
        %v1564 = vpack.c.b16 %v1562, %v1561
        %v1568 = vsel %vm903, %v1510, 0
        %1570 = vmatprep.subr.bf16.mxu0 0
        %1571 = vmatpush1.bf16.msra.mxu0 %v1563
        %1572 = vmatprep.subr.bf16.mxu0 0
        %1573 = vmatpush1.bf16.msra.mxu0 %v1564
        %1574 = vmatprep.subr.bf16.mxu0 0
        %1575 = vmatpush1.bf16.msra.mxu0 0
        %1576 = vmatprep.subr.bf16.mxu0 0
        %1577 = vmatpush1.bf16.msra.mxu0 0
        %1578 = vmatprep.subr.bf16.mxu0 0
        %1579 = vmatpush1.bf16.msra.mxu0 0
        %1580 = vmatprep.subr.bf16.mxu0 0
        %1581 = vmatpush1.bf16.msra.mxu0 0
        %1582 = vmatprep.subr.bf16.mxu0 0
        %1583 = vmatpush1.bf16.msra.mxu0 0
        %1584 = vmatprep.subr.bf16.mxu0 0
        %1585 = vmatpush1.bf16.msra.mxu0 0
        %1586 = vmatprep.subr.bf16.mxu0 0
        %1587 = vmatpush1.bf16.msra.mxu0 0
        %1588 = vmatprep.subr.bf16.mxu0 0
        %1589 = vmatpush1.bf16.msra.mxu0 0
        %1590 = vmatprep.subr.bf16.mxu0 0
        %1591 = vmatpush1.bf16.msra.mxu0 0
        %1592 = vmatprep.subr.bf16.mxu0 0
        %1593 = vmatpush1.bf16.msra.mxu0 0
        %1594 = vmatprep.subr.bf16.mxu0 0
        %1595 = vmatpush1.bf16.msra.mxu0 0
        %1596 = vmatprep.subr.bf16.mxu0 0
        %1597 = vmatpush1.bf16.msra.mxu0 0
        %1598 = vmatprep.subr.bf16.mxu0 0
        %1599 = vmatpush1.bf16.msra.mxu0 0
        %1600 = vmatprep.subr.bf16.mxu0 0
        %1601 = vmatpush1.bf16.msra.mxu0 0
        %1602 = vmatprep.mubr.bf16.mxu0 0
        %1603 = vmatmul.mubr.bf16.gmra.mrb[0].mxu0 %v1568
        %v1604 = vpop.f32.mrb[0].mxu0
        %v1605 = vadd.f32 %v1538, %v1604
        %v1606 = vpop.f32.mrb[0].mxu0
        %v1607 = vpop.f32.mrb[0].mxu0
        %v1608 = vpop.f32.mrb[0].mxu0
        %1609 = vdwg.mxu0
        %v1614 = vunpack.c.l.b16 %v1515
        %v1615 = vunpack.c.l.b16 %v1516
        %v1616 = vunpack.c.l.b16 %v1517
        %v1617 = vunpack.c.l.b16 %v1518
        %v1618 = vpack.c.b16 %v1615, %v1614
        %v1619 = vpack.c.b16 %v1617, %v1616
        %1622 = vmatprep.subr.bf16.mxu0 0
        %1623 = vmatpush1.bf16.msra.mxu0 %v1618
        %1624 = vmatprep.subr.bf16.mxu0 0
        %1625 = vmatpush1.bf16.msra.mxu0 %v1619
        %1626 = vmatprep.subr.bf16.mxu0 0
        %1627 = vmatpush1.bf16.msra.mxu0 0
        %1628 = vmatprep.subr.bf16.mxu0 0
        %1629 = vmatpush1.bf16.msra.mxu0 0
        %1630 = vmatprep.subr.bf16.mxu0 0
        %1631 = vmatpush1.bf16.msra.mxu0 0
        %1632 = vmatprep.subr.bf16.mxu0 0
        %1633 = vmatpush1.bf16.msra.mxu0 0
        %1634 = vmatprep.subr.bf16.mxu0 0
        %1635 = vmatpush1.bf16.msra.mxu0 0
        %1636 = vmatprep.subr.bf16.mxu0 0
        %1637 = vmatpush1.bf16.msra.mxu0 0
        %1638 = vmatprep.subr.bf16.mxu0 0
        %1639 = vmatpush1.bf16.msra.mxu0 0
        %1640 = vmatprep.subr.bf16.mxu0 0
        %1641 = vmatpush1.bf16.msra.mxu0 0
        %1642 = vmatprep.subr.bf16.mxu0 0
        %1643 = vmatpush1.bf16.msra.mxu0 0
        %1644 = vmatprep.subr.bf16.mxu0 0
        %1645 = vmatpush1.bf16.msra.mxu0 0
        %1646 = vmatprep.subr.bf16.mxu0 0
        %1647 = vmatpush1.bf16.msra.mxu0 0
        %1648 = vmatprep.subr.bf16.mxu0 0
        %1649 = vmatpush1.bf16.msra.mxu0 0
        %1650 = vmatprep.subr.bf16.mxu0 0
        %1651 = vmatpush1.bf16.msra.mxu0 0
        %1652 = vmatprep.subr.bf16.mxu0 0
        %1653 = vmatpush1.bf16.msra.mxu0 0
        %1654 = vmatprep.mubr.bf16.mxu0 0
        %1655 = vmatmul.mubr.bf16.gmra.mrb[0].mxu0 %v1568
        %v1656 = vpop.f32.mrb[0].mxu0
        %v1657 = vadd.f32 %v1542, %v1656
        %v1658 = vpop.f32.mrb[0].mxu0
        %v1659 = vpop.f32.mrb[0].mxu0
        %v1660 = vpop.f32.mrb[0].mxu0
        %1661 = vdwg.mxu0
        %v1666 = vunpack.c.l.b16 %v1519
        %v1667 = vunpack.c.l.b16 %v1520
        %v1668 = vunpack.c.l.b16 %v1521
        %v1669 = vunpack.c.l.b16 %v1522
        %v1670 = vpack.c.b16 %v1667, %v1666
        %v1671 = vpack.c.b16 %v1669, %v1668
        %1674 = vmatprep.subr.bf16.mxu0 0
        %1675 = vmatpush1.bf16.msra.mxu0 %v1670
        %1676 = vmatprep.subr.bf16.mxu0 0
        %1677 = vmatpush1.bf16.msra.mxu0 %v1671
        %1678 = vmatprep.subr.bf16.mxu0 0
        %1679 = vmatpush1.bf16.msra.mxu0 0
        %1680 = vmatprep.subr.bf16.mxu0 0
        %1681 = vmatpush1.bf16.msra.mxu0 0
        %1682 = vmatprep.subr.bf16.mxu0 0
        %1683 = vmatpush1.bf16.msra.mxu0 0
        %1684 = vmatprep.subr.bf16.mxu0 0
        %1685 = vmatpush1.bf16.msra.mxu0 0
        %1686 = vmatprep.subr.bf16.mxu0 0
        %1687 = vmatpush1.bf16.msra.mxu0 0
        %1688 = vmatprep.subr.bf16.mxu0 0
        %1689 = vmatpush1.bf16.msra.mxu0 0
        %1690 = vmatprep.subr.bf16.mxu0 0
        %1691 = vmatpush1.bf16.msra.mxu0 0
        %1692 = vmatprep.subr.bf16.mxu0 0
        %1693 = vmatpush1.bf16.msra.mxu0 0
        %1694 = vmatprep.subr.bf16.mxu0 0
        %1695 = vmatpush1.bf16.msra.mxu0 0
        %1696 = vmatprep.subr.bf16.mxu0 0
        %1697 = vmatpush1.bf16.msra.mxu0 0
        %1698 = vmatprep.subr.bf16.mxu0 0
        %1699 = vmatpush1.bf16.msra.mxu0 0
        %1700 = vmatprep.subr.bf16.mxu0 0
        %1701 = vmatpush1.bf16.msra.mxu0 0
        %1702 = vmatprep.subr.bf16.mxu0 0
        %1703 = vmatpush1.bf16.msra.mxu0 0
        %1704 = vmatprep.subr.bf16.mxu0 0
        %1705 = vmatpush1.bf16.msra.mxu0 0
        %1706 = vmatprep.mubr.bf16.mxu0 0
        %1707 = vmatmul.mubr.bf16.gmra.mrb[0].mxu0 %v1568
        %v1708 = vpop.f32.mrb[0].mxu0
        %v1709 = vadd.f32 %v1546, %v1708
        %v1710 = vpop.f32.mrb[0].mxu0
        %v1711 = vpop.f32.mrb[0].mxu0
        %v1712 = vpop.f32.mrb[0].mxu0
        %1713 = vdwg.mxu0
        %v1718 = vunpack.c.l.b16 %v1523
        %v1719 = vunpack.c.l.b16 %v1524
        %v1720 = vunpack.c.l.b16 %v1525
        %v1721 = vunpack.c.l.b16 %v1526
        %v1722 = vpack.c.b16 %v1719, %v1718
        %v1723 = vpack.c.b16 %v1721, %v1720
        %1726 = vmatprep.subr.bf16.mxu0 0
        %1727 = vmatpush1.bf16.msra.mxu0 %v1722
        %1728 = vmatprep.subr.bf16.mxu0 0
        %1729 = vmatpush1.bf16.msra.mxu0 %v1723
        %1730 = vmatprep.subr.bf16.mxu0 0
        %1731 = vmatpush1.bf16.msra.mxu0 0
        %1732 = vmatprep.subr.bf16.mxu0 0
        %1733 = vmatpush1.bf16.msra.mxu0 0
        %1734 = vmatprep.subr.bf16.mxu0 0
        %1735 = vmatpush1.bf16.msra.mxu0 0
        %1736 = vmatprep.subr.bf16.mxu0 0
        %1737 = vmatpush1.bf16.msra.mxu0 0
        %1738 = vmatprep.subr.bf16.mxu0 0
        %1739 = vmatpush1.bf16.msra.mxu0 0
        %1740 = vmatprep.subr.bf16.mxu0 0
        %1741 = vmatpush1.bf16.msra.mxu0 0
        %1742 = vmatprep.subr.bf16.mxu0 0
        %1743 = vmatpush1.bf16.msra.mxu0 0
        %1744 = vmatprep.subr.bf16.mxu0 0
        %1745 = vmatpush1.bf16.msra.mxu0 0
        %1746 = vmatprep.subr.bf16.mxu0 0
        %1747 = vmatpush1.bf16.msra.mxu0 0
        %1748 = vmatprep.subr.bf16.mxu0 0
        %1749 = vmatpush1.bf16.msra.mxu0 0
        %1750 = vmatprep.subr.bf16.mxu0 0
        %1751 = vmatpush1.bf16.msra.mxu0 0
        %1752 = vmatprep.subr.bf16.mxu0 0
        %1753 = vmatpush1.bf16.msra.mxu0 0
        %1754 = vmatprep.subr.bf16.mxu0 0
        %1755 = vmatpush1.bf16.msra.mxu0 0
        %1756 = vmatprep.subr.bf16.mxu0 0
        %1757 = vmatpush1.bf16.msra.mxu0 0
        %1758 = vmatprep.mubr.bf16.mxu0 0
        %1759 = vmatmul.mubr.bf16.gmra.mrb[0].mxu0 %v1568
        %v1760 = vpop.f32.mrb[0].mxu0
        %v1761 = vadd.f32 %v1550, %v1760
        %v1762 = vpop.f32.mrb[0].mxu0
        %v1763 = vpop.f32.mrb[0].mxu0
        %v1764 = vpop.f32.mrb[0].mxu0
        %1765 = vdwg.mxu0
        %v1766 = vpack.c.bf16 %v933, %v933
        %v1767 = vld [vmem:[%s13] sm:$0xf]
        %v1768 = vld [vmem:[%s13 + $0x4] sm:$0xf]
        %v1769 = vld [vmem:[%s13 + $0x8] sm:$0xf]
        %v1770 = vld [vmem:[%s13 + $0xc] sm:$0xf]
        %v1771 = vld [vmem:[%s13 + $0x10] sm:$0xf]
        %v1772 = vld [vmem:[%s13 + $0x14] sm:$0xf]
        %v1773 = vld [vmem:[%s13 + $0x18] sm:$0xf]
        %v1774 = vld [vmem:[%s13 + $0x1c] sm:$0xf]
        %v1775 = vld [vmem:[%s13 + $0x20] sm:$0xf]
        %v1776 = vld [vmem:[%s13 + $0x24] sm:$0xf]
        %v1777 = vld [vmem:[%s13 + $0x28] sm:$0xf]
        %v1778 = vld [vmem:[%s13 + $0x2c] sm:$0xf]
        %v1779 = vld [vmem:[%s13 + $0x30] sm:$0xf]
        %v1780 = vld [vmem:[%s13 + $0x34] sm:$0xf]
        %v1781 = vld [vmem:[%s13 + $0x38] sm:$0xf]
        %v1782 = vld [vmem:[%s13 + $0x3c] sm:$0xf]
        %v1783 = vld [vmem:[%s14] sm:$0x1]
        %v1784 = vld [vmem:[%s14 + $0x1] sm:$0x1]
        %v1785 = vld [vmem:[%s14 + $0x2] sm:$0x1]
        %v1786 = vld [vmem:[%s14 + $0x3] sm:$0x1]
        %v1791 = vlaneseq
        %v1792 = vshrl.u32 %v1791, 7
        %v1793 = vsub.s32 0, %v1792
        %v1794 = vrot.slane %v1783, %v1793
        %v1795 = vlaneseq
        %v1796 = vshrl.u32 %v1795, 7
        %v1797 = vsub.s32 0, %v1796
        %v1798 = vrot.slane %v1784, %v1797
        %v1799 = vlaneseq
        %v1800 = vshrl.u32 %v1799, 7
        %v1801 = vsub.s32 0, %v1800
        %v1802 = vrot.slane %v1785, %v1801
        %v1803 = vlaneseq
        %v1804 = vshrl.u32 %v1803, 7
        %v1805 = vsub.s32 0, %v1804
        %v1806 = vrot.slane %v1786, %v1805
        %v1815 = vunpack.c.l.b16 %v1767
        %v1816 = vunpack.c.l.b16 %v1768
        %v1817 = vunpack.c.l.b16 %v1769
        %v1818 = vunpack.c.l.b16 %v1770
        %v1819 = vpack.c.b16 %v1816, %v1815
        %v1820 = vpack.c.b16 %v1818, %v1817
        %v1824 = vsel %vm903, %v1766, 0
        %1826 = vmatprep.subr.bf16.mxu0 0
        %1827 = vmatpush1.bf16.msra.mxu0 %v1819
        %1828 = vmatprep.subr.bf16.mxu0 0
        %1829 = vmatpush1.bf16.msra.mxu0 %v1820
        %1830 = vmatprep.subr.bf16.mxu0 0
        %1831 = vmatpush1.bf16.msra.mxu0 0
        %1832 = vmatprep.subr.bf16.mxu0 0
        %1833 = vmatpush1.bf16.msra.mxu0 0
        %1834 = vmatprep.subr.bf16.mxu0 0
        %1835 = vmatpush1.bf16.msra.mxu0 0
        %1836 = vmatprep.subr.bf16.mxu0 0
        %1837 = vmatpush1.bf16.msra.mxu0 0
        %1838 = vmatprep.subr.bf16.mxu0 0
        %1839 = vmatpush1.bf16.msra.mxu0 0
        %1840 = vmatprep.subr.bf16.mxu0 0
        %1841 = vmatpush1.bf16.msra.mxu0 0
        %1842 = vmatprep.subr.bf16.mxu0 0
        %1843 = vmatpush1.bf16.msra.mxu0 0
        %1844 = vmatprep.subr.bf16.mxu0 0
        %1845 = vmatpush1.bf16.msra.mxu0 0
        %1846 = vmatprep.subr.bf16.mxu0 0
        %1847 = vmatpush1.bf16.msra.mxu0 0
        %1848 = vmatprep.subr.bf16.mxu0 0
        %1849 = vmatpush1.bf16.msra.mxu0 0
        %1850 = vmatprep.subr.bf16.mxu0 0
        %1851 = vmatpush1.bf16.msra.mxu0 0
        %1852 = vmatprep.subr.bf16.mxu0 0
        %1853 = vmatpush1.bf16.msra.mxu0 0
        %1854 = vmatprep.subr.bf16.mxu0 0
        %1855 = vmatpush1.bf16.msra.mxu0 0
        %1856 = vmatprep.subr.bf16.mxu0 0
        %1857 = vmatpush1.bf16.msra.mxu0 0
        %1858 = vmatprep.mubr.bf16.mxu0 0
        %1859 = vmatmul.mubr.bf16.gmra.mrb[0].mxu0 %v1824
        %v1860 = vpop.f32.mrb[0].mxu0
        %v1861 = vadd.f32 %v1794, %v1860
        %v1862 = vpop.f32.mrb[0].mxu0
        %v1863 = vpop.f32.mrb[0].mxu0
        %v1864 = vpop.f32.mrb[0].mxu0
        %1865 = vdwg.mxu0
        %v1870 = vunpack.c.l.b16 %v1771
        %v1871 = vunpack.c.l.b16 %v1772
        %v1872 = vunpack.c.l.b16 %v1773
        %v1873 = vunpack.c.l.b16 %v1774
        %v1874 = vpack.c.b16 %v1871, %v1870
        %v1875 = vpack.c.b16 %v1873, %v1872
        %1878 = vmatprep.subr.bf16.mxu0 0
        %1879 = vmatpush1.bf16.msra.mxu0 %v1874
        %1880 = vmatprep.subr.bf16.mxu0 0
        %1881 = vmatpush1.bf16.msra.mxu0 %v1875
        %1882 = vmatprep.subr.bf16.mxu0 0
        %1883 = vmatpush1.bf16.msra.mxu0 0
        %1884 = vmatprep.subr.bf16.mxu0 0
        %1885 = vmatpush1.bf16.msra.mxu0 0
        %1886 = vmatprep.subr.bf16.mxu0 0
        %1887 = vmatpush1.bf16.msra.mxu0 0
        %1888 = vmatprep.subr.bf16.mxu0 0
        %1889 = vmatpush1.bf16.msra.mxu0 0
        %1890 = vmatprep.subr.bf16.mxu0 0
        %1891 = vmatpush1.bf16.msra.mxu0 0
        %1892 = vmatprep.subr.bf16.mxu0 0
        %1893 = vmatpush1.bf16.msra.mxu0 0
        %1894 = vmatprep.subr.bf16.mxu0 0
        %1895 = vmatpush1.bf16.msra.mxu0 0
        %1896 = vmatprep.subr.bf16.mxu0 0
        %1897 = vmatpush1.bf16.msra.mxu0 0
        %1898 = vmatprep.subr.bf16.mxu0 0
        %1899 = vmatpush1.bf16.msra.mxu0 0
        %1900 = vmatprep.subr.bf16.mxu0 0
        %1901 = vmatpush1.bf16.msra.mxu0 0
        %1902 = vmatprep.subr.bf16.mxu0 0
        %1903 = vmatpush1.bf16.msra.mxu0 0
        %1904 = vmatprep.subr.bf16.mxu0 0
        %1905 = vmatpush1.bf16.msra.mxu0 0
        %1906 = vmatprep.subr.bf16.mxu0 0
        %1907 = vmatpush1.bf16.msra.mxu0 0
        %1908 = vmatprep.subr.bf16.mxu0 0
        %1909 = vmatpush1.bf16.msra.mxu0 0
        %1910 = vmatprep.mubr.bf16.mxu0 0
        %1911 = vmatmul.mubr.bf16.gmra.mrb[0].mxu0 %v1824
        %v1912 = vpop.f32.mrb[0].mxu0
        %v1913 = vadd.f32 %v1798, %v1912
        %v1914 = vpop.f32.mrb[0].mxu0
        %v1915 = vpop.f32.mrb[0].mxu0
        %v1916 = vpop.f32.mrb[0].mxu0
        %1917 = vdwg.mxu0
        %v1922 = vunpack.c.l.b16 %v1775
        %v1923 = vunpack.c.l.b16 %v1776
        %v1924 = vunpack.c.l.b16 %v1777
        %v1925 = vunpack.c.l.b16 %v1778
        %v1926 = vpack.c.b16 %v1923, %v1922
        %v1927 = vpack.c.b16 %v1925, %v1924
        %1930 = vmatprep.subr.bf16.mxu0 0
        %1931 = vmatpush1.bf16.msra.mxu0 %v1926
        %1932 = vmatprep.subr.bf16.mxu0 0
        %1933 = vmatpush1.bf16.msra.mxu0 %v1927
        %1934 = vmatprep.subr.bf16.mxu0 0
        %1935 = vmatpush1.bf16.msra.mxu0 0
        %1936 = vmatprep.subr.bf16.mxu0 0
        %1937 = vmatpush1.bf16.msra.mxu0 0
        %1938 = vmatprep.subr.bf16.mxu0 0
        %1939 = vmatpush1.bf16.msra.mxu0 0
        %1940 = vmatprep.subr.bf16.mxu0 0
        %1941 = vmatpush1.bf16.msra.mxu0 0
        %1942 = vmatprep.subr.bf16.mxu0 0
        %1943 = vmatpush1.bf16.msra.mxu0 0
        %1944 = vmatprep.subr.bf16.mxu0 0
        %1945 = vmatpush1.bf16.msra.mxu0 0
        %1946 = vmatprep.subr.bf16.mxu0 0
        %1947 = vmatpush1.bf16.msra.mxu0 0
        %1948 = vmatprep.subr.bf16.mxu0 0
        %1949 = vmatpush1.bf16.msra.mxu0 0
        %1950 = vmatprep.subr.bf16.mxu0 0
        %1951 = vmatpush1.bf16.msra.mxu0 0
        %1952 = vmatprep.subr.bf16.mxu0 0
        %1953 = vmatpush1.bf16.msra.mxu0 0
        %1954 = vmatprep.subr.bf16.mxu0 0
        %1955 = vmatpush1.bf16.msra.mxu0 0
        %1956 = vmatprep.subr.bf16.mxu0 0
        %1957 = vmatpush1.bf16.msra.mxu0 0
        %1958 = vmatprep.subr.bf16.mxu0 0
        %1959 = vmatpush1.bf16.msra.mxu0 0
        %1960 = vmatprep.subr.bf16.mxu0 0
        %1961 = vmatpush1.bf16.msra.mxu0 0
        %1962 = vmatprep.mubr.bf16.mxu0 0
        %1963 = vmatmul.mubr.bf16.gmra.mrb[0].mxu0 %v1824
        %v1964 = vpop.f32.mrb[0].mxu0
        %v1965 = vadd.f32 %v1802, %v1964
        %v1966 = vpop.f32.mrb[0].mxu0
        %v1967 = vpop.f32.mrb[0].mxu0
        %v1968 = vpop.f32.mrb[0].mxu0
        %1969 = vdwg.mxu0
        %v1974 = vunpack.c.l.b16 %v1779
        %v1975 = vunpack.c.l.b16 %v1780
        %v1976 = vunpack.c.l.b16 %v1781
        %v1977 = vunpack.c.l.b16 %v1782
        %v1978 = vpack.c.b16 %v1975, %v1974
        %v1979 = vpack.c.b16 %v1977, %v1976
        %1982 = vmatprep.subr.bf16.mxu0 0
        %1983 = vmatpush1.bf16.msra.mxu0 %v1978
        %1984 = vmatprep.subr.bf16.mxu0 0
        %1985 = vmatpush1.bf16.msra.mxu0 %v1979
        %1986 = vmatprep.subr.bf16.mxu0 0
        %1987 = vmatpush1.bf16.msra.mxu0 0
        %1988 = vmatprep.subr.bf16.mxu0 0
        %1989 = vmatpush1.bf16.msra.mxu0 0
        %1990 = vmatprep.subr.bf16.mxu0 0
        %1991 = vmatpush1.bf16.msra.mxu0 0
        %1992 = vmatprep.subr.bf16.mxu0 0
        %1993 = vmatpush1.bf16.msra.mxu0 0
        %1994 = vmatprep.subr.bf16.mxu0 0
        %1995 = vmatpush1.bf16.msra.mxu0 0
        %1996 = vmatprep.subr.bf16.mxu0 0
        %1997 = vmatpush1.bf16.msra.mxu0 0
        %1998 = vmatprep.subr.bf16.mxu0 0
        %1999 = vmatpush1.bf16.msra.mxu0 0
        %2000 = vmatprep.subr.bf16.mxu0 0
        %2001 = vmatpush1.bf16.msra.mxu0 0
        %2002 = vmatprep.subr.bf16.mxu0 0
        %2003 = vmatpush1.bf16.msra.mxu0 0
        %2004 = vmatprep.subr.bf16.mxu0 0
        %2005 = vmatpush1.bf16.msra.mxu0 0
        %2006 = vmatprep.subr.bf16.mxu0 0
        %2007 = vmatpush1.bf16.msra.mxu0 0
        %2008 = vmatprep.subr.bf16.mxu0 0
        %2009 = vmatpush1.bf16.msra.mxu0 0
        %2010 = vmatprep.subr.bf16.mxu0 0
        %2011 = vmatpush1.bf16.msra.mxu0 0
        %2012 = vmatprep.subr.bf16.mxu0 0
        %2013 = vmatpush1.bf16.msra.mxu0 0
        %2014 = vmatprep.mubr.bf16.mxu0 0
        %2015 = vmatmul.mubr.bf16.gmra.mrb[0].mxu0 %v1824
        %v2016 = vpop.f32.mrb[0].mxu0
        %v2017 = vadd.f32 %v1806, %v2016
        %v2018 = vpop.f32.mrb[0].mxu0
        %v2019 = vpop.f32.mrb[0].mxu0
        %v2020 = vpop.f32.mrb[0].mxu0
        %2021 = vdwg.mxu0
        %v2022 = vpack.c.bf16 %v964, %v964
        %v2023 = vld [vmem:[%s15] sm:$0xf]
        %v2024 = vld [vmem:[%s15 + $0x4] sm:$0xf]
        %v2025 = vld [vmem:[%s15 + $0x8] sm:$0xf]
        %v2026 = vld [vmem:[%s15 + $0xc] sm:$0xf]
        %v2027 = vld [vmem:[%s15 + $0x10] sm:$0xf]
        %v2028 = vld [vmem:[%s15 + $0x14] sm:$0xf]
        %v2029 = vld [vmem:[%s15 + $0x18] sm:$0xf]
        %v2030 = vld [vmem:[%s15 + $0x1c] sm:$0xf]
        %v2031 = vld [vmem:[%s15 + $0x20] sm:$0xf]
        %v2032 = vld [vmem:[%s15 + $0x24] sm:$0xf]
        %v2033 = vld [vmem:[%s15 + $0x28] sm:$0xf]
        %v2034 = vld [vmem:[%s15 + $0x2c] sm:$0xf]
        %v2035 = vld [vmem:[%s15 + $0x30] sm:$0xf]
        %v2036 = vld [vmem:[%s15 + $0x34] sm:$0xf]
        %v2037 = vld [vmem:[%s15 + $0x38] sm:$0xf]
        %v2038 = vld [vmem:[%s15 + $0x3c] sm:$0xf]
        %v2039 = vld [vmem:[%s16] sm:$0x1]
        %v2040 = vld [vmem:[%s16 + $0x1] sm:$0x1]
        %v2041 = vld [vmem:[%s16 + $0x2] sm:$0x1]
        %v2042 = vld [vmem:[%s16 + $0x3] sm:$0x1]
        %v2047 = vlaneseq
        %v2048 = vshrl.u32 %v2047, 7
        %v2049 = vsub.s32 0, %v2048
        %v2050 = vrot.slane %v2039, %v2049
        %v2051 = vlaneseq
        %v2052 = vshrl.u32 %v2051, 7
        %v2053 = vsub.s32 0, %v2052
        %v2054 = vrot.slane %v2040, %v2053
        %v2055 = vlaneseq
        %v2056 = vshrl.u32 %v2055, 7
        %v2057 = vsub.s32 0, %v2056
        %v2058 = vrot.slane %v2041, %v2057
        %v2059 = vlaneseq
        %v2060 = vshrl.u32 %v2059, 7
        %v2061 = vsub.s32 0, %v2060
        %v2062 = vrot.slane %v2042, %v2061
        %v2071 = vunpack.c.l.b16 %v2023
        %v2072 = vunpack.c.l.b16 %v2024
        %v2073 = vunpack.c.l.b16 %v2025
        %v2074 = vunpack.c.l.b16 %v2026
        %v2075 = vpack.c.b16 %v2072, %v2071
        %v2076 = vpack.c.b16 %v2074, %v2073
        %v2080 = vsel %vm903, %v2022, 0
        %2082 = vmatprep.subr.bf16.mxu0 0
        %2083 = vmatpush1.bf16.msra.mxu0 %v2075
        %2084 = vmatprep.subr.bf16.mxu0 0
        %2085 = vmatpush1.bf16.msra.mxu0 %v2076
        %2086 = vmatprep.subr.bf16.mxu0 0
        %2087 = vmatpush1.bf16.msra.mxu0 0
        %2088 = vmatprep.subr.bf16.mxu0 0
        %2089 = vmatpush1.bf16.msra.mxu0 0
        %2090 = vmatprep.subr.bf16.mxu0 0
        %2091 = vmatpush1.bf16.msra.mxu0 0
        %2092 = vmatprep.subr.bf16.mxu0 0
        %2093 = vmatpush1.bf16.msra.mxu0 0
        %2094 = vmatprep.subr.bf16.mxu0 0
        %2095 = vmatpush1.bf16.msra.mxu0 0
        %2096 = vmatprep.subr.bf16.mxu0 0
        %2097 = vmatpush1.bf16.msra.mxu0 0
        %2098 = vmatprep.subr.bf16.mxu0 0
        %2099 = vmatpush1.bf16.msra.mxu0 0
        %2100 = vmatprep.subr.bf16.mxu0 0
        %2101 = vmatpush1.bf16.msra.mxu0 0
        %2102 = vmatprep.subr.bf16.mxu0 0
        %2103 = vmatpush1.bf16.msra.mxu0 0
        %2104 = vmatprep.subr.bf16.mxu0 0
        %2105 = vmatpush1.bf16.msra.mxu0 0
        %2106 = vmatprep.subr.bf16.mxu0 0
        %2107 = vmatpush1.bf16.msra.mxu0 0
        %2108 = vmatprep.subr.bf16.mxu0 0
        %2109 = vmatpush1.bf16.msra.mxu0 0
        %2110 = vmatprep.subr.bf16.mxu0 0
        %2111 = vmatpush1.bf16.msra.mxu0 0
        %2112 = vmatprep.subr.bf16.mxu0 0
        %2113 = vmatpush1.bf16.msra.mxu0 0
        %2114 = vmatprep.mubr.bf16.mxu0 0
        %2115 = vmatmul.mubr.bf16.gmra.mrb[0].mxu0 %v2080
        %v2116 = vpop.f32.mrb[0].mxu0
        %v2117 = vadd.f32 %v2050, %v2116
        %v2118 = vpop.f32.mrb[0].mxu0
        %v2119 = vpop.f32.mrb[0].mxu0
        %v2120 = vpop.f32.mrb[0].mxu0
        %2121 = vdwg.mxu0
        %v2126 = vunpack.c.l.b16 %v2027
        %v2127 = vunpack.c.l.b16 %v2028
        %v2128 = vunpack.c.l.b16 %v2029
        %v2129 = vunpack.c.l.b16 %v2030
        %v2130 = vpack.c.b16 %v2127, %v2126
        %v2131 = vpack.c.b16 %v2129, %v2128
        %2134 = vmatprep.subr.bf16.mxu0 0
        %2135 = vmatpush1.bf16.msra.mxu0 %v2130
        %2136 = vmatprep.subr.bf16.mxu0 0
        %2137 = vmatpush1.bf16.msra.mxu0 %v2131
        %2138 = vmatprep.subr.bf16.mxu0 0
        %2139 = vmatpush1.bf16.msra.mxu0 0
        %2140 = vmatprep.subr.bf16.mxu0 0
        %2141 = vmatpush1.bf16.msra.mxu0 0
        %2142 = vmatprep.subr.bf16.mxu0 0
        %2143 = vmatpush1.bf16.msra.mxu0 0
        %2144 = vmatprep.subr.bf16.mxu0 0
        %2145 = vmatpush1.bf16.msra.mxu0 0
        %2146 = vmatprep.subr.bf16.mxu0 0
        %2147 = vmatpush1.bf16.msra.mxu0 0
        %2148 = vmatprep.subr.bf16.mxu0 0
        %2149 = vmatpush1.bf16.msra.mxu0 0
        %2150 = vmatprep.subr.bf16.mxu0 0
        %2151 = vmatpush1.bf16.msra.mxu0 0
        %2152 = vmatprep.subr.bf16.mxu0 0
        %2153 = vmatpush1.bf16.msra.mxu0 0
        %2154 = vmatprep.subr.bf16.mxu0 0
        %2155 = vmatpush1.bf16.msra.mxu0 0
        %2156 = vmatprep.subr.bf16.mxu0 0
        %2157 = vmatpush1.bf16.msra.mxu0 0
        %2158 = vmatprep.subr.bf16.mxu0 0
        %2159 = vmatpush1.bf16.msra.mxu0 0
        %2160 = vmatprep.subr.bf16.mxu0 0
        %2161 = vmatpush1.bf16.msra.mxu0 0
        %2162 = vmatprep.subr.bf16.mxu0 0
        %2163 = vmatpush1.bf16.msra.mxu0 0
        %2164 = vmatprep.subr.bf16.mxu0 0
        %2165 = vmatpush1.bf16.msra.mxu0 0
        %2166 = vmatprep.mubr.bf16.mxu0 0
        %2167 = vmatmul.mubr.bf16.gmra.mrb[0].mxu0 %v2080
        %v2168 = vpop.f32.mrb[0].mxu0
        %v2169 = vadd.f32 %v2054, %v2168
        %v2170 = vpop.f32.mrb[0].mxu0
        %v2171 = vpop.f32.mrb[0].mxu0
        %v2172 = vpop.f32.mrb[0].mxu0
        %2173 = vdwg.mxu0
        %v2178 = vunpack.c.l.b16 %v2031
        %v2179 = vunpack.c.l.b16 %v2032
        %v2180 = vunpack.c.l.b16 %v2033
        %v2181 = vunpack.c.l.b16 %v2034
        %v2182 = vpack.c.b16 %v2179, %v2178
        %v2183 = vpack.c.b16 %v2181, %v2180
        %2186 = vmatprep.subr.bf16.mxu0 0
        %2187 = vmatpush1.bf16.msra.mxu0 %v2182
        %2188 = vmatprep.subr.bf16.mxu0 0
        %2189 = vmatpush1.bf16.msra.mxu0 %v2183
        %2190 = vmatprep.subr.bf16.mxu0 0
        %2191 = vmatpush1.bf16.msra.mxu0 0
        %2192 = vmatprep.subr.bf16.mxu0 0
        %2193 = vmatpush1.bf16.msra.mxu0 0
        %2194 = vmatprep.subr.bf16.mxu0 0
        %2195 = vmatpush1.bf16.msra.mxu0 0
        %2196 = vmatprep.subr.bf16.mxu0 0
        %2197 = vmatpush1.bf16.msra.mxu0 0
        %2198 = vmatprep.subr.bf16.mxu0 0
        %2199 = vmatpush1.bf16.msra.mxu0 0
        %2200 = vmatprep.subr.bf16.mxu0 0
        %2201 = vmatpush1.bf16.msra.mxu0 0
        %2202 = vmatprep.subr.bf16.mxu0 0
        %2203 = vmatpush1.bf16.msra.mxu0 0
        %2204 = vmatprep.subr.bf16.mxu0 0
        %2205 = vmatpush1.bf16.msra.mxu0 0
        %2206 = vmatprep.subr.bf16.mxu0 0
        %2207 = vmatpush1.bf16.msra.mxu0 0
        %2208 = vmatprep.subr.bf16.mxu0 0
        %2209 = vmatpush1.bf16.msra.mxu0 0
        %2210 = vmatprep.subr.bf16.mxu0 0
        %2211 = vmatpush1.bf16.msra.mxu0 0
        %2212 = vmatprep.subr.bf16.mxu0 0
        %2213 = vmatpush1.bf16.msra.mxu0 0
        %2214 = vmatprep.subr.bf16.mxu0 0
        %2215 = vmatpush1.bf16.msra.mxu0 0
        %2216 = vmatprep.subr.bf16.mxu0 0
        %2217 = vmatpush1.bf16.msra.mxu0 0
        %2218 = vmatprep.mubr.bf16.mxu0 0
        %2219 = vmatmul.mubr.bf16.gmra.mrb[0].mxu0 %v2080
        %v2220 = vpop.f32.mrb[0].mxu0
        %v2221 = vadd.f32 %v2058, %v2220
        %v2222 = vpop.f32.mrb[0].mxu0
        %v2223 = vpop.f32.mrb[0].mxu0
        %v2224 = vpop.f32.mrb[0].mxu0
        %2225 = vdwg.mxu0
        %v2230 = vunpack.c.l.b16 %v2035
        %v2231 = vunpack.c.l.b16 %v2036
        %v2232 = vunpack.c.l.b16 %v2037
        %v2233 = vunpack.c.l.b16 %v2038
        %v2234 = vpack.c.b16 %v2231, %v2230
        %v2235 = vpack.c.b16 %v2233, %v2232
        %2238 = vmatprep.subr.bf16.mxu0 0
        %2239 = vmatpush1.bf16.msra.mxu0 %v2234
        %2240 = vmatprep.subr.bf16.mxu0 0
        %2241 = vmatpush1.bf16.msra.mxu0 %v2235
        %2242 = vmatprep.subr.bf16.mxu0 0
        %2243 = vmatpush1.bf16.msra.mxu0 0
        %2244 = vmatprep.subr.bf16.mxu0 0
        %2245 = vmatpush1.bf16.msra.mxu0 0
        %2246 = vmatprep.subr.bf16.mxu0 0
        %2247 = vmatpush1.bf16.msra.mxu0 0
        %2248 = vmatprep.subr.bf16.mxu0 0
        %2249 = vmatpush1.bf16.msra.mxu0 0
        %2250 = vmatprep.subr.bf16.mxu0 0
        %2251 = vmatpush1.bf16.msra.mxu0 0
        %2252 = vmatprep.subr.bf16.mxu0 0
        %2253 = vmatpush1.bf16.msra.mxu0 0
        %2254 = vmatprep.subr.bf16.mxu0 0
        %2255 = vmatpush1.bf16.msra.mxu0 0
        %2256 = vmatprep.subr.bf16.mxu0 0
        %2257 = vmatpush1.bf16.msra.mxu0 0
        %2258 = vmatprep.subr.bf16.mxu0 0
        %2259 = vmatpush1.bf16.msra.mxu0 0
        %2260 = vmatprep.subr.bf16.mxu0 0
        %2261 = vmatpush1.bf16.msra.mxu0 0
        %2262 = vmatprep.subr.bf16.mxu0 0
        %2263 = vmatpush1.bf16.msra.mxu0 0
        %2264 = vmatprep.subr.bf16.mxu0 0
        %2265 = vmatpush1.bf16.msra.mxu0 0
        %2266 = vmatprep.subr.bf16.mxu0 0
        %2267 = vmatpush1.bf16.msra.mxu0 0
        %2268 = vmatprep.subr.bf16.mxu0 0
        %2269 = vmatpush1.bf16.msra.mxu0 0
        %2270 = vmatprep.mubr.bf16.mxu0 0
        %2271 = vmatmul.mubr.bf16.gmra.mrb[0].mxu0 %v2080
        %v2272 = vpop.f32.mrb[0].mxu0
        %v2273 = vadd.f32 %v2062, %v2272
        %v2274 = vpop.f32.mrb[0].mxu0
        %v2275 = vpop.f32.mrb[0].mxu0
        %v2276 = vpop.f32.mrb[0].mxu0
        %2277 = vdwg.mxu0
        %v2278 = vld [vmem:[%s19] sm:$0xf]
        %v2279 = vld [vmem:[%s19 + $0x4] sm:$0xf]
        %v2280 = vld [vmem:[%s19 + $0x8] sm:$0xf]
        %v2281 = vld [vmem:[%s19 + $0xc] sm:$0xf]
        %v2282 = vld [vmem:[%s20] sm:$0x1]
        %v2283 = vpack.c.bf16 %v1093, %v1093
        %v2284 = vpack.c.bf16 %v1145, %v1145
        %v2285 = vpack.c.bf16 %v1197, %v1197
        %v2286 = vpack.c.bf16 %v1249, %v1249
        %v2287 = vpack.c.bf16 %v1349, %v1349
        %v2288 = vpack.c.bf16 %v1401, %v1401
        %v2289 = vpack.c.bf16 %v1453, %v1453
        %v2290 = vpack.c.bf16 %v1505, %v1505
        %v2292 = vlaneseq
        %v2293 = vshrl.u32 %v2292, 7
        %v2294 = vsub.s32 0, %v2293
        %v2295 = vrot.slane %v902, %v2294
        %vm2297 = vcmask 64512
        %v2299 = vsel %vm2297, %v2283, 0
        %v2302 = vsel %vm2297, %v2287, 0
        %2304 = vmatprep.subr.bf16.mxu0 0
        %2305 = vmatpush1.bf16.xpose.msra.mxu0 %v2302
        %2306 = vmatprep.subr.bf16.mxu0 0
        %2307 = vmatpush1.bf16.xpose.msra.mxu0 0
        %2308 = vmatprep.subr.bf16.mxu0 0
        %2309 = vmatpush1.bf16.xpose.msra.mxu0 0
        %2310 = vmatprep.subr.bf16.mxu0 0
        %2311 = vmatpush1.bf16.xpose.msra.mxu0 0
        %2312 = vmatprep.subr.bf16.mxu0 0
        %2313 = vmatpush1.bf16.xpose.msra.mxu0 0
        %2314 = vmatprep.subr.bf16.mxu0 0
        %2315 = vmatpush1.bf16.xpose.msra.mxu0 0
        %2316 = vmatprep.subr.bf16.mxu0 0
        %2317 = vmatpush1.bf16.xpose.msra.mxu0 0
        %2318 = vmatprep.subr.bf16.mxu0 0
        %2319 = vmatpush1.bf16.xpose.msra.mxu0 0
        %2320 = vmatprep.subr.bf16.mxu0 0
        %2321 = vmatpush1.bf16.xpose.msra.mxu0 0
        %2322 = vmatprep.subr.bf16.mxu0 0
        %2323 = vmatpush1.bf16.xpose.msra.mxu0 0
        %2324 = vmatprep.subr.bf16.mxu0 0
        %2325 = vmatpush1.bf16.xpose.msra.mxu0 0
        %2326 = vmatprep.subr.bf16.mxu0 0
        %2327 = vmatpush1.bf16.xpose.msra.mxu0 0
        %2328 = vmatprep.subr.bf16.mxu0 0
        %2329 = vmatpush1.bf16.xpose.msra.mxu0 0
        %2330 = vmatprep.subr.bf16.mxu0 0
        %2331 = vmatpush1.bf16.xpose.msra.mxu0 0
        %2332 = vmatprep.subr.bf16.mxu0 0
        %2333 = vmatpush1.bf16.xpose.msra.mxu0 0
        %2334 = vmatprep.subr.bf16.mxu0 0
        %2335 = vmatpush1.bf16.xpose.msra.mxu0 0
        %2336 = vmatprep.mubr.bf16.mxu0 0
        %2337 = vmatmul.mubr.bf16.gmra.mrb[0].mxu0 %v2299
        %v2338 = vpop.f32.mrb[0].mxu0
        %v2339 = vadd.f32 %v2295, %v2338
        %v2340 = vpop.f32.mrb[0].mxu0
        %v2341 = vpop.f32.mrb[0].mxu0
        %v2342 = vpop.f32.mrb[0].mxu0
        %2343 = vdwg.mxu0
        %v2345 = vsel %vm2297, %v2284, 0
        %v2348 = vsel %vm2297, %v2288, 0
        %2350 = vmatprep.subr.bf16.mxu0 0
        %2351 = vmatpush1.bf16.xpose.msra.mxu0 %v2348
        %2352 = vmatprep.subr.bf16.mxu0 0
        %2353 = vmatpush1.bf16.xpose.msra.mxu0 0
        %2354 = vmatprep.subr.bf16.mxu0 0
        %2355 = vmatpush1.bf16.xpose.msra.mxu0 0
        %2356 = vmatprep.subr.bf16.mxu0 0
        %2357 = vmatpush1.bf16.xpose.msra.mxu0 0
        %2358 = vmatprep.subr.bf16.mxu0 0
        %2359 = vmatpush1.bf16.xpose.msra.mxu0 0
        %2360 = vmatprep.subr.bf16.mxu0 0
        %2361 = vmatpush1.bf16.xpose.msra.mxu0 0
        %2362 = vmatprep.subr.bf16.mxu0 0
        %2363 = vmatpush1.bf16.xpose.msra.mxu0 0
        %2364 = vmatprep.subr.bf16.mxu0 0
        %2365 = vmatpush1.bf16.xpose.msra.mxu0 0
        %2366 = vmatprep.subr.bf16.mxu0 0
        %2367 = vmatpush1.bf16.xpose.msra.mxu0 0
        %2368 = vmatprep.subr.bf16.mxu0 0
        %2369 = vmatpush1.bf16.xpose.msra.mxu0 0
        %2370 = vmatprep.subr.bf16.mxu0 0
        %2371 = vmatpush1.bf16.xpose.msra.mxu0 0
        %2372 = vmatprep.subr.bf16.mxu0 0
        %2373 = vmatpush1.bf16.xpose.msra.mxu0 0
        %2374 = vmatprep.subr.bf16.mxu0 0
        %2375 = vmatpush1.bf16.xpose.msra.mxu0 0
        %2376 = vmatprep.subr.bf16.mxu0 0
        %2377 = vmatpush1.bf16.xpose.msra.mxu0 0
        %2378 = vmatprep.subr.bf16.mxu0 0
        %2379 = vmatpush1.bf16.xpose.msra.mxu0 0
        %2380 = vmatprep.subr.bf16.mxu0 0
        %2381 = vmatpush1.bf16.xpose.msra.mxu0 0
        %2382 = vmatprep.mubr.bf16.mxu0 0
        %2383 = vmatmul.mubr.bf16.gmra.mrb[0].mxu0 %v2345
        %v2384 = vpop.f32.mrb[0].mxu0
        %v2385 = vadd.f32 %v2295, %v2384
        %v2386 = vpop.f32.mrb[0].mxu0
        %v2387 = vpop.f32.mrb[0].mxu0
        %v2388 = vpop.f32.mrb[0].mxu0
        %2389 = vdwg.mxu0
        %v2391 = vsel %vm2297, %v2285, 0
        %v2394 = vsel %vm2297, %v2289, 0
        %2396 = vmatprep.subr.bf16.mxu0 0
        %2397 = vmatpush1.bf16.xpose.msra.mxu0 %v2394
        %2398 = vmatprep.subr.bf16.mxu0 0
        %2399 = vmatpush1.bf16.xpose.msra.mxu0 0
        %2400 = vmatprep.subr.bf16.mxu0 0
        %2401 = vmatpush1.bf16.xpose.msra.mxu0 0
        %2402 = vmatprep.subr.bf16.mxu0 0
        %2403 = vmatpush1.bf16.xpose.msra.mxu0 0
        %2404 = vmatprep.subr.bf16.mxu0 0
        %2405 = vmatpush1.bf16.xpose.msra.mxu0 0
        %2406 = vmatprep.subr.bf16.mxu0 0
        %2407 = vmatpush1.bf16.xpose.msra.mxu0 0
        %2408 = vmatprep.subr.bf16.mxu0 0
        %2409 = vmatpush1.bf16.xpose.msra.mxu0 0
        %2410 = vmatprep.subr.bf16.mxu0 0
        %2411 = vmatpush1.bf16.xpose.msra.mxu0 0
        %2412 = vmatprep.subr.bf16.mxu0 0
        %2413 = vmatpush1.bf16.xpose.msra.mxu0 0
        %2414 = vmatprep.subr.bf16.mxu0 0
        %2415 = vmatpush1.bf16.xpose.msra.mxu0 0
        %2416 = vmatprep.subr.bf16.mxu0 0
        %2417 = vmatpush1.bf16.xpose.msra.mxu0 0
        %2418 = vmatprep.subr.bf16.mxu0 0
        %2419 = vmatpush1.bf16.xpose.msra.mxu0 0
        %2420 = vmatprep.subr.bf16.mxu0 0
        %2421 = vmatpush1.bf16.xpose.msra.mxu0 0
        %2422 = vmatprep.subr.bf16.mxu0 0
        %2423 = vmatpush1.bf16.xpose.msra.mxu0 0
        %2424 = vmatprep.subr.bf16.mxu0 0
        %2425 = vmatpush1.bf16.xpose.msra.mxu0 0
        %2426 = vmatprep.subr.bf16.mxu0 0
        %2427 = vmatpush1.bf16.xpose.msra.mxu0 0
        %2428 = vmatprep.mubr.bf16.mxu0 0
        %2429 = vmatmul.mubr.bf16.gmra.mrb[0].mxu0 %v2391
        %v2430 = vpop.f32.mrb[0].mxu0
        %v2431 = vadd.f32 %v2295, %v2430
        %v2432 = vpop.f32.mrb[0].mxu0
        %v2433 = vpop.f32.mrb[0].mxu0
        %v2434 = vpop.f32.mrb[0].mxu0
        %2435 = vdwg.mxu0
        %v2437 = vsel %vm2297, %v2286, 0
        %v2440 = vsel %vm2297, %v2290, 0
        %2442 = vmatprep.subr.bf16.mxu0 0
        %2443 = vmatpush1.bf16.xpose.msra.mxu0 %v2440
        %2444 = vmatprep.subr.bf16.mxu0 0
        %2445 = vmatpush1.bf16.xpose.msra.mxu0 0
        %2446 = vmatprep.subr.bf16.mxu0 0
        %2447 = vmatpush1.bf16.xpose.msra.mxu0 0
        %2448 = vmatprep.subr.bf16.mxu0 0
        %2449 = vmatpush1.bf16.xpose.msra.mxu0 0
        %2450 = vmatprep.subr.bf16.mxu0 0
        %2451 = vmatpush1.bf16.xpose.msra.mxu0 0
        %2452 = vmatprep.subr.bf16.mxu0 0
        %2453 = vmatpush1.bf16.xpose.msra.mxu0 0
        %2454 = vmatprep.subr.bf16.mxu0 0
        %2455 = vmatpush1.bf16.xpose.msra.mxu0 0
        %2456 = vmatprep.subr.bf16.mxu0 0
        %2457 = vmatpush1.bf16.xpose.msra.mxu0 0
        %2458 = vmatprep.subr.bf16.mxu0 0
        %2459 = vmatpush1.bf16.xpose.msra.mxu0 0
        %2460 = vmatprep.subr.bf16.mxu0 0
        %2461 = vmatpush1.bf16.xpose.msra.mxu0 0
        %2462 = vmatprep.subr.bf16.mxu0 0
        %2463 = vmatpush1.bf16.xpose.msra.mxu0 0
        %2464 = vmatprep.subr.bf16.mxu0 0
        %2465 = vmatpush1.bf16.xpose.msra.mxu0 0
        %2466 = vmatprep.subr.bf16.mxu0 0
        %2467 = vmatpush1.bf16.xpose.msra.mxu0 0
        %2468 = vmatprep.subr.bf16.mxu0 0
        %2469 = vmatpush1.bf16.xpose.msra.mxu0 0
        %2470 = vmatprep.subr.bf16.mxu0 0
        %2471 = vmatpush1.bf16.xpose.msra.mxu0 0
        %2472 = vmatprep.subr.bf16.mxu0 0
        %2473 = vmatpush1.bf16.xpose.msra.mxu0 0
        %2474 = vmatprep.mubr.bf16.mxu0 0
        %2475 = vmatmul.mubr.bf16.gmra.mrb[0].mxu0 %v2437
        %v2476 = vpop.f32.mrb[0].mxu0
        %v2477 = vadd.f32 %v2295, %v2476
        %v2478 = vpop.f32.mrb[0].mxu0
        %v2479 = vpop.f32.mrb[0].mxu0
        %v2480 = vpop.f32.mrb[0].mxu0
        %2481 = vdwg.mxu0
        %v2482 = vsel %vm2297, %v2339, -inf
        %2483 = vmax.xlane.f32.xlu0 %v2482
        %v2484 = vpop.xlane.xlu0 %2483
        %v2485 = vsel %vm2297, %v2385, -inf
        %2486 = vmax.xlane.f32.xlu0 %v2485
        %v2487 = vpop.xlane.xlu0 %2486
        %v2488 = vsel %vm2297, %v2431, -inf
        %2489 = vmax.xlane.f32.xlu0 %v2488
        %v2490 = vpop.xlane.xlu0 %2489
        %v2491 = vsel %vm2297, %v2477, -inf
        %2492 = vmax.xlane.f32.xlu0 %v2491
        %v2493 = vpop.xlane.xlu0 %2492
        %v2494 = vsub.f32 %v2339, %v2484
        %v2495 = vsub.f32 %v2385, %v2487
        %v2496 = vsub.f32 %v2431, %v2490
        %v2497 = vsub.f32 %v2477, %v2493
        %v2498 = vmul.f32 %v2494, 1.442695
        %v2499 = vpow.pop %v2498
        %v2500 = vmul.f32 %v2495, 1.442695
        %v2501 = vpow.pop %v2500
        %v2502 = vmul.f32 %v2496, 1.442695
        %v2503 = vpow.pop %v2502
        %v2504 = vmul.f32 %v2497, 1.442695
        %v2505 = vpow.pop %v2504
        %v2506 = vsel %vm2297, %v2499, 0.0
        %2507 = vadd.xlane.f32.xlu0 %v2506
        %v2508 = vpop.xlane.xlu0 %2507
        %v2509 = vsel %vm2297, %v2501, 0.0
        %2510 = vadd.xlane.f32.xlu0 %v2509
        %v2511 = vpop.xlane.xlu0 %2510
        %v2512 = vsel %vm2297, %v2503, 0.0
        %2513 = vadd.xlane.f32.xlu0 %v2512
        %v2514 = vpop.xlane.xlu0 %2513
        %v2515 = vsel %vm2297, %v2505, 0.0
        %2516 = vadd.xlane.f32.xlu0 %v2515
        %v2517 = vpop.xlane.xlu0 %2516
        %v2518 = vrcp.pop %v2508
        %v2519 = vrcp.pop %v2511
        %v2520 = vrcp.pop %v2514
        %v2521 = vrcp.pop %v2517
        %v2522 = vmul.f32 %v2499, %v2518
        %v2523 = vmul.f32 %v2501, %v2519
        %v2524 = vmul.f32 %v2503, %v2520
        %v2525 = vmul.f32 %v2505, %v2521
        %v2526 = vpack.c.bf16 %v2522, %v2522
        %v2527 = vpack.c.bf16 %v2523, %v2523
        %v2528 = vpack.c.bf16 %v2524, %v2524
        %v2529 = vpack.c.bf16 %v2525, %v2525
        %v2530 = vpack.c.bf16 %v1861, %v1861
        %v2531 = vpack.c.bf16 %v1913, %v1913
        %v2532 = vpack.c.bf16 %v1965, %v1965
        %v2533 = vpack.c.bf16 %v2017, %v2017
        %v2535 = vsel %vm2297, %v2526, 0
        %vm2537 = vcmask 1043456
        %v2539 = vsel %vm2537, %v2530, 0
        %2541 = vmatprep.subr.bf16.mxu0 0
        %2542 = vmatpush1.bf16.msra.mxu0 %v2539
        %2543 = vmatprep.subr.bf16.mxu0 0
        %2544 = vmatpush1.bf16.msra.mxu0 0
        %2545 = vmatprep.subr.bf16.mxu0 0
        %2546 = vmatpush1.bf16.msra.mxu0 0
        %2547 = vmatprep.subr.bf16.mxu0 0
        %2548 = vmatpush1.bf16.msra.mxu0 0
        %2549 = vmatprep.subr.bf16.mxu0 0
        %2550 = vmatpush1.bf16.msra.mxu0 0
        %2551 = vmatprep.subr.bf16.mxu0 0
        %2552 = vmatpush1.bf16.msra.mxu0 0
        %2553 = vmatprep.subr.bf16.mxu0 0
        %2554 = vmatpush1.bf16.msra.mxu0 0
        %2555 = vmatprep.subr.bf16.mxu0 0
        %2556 = vmatpush1.bf16.msra.mxu0 0
        %2557 = vmatprep.subr.bf16.mxu0 0
        %2558 = vmatpush1.bf16.msra.mxu0 0
        %2559 = vmatprep.subr.bf16.mxu0 0
        %2560 = vmatpush1.bf16.msra.mxu0 0
        %2561 = vmatprep.subr.bf16.mxu0 0
        %2562 = vmatpush1.bf16.msra.mxu0 0
        %2563 = vmatprep.subr.bf16.mxu0 0
        %2564 = vmatpush1.bf16.msra.mxu0 0
        %2565 = vmatprep.subr.bf16.mxu0 0
        %2566 = vmatpush1.bf16.msra.mxu0 0
        %2567 = vmatprep.subr.bf16.mxu0 0
        %2568 = vmatpush1.bf16.msra.mxu0 0
        %2569 = vmatprep.subr.bf16.mxu0 0
        %2570 = vmatpush1.bf16.msra.mxu0 0
        %2571 = vmatprep.subr.bf16.mxu0 0
        %2572 = vmatpush1.bf16.msra.mxu0 0
        %2573 = vmatprep.mubr.bf16.mxu0 0
        %2574 = vmatmul.mubr.bf16.gmra.mrb[0].mxu0 %v2535
        %v2575 = vpop.f32.mrb[0].mxu0
        %v2576 = vadd.f32 0.0, %v2575
        %v2577 = vpop.f32.mrb[0].mxu0
        %v2578 = vpop.f32.mrb[0].mxu0
        %v2579 = vpop.f32.mrb[0].mxu0
        %2580 = vdwg.mxu0
        %v2582 = vsel %vm2297, %v2527, 0
        %v2585 = vsel %vm2537, %v2531, 0
        %2587 = vmatprep.subr.bf16.mxu0 0
        %2588 = vmatpush1.bf16.msra.mxu0 %v2585
        %2589 = vmatprep.subr.bf16.mxu0 0
        %2590 = vmatpush1.bf16.msra.mxu0 0
        %2591 = vmatprep.subr.bf16.mxu0 0
        %2592 = vmatpush1.bf16.msra.mxu0 0
        %2593 = vmatprep.subr.bf16.mxu0 0
        %2594 = vmatpush1.bf16.msra.mxu0 0
        %2595 = vmatprep.subr.bf16.mxu0 0
        %2596 = vmatpush1.bf16.msra.mxu0 0
        %2597 = vmatprep.subr.bf16.mxu0 0
        %2598 = vmatpush1.bf16.msra.mxu0 0
        %2599 = vmatprep.subr.bf16.mxu0 0
        %2600 = vmatpush1.bf16.msra.mxu0 0
        %2601 = vmatprep.subr.bf16.mxu0 0
        %2602 = vmatpush1.bf16.msra.mxu0 0
        %2603 = vmatprep.subr.bf16.mxu0 0
        %2604 = vmatpush1.bf16.msra.mxu0 0
        %2605 = vmatprep.subr.bf16.mxu0 0
        %2606 = vmatpush1.bf16.msra.mxu0 0
        %2607 = vmatprep.subr.bf16.mxu0 0
        %2608 = vmatpush1.bf16.msra.mxu0 0
        %2609 = vmatprep.subr.bf16.mxu0 0
        %2610 = vmatpush1.bf16.msra.mxu0 0
        %2611 = vmatprep.subr.bf16.mxu0 0
        %2612 = vmatpush1.bf16.msra.mxu0 0
        %2613 = vmatprep.subr.bf16.mxu0 0
        %2614 = vmatpush1.bf16.msra.mxu0 0
        %2615 = vmatprep.subr.bf16.mxu0 0
        %2616 = vmatpush1.bf16.msra.mxu0 0
        %2617 = vmatprep.subr.bf16.mxu0 0
        %2618 = vmatpush1.bf16.msra.mxu0 0
        %2619 = vmatprep.mubr.bf16.mxu0 0
        %2620 = vmatmul.mubr.bf16.gmra.mrb[0].mxu0 %v2582
        %v2621 = vpop.f32.mrb[0].mxu0
        %v2622 = vadd.f32 0.0, %v2621
        %v2623 = vpop.f32.mrb[0].mxu0
        %v2624 = vpop.f32.mrb[0].mxu0
        %v2625 = vpop.f32.mrb[0].mxu0
        %2626 = vdwg.mxu0
        %v2628 = vsel %vm2297, %v2528, 0
        %v2631 = vsel %vm2537, %v2532, 0
        %2633 = vmatprep.subr.bf16.mxu0 0
        %2634 = vmatpush1.bf16.msra.mxu0 %v2631
        %2635 = vmatprep.subr.bf16.mxu0 0
        %2636 = vmatpush1.bf16.msra.mxu0 0
        %2637 = vmatprep.subr.bf16.mxu0 0
        %2638 = vmatpush1.bf16.msra.mxu0 0
        %2639 = vmatprep.subr.bf16.mxu0 0
        %2640 = vmatpush1.bf16.msra.mxu0 0
        %2641 = vmatprep.subr.bf16.mxu0 0
        %2642 = vmatpush1.bf16.msra.mxu0 0
        %2643 = vmatprep.subr.bf16.mxu0 0
        %2644 = vmatpush1.bf16.msra.mxu0 0
        %2645 = vmatprep.subr.bf16.mxu0 0
        %2646 = vmatpush1.bf16.msra.mxu0 0
        %2647 = vmatprep.subr.bf16.mxu0 0
        %2648 = vmatpush1.bf16.msra.mxu0 0
        %2649 = vmatprep.subr.bf16.mxu0 0
        %2650 = vmatpush1.bf16.msra.mxu0 0
        %2651 = vmatprep.subr.bf16.mxu0 0
        %2652 = vmatpush1.bf16.msra.mxu0 0
        %2653 = vmatprep.subr.bf16.mxu0 0
        %2654 = vmatpush1.bf16.msra.mxu0 0
        %2655 = vmatprep.subr.bf16.mxu0 0
        %2656 = vmatpush1.bf16.msra.mxu0 0
        %2657 = vmatprep.subr.bf16.mxu0 0
        %2658 = vmatpush1.bf16.msra.mxu0 0
        %2659 = vmatprep.subr.bf16.mxu0 0
        %2660 = vmatpush1.bf16.msra.mxu0 0
        %2661 = vmatprep.subr.bf16.mxu0 0
        %2662 = vmatpush1.bf16.msra.mxu0 0
        %2663 = vmatprep.subr.bf16.mxu0 0
        %2664 = vmatpush1.bf16.msra.mxu0 0
        %2665 = vmatprep.mubr.bf16.mxu0 0
        %2666 = vmatmul.mubr.bf16.gmra.mrb[0].mxu0 %v2628
        %v2667 = vpop.f32.mrb[0].mxu0
        %v2668 = vadd.f32 0.0, %v2667
        %v2669 = vpop.f32.mrb[0].mxu0
        %v2670 = vpop.f32.mrb[0].mxu0
        %v2671 = vpop.f32.mrb[0].mxu0
        %2672 = vdwg.mxu0
        %v2674 = vsel %vm2297, %v2529, 0
        %v2677 = vsel %vm2537, %v2533, 0
        %2679 = vmatprep.subr.bf16.mxu0 0
        %2680 = vmatpush1.bf16.msra.mxu0 %v2677
        %2681 = vmatprep.subr.bf16.mxu0 0
        %2682 = vmatpush1.bf16.msra.mxu0 0
        %2683 = vmatprep.subr.bf16.mxu0 0
        %2684 = vmatpush1.bf16.msra.mxu0 0
        %2685 = vmatprep.subr.bf16.mxu0 0
        %2686 = vmatpush1.bf16.msra.mxu0 0
        %2687 = vmatprep.subr.bf16.mxu0 0
        %2688 = vmatpush1.bf16.msra.mxu0 0
        %2689 = vmatprep.subr.bf16.mxu0 0
        %2690 = vmatpush1.bf16.msra.mxu0 0
        %2691 = vmatprep.subr.bf16.mxu0 0
        %2692 = vmatpush1.bf16.msra.mxu0 0
        %2693 = vmatprep.subr.bf16.mxu0 0
        %2694 = vmatpush1.bf16.msra.mxu0 0
        %2695 = vmatprep.subr.bf16.mxu0 0
        %2696 = vmatpush1.bf16.msra.mxu0 0
        %2697 = vmatprep.subr.bf16.mxu0 0
        %2698 = vmatpush1.bf16.msra.mxu0 0
        %2699 = vmatprep.subr.bf16.mxu0 0
        %2700 = vmatpush1.bf16.msra.mxu0 0
        %2701 = vmatprep.subr.bf16.mxu0 0
        %2702 = vmatpush1.bf16.msra.mxu0 0
        %2703 = vmatprep.subr.bf16.mxu0 0
        %2704 = vmatpush1.bf16.msra.mxu0 0
        %2705 = vmatprep.subr.bf16.mxu0 0
        %2706 = vmatpush1.bf16.msra.mxu0 0
        %2707 = vmatprep.subr.bf16.mxu0 0
        %2708 = vmatpush1.bf16.msra.mxu0 0
        %2709 = vmatprep.subr.bf16.mxu0 0
        %2710 = vmatpush1.bf16.msra.mxu0 0
        %2711 = vmatprep.mubr.bf16.mxu0 0
        %2712 = vmatmul.mubr.bf16.gmra.mrb[0].mxu0 %v2674
        %v2713 = vpop.f32.mrb[0].mxu0
        %v2714 = vadd.f32 0.0, %v2713
        %v2715 = vpop.f32.mrb[0].mxu0
        %v2716 = vpop.f32.mrb[0].mxu0
        %v2717 = vpop.f32.mrb[0].mxu0
        %2718 = vdwg.mxu0
        %v2719 = vpack.c.bf16 %v2576, %v2576
        %v2720 = vpack.c.bf16 %v2622, %v2622
        %v2721 = vpack.c.bf16 %v2668, %v2668
        %v2722 = vpack.c.bf16 %v2714, %v2714
        %v2724 = vsel %vm2297, %v2719, 0
        %v2727 = vsel %vm2537, %v2278, 0
        %2729 = vmatprep.subr.bf16.mxu0 0
        %2730 = vmatpush1.bf16.msra.mxu0 %v2727
        %2731 = vmatprep.subr.bf16.mxu0 0
        %2732 = vmatpush1.bf16.msra.mxu0 0
        %2733 = vmatprep.subr.bf16.mxu0 0
        %2734 = vmatpush1.bf16.msra.mxu0 0
        %2735 = vmatprep.subr.bf16.mxu0 0
        %2736 = vmatpush1.bf16.msra.mxu0 0
        %2737 = vmatprep.subr.bf16.mxu0 0
        %2738 = vmatpush1.bf16.msra.mxu0 0
        %2739 = vmatprep.subr.bf16.mxu0 0
        %2740 = vmatpush1.bf16.msra.mxu0 0
        %2741 = vmatprep.subr.bf16.mxu0 0
        %2742 = vmatpush1.bf16.msra.mxu0 0
        %2743 = vmatprep.subr.bf16.mxu0 0
        %2744 = vmatpush1.bf16.msra.mxu0 0
        %2745 = vmatprep.subr.bf16.mxu0 0
        %2746 = vmatpush1.bf16.msra.mxu0 0
        %2747 = vmatprep.subr.bf16.mxu0 0
        %2748 = vmatpush1.bf16.msra.mxu0 0
        %2749 = vmatprep.subr.bf16.mxu0 0
        %2750 = vmatpush1.bf16.msra.mxu0 0
        %2751 = vmatprep.subr.bf16.mxu0 0
        %2752 = vmatpush1.bf16.msra.mxu0 0
        %2753 = vmatprep.subr.bf16.mxu0 0
        %2754 = vmatpush1.bf16.msra.mxu0 0
        %2755 = vmatprep.subr.bf16.mxu0 0
        %2756 = vmatpush1.bf16.msra.mxu0 0
        %2757 = vmatprep.subr.bf16.mxu0 0
        %2758 = vmatpush1.bf16.msra.mxu0 0
        %2759 = vmatprep.subr.bf16.mxu0 0
        %2760 = vmatpush1.bf16.msra.mxu0 0
        %2761 = vmatprep.mubr.bf16.mxu0 0
        %2762 = vmatmul.mubr.bf16.gmra.mrb[0].mxu0 %v2724
        %v2763 = vpop.f32.mrb[0].mxu0
        %v2764 = vadd.f32 0.0, %v2763
        %v2765 = vpop.f32.mrb[0].mxu0
        %v2766 = vpop.f32.mrb[0].mxu0
        %v2767 = vpop.f32.mrb[0].mxu0
        %2768 = vdwg.mxu0
        %v2770 = vsel %vm2297, %v2720, 0
        %v2773 = vsel %vm2537, %v2279, 0
        %2775 = vmatprep.subr.bf16.mxu0 0
        %2776 = vmatpush1.bf16.msra.mxu0 %v2773
        %2777 = vmatprep.subr.bf16.mxu0 0
        %2778 = vmatpush1.bf16.msra.mxu0 0
        %2779 = vmatprep.subr.bf16.mxu0 0
        %2780 = vmatpush1.bf16.msra.mxu0 0
        %2781 = vmatprep.subr.bf16.mxu0 0
        %2782 = vmatpush1.bf16.msra.mxu0 0
        %2783 = vmatprep.subr.bf16.mxu0 0
        %2784 = vmatpush1.bf16.msra.mxu0 0
        %2785 = vmatprep.subr.bf16.mxu0 0
        %2786 = vmatpush1.bf16.msra.mxu0 0
        %2787 = vmatprep.subr.bf16.mxu0 0
        %2788 = vmatpush1.bf16.msra.mxu0 0
        %2789 = vmatprep.subr.bf16.mxu0 0
        %2790 = vmatpush1.bf16.msra.mxu0 0
        %2791 = vmatprep.subr.bf16.mxu0 0
        %2792 = vmatpush1.bf16.msra.mxu0 0
        %2793 = vmatprep.subr.bf16.mxu0 0
        %2794 = vmatpush1.bf16.msra.mxu0 0
        %2795 = vmatprep.subr.bf16.mxu0 0
        %2796 = vmatpush1.bf16.msra.mxu0 0
        %2797 = vmatprep.subr.bf16.mxu0 0
        %2798 = vmatpush1.bf16.msra.mxu0 0
        %2799 = vmatprep.subr.bf16.mxu0 0
        %2800 = vmatpush1.bf16.msra.mxu0 0
        %2801 = vmatprep.subr.bf16.mxu0 0
        %2802 = vmatpush1.bf16.msra.mxu0 0
        %2803 = vmatprep.subr.bf16.mxu0 0
        %2804 = vmatpush1.bf16.msra.mxu0 0
        %2805 = vmatprep.subr.bf16.mxu0 0
        %2806 = vmatpush1.bf16.msra.mxu0 0
        %2807 = vmatprep.mubr.bf16.mxu0 0
        %2808 = vmatmul.mubr.bf16.gmra.mrb[0].mxu0 %v2770
        %v2809 = vpop.f32.mrb[0].mxu0
        %v2810 = vadd.f32 0.0, %v2809
        %v2811 = vpop.f32.mrb[0].mxu0
        %v2812 = vpop.f32.mrb[0].mxu0
        %v2813 = vpop.f32.mrb[0].mxu0
        %2814 = vdwg.mxu0
        %v2816 = vsel %vm2297, %v2721, 0
        %v2819 = vsel %vm2537, %v2280, 0
        %2821 = vmatprep.subr.bf16.mxu0 0
        %2822 = vmatpush1.bf16.msra.mxu0 %v2819
        %2823 = vmatprep.subr.bf16.mxu0 0
        %2824 = vmatpush1.bf16.msra.mxu0 0
        %2825 = vmatprep.subr.bf16.mxu0 0
        %2826 = vmatpush1.bf16.msra.mxu0 0
        %2827 = vmatprep.subr.bf16.mxu0 0
        %2828 = vmatpush1.bf16.msra.mxu0 0
        %2829 = vmatprep.subr.bf16.mxu0 0
        %2830 = vmatpush1.bf16.msra.mxu0 0
        %2831 = vmatprep.subr.bf16.mxu0 0
        %2832 = vmatpush1.bf16.msra.mxu0 0
        %2833 = vmatprep.subr.bf16.mxu0 0
        %2834 = vmatpush1.bf16.msra.mxu0 0
        %2835 = vmatprep.subr.bf16.mxu0 0
        %2836 = vmatpush1.bf16.msra.mxu0 0
        %2837 = vmatprep.subr.bf16.mxu0 0
        %2838 = vmatpush1.bf16.msra.mxu0 0
        %2839 = vmatprep.subr.bf16.mxu0 0
        %2840 = vmatpush1.bf16.msra.mxu0 0
        %2841 = vmatprep.subr.bf16.mxu0 0
        %2842 = vmatpush1.bf16.msra.mxu0 0
        %2843 = vmatprep.subr.bf16.mxu0 0
        %2844 = vmatpush1.bf16.msra.mxu0 0
        %2845 = vmatprep.subr.bf16.mxu0 0
        %2846 = vmatpush1.bf16.msra.mxu0 0
        %2847 = vmatprep.subr.bf16.mxu0 0
        %2848 = vmatpush1.bf16.msra.mxu0 0
        %2849 = vmatprep.subr.bf16.mxu0 0
        %2850 = vmatpush1.bf16.msra.mxu0 0
        %2851 = vmatprep.subr.bf16.mxu0 0
        %2852 = vmatpush1.bf16.msra.mxu0 0
        %2853 = vmatprep.mubr.bf16.mxu0 0
        %2854 = vmatmul.mubr.bf16.gmra.mrb[0].mxu0 %v2816
        %v2855 = vpop.f32.mrb[0].mxu0
        %v2856 = vadd.f32 0.0, %v2855
        %v2857 = vpop.f32.mrb[0].mxu0
        %v2858 = vpop.f32.mrb[0].mxu0
        %v2859 = vpop.f32.mrb[0].mxu0
        %2860 = vdwg.mxu0
        %v2862 = vsel %vm2297, %v2722, 0
        %v2865 = vsel %vm2537, %v2281, 0
        %2867 = vmatprep.subr.bf16.mxu0 0
        %2868 = vmatpush1.bf16.msra.mxu0 %v2865
        %2869 = vmatprep.subr.bf16.mxu0 0
        %2870 = vmatpush1.bf16.msra.mxu0 0
        %2871 = vmatprep.subr.bf16.mxu0 0
        %2872 = vmatpush1.bf16.msra.mxu0 0
        %2873 = vmatprep.subr.bf16.mxu0 0
        %2874 = vmatpush1.bf16.msra.mxu0 0
        %2875 = vmatprep.subr.bf16.mxu0 0
        %2876 = vmatpush1.bf16.msra.mxu0 0
        %2877 = vmatprep.subr.bf16.mxu0 0
        %2878 = vmatpush1.bf16.msra.mxu0 0
        %2879 = vmatprep.subr.bf16.mxu0 0
        %2880 = vmatpush1.bf16.msra.mxu0 0
        %2881 = vmatprep.subr.bf16.mxu0 0
        %2882 = vmatpush1.bf16.msra.mxu0 0
        %2883 = vmatprep.subr.bf16.mxu0 0
        %2884 = vmatpush1.bf16.msra.mxu0 0
        %2885 = vmatprep.subr.bf16.mxu0 0
        %2886 = vmatpush1.bf16.msra.mxu0 0
        %2887 = vmatprep.subr.bf16.mxu0 0
        %2888 = vmatpush1.bf16.msra.mxu0 0
        %2889 = vmatprep.subr.bf16.mxu0 0
        %2890 = vmatpush1.bf16.msra.mxu0 0
        %2891 = vmatprep.subr.bf16.mxu0 0
        %2892 = vmatpush1.bf16.msra.mxu0 0
        %2893 = vmatprep.subr.bf16.mxu0 0
        %2894 = vmatpush1.bf16.msra.mxu0 0
        %2895 = vmatprep.subr.bf16.mxu0 0
        %2896 = vmatpush1.bf16.msra.mxu0 0
        %2897 = vmatprep.subr.bf16.mxu0 0
        %2898 = vmatpush1.bf16.msra.mxu0 0
        %2899 = vmatprep.mubr.bf16.mxu0 0
        %2900 = vmatmul.mubr.bf16.gmra.mrb[0].mxu0 %v2862
        %v2901 = vpop.f32.mrb[0].mxu0
        %v2902 = vadd.f32 0.0, %v2901
        %v2903 = vpop.f32.mrb[0].mxu0
        %v2904 = vpop.f32.mrb[0].mxu0
        %v2905 = vpop.f32.mrb[0].mxu0
        %2906 = vdwg.mxu0
        %v2907 = vsel %vm903, %v2764, 0.0
        %v2908 = vsel %vm903, %v2810, 0.0
        %v2909 = vadd.f32 %v2907, %v2908
        %v2910 = vsel %vm903, %v2856, 0.0
        %v2911 = vadd.f32 %v2909, %v2910
        %v2912 = vsel %vm903, %v2902, 0.0
        %v2913 = vadd.f32 %v2911, %v2912
        %v2915 = vlaneseq
        %v2916 = vshrl.u32 %v2915, 7
        %v2917 = vsub.s32 0, %v2916
        %v2918 = vrot.slane %v2282, %v2917
        %v2920 = vadd.f32 %v2913, %v2918
        %s2921 = scalar_lea.vmem %s19, 16
        %v2922 = vld [vmem:[%s2921] sm:$0xf]
        %v2923 = vld [vmem:[%s2921 + $0x4] sm:$0xf]
        %v2924 = vld [vmem:[%s2921 + $0x8] sm:$0xf]
        %v2925 = vld [vmem:[%s2921 + $0xc] sm:$0xf]
        %s2926 = scalar_lea.vmem %s20, 1
        %v2927 = vld [vmem:[%s2926] sm:$0x1]
        %v2928 = vpack.c.bf16 %v1605, %v1605
        %v2929 = vpack.c.bf16 %v1657, %v1657
        %v2930 = vpack.c.bf16 %v1709, %v1709
        %v2931 = vpack.c.bf16 %v1761, %v1761
        %2933 = vrot.lane.b32.xlu0 %v2283, 120
        %v2934 = vpop.permute.xlu0 %2933
        %v2936 = vsel %vm2297, %v2934, 0
        %v2939 = vsel %vm2297, %v2928, 0
        %2941 = vmatprep.subr.bf16.mxu0 0
        %2942 = vmatpush1.bf16.xpose.msra.mxu0 %v2939
        %2943 = vmatprep.subr.bf16.mxu0 0
        %2944 = vmatpush1.bf16.xpose.msra.mxu0 0
        %2945 = vmatprep.subr.bf16.mxu0 0
        %2946 = vmatpush1.bf16.xpose.msra.mxu0 0
        %2947 = vmatprep.subr.bf16.mxu0 0
        %2948 = vmatpush1.bf16.xpose.msra.mxu0 0
        %2949 = vmatprep.subr.bf16.mxu0 0
        %2950 = vmatpush1.bf16.xpose.msra.mxu0 0
        %2951 = vmatprep.subr.bf16.mxu0 0
        %2952 = vmatpush1.bf16.xpose.msra.mxu0 0
        %2953 = vmatprep.subr.bf16.mxu0 0
        %2954 = vmatpush1.bf16.xpose.msra.mxu0 0
        %2955 = vmatprep.subr.bf16.mxu0 0
        %2956 = vmatpush1.bf16.xpose.msra.mxu0 0
        %2957 = vmatprep.subr.bf16.mxu0 0
        %2958 = vmatpush1.bf16.xpose.msra.mxu0 0
        %2959 = vmatprep.subr.bf16.mxu0 0
        %2960 = vmatpush1.bf16.xpose.msra.mxu0 0
        %2961 = vmatprep.subr.bf16.mxu0 0
        %2962 = vmatpush1.bf16.xpose.msra.mxu0 0
        %2963 = vmatprep.subr.bf16.mxu0 0
        %2964 = vmatpush1.bf16.xpose.msra.mxu0 0
        %2965 = vmatprep.subr.bf16.mxu0 0
        %2966 = vmatpush1.bf16.xpose.msra.mxu0 0
        %2967 = vmatprep.subr.bf16.mxu0 0
        %2968 = vmatpush1.bf16.xpose.msra.mxu0 0
        %2969 = vmatprep.subr.bf16.mxu0 0
        %2970 = vmatpush1.bf16.xpose.msra.mxu0 0
        %2971 = vmatprep.subr.bf16.mxu0 0
        %2972 = vmatpush1.bf16.xpose.msra.mxu0 0
        %2973 = vmatprep.mubr.bf16.mxu0 0
        %2974 = vmatmul.mubr.bf16.gmra.mrb[0].mxu0 %v2936
        %v2975 = vpop.f32.mrb[0].mxu0
        %v2976 = vadd.f32 %v2295, %v2975
        %v2977 = vpop.f32.mrb[0].mxu0
        %v2978 = vpop.f32.mrb[0].mxu0
        %v2979 = vpop.f32.mrb[0].mxu0
        %2980 = vdwg.mxu0
        %2982 = vrot.lane.b32.xlu0 %v2284, 120
        %v2983 = vpop.permute.xlu0 %2982
        %v2985 = vsel %vm2297, %v2983, 0
        %v2988 = vsel %vm2297, %v2929, 0
        %2990 = vmatprep.subr.bf16.mxu0 0
        %2991 = vmatpush1.bf16.xpose.msra.mxu0 %v2988
        %2992 = vmatprep.subr.bf16.mxu0 0
        %2993 = vmatpush1.bf16.xpose.msra.mxu0 0
        %2994 = vmatprep.subr.bf16.mxu0 0
        %2995 = vmatpush1.bf16.xpose.msra.mxu0 0
        %2996 = vmatprep.subr.bf16.mxu0 0
        %2997 = vmatpush1.bf16.xpose.msra.mxu0 0
        %2998 = vmatprep.subr.bf16.mxu0 0
        %2999 = vmatpush1.bf16.xpose.msra.mxu0 0
        %3000 = vmatprep.subr.bf16.mxu0 0
        %3001 = vmatpush1.bf16.xpose.msra.mxu0 0
        %3002 = vmatprep.subr.bf16.mxu0 0
        %3003 = vmatpush1.bf16.xpose.msra.mxu0 0
        %3004 = vmatprep.subr.bf16.mxu0 0
        %3005 = vmatpush1.bf16.xpose.msra.mxu0 0
        %3006 = vmatprep.subr.bf16.mxu0 0
        %3007 = vmatpush1.bf16.xpose.msra.mxu0 0
        %3008 = vmatprep.subr.bf16.mxu0 0
        %3009 = vmatpush1.bf16.xpose.msra.mxu0 0
        %3010 = vmatprep.subr.bf16.mxu0 0
        %3011 = vmatpush1.bf16.xpose.msra.mxu0 0
        %3012 = vmatprep.subr.bf16.mxu0 0
        %3013 = vmatpush1.bf16.xpose.msra.mxu0 0
        %3014 = vmatprep.subr.bf16.mxu0 0
        %3015 = vmatpush1.bf16.xpose.msra.mxu0 0
        %3016 = vmatprep.subr.bf16.mxu0 0
        %3017 = vmatpush1.bf16.xpose.msra.mxu0 0
        %3018 = vmatprep.subr.bf16.mxu0 0
        %3019 = vmatpush1.bf16.xpose.msra.mxu0 0
        %3020 = vmatprep.subr.bf16.mxu0 0
        %3021 = vmatpush1.bf16.xpose.msra.mxu0 0
        %3022 = vmatprep.mubr.bf16.mxu0 0
        %3023 = vmatmul.mubr.bf16.gmra.mrb[0].mxu0 %v2985
        %v3024 = vpop.f32.mrb[0].mxu0
        %v3025 = vadd.f32 %v2295, %v3024
        %v3026 = vpop.f32.mrb[0].mxu0
        %v3027 = vpop.f32.mrb[0].mxu0
        %v3028 = vpop.f32.mrb[0].mxu0
        %3029 = vdwg.mxu0
        %3031 = vrot.lane.b32.xlu0 %v2285, 120
        %v3032 = vpop.permute.xlu0 %3031
        %v3034 = vsel %vm2297, %v3032, 0
        %v3037 = vsel %vm2297, %v2930, 0
        %3039 = vmatprep.subr.bf16.mxu0 0
        %3040 = vmatpush1.bf16.xpose.msra.mxu0 %v3037
        %3041 = vmatprep.subr.bf16.mxu0 0
        %3042 = vmatpush1.bf16.xpose.msra.mxu0 0
        %3043 = vmatprep.subr.bf16.mxu0 0
        %3044 = vmatpush1.bf16.xpose.msra.mxu0 0
        %3045 = vmatprep.subr.bf16.mxu0 0
        %3046 = vmatpush1.bf16.xpose.msra.mxu0 0
        %3047 = vmatprep.subr.bf16.mxu0 0
        %3048 = vmatpush1.bf16.xpose.msra.mxu0 0
        %3049 = vmatprep.subr.bf16.mxu0 0
        %3050 = vmatpush1.bf16.xpose.msra.mxu0 0
        %3051 = vmatprep.subr.bf16.mxu0 0
        %3052 = vmatpush1.bf16.xpose.msra.mxu0 0
        %3053 = vmatprep.subr.bf16.mxu0 0
        %3054 = vmatpush1.bf16.xpose.msra.mxu0 0
        %3055 = vmatprep.subr.bf16.mxu0 0
        %3056 = vmatpush1.bf16.xpose.msra.mxu0 0
        %3057 = vmatprep.subr.bf16.mxu0 0
        %3058 = vmatpush1.bf16.xpose.msra.mxu0 0
        %3059 = vmatprep.subr.bf16.mxu0 0
        %3060 = vmatpush1.bf16.xpose.msra.mxu0 0
        %3061 = vmatprep.subr.bf16.mxu0 0
        %3062 = vmatpush1.bf16.xpose.msra.mxu0 0
        %3063 = vmatprep.subr.bf16.mxu0 0
        %3064 = vmatpush1.bf16.xpose.msra.mxu0 0
        %3065 = vmatprep.subr.bf16.mxu0 0
        %3066 = vmatpush1.bf16.xpose.msra.mxu0 0
        %3067 = vmatprep.subr.bf16.mxu0 0
        %3068 = vmatpush1.bf16.xpose.msra.mxu0 0
        %3069 = vmatprep.subr.bf16.mxu0 0
        %3070 = vmatpush1.bf16.xpose.msra.mxu0 0
        %3071 = vmatprep.mubr.bf16.mxu0 0
        %3072 = vmatmul.mubr.bf16.gmra.mrb[0].mxu0 %v3034
        %v3073 = vpop.f32.mrb[0].mxu0
        %v3074 = vadd.f32 %v2295, %v3073
        %v3075 = vpop.f32.mrb[0].mxu0
        %v3076 = vpop.f32.mrb[0].mxu0
        %v3077 = vpop.f32.mrb[0].mxu0
        %3078 = vdwg.mxu0
        %3080 = vrot.lane.b32.xlu0 %v2286, 120
        %v3081 = vpop.permute.xlu0 %3080
        %v3083 = vsel %vm2297, %v3081, 0
        %v3086 = vsel %vm2297, %v2931, 0
        %3088 = vmatprep.subr.bf16.mxu0 0
        %3089 = vmatpush1.bf16.xpose.msra.mxu0 %v3086
        %3090 = vmatprep.subr.bf16.mxu0 0
        %3091 = vmatpush1.bf16.xpose.msra.mxu0 0
        %3092 = vmatprep.subr.bf16.mxu0 0
        %3093 = vmatpush1.bf16.xpose.msra.mxu0 0
        %3094 = vmatprep.subr.bf16.mxu0 0
        %3095 = vmatpush1.bf16.xpose.msra.mxu0 0
        %3096 = vmatprep.subr.bf16.mxu0 0
        %3097 = vmatpush1.bf16.xpose.msra.mxu0 0
        %3098 = vmatprep.subr.bf16.mxu0 0
        %3099 = vmatpush1.bf16.xpose.msra.mxu0 0
        %3100 = vmatprep.subr.bf16.mxu0 0
        %3101 = vmatpush1.bf16.xpose.msra.mxu0 0
        %3102 = vmatprep.subr.bf16.mxu0 0
        %3103 = vmatpush1.bf16.xpose.msra.mxu0 0
        %3104 = vmatprep.subr.bf16.mxu0 0
        %3105 = vmatpush1.bf16.xpose.msra.mxu0 0
        %3106 = vmatprep.subr.bf16.mxu0 0
        %3107 = vmatpush1.bf16.xpose.msra.mxu0 0
        %3108 = vmatprep.subr.bf16.mxu0 0
        %3109 = vmatpush1.bf16.xpose.msra.mxu0 0
        %3110 = vmatprep.subr.bf16.mxu0 0
        %3111 = vmatpush1.bf16.xpose.msra.mxu0 0
        %3112 = vmatprep.subr.bf16.mxu0 0
        %3113 = vmatpush1.bf16.xpose.msra.mxu0 0
        %3114 = vmatprep.subr.bf16.mxu0 0
        %3115 = vmatpush1.bf16.xpose.msra.mxu0 0
        %3116 = vmatprep.subr.bf16.mxu0 0
        %3117 = vmatpush1.bf16.xpose.msra.mxu0 0
        %3118 = vmatprep.subr.bf16.mxu0 0
        %3119 = vmatpush1.bf16.xpose.msra.mxu0 0
        %3120 = vmatprep.mubr.bf16.mxu0 0
        %3121 = vmatmul.mubr.bf16.gmra.mrb[0].mxu0 %v3083
        %v3122 = vpop.f32.mrb[0].mxu0
        %v3123 = vadd.f32 %v2295, %v3122
        %v3124 = vpop.f32.mrb[0].mxu0
        %v3125 = vpop.f32.mrb[0].mxu0
        %v3126 = vpop.f32.mrb[0].mxu0
        %3127 = vdwg.mxu0
        %v3128 = vsel %vm2297, %v2976, -inf
        %3129 = vmax.xlane.f32.xlu0 %v3128
        %v3130 = vpop.xlane.xlu0 %3129
        %v3131 = vsel %vm2297, %v3025, -inf
        %3132 = vmax.xlane.f32.xlu0 %v3131
        %v3133 = vpop.xlane.xlu0 %3132
        %v3134 = vsel %vm2297, %v3074, -inf
        %3135 = vmax.xlane.f32.xlu0 %v3134
        %v3136 = vpop.xlane.xlu0 %3135
        %v3137 = vsel %vm2297, %v3123, -inf
        %3138 = vmax.xlane.f32.xlu0 %v3137
        %v3139 = vpop.xlane.xlu0 %3138
        %v3140 = vsub.f32 %v2976, %v3130
        %v3141 = vsub.f32 %v3025, %v3133
        %v3142 = vsub.f32 %v3074, %v3136
        %v3143 = vsub.f32 %v3123, %v3139
        %v3144 = vmul.f32 %v3140, 1.442695
        %v3145 = vpow.pop %v3144
        %v3146 = vmul.f32 %v3141, 1.442695
        %v3147 = vpow.pop %v3146
        %v3148 = vmul.f32 %v3142, 1.442695
        %v3149 = vpow.pop %v3148
        %v3150 = vmul.f32 %v3143, 1.442695
        %v3151 = vpow.pop %v3150
        %v3152 = vsel %vm2297, %v3145, 0.0
        %3153 = vadd.xlane.f32.xlu0 %v3152
        %v3154 = vpop.xlane.xlu0 %3153
        %v3155 = vsel %vm2297, %v3147, 0.0
        %3156 = vadd.xlane.f32.xlu0 %v3155
        %v3157 = vpop.xlane.xlu0 %3156
        %v3158 = vsel %vm2297, %v3149, 0.0
        %3159 = vadd.xlane.f32.xlu0 %v3158
        %v3160 = vpop.xlane.xlu0 %3159
        %v3161 = vsel %vm2297, %v3151, 0.0
        %3162 = vadd.xlane.f32.xlu0 %v3161
        %v3163 = vpop.xlane.xlu0 %3162
        %v3164 = vrcp.pop %v3154
        %v3165 = vrcp.pop %v3157
        %v3166 = vrcp.pop %v3160
        %v3167 = vrcp.pop %v3163
        %v3168 = vmul.f32 %v3145, %v3164
        %v3169 = vmul.f32 %v3147, %v3165
        %v3170 = vmul.f32 %v3149, %v3166
        %v3171 = vmul.f32 %v3151, %v3167
        %v3172 = vpack.c.bf16 %v3168, %v3168
        %v3173 = vpack.c.bf16 %v3169, %v3169
        %v3174 = vpack.c.bf16 %v3170, %v3170
        %v3175 = vpack.c.bf16 %v3171, %v3171
        %v3176 = vpack.c.bf16 %v2117, %v2117
        %v3177 = vpack.c.bf16 %v2169, %v2169
        %v3178 = vpack.c.bf16 %v2221, %v2221
        %v3179 = vpack.c.bf16 %v2273, %v2273
        %v3181 = vsel %vm2297, %v3172, 0
        %v3184 = vsel %vm2537, %v3176, 0
        %3186 = vmatprep.subr.bf16.mxu0 0
        %3187 = vmatpush1.bf16.msra.mxu0 %v3184
        %3188 = vmatprep.subr.bf16.mxu0 0
        %3189 = vmatpush1.bf16.msra.mxu0 0
        %3190 = vmatprep.subr.bf16.mxu0 0
        %3191 = vmatpush1.bf16.msra.mxu0 0
        %3192 = vmatprep.subr.bf16.mxu0 0
        %3193 = vmatpush1.bf16.msra.mxu0 0
        %3194 = vmatprep.subr.bf16.mxu0 0
        %3195 = vmatpush1.bf16.msra.mxu0 0
        %3196 = vmatprep.subr.bf16.mxu0 0
        %3197 = vmatpush1.bf16.msra.mxu0 0
        %3198 = vmatprep.subr.bf16.mxu0 0
        %3199 = vmatpush1.bf16.msra.mxu0 0
        %3200 = vmatprep.subr.bf16.mxu0 0
        %3201 = vmatpush1.bf16.msra.mxu0 0
        %3202 = vmatprep.subr.bf16.mxu0 0
        %3203 = vmatpush1.bf16.msra.mxu0 0
        %3204 = vmatprep.subr.bf16.mxu0 0
        %3205 = vmatpush1.bf16.msra.mxu0 0
        %3206 = vmatprep.subr.bf16.mxu0 0
        %3207 = vmatpush1.bf16.msra.mxu0 0
        %3208 = vmatprep.subr.bf16.mxu0 0
        %3209 = vmatpush1.bf16.msra.mxu0 0
        %3210 = vmatprep.subr.bf16.mxu0 0
        %3211 = vmatpush1.bf16.msra.mxu0 0
        %3212 = vmatprep.subr.bf16.mxu0 0
        %3213 = vmatpush1.bf16.msra.mxu0 0
        %3214 = vmatprep.subr.bf16.mxu0 0
        %3215 = vmatpush1.bf16.msra.mxu0 0
        %3216 = vmatprep.subr.bf16.mxu0 0
        %3217 = vmatpush1.bf16.msra.mxu0 0
        %3218 = vmatprep.mubr.bf16.mxu0 0
        %3219 = vmatmul.mubr.bf16.gmra.mrb[0].mxu0 %v3181
        %v3220 = vpop.f32.mrb[0].mxu0
        %v3221 = vadd.f32 0.0, %v3220
        %v3222 = vpop.f32.mrb[0].mxu0
        %v3223 = vpop.f32.mrb[0].mxu0
        %v3224 = vpop.f32.mrb[0].mxu0
        %3225 = vdwg.mxu0
        %v3227 = vsel %vm2297, %v3173, 0
        %v3230 = vsel %vm2537, %v3177, 0
        %3232 = vmatprep.subr.bf16.mxu0 0
        %3233 = vmatpush1.bf16.msra.mxu0 %v3230
        %3234 = vmatprep.subr.bf16.mxu0 0
        %3235 = vmatpush1.bf16.msra.mxu0 0
        %3236 = vmatprep.subr.bf16.mxu0 0
        %3237 = vmatpush1.bf16.msra.mxu0 0
        %3238 = vmatprep.subr.bf16.mxu0 0
        %3239 = vmatpush1.bf16.msra.mxu0 0
        %3240 = vmatprep.subr.bf16.mxu0 0
        %3241 = vmatpush1.bf16.msra.mxu0 0
        %3242 = vmatprep.subr.bf16.mxu0 0
        %3243 = vmatpush1.bf16.msra.mxu0 0
        %3244 = vmatprep.subr.bf16.mxu0 0
        %3245 = vmatpush1.bf16.msra.mxu0 0
        %3246 = vmatprep.subr.bf16.mxu0 0
        %3247 = vmatpush1.bf16.msra.mxu0 0
        %3248 = vmatprep.subr.bf16.mxu0 0
        %3249 = vmatpush1.bf16.msra.mxu0 0
        %3250 = vmatprep.subr.bf16.mxu0 0
        %3251 = vmatpush1.bf16.msra.mxu0 0
        %3252 = vmatprep.subr.bf16.mxu0 0
        %3253 = vmatpush1.bf16.msra.mxu0 0
        %3254 = vmatprep.subr.bf16.mxu0 0
        %3255 = vmatpush1.bf16.msra.mxu0 0
        %3256 = vmatprep.subr.bf16.mxu0 0
        %3257 = vmatpush1.bf16.msra.mxu0 0
        %3258 = vmatprep.subr.bf16.mxu0 0
        %3259 = vmatpush1.bf16.msra.mxu0 0
        %3260 = vmatprep.subr.bf16.mxu0 0
        %3261 = vmatpush1.bf16.msra.mxu0 0
        %3262 = vmatprep.subr.bf16.mxu0 0
        %3263 = vmatpush1.bf16.msra.mxu0 0
        %3264 = vmatprep.mubr.bf16.mxu0 0
        %3265 = vmatmul.mubr.bf16.gmra.mrb[0].mxu0 %v3227
        %v3266 = vpop.f32.mrb[0].mxu0
        %v3267 = vadd.f32 0.0, %v3266
        %v3268 = vpop.f32.mrb[0].mxu0
        %v3269 = vpop.f32.mrb[0].mxu0
        %v3270 = vpop.f32.mrb[0].mxu0
        %3271 = vdwg.mxu0
        %v3273 = vsel %vm2297, %v3174, 0
        %v3276 = vsel %vm2537, %v3178, 0
        %3278 = vmatprep.subr.bf16.mxu0 0
        %3279 = vmatpush1.bf16.msra.mxu0 %v3276
        %3280 = vmatprep.subr.bf16.mxu0 0
        %3281 = vmatpush1.bf16.msra.mxu0 0
        %3282 = vmatprep.subr.bf16.mxu0 0
        %3283 = vmatpush1.bf16.msra.mxu0 0
        %3284 = vmatprep.subr.bf16.mxu0 0
        %3285 = vmatpush1.bf16.msra.mxu0 0
        %3286 = vmatprep.subr.bf16.mxu0 0
        %3287 = vmatpush1.bf16.msra.mxu0 0
        %3288 = vmatprep.subr.bf16.mxu0 0
        %3289 = vmatpush1.bf16.msra.mxu0 0
        %3290 = vmatprep.subr.bf16.mxu0 0
        %3291 = vmatpush1.bf16.msra.mxu0 0
        %3292 = vmatprep.subr.bf16.mxu0 0
        %3293 = vmatpush1.bf16.msra.mxu0 0
        %3294 = vmatprep.subr.bf16.mxu0 0
        %3295 = vmatpush1.bf16.msra.mxu0 0
        %3296 = vmatprep.subr.bf16.mxu0 0
        %3297 = vmatpush1.bf16.msra.mxu0 0
        %3298 = vmatprep.subr.bf16.mxu0 0
        %3299 = vmatpush1.bf16.msra.mxu0 0
        %3300 = vmatprep.subr.bf16.mxu0 0
        %3301 = vmatpush1.bf16.msra.mxu0 0
        %3302 = vmatprep.subr.bf16.mxu0 0
        %3303 = vmatpush1.bf16.msra.mxu0 0
        %3304 = vmatprep.subr.bf16.mxu0 0
        %3305 = vmatpush1.bf16.msra.mxu0 0
        %3306 = vmatprep.subr.bf16.mxu0 0
        %3307 = vmatpush1.bf16.msra.mxu0 0
        %3308 = vmatprep.subr.bf16.mxu0 0
        %3309 = vmatpush1.bf16.msra.mxu0 0
        %3310 = vmatprep.mubr.bf16.mxu0 0
        %3311 = vmatmul.mubr.bf16.gmra.mrb[0].mxu0 %v3273
        %v3312 = vpop.f32.mrb[0].mxu0
        %v3313 = vadd.f32 0.0, %v3312
        %v3314 = vpop.f32.mrb[0].mxu0
        %v3315 = vpop.f32.mrb[0].mxu0
        %v3316 = vpop.f32.mrb[0].mxu0
        %3317 = vdwg.mxu0
        %v3319 = vsel %vm2297, %v3175, 0
        %v3322 = vsel %vm2537, %v3179, 0
        %3324 = vmatprep.subr.bf16.mxu0 0
        %3325 = vmatpush1.bf16.msra.mxu0 %v3322
        %3326 = vmatprep.subr.bf16.mxu0 0
        %3327 = vmatpush1.bf16.msra.mxu0 0
        %3328 = vmatprep.subr.bf16.mxu0 0
        %3329 = vmatpush1.bf16.msra.mxu0 0
        %3330 = vmatprep.subr.bf16.mxu0 0
        %3331 = vmatpush1.bf16.msra.mxu0 0
        %3332 = vmatprep.subr.bf16.mxu0 0
        %3333 = vmatpush1.bf16.msra.mxu0 0
        %3334 = vmatprep.subr.bf16.mxu0 0
        %3335 = vmatpush1.bf16.msra.mxu0 0
        %3336 = vmatprep.subr.bf16.mxu0 0
        %3337 = vmatpush1.bf16.msra.mxu0 0
        %3338 = vmatprep.subr.bf16.mxu0 0
        %3339 = vmatpush1.bf16.msra.mxu0 0
        %3340 = vmatprep.subr.bf16.mxu0 0
        %3341 = vmatpush1.bf16.msra.mxu0 0
        %3342 = vmatprep.subr.bf16.mxu0 0
        %3343 = vmatpush1.bf16.msra.mxu0 0
        %3344 = vmatprep.subr.bf16.mxu0 0
        %3345 = vmatpush1.bf16.msra.mxu0 0
        %3346 = vmatprep.subr.bf16.mxu0 0
        %3347 = vmatpush1.bf16.msra.mxu0 0
        %3348 = vmatprep.subr.bf16.mxu0 0
        %3349 = vmatpush1.bf16.msra.mxu0 0
        %3350 = vmatprep.subr.bf16.mxu0 0
        %3351 = vmatpush1.bf16.msra.mxu0 0
        %3352 = vmatprep.subr.bf16.mxu0 0
        %3353 = vmatpush1.bf16.msra.mxu0 0
        %3354 = vmatprep.subr.bf16.mxu0 0
        %3355 = vmatpush1.bf16.msra.mxu0 0
        %3356 = vmatprep.mubr.bf16.mxu0 0
        %3357 = vmatmul.mubr.bf16.gmra.mrb[0].mxu0 %v3319
        %v3358 = vpop.f32.mrb[0].mxu0
        %v3359 = vadd.f32 0.0, %v3358
        %v3360 = vpop.f32.mrb[0].mxu0
        %v3361 = vpop.f32.mrb[0].mxu0
        %v3362 = vpop.f32.mrb[0].mxu0
        %3363 = vdwg.mxu0
        %v3364 = vpack.c.bf16 %v3221, %v3221
        %v3365 = vpack.c.bf16 %v3267, %v3267
        %v3366 = vpack.c.bf16 %v3313, %v3313
        %v3367 = vpack.c.bf16 %v3359, %v3359
        %v3369 = vsel %vm2297, %v3364, 0
        %v3372 = vsel %vm2537, %v2922, 0
        %3374 = vmatprep.subr.bf16.mxu0 0
        %3375 = vmatpush1.bf16.msra.mxu0 %v3372
        %3376 = vmatprep.subr.bf16.mxu0 0
        %3377 = vmatpush1.bf16.msra.mxu0 0
        %3378 = vmatprep.subr.bf16.mxu0 0
        %3379 = vmatpush1.bf16.msra.mxu0 0
        %3380 = vmatprep.subr.bf16.mxu0 0
        %3381 = vmatpush1.bf16.msra.mxu0 0
        %3382 = vmatprep.subr.bf16.mxu0 0
        %3383 = vmatpush1.bf16.msra.mxu0 0
        %3384 = vmatprep.subr.bf16.mxu0 0
        %3385 = vmatpush1.bf16.msra.mxu0 0
        %3386 = vmatprep.subr.bf16.mxu0 0
        %3387 = vmatpush1.bf16.msra.mxu0 0
        %3388 = vmatprep.subr.bf16.mxu0 0
        %3389 = vmatpush1.bf16.msra.mxu0 0
        %3390 = vmatprep.subr.bf16.mxu0 0
        %3391 = vmatpush1.bf16.msra.mxu0 0
        %3392 = vmatprep.subr.bf16.mxu0 0
        %3393 = vmatpush1.bf16.msra.mxu0 0
        %3394 = vmatprep.subr.bf16.mxu0 0
        %3395 = vmatpush1.bf16.msra.mxu0 0
        %3396 = vmatprep.subr.bf16.mxu0 0
        %3397 = vmatpush1.bf16.msra.mxu0 0
        %3398 = vmatprep.subr.bf16.mxu0 0
        %3399 = vmatpush1.bf16.msra.mxu0 0
        %3400 = vmatprep.subr.bf16.mxu0 0
        %3401 = vmatpush1.bf16.msra.mxu0 0
        %3402 = vmatprep.subr.bf16.mxu0 0
        %3403 = vmatpush1.bf16.msra.mxu0 0
        %3404 = vmatprep.subr.bf16.mxu0 0
        %3405 = vmatpush1.bf16.msra.mxu0 0
        %3406 = vmatprep.mubr.bf16.mxu0 0
        %3407 = vmatmul.mubr.bf16.gmra.mrb[0].mxu0 %v3369
        %v3408 = vpop.f32.mrb[0].mxu0
        %v3409 = vadd.f32 0.0, %v3408
        %v3410 = vpop.f32.mrb[0].mxu0
        %v3411 = vpop.f32.mrb[0].mxu0
        %v3412 = vpop.f32.mrb[0].mxu0
        %3413 = vdwg.mxu0
        %v3415 = vsel %vm2297, %v3365, 0
        %v3418 = vsel %vm2537, %v2923, 0
        %3420 = vmatprep.subr.bf16.mxu0 0
        %3421 = vmatpush1.bf16.msra.mxu0 %v3418
        %3422 = vmatprep.subr.bf16.mxu0 0
        %3423 = vmatpush1.bf16.msra.mxu0 0
        %3424 = vmatprep.subr.bf16.mxu0 0
        %3425 = vmatpush1.bf16.msra.mxu0 0
        %3426 = vmatprep.subr.bf16.mxu0 0
        %3427 = vmatpush1.bf16.msra.mxu0 0
        %3428 = vmatprep.subr.bf16.mxu0 0
        %3429 = vmatpush1.bf16.msra.mxu0 0
        %3430 = vmatprep.subr.bf16.mxu0 0
        %3431 = vmatpush1.bf16.msra.mxu0 0
        %3432 = vmatprep.subr.bf16.mxu0 0
        %3433 = vmatpush1.bf16.msra.mxu0 0
        %3434 = vmatprep.subr.bf16.mxu0 0
        %3435 = vmatpush1.bf16.msra.mxu0 0
        %3436 = vmatprep.subr.bf16.mxu0 0
        %3437 = vmatpush1.bf16.msra.mxu0 0
        %3438 = vmatprep.subr.bf16.mxu0 0
        %3439 = vmatpush1.bf16.msra.mxu0 0
        %3440 = vmatprep.subr.bf16.mxu0 0
        %3441 = vmatpush1.bf16.msra.mxu0 0
        %3442 = vmatprep.subr.bf16.mxu0 0
        %3443 = vmatpush1.bf16.msra.mxu0 0
        %3444 = vmatprep.subr.bf16.mxu0 0
        %3445 = vmatpush1.bf16.msra.mxu0 0
        %3446 = vmatprep.subr.bf16.mxu0 0
        %3447 = vmatpush1.bf16.msra.mxu0 0
        %3448 = vmatprep.subr.bf16.mxu0 0
        %3449 = vmatpush1.bf16.msra.mxu0 0
        %3450 = vmatprep.subr.bf16.mxu0 0
        %3451 = vmatpush1.bf16.msra.mxu0 0
        %3452 = vmatprep.mubr.bf16.mxu0 0
        %3453 = vmatmul.mubr.bf16.gmra.mrb[0].mxu0 %v3415
        %v3454 = vpop.f32.mrb[0].mxu0
        %v3455 = vadd.f32 0.0, %v3454
        %v3456 = vpop.f32.mrb[0].mxu0
        %v3457 = vpop.f32.mrb[0].mxu0
        %v3458 = vpop.f32.mrb[0].mxu0
        %3459 = vdwg.mxu0
        %v3461 = vsel %vm2297, %v3366, 0
        %v3464 = vsel %vm2537, %v2924, 0
        %3466 = vmatprep.subr.bf16.mxu0 0
        %3467 = vmatpush1.bf16.msra.mxu0 %v3464
        %3468 = vmatprep.subr.bf16.mxu0 0
        %3469 = vmatpush1.bf16.msra.mxu0 0
        %3470 = vmatprep.subr.bf16.mxu0 0
        %3471 = vmatpush1.bf16.msra.mxu0 0
        %3472 = vmatprep.subr.bf16.mxu0 0
        %3473 = vmatpush1.bf16.msra.mxu0 0
        %3474 = vmatprep.subr.bf16.mxu0 0
        %3475 = vmatpush1.bf16.msra.mxu0 0
        %3476 = vmatprep.subr.bf16.mxu0 0
        %3477 = vmatpush1.bf16.msra.mxu0 0
        %3478 = vmatprep.subr.bf16.mxu0 0
        %3479 = vmatpush1.bf16.msra.mxu0 0
        %3480 = vmatprep.subr.bf16.mxu0 0
        %3481 = vmatpush1.bf16.msra.mxu0 0
        %3482 = vmatprep.subr.bf16.mxu0 0
        %3483 = vmatpush1.bf16.msra.mxu0 0
        %3484 = vmatprep.subr.bf16.mxu0 0
        %3485 = vmatpush1.bf16.msra.mxu0 0
        %3486 = vmatprep.subr.bf16.mxu0 0
        %3487 = vmatpush1.bf16.msra.mxu0 0
        %3488 = vmatprep.subr.bf16.mxu0 0
        %3489 = vmatpush1.bf16.msra.mxu0 0
        %3490 = vmatprep.subr.bf16.mxu0 0
        %3491 = vmatpush1.bf16.msra.mxu0 0
        %3492 = vmatprep.subr.bf16.mxu0 0
        %3493 = vmatpush1.bf16.msra.mxu0 0
        %3494 = vmatprep.subr.bf16.mxu0 0
        %3495 = vmatpush1.bf16.msra.mxu0 0
        %3496 = vmatprep.subr.bf16.mxu0 0
        %3497 = vmatpush1.bf16.msra.mxu0 0
        %3498 = vmatprep.mubr.bf16.mxu0 0
        %3499 = vmatmul.mubr.bf16.gmra.mrb[0].mxu0 %v3461
        %v3500 = vpop.f32.mrb[0].mxu0
        %v3501 = vadd.f32 0.0, %v3500
        %v3502 = vpop.f32.mrb[0].mxu0
        %v3503 = vpop.f32.mrb[0].mxu0
        %v3504 = vpop.f32.mrb[0].mxu0
        %3505 = vdwg.mxu0
        %v3507 = vsel %vm2297, %v3367, 0
        %v3510 = vsel %vm2537, %v2925, 0
        %3512 = vmatprep.subr.bf16.mxu0 0
        %3513 = vmatpush1.bf16.msra.mxu0 %v3510
        %3514 = vmatprep.subr.bf16.mxu0 0
        %3515 = vmatpush1.bf16.msra.mxu0 0
        %3516 = vmatprep.subr.bf16.mxu0 0
        %3517 = vmatpush1.bf16.msra.mxu0 0
        %3518 = vmatprep.subr.bf16.mxu0 0
        %3519 = vmatpush1.bf16.msra.mxu0 0
        %3520 = vmatprep.subr.bf16.mxu0 0
        %3521 = vmatpush1.bf16.msra.mxu0 0
        %3522 = vmatprep.subr.bf16.mxu0 0
        %3523 = vmatpush1.bf16.msra.mxu0 0
        %3524 = vmatprep.subr.bf16.mxu0 0
        %3525 = vmatpush1.bf16.msra.mxu0 0
        %3526 = vmatprep.subr.bf16.mxu0 0
        %3527 = vmatpush1.bf16.msra.mxu0 0
        %3528 = vmatprep.subr.bf16.mxu0 0
        %3529 = vmatpush1.bf16.msra.mxu0 0
        %3530 = vmatprep.subr.bf16.mxu0 0
        %3531 = vmatpush1.bf16.msra.mxu0 0
        %3532 = vmatprep.subr.bf16.mxu0 0
        %3533 = vmatpush1.bf16.msra.mxu0 0
        %3534 = vmatprep.subr.bf16.mxu0 0
        %3535 = vmatpush1.bf16.msra.mxu0 0
        %3536 = vmatprep.subr.bf16.mxu0 0
        %3537 = vmatpush1.bf16.msra.mxu0 0
        %3538 = vmatprep.subr.bf16.mxu0 0
        %3539 = vmatpush1.bf16.msra.mxu0 0
        %3540 = vmatprep.subr.bf16.mxu0 0
        %3541 = vmatpush1.bf16.msra.mxu0 0
        %3542 = vmatprep.subr.bf16.mxu0 0
        %3543 = vmatpush1.bf16.msra.mxu0 0
        %3544 = vmatprep.mubr.bf16.mxu0 0
        %3545 = vmatmul.mubr.bf16.gmra.mrb[0].mxu0 %v3507
        %v3546 = vpop.f32.mrb[0].mxu0
        %v3547 = vadd.f32 0.0, %v3546
        %v3548 = vpop.f32.mrb[0].mxu0
        %v3549 = vpop.f32.mrb[0].mxu0
        %v3550 = vpop.f32.mrb[0].mxu0
        %3551 = vdwg.mxu0
        %v3552 = vsel %vm903, %v3409, 0.0
        %v3553 = vsel %vm903, %v3455, 0.0
        %v3554 = vadd.f32 %v3552, %v3553
        %v3555 = vsel %vm903, %v3501, 0.0
        %v3556 = vadd.f32 %v3554, %v3555
        %v3557 = vsel %vm903, %v3547, 0.0
        %v3558 = vadd.f32 %v3556, %v3557
        %v3560 = vlaneseq
        %v3561 = vshrl.u32 %v3560, 7
        %v3562 = vsub.s32 0, %v3561
        %v3563 = vrot.slane %v2927, %v3562
        %v3565 = vadd.f32 %v3558, %v3563
        %v3566 = vadd.f32 %v900, %v2920
        %v3567 = vadd.f32 %v3566, %v3565
        %3568 = vst.msk [vmem:[%s877] sm:$0xff] %vm903, %v3567
        %v3569 = vsel %vm903, %v3567, 0.0
        %3570 = vadd.xlane.f32.xlu0 %v3569
        %v3571 = vpop.xlane.xlu0 %3570
        %v3572 = vmul.f32 %v3571, %v907
        %v3573 = vsub.f32 %v3567, %v3572
        %v3574 = vmul.f32 %v3573, %v3573
        %v3575 = vsel %vm903, %v3574, 0.0
        %3576 = vadd.xlane.f32.xlu0 %v3575
        %v3577 = vpop.xlane.xlu0 %3576
        %v3578 = vmul.f32 %v3577, %v907
        %v3579 = vadd.f32 %v3578, 1e-05
        %v3580 = vrsqrt.pop %v3579
        %v3581 = vmul.f32 %v3573, %v3580
        %s3582 = scalar_lea.vmem %s5, 3
        %v3583 = vld [vmem:[%s3582] sm:$0x1]
        %v3585 = vlaneseq
        %v3586 = vshrl.u32 %v3585, 7
        %v3587 = vsub.s32 0, %v3586
        %v3588 = vrot.slane %v3583, %v3587
        %v3590 = vmul.f32 %v3581, %v3588
        %s3591 = scalar_lea.vmem %s6, 3
        %v3592 = vld [vmem:[%s3591] sm:$0x1]
        %v3594 = vlaneseq
        %v3595 = vshrl.u32 %v3594, 7
        %v3596 = vsub.s32 0, %v3595
        %v3597 = vrot.slane %v3592, %v3596
        %v3599 = vadd.f32 %v3590, %v3597
        %v3600 = vpack.c.bf16 %v3599, %v3599
        %v3601 = vld [vmem:[%s17] sm:$0xf]
        %v3602 = vld [vmem:[%s17 + $0x4] sm:$0xf]
        %v3603 = vld [vmem:[%s17 + $0x8] sm:$0xf]
        %v3604 = vld [vmem:[%s17 + $0xc] sm:$0xf]
        %v3605 = vld [vmem:[%s17 + $0x10] sm:$0xf]
        %v3606 = vld [vmem:[%s17 + $0x14] sm:$0xf]
        %v3607 = vld [vmem:[%s17 + $0x18] sm:$0xf]
        %v3608 = vld [vmem:[%s17 + $0x1c] sm:$0xf]
        %v3609 = vld [vmem:[%s17 + $0x20] sm:$0xf]
        %v3610 = vld [vmem:[%s17 + $0x24] sm:$0xf]
        %v3611 = vld [vmem:[%s17 + $0x28] sm:$0xf]
        %v3612 = vld [vmem:[%s17 + $0x2c] sm:$0xf]
        %v3613 = vld [vmem:[%s17 + $0x30] sm:$0xf]
        %v3614 = vld [vmem:[%s17 + $0x34] sm:$0xf]
        %v3615 = vld [vmem:[%s17 + $0x38] sm:$0xf]
        %v3616 = vld [vmem:[%s17 + $0x3c] sm:$0xf]
        %v3617 = vld [vmem:[%s18] sm:$0x1]
        %v3618 = vld [vmem:[%s18 + $0x1] sm:$0x1]
        %v3619 = vld [vmem:[%s18 + $0x2] sm:$0x1]
        %v3620 = vld [vmem:[%s18 + $0x3] sm:$0x1]
        %v3625 = vlaneseq
        %v3626 = vshrl.u32 %v3625, 7
        %v3627 = vsub.s32 0, %v3626
        %v3628 = vrot.slane %v3617, %v3627
        %v3629 = vlaneseq
        %v3630 = vshrl.u32 %v3629, 7
        %v3631 = vsub.s32 0, %v3630
        %v3632 = vrot.slane %v3618, %v3631
        %v3633 = vlaneseq
        %v3634 = vshrl.u32 %v3633, 7
        %v3635 = vsub.s32 0, %v3634
        %v3636 = vrot.slane %v3619, %v3635
        %v3637 = vlaneseq
        %v3638 = vshrl.u32 %v3637, 7
        %v3639 = vsub.s32 0, %v3638
        %v3640 = vrot.slane %v3620, %v3639
        %v3649 = vunpack.c.l.b16 %v3601
        %v3650 = vunpack.c.l.b16 %v3602
        %v3651 = vunpack.c.l.b16 %v3603
        %v3652 = vunpack.c.l.b16 %v3604
        %v3653 = vpack.c.b16 %v3650, %v3649
        %v3654 = vpack.c.b16 %v3652, %v3651
        %v3658 = vsel %vm903, %v3600, 0
        %3660 = vmatprep.subr.bf16.mxu0 0
        %3661 = vmatpush1.bf16.msra.mxu0 %v3653
        %3662 = vmatprep.subr.bf16.mxu0 0
        %3663 = vmatpush1.bf16.msra.mxu0 %v3654
        %3664 = vmatprep.subr.bf16.mxu0 0
        %3665 = vmatpush1.bf16.msra.mxu0 0
        %3666 = vmatprep.subr.bf16.mxu0 0
        %3667 = vmatpush1.bf16.msra.mxu0 0
        %3668 = vmatprep.subr.bf16.mxu0 0
        %3669 = vmatpush1.bf16.msra.mxu0 0
        %3670 = vmatprep.subr.bf16.mxu0 0
        %3671 = vmatpush1.bf16.msra.mxu0 0
        %3672 = vmatprep.subr.bf16.mxu0 0
        %3673 = vmatpush1.bf16.msra.mxu0 0
        %3674 = vmatprep.subr.bf16.mxu0 0
        %3675 = vmatpush1.bf16.msra.mxu0 0
        %3676 = vmatprep.subr.bf16.mxu0 0
        %3677 = vmatpush1.bf16.msra.mxu0 0
        %3678 = vmatprep.subr.bf16.mxu0 0
        %3679 = vmatpush1.bf16.msra.mxu0 0
        %3680 = vmatprep.subr.bf16.mxu0 0
        %3681 = vmatpush1.bf16.msra.mxu0 0
        %3682 = vmatprep.subr.bf16.mxu0 0
        %3683 = vmatpush1.bf16.msra.mxu0 0
        %3684 = vmatprep.subr.bf16.mxu0 0
        %3685 = vmatpush1.bf16.msra.mxu0 0
        %3686 = vmatprep.subr.bf16.mxu0 0
        %3687 = vmatpush1.bf16.msra.mxu0 0
        %3688 = vmatprep.subr.bf16.mxu0 0
        %3689 = vmatpush1.bf16.msra.mxu0 0
        %3690 = vmatprep.subr.bf16.mxu0 0
        %3691 = vmatpush1.bf16.msra.mxu0 0
        %3692 = vmatprep.mubr.bf16.mxu0 0
        %3693 = vmatmul.mubr.bf16.gmra.mrb[0].mxu0 %v3658
        %v3694 = vpop.f32.mrb[0].mxu0
        %v3695 = vadd.f32 %v3628, %v3694
        %v3696 = vpop.f32.mrb[0].mxu0
        %v3697 = vpop.f32.mrb[0].mxu0
        %v3698 = vpop.f32.mrb[0].mxu0
        %3699 = vdwg.mxu0
        %v3704 = vunpack.c.l.b16 %v3605
        %v3705 = vunpack.c.l.b16 %v3606
        %v3706 = vunpack.c.l.b16 %v3607
        %v3707 = vunpack.c.l.b16 %v3608
        %v3708 = vpack.c.b16 %v3705, %v3704
        %v3709 = vpack.c.b16 %v3707, %v3706
        %3712 = vmatprep.subr.bf16.mxu0 0
        %3713 = vmatpush1.bf16.msra.mxu0 %v3708
        %3714 = vmatprep.subr.bf16.mxu0 0
        %3715 = vmatpush1.bf16.msra.mxu0 %v3709
        %3716 = vmatprep.subr.bf16.mxu0 0
        %3717 = vmatpush1.bf16.msra.mxu0 0
        %3718 = vmatprep.subr.bf16.mxu0 0
        %3719 = vmatpush1.bf16.msra.mxu0 0
        %3720 = vmatprep.subr.bf16.mxu0 0
        %3721 = vmatpush1.bf16.msra.mxu0 0
        %3722 = vmatprep.subr.bf16.mxu0 0
        %3723 = vmatpush1.bf16.msra.mxu0 0
        %3724 = vmatprep.subr.bf16.mxu0 0
        %3725 = vmatpush1.bf16.msra.mxu0 0
        %3726 = vmatprep.subr.bf16.mxu0 0
        %3727 = vmatpush1.bf16.msra.mxu0 0
        %3728 = vmatprep.subr.bf16.mxu0 0
        %3729 = vmatpush1.bf16.msra.mxu0 0
        %3730 = vmatprep.subr.bf16.mxu0 0
        %3731 = vmatpush1.bf16.msra.mxu0 0
        %3732 = vmatprep.subr.bf16.mxu0 0
        %3733 = vmatpush1.bf16.msra.mxu0 0
        %3734 = vmatprep.subr.bf16.mxu0 0
        %3735 = vmatpush1.bf16.msra.mxu0 0
        %3736 = vmatprep.subr.bf16.mxu0 0
        %3737 = vmatpush1.bf16.msra.mxu0 0
        %3738 = vmatprep.subr.bf16.mxu0 0
        %3739 = vmatpush1.bf16.msra.mxu0 0
        %3740 = vmatprep.subr.bf16.mxu0 0
        %3741 = vmatpush1.bf16.msra.mxu0 0
        %3742 = vmatprep.subr.bf16.mxu0 0
        %3743 = vmatpush1.bf16.msra.mxu0 0
        %3744 = vmatprep.mubr.bf16.mxu0 0
        %3745 = vmatmul.mubr.bf16.gmra.mrb[0].mxu0 %v3658
        %v3746 = vpop.f32.mrb[0].mxu0
        %v3747 = vadd.f32 %v3632, %v3746
        %v3748 = vpop.f32.mrb[0].mxu0
        %v3749 = vpop.f32.mrb[0].mxu0
        %v3750 = vpop.f32.mrb[0].mxu0
        %3751 = vdwg.mxu0
        %v3756 = vunpack.c.l.b16 %v3609
        %v3757 = vunpack.c.l.b16 %v3610
        %v3758 = vunpack.c.l.b16 %v3611
        %v3759 = vunpack.c.l.b16 %v3612
        %v3760 = vpack.c.b16 %v3757, %v3756
        %v3761 = vpack.c.b16 %v3759, %v3758
        %3764 = vmatprep.subr.bf16.mxu0 0
        %3765 = vmatpush1.bf16.msra.mxu0 %v3760
        %3766 = vmatprep.subr.bf16.mxu0 0
        %3767 = vmatpush1.bf16.msra.mxu0 %v3761
        %3768 = vmatprep.subr.bf16.mxu0 0
        %3769 = vmatpush1.bf16.msra.mxu0 0
        %3770 = vmatprep.subr.bf16.mxu0 0
        %3771 = vmatpush1.bf16.msra.mxu0 0
        %3772 = vmatprep.subr.bf16.mxu0 0
        %3773 = vmatpush1.bf16.msra.mxu0 0
        %3774 = vmatprep.subr.bf16.mxu0 0
        %3775 = vmatpush1.bf16.msra.mxu0 0
        %3776 = vmatprep.subr.bf16.mxu0 0
        %3777 = vmatpush1.bf16.msra.mxu0 0
        %3778 = vmatprep.subr.bf16.mxu0 0
        %3779 = vmatpush1.bf16.msra.mxu0 0
        %3780 = vmatprep.subr.bf16.mxu0 0
        %3781 = vmatpush1.bf16.msra.mxu0 0
        %3782 = vmatprep.subr.bf16.mxu0 0
        %3783 = vmatpush1.bf16.msra.mxu0 0
        %3784 = vmatprep.subr.bf16.mxu0 0
        %3785 = vmatpush1.bf16.msra.mxu0 0
        %3786 = vmatprep.subr.bf16.mxu0 0
        %3787 = vmatpush1.bf16.msra.mxu0 0
        %3788 = vmatprep.subr.bf16.mxu0 0
        %3789 = vmatpush1.bf16.msra.mxu0 0
        %3790 = vmatprep.subr.bf16.mxu0 0
        %3791 = vmatpush1.bf16.msra.mxu0 0
        %3792 = vmatprep.subr.bf16.mxu0 0
        %3793 = vmatpush1.bf16.msra.mxu0 0
        %3794 = vmatprep.subr.bf16.mxu0 0
        %3795 = vmatpush1.bf16.msra.mxu0 0
        %3796 = vmatprep.mubr.bf16.mxu0 0
        %3797 = vmatmul.mubr.bf16.gmra.mrb[0].mxu0 %v3658
        %v3798 = vpop.f32.mrb[0].mxu0
        %v3799 = vadd.f32 %v3636, %v3798
        %v3800 = vpop.f32.mrb[0].mxu0
        %v3801 = vpop.f32.mrb[0].mxu0
        %v3802 = vpop.f32.mrb[0].mxu0
        %3803 = vdwg.mxu0
        %v3808 = vunpack.c.l.b16 %v3613
        %v3809 = vunpack.c.l.b16 %v3614
        %v3810 = vunpack.c.l.b16 %v3615
        %v3811 = vunpack.c.l.b16 %v3616
        %v3812 = vpack.c.b16 %v3809, %v3808
        %v3813 = vpack.c.b16 %v3811, %v3810
        %3816 = vmatprep.subr.bf16.mxu0 0
        %3817 = vmatpush1.bf16.msra.mxu0 %v3812
        %3818 = vmatprep.subr.bf16.mxu0 0
        %3819 = vmatpush1.bf16.msra.mxu0 %v3813
        %3820 = vmatprep.subr.bf16.mxu0 0
        %3821 = vmatpush1.bf16.msra.mxu0 0
        %3822 = vmatprep.subr.bf16.mxu0 0
        %3823 = vmatpush1.bf16.msra.mxu0 0
        %3824 = vmatprep.subr.bf16.mxu0 0
        %3825 = vmatpush1.bf16.msra.mxu0 0
        %3826 = vmatprep.subr.bf16.mxu0 0
        %3827 = vmatpush1.bf16.msra.mxu0 0
        %3828 = vmatprep.subr.bf16.mxu0 0
        %3829 = vmatpush1.bf16.msra.mxu0 0
        %3830 = vmatprep.subr.bf16.mxu0 0
        %3831 = vmatpush1.bf16.msra.mxu0 0
        %3832 = vmatprep.subr.bf16.mxu0 0
        %3833 = vmatpush1.bf16.msra.mxu0 0
        %3834 = vmatprep.subr.bf16.mxu0 0
        %3835 = vmatpush1.bf16.msra.mxu0 0
        %3836 = vmatprep.subr.bf16.mxu0 0
        %3837 = vmatpush1.bf16.msra.mxu0 0
        %3838 = vmatprep.subr.bf16.mxu0 0
        %3839 = vmatpush1.bf16.msra.mxu0 0
        %3840 = vmatprep.subr.bf16.mxu0 0
        %3841 = vmatpush1.bf16.msra.mxu0 0
        %3842 = vmatprep.subr.bf16.mxu0 0
        %3843 = vmatpush1.bf16.msra.mxu0 0
        %3844 = vmatprep.subr.bf16.mxu0 0
        %3845 = vmatpush1.bf16.msra.mxu0 0
        %3846 = vmatprep.subr.bf16.mxu0 0
        %3847 = vmatpush1.bf16.msra.mxu0 0
        %3848 = vmatprep.mubr.bf16.mxu0 0
        %3849 = vmatmul.mubr.bf16.gmra.mrb[0].mxu0 %v3658
        %v3850 = vpop.f32.mrb[0].mxu0
        %v3851 = vadd.f32 %v3640, %v3850
        %v3852 = vpop.f32.mrb[0].mxu0
        %v3853 = vpop.f32.mrb[0].mxu0
        %v3854 = vpop.f32.mrb[0].mxu0
        %3855 = vdwg.mxu0
        %s3856 = scalar_lea.vmem %s19, 32
        %v3857 = vld [vmem:[%s3856] sm:$0xf]
        %v3858 = vld [vmem:[%s3856 + $0x4] sm:$0xf]
        %v3859 = vld [vmem:[%s3856 + $0x8] sm:$0xf]
        %v3860 = vld [vmem:[%s3856 + $0xc] sm:$0xf]
        %s3861 = scalar_lea.vmem %s20, 2
        %v3862 = vld [vmem:[%s3861] sm:$0x1]
        %v3863 = vpack.c.bf16 %v3695, %v3695
        %v3864 = vpack.c.bf16 %v3747, %v3747
        %v3865 = vpack.c.bf16 %v3799, %v3799
        %v3866 = vpack.c.bf16 %v3851, %v3851
        %3868 = vrot.lane.b32.xlu0 %v2287, 120
        %v3869 = vpop.permute.xlu0 %3868
        %v3871 = vsel %vm2297, %v3869, 0
        %v3874 = vsel %vm2297, %v3863, 0
        %3876 = vmatprep.subr.bf16.mxu0 0
        %3877 = vmatpush1.bf16.xpose.msra.mxu0 %v3874
        %3878 = vmatprep.subr.bf16.mxu0 0
        %3879 = vmatpush1.bf16.xpose.msra.mxu0 0
        %3880 = vmatprep.subr.bf16.mxu0 0
        %3881 = vmatpush1.bf16.xpose.msra.mxu0 0
        %3882 = vmatprep.subr.bf16.mxu0 0
        %3883 = vmatpush1.bf16.xpose.msra.mxu0 0
        %3884 = vmatprep.subr.bf16.mxu0 0
        %3885 = vmatpush1.bf16.xpose.msra.mxu0 0
        %3886 = vmatprep.subr.bf16.mxu0 0
        %3887 = vmatpush1.bf16.xpose.msra.mxu0 0
        %3888 = vmatprep.subr.bf16.mxu0 0
        %3889 = vmatpush1.bf16.xpose.msra.mxu0 0
        %3890 = vmatprep.subr.bf16.mxu0 0
        %3891 = vmatpush1.bf16.xpose.msra.mxu0 0
        %3892 = vmatprep.subr.bf16.mxu0 0
        %3893 = vmatpush1.bf16.xpose.msra.mxu0 0
        %3894 = vmatprep.subr.bf16.mxu0 0
        %3895 = vmatpush1.bf16.xpose.msra.mxu0 0
        %3896 = vmatprep.subr.bf16.mxu0 0
        %3897 = vmatpush1.bf16.xpose.msra.mxu0 0
        %3898 = vmatprep.subr.bf16.mxu0 0
        %3899 = vmatpush1.bf16.xpose.msra.mxu0 0
        %3900 = vmatprep.subr.bf16.mxu0 0
        %3901 = vmatpush1.bf16.xpose.msra.mxu0 0
        %3902 = vmatprep.subr.bf16.mxu0 0
        %3903 = vmatpush1.bf16.xpose.msra.mxu0 0
        %3904 = vmatprep.subr.bf16.mxu0 0
        %3905 = vmatpush1.bf16.xpose.msra.mxu0 0
        %3906 = vmatprep.subr.bf16.mxu0 0
        %3907 = vmatpush1.bf16.xpose.msra.mxu0 0
        %3908 = vmatprep.mubr.bf16.mxu0 0
        %3909 = vmatmul.mubr.bf16.gmra.mrb[0].mxu0 %v3871
        %v3910 = vpop.f32.mrb[0].mxu0
        %v3911 = vadd.f32 0.0, %v3910
        %v3912 = vpop.f32.mrb[0].mxu0
        %v3913 = vpop.f32.mrb[0].mxu0
        %v3914 = vpop.f32.mrb[0].mxu0
        %3915 = vdwg.mxu0
        %3917 = vrot.lane.b32.xlu0 %v2288, 120
        %v3918 = vpop.permute.xlu0 %3917
        %v3920 = vsel %vm2297, %v3918, 0
        %v3923 = vsel %vm2297, %v3864, 0
        %3925 = vmatprep.subr.bf16.mxu0 0
        %3926 = vmatpush1.bf16.xpose.msra.mxu0 %v3923
        %3927 = vmatprep.subr.bf16.mxu0 0
        %3928 = vmatpush1.bf16.xpose.msra.mxu0 0
        %3929 = vmatprep.subr.bf16.mxu0 0
        %3930 = vmatpush1.bf16.xpose.msra.mxu0 0
        %3931 = vmatprep.subr.bf16.mxu0 0
        %3932 = vmatpush1.bf16.xpose.msra.mxu0 0
        %3933 = vmatprep.subr.bf16.mxu0 0
        %3934 = vmatpush1.bf16.xpose.msra.mxu0 0
        %3935 = vmatprep.subr.bf16.mxu0 0
        %3936 = vmatpush1.bf16.xpose.msra.mxu0 0
        %3937 = vmatprep.subr.bf16.mxu0 0
        %3938 = vmatpush1.bf16.xpose.msra.mxu0 0
        %3939 = vmatprep.subr.bf16.mxu0 0
        %3940 = vmatpush1.bf16.xpose.msra.mxu0 0
        %3941 = vmatprep.subr.bf16.mxu0 0
        %3942 = vmatpush1.bf16.xpose.msra.mxu0 0
        %3943 = vmatprep.subr.bf16.mxu0 0
        %3944 = vmatpush1.bf16.xpose.msra.mxu0 0
        %3945 = vmatprep.subr.bf16.mxu0 0
        %3946 = vmatpush1.bf16.xpose.msra.mxu0 0
        %3947 = vmatprep.subr.bf16.mxu0 0
        %3948 = vmatpush1.bf16.xpose.msra.mxu0 0
        %3949 = vmatprep.subr.bf16.mxu0 0
        %3950 = vmatpush1.bf16.xpose.msra.mxu0 0
        %3951 = vmatprep.subr.bf16.mxu0 0
        %3952 = vmatpush1.bf16.xpose.msra.mxu0 0
        %3953 = vmatprep.subr.bf16.mxu0 0
        %3954 = vmatpush1.bf16.xpose.msra.mxu0 0
        %3955 = vmatprep.subr.bf16.mxu0 0
        %3956 = vmatpush1.bf16.xpose.msra.mxu0 0
        %3957 = vmatprep.mubr.bf16.mxu0 0
        %3958 = vmatmul.mubr.bf16.gmra.mrb[0].mxu0 %v3920
        %v3959 = vpop.f32.mrb[0].mxu0
        %v3960 = vadd.f32 0.0, %v3959
        %v3961 = vpop.f32.mrb[0].mxu0
        %v3962 = vpop.f32.mrb[0].mxu0
        %v3963 = vpop.f32.mrb[0].mxu0
        %3964 = vdwg.mxu0
        %3966 = vrot.lane.b32.xlu0 %v2289, 120
        %v3967 = vpop.permute.xlu0 %3966
        %v3969 = vsel %vm2297, %v3967, 0
        %v3972 = vsel %vm2297, %v3865, 0
        %3974 = vmatprep.subr.bf16.mxu0 0
        %3975 = vmatpush1.bf16.xpose.msra.mxu0 %v3972
        %3976 = vmatprep.subr.bf16.mxu0 0
        %3977 = vmatpush1.bf16.xpose.msra.mxu0 0
        %3978 = vmatprep.subr.bf16.mxu0 0
        %3979 = vmatpush1.bf16.xpose.msra.mxu0 0
        %3980 = vmatprep.subr.bf16.mxu0 0
        %3981 = vmatpush1.bf16.xpose.msra.mxu0 0
        %3982 = vmatprep.subr.bf16.mxu0 0
        %3983 = vmatpush1.bf16.xpose.msra.mxu0 0
        %3984 = vmatprep.subr.bf16.mxu0 0
        %3985 = vmatpush1.bf16.xpose.msra.mxu0 0
        %3986 = vmatprep.subr.bf16.mxu0 0
        %3987 = vmatpush1.bf16.xpose.msra.mxu0 0
        %3988 = vmatprep.subr.bf16.mxu0 0
        %3989 = vmatpush1.bf16.xpose.msra.mxu0 0
        %3990 = vmatprep.subr.bf16.mxu0 0
        %3991 = vmatpush1.bf16.xpose.msra.mxu0 0
        %3992 = vmatprep.subr.bf16.mxu0 0
        %3993 = vmatpush1.bf16.xpose.msra.mxu0 0
        %3994 = vmatprep.subr.bf16.mxu0 0
        %3995 = vmatpush1.bf16.xpose.msra.mxu0 0
        %3996 = vmatprep.subr.bf16.mxu0 0
        %3997 = vmatpush1.bf16.xpose.msra.mxu0 0
        %3998 = vmatprep.subr.bf16.mxu0 0
        %3999 = vmatpush1.bf16.xpose.msra.mxu0 0
        %4000 = vmatprep.subr.bf16.mxu0 0
        %4001 = vmatpush1.bf16.xpose.msra.mxu0 0
        %4002 = vmatprep.subr.bf16.mxu0 0
        %4003 = vmatpush1.bf16.xpose.msra.mxu0 0
        %4004 = vmatprep.subr.bf16.mxu0 0
        %4005 = vmatpush1.bf16.xpose.msra.mxu0 0
        %4006 = vmatprep.mubr.bf16.mxu0 0
        %4007 = vmatmul.mubr.bf16.gmra.mrb[0].mxu0 %v3969
        %v4008 = vpop.f32.mrb[0].mxu0
        %v4009 = vadd.f32 0.0, %v4008
        %v4010 = vpop.f32.mrb[0].mxu0
        %v4011 = vpop.f32.mrb[0].mxu0
        %v4012 = vpop.f32.mrb[0].mxu0
        %4013 = vdwg.mxu0
        %4015 = vrot.lane.b32.xlu0 %v2290, 120
        %v4016 = vpop.permute.xlu0 %4015
        %v4018 = vsel %vm2297, %v4016, 0
        %v4021 = vsel %vm2297, %v3866, 0
        %4023 = vmatprep.subr.bf16.mxu0 0
        %4024 = vmatpush1.bf16.xpose.msra.mxu0 %v4021
        %4025 = vmatprep.subr.bf16.mxu0 0
        %4026 = vmatpush1.bf16.xpose.msra.mxu0 0
        %4027 = vmatprep.subr.bf16.mxu0 0
        %4028 = vmatpush1.bf16.xpose.msra.mxu0 0
        %4029 = vmatprep.subr.bf16.mxu0 0
        %4030 = vmatpush1.bf16.xpose.msra.mxu0 0
        %4031 = vmatprep.subr.bf16.mxu0 0
        %4032 = vmatpush1.bf16.xpose.msra.mxu0 0
        %4033 = vmatprep.subr.bf16.mxu0 0
        %4034 = vmatpush1.bf16.xpose.msra.mxu0 0
        %4035 = vmatprep.subr.bf16.mxu0 0
        %4036 = vmatpush1.bf16.xpose.msra.mxu0 0
        %4037 = vmatprep.subr.bf16.mxu0 0
        %4038 = vmatpush1.bf16.xpose.msra.mxu0 0
        %4039 = vmatprep.subr.bf16.mxu0 0
        %4040 = vmatpush1.bf16.xpose.msra.mxu0 0
        %4041 = vmatprep.subr.bf16.mxu0 0
        %4042 = vmatpush1.bf16.xpose.msra.mxu0 0
        %4043 = vmatprep.subr.bf16.mxu0 0
        %4044 = vmatpush1.bf16.xpose.msra.mxu0 0
        %4045 = vmatprep.subr.bf16.mxu0 0
        %4046 = vmatpush1.bf16.xpose.msra.mxu0 0
        %4047 = vmatprep.subr.bf16.mxu0 0
        %4048 = vmatpush1.bf16.xpose.msra.mxu0 0
        %4049 = vmatprep.subr.bf16.mxu0 0
        %4050 = vmatpush1.bf16.xpose.msra.mxu0 0
        %4051 = vmatprep.subr.bf16.mxu0 0
        %4052 = vmatpush1.bf16.xpose.msra.mxu0 0
        %4053 = vmatprep.subr.bf16.mxu0 0
        %4054 = vmatpush1.bf16.xpose.msra.mxu0 0
        %4055 = vmatprep.mubr.bf16.mxu0 0
        %4056 = vmatmul.mubr.bf16.gmra.mrb[0].mxu0 %v4018
        %v4057 = vpop.f32.mrb[0].mxu0
        %v4058 = vadd.f32 0.0, %v4057
        %v4059 = vpop.f32.mrb[0].mxu0
        %v4060 = vpop.f32.mrb[0].mxu0
        %v4061 = vpop.f32.mrb[0].mxu0
        %4062 = vdwg.mxu0
        %v4063 = vsel %vm2297, %v3911, -inf
        %4064 = vmax.xlane.f32.xlu0 %v4063
        %v4065 = vpop.xlane.xlu0 %4064
        %v4066 = vsel %vm2297, %v3960, -inf
        %4067 = vmax.xlane.f32.xlu0 %v4066
        %v4068 = vpop.xlane.xlu0 %4067
        %v4069 = vsel %vm2297, %v4009, -inf
        %4070 = vmax.xlane.f32.xlu0 %v4069
        %v4071 = vpop.xlane.xlu0 %4070
        %v4072 = vsel %vm2297, %v4058, -inf
        %4073 = vmax.xlane.f32.xlu0 %v4072
        %v4074 = vpop.xlane.xlu0 %4073
        %v4075 = vsub.f32 %v3911, %v4065
        %v4076 = vsub.f32 %v3960, %v4068
        %v4077 = vsub.f32 %v4009, %v4071
        %v4078 = vsub.f32 %v4058, %v4074
        %v4079 = vmul.f32 %v4075, 1.442695
        %v4080 = vpow.pop %v4079
        %v4081 = vmul.f32 %v4076, 1.442695
        %v4082 = vpow.pop %v4081
        %v4083 = vmul.f32 %v4077, 1.442695
        %v4084 = vpow.pop %v4083
        %v4085 = vmul.f32 %v4078, 1.442695
        %v4086 = vpow.pop %v4085
        %v4087 = vsel %vm2297, %v4080, 0.0
        %4088 = vadd.xlane.f32.xlu0 %v4087
        %v4089 = vpop.xlane.xlu0 %4088
        %v4090 = vsel %vm2297, %v4082, 0.0
        %4091 = vadd.xlane.f32.xlu0 %v4090
        %v4092 = vpop.xlane.xlu0 %4091
        %v4093 = vsel %vm2297, %v4084, 0.0
        %4094 = vadd.xlane.f32.xlu0 %v4093
        %v4095 = vpop.xlane.xlu0 %4094
        %v4096 = vsel %vm2297, %v4086, 0.0
        %4097 = vadd.xlane.f32.xlu0 %v4096
        %v4098 = vpop.xlane.xlu0 %4097
        %v4099 = vrcp.pop %v4089
        %v4100 = vrcp.pop %v4092
        %v4101 = vrcp.pop %v4095
        %v4102 = vrcp.pop %v4098
        %v4103 = vmul.f32 %v4080, %v4099
        %v4104 = vmul.f32 %v4082, %v4100
        %v4105 = vmul.f32 %v4084, %v4101
        %v4106 = vmul.f32 %v4086, %v4102
        %v4107 = vpack.c.bf16 %v4103, %v4103
        %v4108 = vpack.c.bf16 %v4104, %v4104
        %v4109 = vpack.c.bf16 %v4105, %v4105
        %v4110 = vpack.c.bf16 %v4106, %v4106
        %4112 = vrot.lane.b32.xlu0 %v3863, 120
        %v4113 = vpop.permute.xlu0 %4112
        %v4115 = vsel %vm2297, %v4107, 0
        %v4118 = vsel %vm2537, %v4113, 0
        %4120 = vmatprep.subr.bf16.mxu0 0
        %4121 = vmatpush1.bf16.msra.mxu0 %v4118
        %4122 = vmatprep.subr.bf16.mxu0 0
        %4123 = vmatpush1.bf16.msra.mxu0 0
        %4124 = vmatprep.subr.bf16.mxu0 0
        %4125 = vmatpush1.bf16.msra.mxu0 0
        %4126 = vmatprep.subr.bf16.mxu0 0
        %4127 = vmatpush1.bf16.msra.mxu0 0
        %4128 = vmatprep.subr.bf16.mxu0 0
        %4129 = vmatpush1.bf16.msra.mxu0 0
        %4130 = vmatprep.subr.bf16.mxu0 0
        %4131 = vmatpush1.bf16.msra.mxu0 0
        %4132 = vmatprep.subr.bf16.mxu0 0
        %4133 = vmatpush1.bf16.msra.mxu0 0
        %4134 = vmatprep.subr.bf16.mxu0 0
        %4135 = vmatpush1.bf16.msra.mxu0 0
        %4136 = vmatprep.subr.bf16.mxu0 0
        %4137 = vmatpush1.bf16.msra.mxu0 0
        %4138 = vmatprep.subr.bf16.mxu0 0
        %4139 = vmatpush1.bf16.msra.mxu0 0
        %4140 = vmatprep.subr.bf16.mxu0 0
        %4141 = vmatpush1.bf16.msra.mxu0 0
        %4142 = vmatprep.subr.bf16.mxu0 0
        %4143 = vmatpush1.bf16.msra.mxu0 0
        %4144 = vmatprep.subr.bf16.mxu0 0
        %4145 = vmatpush1.bf16.msra.mxu0 0
        %4146 = vmatprep.subr.bf16.mxu0 0
        %4147 = vmatpush1.bf16.msra.mxu0 0
        %4148 = vmatprep.subr.bf16.mxu0 0
        %4149 = vmatpush1.bf16.msra.mxu0 0
        %4150 = vmatprep.subr.bf16.mxu0 0
        %4151 = vmatpush1.bf16.msra.mxu0 0
        %4152 = vmatprep.mubr.bf16.mxu0 0
        %4153 = vmatmul.mubr.bf16.gmra.mrb[0].mxu0 %v4115
        %v4154 = vpop.f32.mrb[0].mxu0
        %v4155 = vadd.f32 0.0, %v4154
        %v4156 = vpop.f32.mrb[0].mxu0
        %v4157 = vpop.f32.mrb[0].mxu0
        %v4158 = vpop.f32.mrb[0].mxu0
        %4159 = vdwg.mxu0
        %4161 = vrot.lane.b32.xlu0 %v3864, 120
        %v4162 = vpop.permute.xlu0 %4161
        %v4164 = vsel %vm2297, %v4108, 0
        %v4167 = vsel %vm2537, %v4162, 0
        %4169 = vmatprep.subr.bf16.mxu0 0
        %4170 = vmatpush1.bf16.msra.mxu0 %v4167
        %4171 = vmatprep.subr.bf16.mxu0 0
        %4172 = vmatpush1.bf16.msra.mxu0 0
        %4173 = vmatprep.subr.bf16.mxu0 0
        %4174 = vmatpush1.bf16.msra.mxu0 0
        %4175 = vmatprep.subr.bf16.mxu0 0
        %4176 = vmatpush1.bf16.msra.mxu0 0
        %4177 = vmatprep.subr.bf16.mxu0 0
        %4178 = vmatpush1.bf16.msra.mxu0 0
        %4179 = vmatprep.subr.bf16.mxu0 0
        %4180 = vmatpush1.bf16.msra.mxu0 0
        %4181 = vmatprep.subr.bf16.mxu0 0
        %4182 = vmatpush1.bf16.msra.mxu0 0
        %4183 = vmatprep.subr.bf16.mxu0 0
        %4184 = vmatpush1.bf16.msra.mxu0 0
        %4185 = vmatprep.subr.bf16.mxu0 0
        %4186 = vmatpush1.bf16.msra.mxu0 0
        %4187 = vmatprep.subr.bf16.mxu0 0
        %4188 = vmatpush1.bf16.msra.mxu0 0
        %4189 = vmatprep.subr.bf16.mxu0 0
        %4190 = vmatpush1.bf16.msra.mxu0 0
        %4191 = vmatprep.subr.bf16.mxu0 0
        %4192 = vmatpush1.bf16.msra.mxu0 0
        %4193 = vmatprep.subr.bf16.mxu0 0
        %4194 = vmatpush1.bf16.msra.mxu0 0
        %4195 = vmatprep.subr.bf16.mxu0 0
        %4196 = vmatpush1.bf16.msra.mxu0 0
        %4197 = vmatprep.subr.bf16.mxu0 0
        %4198 = vmatpush1.bf16.msra.mxu0 0
        %4199 = vmatprep.subr.bf16.mxu0 0
        %4200 = vmatpush1.bf16.msra.mxu0 0
        %4201 = vmatprep.mubr.bf16.mxu0 0
        %4202 = vmatmul.mubr.bf16.gmra.mrb[0].mxu0 %v4164
        %v4203 = vpop.f32.mrb[0].mxu0
        %v4204 = vadd.f32 0.0, %v4203
        %v4205 = vpop.f32.mrb[0].mxu0
        %v4206 = vpop.f32.mrb[0].mxu0
        %v4207 = vpop.f32.mrb[0].mxu0
        %4208 = vdwg.mxu0
        %4210 = vrot.lane.b32.xlu0 %v3865, 120
        %v4211 = vpop.permute.xlu0 %4210
        %v4213 = vsel %vm2297, %v4109, 0
        %v4216 = vsel %vm2537, %v4211, 0
        %4218 = vmatprep.subr.bf16.mxu0 0
        %4219 = vmatpush1.bf16.msra.mxu0 %v4216
        %4220 = vmatprep.subr.bf16.mxu0 0
        %4221 = vmatpush1.bf16.msra.mxu0 0
        %4222 = vmatprep.subr.bf16.mxu0 0
        %4223 = vmatpush1.bf16.msra.mxu0 0
        %4224 = vmatprep.subr.bf16.mxu0 0
        %4225 = vmatpush1.bf16.msra.mxu0 0
        %4226 = vmatprep.subr.bf16.mxu0 0
        %4227 = vmatpush1.bf16.msra.mxu0 0
        %4228 = vmatprep.subr.bf16.mxu0 0
        %4229 = vmatpush1.bf16.msra.mxu0 0
        %4230 = vmatprep.subr.bf16.mxu0 0
        %4231 = vmatpush1.bf16.msra.mxu0 0
        %4232 = vmatprep.subr.bf16.mxu0 0
        %4233 = vmatpush1.bf16.msra.mxu0 0
        %4234 = vmatprep.subr.bf16.mxu0 0
        %4235 = vmatpush1.bf16.msra.mxu0 0
        %4236 = vmatprep.subr.bf16.mxu0 0
        %4237 = vmatpush1.bf16.msra.mxu0 0
        %4238 = vmatprep.subr.bf16.mxu0 0
        %4239 = vmatpush1.bf16.msra.mxu0 0
        %4240 = vmatprep.subr.bf16.mxu0 0
        %4241 = vmatpush1.bf16.msra.mxu0 0
        %4242 = vmatprep.subr.bf16.mxu0 0
        %4243 = vmatpush1.bf16.msra.mxu0 0
        %4244 = vmatprep.subr.bf16.mxu0 0
        %4245 = vmatpush1.bf16.msra.mxu0 0
        %4246 = vmatprep.subr.bf16.mxu0 0
        %4247 = vmatpush1.bf16.msra.mxu0 0
        %4248 = vmatprep.subr.bf16.mxu0 0
        %4249 = vmatpush1.bf16.msra.mxu0 0
        %4250 = vmatprep.mubr.bf16.mxu0 0
        %4251 = vmatmul.mubr.bf16.gmra.mrb[0].mxu0 %v4213
        %v4252 = vpop.f32.mrb[0].mxu0
        %v4253 = vadd.f32 0.0, %v4252
        %v4254 = vpop.f32.mrb[0].mxu0
        %v4255 = vpop.f32.mrb[0].mxu0
        %v4256 = vpop.f32.mrb[0].mxu0
        %4257 = vdwg.mxu0
        %4259 = vrot.lane.b32.xlu0 %v3866, 120
        %v4260 = vpop.permute.xlu0 %4259
        %v4262 = vsel %vm2297, %v4110, 0
        %v4265 = vsel %vm2537, %v4260, 0
        %4267 = vmatprep.subr.bf16.mxu0 0
        %4268 = vmatpush1.bf16.msra.mxu0 %v4265
        %4269 = vmatprep.subr.bf16.mxu0 0
        %4270 = vmatpush1.bf16.msra.mxu0 0
        %4271 = vmatprep.subr.bf16.mxu0 0
        %4272 = vmatpush1.bf16.msra.mxu0 0
        %4273 = vmatprep.subr.bf16.mxu0 0
        %4274 = vmatpush1.bf16.msra.mxu0 0
        %4275 = vmatprep.subr.bf16.mxu0 0
        %4276 = vmatpush1.bf16.msra.mxu0 0
        %4277 = vmatprep.subr.bf16.mxu0 0
        %4278 = vmatpush1.bf16.msra.mxu0 0
        %4279 = vmatprep.subr.bf16.mxu0 0
        %4280 = vmatpush1.bf16.msra.mxu0 0
        %4281 = vmatprep.subr.bf16.mxu0 0
        %4282 = vmatpush1.bf16.msra.mxu0 0
        %4283 = vmatprep.subr.bf16.mxu0 0
        %4284 = vmatpush1.bf16.msra.mxu0 0
        %4285 = vmatprep.subr.bf16.mxu0 0
        %4286 = vmatpush1.bf16.msra.mxu0 0
        %4287 = vmatprep.subr.bf16.mxu0 0
        %4288 = vmatpush1.bf16.msra.mxu0 0
        %4289 = vmatprep.subr.bf16.mxu0 0
        %4290 = vmatpush1.bf16.msra.mxu0 0
        %4291 = vmatprep.subr.bf16.mxu0 0
        %4292 = vmatpush1.bf16.msra.mxu0 0
        %4293 = vmatprep.subr.bf16.mxu0 0
        %4294 = vmatpush1.bf16.msra.mxu0 0
        %4295 = vmatprep.subr.bf16.mxu0 0
        %4296 = vmatpush1.bf16.msra.mxu0 0
        %4297 = vmatprep.subr.bf16.mxu0 0
        %4298 = vmatpush1.bf16.msra.mxu0 0
        %4299 = vmatprep.mubr.bf16.mxu0 0
        %4300 = vmatmul.mubr.bf16.gmra.mrb[0].mxu0 %v4262
        %v4301 = vpop.f32.mrb[0].mxu0
        %v4302 = vadd.f32 0.0, %v4301
        %v4303 = vpop.f32.mrb[0].mxu0
        %v4304 = vpop.f32.mrb[0].mxu0
        %v4305 = vpop.f32.mrb[0].mxu0
        %4306 = vdwg.mxu0
        %v4307 = vpack.c.bf16 %v4155, %v4155
        %v4308 = vpack.c.bf16 %v4204, %v4204
        %v4309 = vpack.c.bf16 %v4253, %v4253
        %v4310 = vpack.c.bf16 %v4302, %v4302
        %v4312 = vsel %vm2297, %v4307, 0
        %v4315 = vsel %vm2537, %v3857, 0
        %4317 = vmatprep.subr.bf16.mxu0 0
        %4318 = vmatpush1.bf16.msra.mxu0 %v4315
        %4319 = vmatprep.subr.bf16.mxu0 0
        %4320 = vmatpush1.bf16.msra.mxu0 0
        %4321 = vmatprep.subr.bf16.mxu0 0
        %4322 = vmatpush1.bf16.msra.mxu0 0
        %4323 = vmatprep.subr.bf16.mxu0 0
        %4324 = vmatpush1.bf16.msra.mxu0 0
        %4325 = vmatprep.subr.bf16.mxu0 0
        %4326 = vmatpush1.bf16.msra.mxu0 0
        %4327 = vmatprep.subr.bf16.mxu0 0
        %4328 = vmatpush1.bf16.msra.mxu0 0
        %4329 = vmatprep.subr.bf16.mxu0 0
        %4330 = vmatpush1.bf16.msra.mxu0 0
        %4331 = vmatprep.subr.bf16.mxu0 0
        %4332 = vmatpush1.bf16.msra.mxu0 0
        %4333 = vmatprep.subr.bf16.mxu0 0
        %4334 = vmatpush1.bf16.msra.mxu0 0
        %4335 = vmatprep.subr.bf16.mxu0 0
        %4336 = vmatpush1.bf16.msra.mxu0 0
        %4337 = vmatprep.subr.bf16.mxu0 0
        %4338 = vmatpush1.bf16.msra.mxu0 0
        %4339 = vmatprep.subr.bf16.mxu0 0
        %4340 = vmatpush1.bf16.msra.mxu0 0
        %4341 = vmatprep.subr.bf16.mxu0 0
        %4342 = vmatpush1.bf16.msra.mxu0 0
        %4343 = vmatprep.subr.bf16.mxu0 0
        %4344 = vmatpush1.bf16.msra.mxu0 0
        %4345 = vmatprep.subr.bf16.mxu0 0
        %4346 = vmatpush1.bf16.msra.mxu0 0
        %4347 = vmatprep.subr.bf16.mxu0 0
        %4348 = vmatpush1.bf16.msra.mxu0 0
        %4349 = vmatprep.mubr.bf16.mxu0 0
        %4350 = vmatmul.mubr.bf16.gmra.mrb[0].mxu0 %v4312
        %v4351 = vpop.f32.mrb[0].mxu0
        %v4352 = vadd.f32 0.0, %v4351
        %v4353 = vpop.f32.mrb[0].mxu0
        %v4354 = vpop.f32.mrb[0].mxu0
        %v4355 = vpop.f32.mrb[0].mxu0
        %4356 = vdwg.mxu0
        %v4358 = vsel %vm2297, %v4308, 0
        %v4361 = vsel %vm2537, %v3858, 0
        %4363 = vmatprep.subr.bf16.mxu0 0
        %4364 = vmatpush1.bf16.msra.mxu0 %v4361
        %4365 = vmatprep.subr.bf16.mxu0 0
        %4366 = vmatpush1.bf16.msra.mxu0 0
        %4367 = vmatprep.subr.bf16.mxu0 0
        %4368 = vmatpush1.bf16.msra.mxu0 0
        %4369 = vmatprep.subr.bf16.mxu0 0
        %4370 = vmatpush1.bf16.msra.mxu0 0
        %4371 = vmatprep.subr.bf16.mxu0 0
        %4372 = vmatpush1.bf16.msra.mxu0 0
        %4373 = vmatprep.subr.bf16.mxu0 0
        %4374 = vmatpush1.bf16.msra.mxu0 0
        %4375 = vmatprep.subr.bf16.mxu0 0
        %4376 = vmatpush1.bf16.msra.mxu0 0
        %4377 = vmatprep.subr.bf16.mxu0 0
        %4378 = vmatpush1.bf16.msra.mxu0 0
        %4379 = vmatprep.subr.bf16.mxu0 0
        %4380 = vmatpush1.bf16.msra.mxu0 0
        %4381 = vmatprep.subr.bf16.mxu0 0
        %4382 = vmatpush1.bf16.msra.mxu0 0
        %4383 = vmatprep.subr.bf16.mxu0 0
        %4384 = vmatpush1.bf16.msra.mxu0 0
        %4385 = vmatprep.subr.bf16.mxu0 0
        %4386 = vmatpush1.bf16.msra.mxu0 0
        %4387 = vmatprep.subr.bf16.mxu0 0
        %4388 = vmatpush1.bf16.msra.mxu0 0
        %4389 = vmatprep.subr.bf16.mxu0 0
        %4390 = vmatpush1.bf16.msra.mxu0 0
        %4391 = vmatprep.subr.bf16.mxu0 0
        %4392 = vmatpush1.bf16.msra.mxu0 0
        %4393 = vmatprep.subr.bf16.mxu0 0
        %4394 = vmatpush1.bf16.msra.mxu0 0
        %4395 = vmatprep.mubr.bf16.mxu0 0
        %4396 = vmatmul.mubr.bf16.gmra.mrb[0].mxu0 %v4358
        %v4397 = vpop.f32.mrb[0].mxu0
        %v4398 = vadd.f32 0.0, %v4397
        %v4399 = vpop.f32.mrb[0].mxu0
        %v4400 = vpop.f32.mrb[0].mxu0
        %v4401 = vpop.f32.mrb[0].mxu0
        %4402 = vdwg.mxu0
        %v4404 = vsel %vm2297, %v4309, 0
        %v4407 = vsel %vm2537, %v3859, 0
        %4409 = vmatprep.subr.bf16.mxu0 0
        %4410 = vmatpush1.bf16.msra.mxu0 %v4407
        %4411 = vmatprep.subr.bf16.mxu0 0
        %4412 = vmatpush1.bf16.msra.mxu0 0
        %4413 = vmatprep.subr.bf16.mxu0 0
        %4414 = vmatpush1.bf16.msra.mxu0 0
        %4415 = vmatprep.subr.bf16.mxu0 0
        %4416 = vmatpush1.bf16.msra.mxu0 0
        %4417 = vmatprep.subr.bf16.mxu0 0
        %4418 = vmatpush1.bf16.msra.mxu0 0
        %4419 = vmatprep.subr.bf16.mxu0 0
        %4420 = vmatpush1.bf16.msra.mxu0 0
        %4421 = vmatprep.subr.bf16.mxu0 0
        %4422 = vmatpush1.bf16.msra.mxu0 0
        %4423 = vmatprep.subr.bf16.mxu0 0
        %4424 = vmatpush1.bf16.msra.mxu0 0
        %4425 = vmatprep.subr.bf16.mxu0 0
        %4426 = vmatpush1.bf16.msra.mxu0 0
        %4427 = vmatprep.subr.bf16.mxu0 0
        %4428 = vmatpush1.bf16.msra.mxu0 0
        %4429 = vmatprep.subr.bf16.mxu0 0
        %4430 = vmatpush1.bf16.msra.mxu0 0
        %4431 = vmatprep.subr.bf16.mxu0 0
        %4432 = vmatpush1.bf16.msra.mxu0 0
        %4433 = vmatprep.subr.bf16.mxu0 0
        %4434 = vmatpush1.bf16.msra.mxu0 0
        %4435 = vmatprep.subr.bf16.mxu0 0
        %4436 = vmatpush1.bf16.msra.mxu0 0
        %4437 = vmatprep.subr.bf16.mxu0 0
        %4438 = vmatpush1.bf16.msra.mxu0 0
        %4439 = vmatprep.subr.bf16.mxu0 0
        %4440 = vmatpush1.bf16.msra.mxu0 0
        %4441 = vmatprep.mubr.bf16.mxu0 0
        %4442 = vmatmul.mubr.bf16.gmra.mrb[0].mxu0 %v4404
        %v4443 = vpop.f32.mrb[0].mxu0
        %v4444 = vadd.f32 0.0, %v4443
        %v4445 = vpop.f32.mrb[0].mxu0
        %v4446 = vpop.f32.mrb[0].mxu0
        %v4447 = vpop.f32.mrb[0].mxu0
        %4448 = vdwg.mxu0
        %v4450 = vsel %vm2297, %v4310, 0
        %v4453 = vsel %vm2537, %v3860, 0
        %4455 = vmatprep.subr.bf16.mxu0 0
        %4456 = vmatpush1.bf16.msra.mxu0 %v4453
        %4457 = vmatprep.subr.bf16.mxu0 0
        %4458 = vmatpush1.bf16.msra.mxu0 0
        %4459 = vmatprep.subr.bf16.mxu0 0
        %4460 = vmatpush1.bf16.msra.mxu0 0
        %4461 = vmatprep.subr.bf16.mxu0 0
        %4462 = vmatpush1.bf16.msra.mxu0 0
        %4463 = vmatprep.subr.bf16.mxu0 0
        %4464 = vmatpush1.bf16.msra.mxu0 0
        %4465 = vmatprep.subr.bf16.mxu0 0
        %4466 = vmatpush1.bf16.msra.mxu0 0
        %4467 = vmatprep.subr.bf16.mxu0 0
        %4468 = vmatpush1.bf16.msra.mxu0 0
        %4469 = vmatprep.subr.bf16.mxu0 0
        %4470 = vmatpush1.bf16.msra.mxu0 0
        %4471 = vmatprep.subr.bf16.mxu0 0
        %4472 = vmatpush1.bf16.msra.mxu0 0
        %4473 = vmatprep.subr.bf16.mxu0 0
        %4474 = vmatpush1.bf16.msra.mxu0 0
        %4475 = vmatprep.subr.bf16.mxu0 0
        %4476 = vmatpush1.bf16.msra.mxu0 0
        %4477 = vmatprep.subr.bf16.mxu0 0
        %4478 = vmatpush1.bf16.msra.mxu0 0
        %4479 = vmatprep.subr.bf16.mxu0 0
        %4480 = vmatpush1.bf16.msra.mxu0 0
        %4481 = vmatprep.subr.bf16.mxu0 0
        %4482 = vmatpush1.bf16.msra.mxu0 0
        %4483 = vmatprep.subr.bf16.mxu0 0
        %4484 = vmatpush1.bf16.msra.mxu0 0
        %4485 = vmatprep.subr.bf16.mxu0 0
        %4486 = vmatpush1.bf16.msra.mxu0 0
        %4487 = vmatprep.mubr.bf16.mxu0 0
        %4488 = vmatmul.mubr.bf16.gmra.mrb[0].mxu0 %v4450
        %v4489 = vpop.f32.mrb[0].mxu0
        %v4490 = vadd.f32 0.0, %v4489
        %v4491 = vpop.f32.mrb[0].mxu0
        %v4492 = vpop.f32.mrb[0].mxu0
        %v4493 = vpop.f32.mrb[0].mxu0
        %4494 = vdwg.mxu0
        %v4495 = vsel %vm903, %v4352, 0.0
        %v4496 = vsel %vm903, %v4398, 0.0
        %v4497 = vadd.f32 %v4495, %v4496
        %v4498 = vsel %vm903, %v4444, 0.0
        %v4499 = vadd.f32 %v4497, %v4498
        %v4500 = vsel %vm903, %v4490, 0.0
        %v4501 = vadd.f32 %v4499, %v4500
        %v4503 = vlaneseq
        %v4504 = vshrl.u32 %v4503, 7
        %v4505 = vsub.s32 0, %v4504
        %v4506 = vrot.slane %v3862, %v4505
        %v4508 = vadd.f32 %v4501, %v4506
        %s4509 = scalar_lea.vmem %s19, 48
        %v4510 = vld [vmem:[%s4509] sm:$0xf]
        %v4511 = vld [vmem:[%s4509 + $0x4] sm:$0xf]
        %v4512 = vld [vmem:[%s4509 + $0x8] sm:$0xf]
        %v4513 = vld [vmem:[%s4509 + $0xc] sm:$0xf]
        %s4514 = scalar_lea.vmem %s20, 3
        %v4515 = vld [vmem:[%s4514] sm:$0x1]
        %4517 = vrot.lane.b32.xlu0 %v2928, 120
        %v4518 = vpop.permute.xlu0 %4517
        %4519 = vrot.lane.b32.xlu0 %v3863, 112
        %v4520 = vpop.permute.xlu0 %4519
        %v4522 = vsel %vm2297, %v4518, 0
        %v4525 = vsel %vm2297, %v4520, 0
        %4527 = vmatprep.subr.bf16.mxu0 0
        %4528 = vmatpush1.bf16.xpose.msra.mxu0 %v4525
        %4529 = vmatprep.subr.bf16.mxu0 0
        %4530 = vmatpush1.bf16.xpose.msra.mxu0 0
        %4531 = vmatprep.subr.bf16.mxu0 0
        %4532 = vmatpush1.bf16.xpose.msra.mxu0 0
        %4533 = vmatprep.subr.bf16.mxu0 0
        %4534 = vmatpush1.bf16.xpose.msra.mxu0 0
        %4535 = vmatprep.subr.bf16.mxu0 0
        %4536 = vmatpush1.bf16.xpose.msra.mxu0 0
        %4537 = vmatprep.subr.bf16.mxu0 0
        %4538 = vmatpush1.bf16.xpose.msra.mxu0 0
        %4539 = vmatprep.subr.bf16.mxu0 0
        %4540 = vmatpush1.bf16.xpose.msra.mxu0 0
        %4541 = vmatprep.subr.bf16.mxu0 0
        %4542 = vmatpush1.bf16.xpose.msra.mxu0 0
        %4543 = vmatprep.subr.bf16.mxu0 0
        %4544 = vmatpush1.bf16.xpose.msra.mxu0 0
        %4545 = vmatprep.subr.bf16.mxu0 0
        %4546 = vmatpush1.bf16.xpose.msra.mxu0 0
        %4547 = vmatprep.subr.bf16.mxu0 0
        %4548 = vmatpush1.bf16.xpose.msra.mxu0 0
        %4549 = vmatprep.subr.bf16.mxu0 0
        %4550 = vmatpush1.bf16.xpose.msra.mxu0 0
        %4551 = vmatprep.subr.bf16.mxu0 0
        %4552 = vmatpush1.bf16.xpose.msra.mxu0 0
        %4553 = vmatprep.subr.bf16.mxu0 0
        %4554 = vmatpush1.bf16.xpose.msra.mxu0 0
        %4555 = vmatprep.subr.bf16.mxu0 0
        %4556 = vmatpush1.bf16.xpose.msra.mxu0 0
        %4557 = vmatprep.subr.bf16.mxu0 0
        %4558 = vmatpush1.bf16.xpose.msra.mxu0 0
        %4559 = vmatprep.mubr.bf16.mxu0 0
        %4560 = vmatmul.mubr.bf16.gmra.mrb[0].mxu0 %v4522
        %v4561 = vpop.f32.mrb[0].mxu0
        %v4562 = vadd.f32 0.0, %v4561
        %v4563 = vpop.f32.mrb[0].mxu0
        %v4564 = vpop.f32.mrb[0].mxu0
        %v4565 = vpop.f32.mrb[0].mxu0
        %4566 = vdwg.mxu0
        %4568 = vrot.lane.b32.xlu0 %v2929, 120
        %v4569 = vpop.permute.xlu0 %4568
        %4570 = vrot.lane.b32.xlu0 %v3864, 112
        %v4571 = vpop.permute.xlu0 %4570
        %v4573 = vsel %vm2297, %v4569, 0
        %v4576 = vsel %vm2297, %v4571, 0
        %4578 = vmatprep.subr.bf16.mxu0 0
        %4579 = vmatpush1.bf16.xpose.msra.mxu0 %v4576
        %4580 = vmatprep.subr.bf16.mxu0 0
        %4581 = vmatpush1.bf16.xpose.msra.mxu0 0
        %4582 = vmatprep.subr.bf16.mxu0 0
        %4583 = vmatpush1.bf16.xpose.msra.mxu0 0
        %4584 = vmatprep.subr.bf16.mxu0 0
        %4585 = vmatpush1.bf16.xpose.msra.mxu0 0
        %4586 = vmatprep.subr.bf16.mxu0 0
        %4587 = vmatpush1.bf16.xpose.msra.mxu0 0
        %4588 = vmatprep.subr.bf16.mxu0 0
        %4589 = vmatpush1.bf16.xpose.msra.mxu0 0
        %4590 = vmatprep.subr.bf16.mxu0 0
        %4591 = vmatpush1.bf16.xpose.msra.mxu0 0
        %4592 = vmatprep.subr.bf16.mxu0 0
        %4593 = vmatpush1.bf16.xpose.msra.mxu0 0
        %4594 = vmatprep.subr.bf16.mxu0 0
        %4595 = vmatpush1.bf16.xpose.msra.mxu0 0
        %4596 = vmatprep.subr.bf16.mxu0 0
        %4597 = vmatpush1.bf16.xpose.msra.mxu0 0
        %4598 = vmatprep.subr.bf16.mxu0 0
        %4599 = vmatpush1.bf16.xpose.msra.mxu0 0
        %4600 = vmatprep.subr.bf16.mxu0 0
        %4601 = vmatpush1.bf16.xpose.msra.mxu0 0
        %4602 = vmatprep.subr.bf16.mxu0 0
        %4603 = vmatpush1.bf16.xpose.msra.mxu0 0
        %4604 = vmatprep.subr.bf16.mxu0 0
        %4605 = vmatpush1.bf16.xpose.msra.mxu0 0
        %4606 = vmatprep.subr.bf16.mxu0 0
        %4607 = vmatpush1.bf16.xpose.msra.mxu0 0
        %4608 = vmatprep.subr.bf16.mxu0 0
        %4609 = vmatpush1.bf16.xpose.msra.mxu0 0
        %4610 = vmatprep.mubr.bf16.mxu0 0
        %4611 = vmatmul.mubr.bf16.gmra.mrb[0].mxu0 %v4573
        %v4612 = vpop.f32.mrb[0].mxu0
        %v4613 = vadd.f32 0.0, %v4612
        %v4614 = vpop.f32.mrb[0].mxu0
        %v4615 = vpop.f32.mrb[0].mxu0
        %v4616 = vpop.f32.mrb[0].mxu0
        %4617 = vdwg.mxu0
        %4619 = vrot.lane.b32.xlu0 %v2930, 120
        %v4620 = vpop.permute.xlu0 %4619
        %4621 = vrot.lane.b32.xlu0 %v3865, 112
        %v4622 = vpop.permute.xlu0 %4621
        %v4624 = vsel %vm2297, %v4620, 0
        %v4627 = vsel %vm2297, %v4622, 0
        %4629 = vmatprep.subr.bf16.mxu0 0
        %4630 = vmatpush1.bf16.xpose.msra.mxu0 %v4627
        %4631 = vmatprep.subr.bf16.mxu0 0
        %4632 = vmatpush1.bf16.xpose.msra.mxu0 0
        %4633 = vmatprep.subr.bf16.mxu0 0
        %4634 = vmatpush1.bf16.xpose.msra.mxu0 0
        %4635 = vmatprep.subr.bf16.mxu0 0
        %4636 = vmatpush1.bf16.xpose.msra.mxu0 0
        %4637 = vmatprep.subr.bf16.mxu0 0
        %4638 = vmatpush1.bf16.xpose.msra.mxu0 0
        %4639 = vmatprep.subr.bf16.mxu0 0
        %4640 = vmatpush1.bf16.xpose.msra.mxu0 0
        %4641 = vmatprep.subr.bf16.mxu0 0
        %4642 = vmatpush1.bf16.xpose.msra.mxu0 0
        %4643 = vmatprep.subr.bf16.mxu0 0
        %4644 = vmatpush1.bf16.xpose.msra.mxu0 0
        %4645 = vmatprep.subr.bf16.mxu0 0
        %4646 = vmatpush1.bf16.xpose.msra.mxu0 0
        %4647 = vmatprep.subr.bf16.mxu0 0
        %4648 = vmatpush1.bf16.xpose.msra.mxu0 0
        %4649 = vmatprep.subr.bf16.mxu0 0
        %4650 = vmatpush1.bf16.xpose.msra.mxu0 0
        %4651 = vmatprep.subr.bf16.mxu0 0
        %4652 = vmatpush1.bf16.xpose.msra.mxu0 0
        %4653 = vmatprep.subr.bf16.mxu0 0
        %4654 = vmatpush1.bf16.xpose.msra.mxu0 0
        %4655 = vmatprep.subr.bf16.mxu0 0
        %4656 = vmatpush1.bf16.xpose.msra.mxu0 0
        %4657 = vmatprep.subr.bf16.mxu0 0
        %4658 = vmatpush1.bf16.xpose.msra.mxu0 0
        %4659 = vmatprep.subr.bf16.mxu0 0
        %4660 = vmatpush1.bf16.xpose.msra.mxu0 0
        %4661 = vmatprep.mubr.bf16.mxu0 0
        %4662 = vmatmul.mubr.bf16.gmra.mrb[0].mxu0 %v4624
        %v4663 = vpop.f32.mrb[0].mxu0
        %v4664 = vadd.f32 0.0, %v4663
        %v4665 = vpop.f32.mrb[0].mxu0
        %v4666 = vpop.f32.mrb[0].mxu0
        %v4667 = vpop.f32.mrb[0].mxu0
        %4668 = vdwg.mxu0
        %4670 = vrot.lane.b32.xlu0 %v2931, 120
        %v4671 = vpop.permute.xlu0 %4670
        %4672 = vrot.lane.b32.xlu0 %v3866, 112
        %v4673 = vpop.permute.xlu0 %4672
        %v4675 = vsel %vm2297, %v4671, 0
        %v4678 = vsel %vm2297, %v4673, 0
        %4680 = vmatprep.subr.bf16.mxu0 0
        %4681 = vmatpush1.bf16.xpose.msra.mxu0 %v4678
        %4682 = vmatprep.subr.bf16.mxu0 0
        %4683 = vmatpush1.bf16.xpose.msra.mxu0 0
        %4684 = vmatprep.subr.bf16.mxu0 0
        %4685 = vmatpush1.bf16.xpose.msra.mxu0 0
        %4686 = vmatprep.subr.bf16.mxu0 0
        %4687 = vmatpush1.bf16.xpose.msra.mxu0 0
        %4688 = vmatprep.subr.bf16.mxu0 0
        %4689 = vmatpush1.bf16.xpose.msra.mxu0 0
        %4690 = vmatprep.subr.bf16.mxu0 0
        %4691 = vmatpush1.bf16.xpose.msra.mxu0 0
        %4692 = vmatprep.subr.bf16.mxu0 0
        %4693 = vmatpush1.bf16.xpose.msra.mxu0 0
        %4694 = vmatprep.subr.bf16.mxu0 0
        %4695 = vmatpush1.bf16.xpose.msra.mxu0 0
        %4696 = vmatprep.subr.bf16.mxu0 0
        %4697 = vmatpush1.bf16.xpose.msra.mxu0 0
        %4698 = vmatprep.subr.bf16.mxu0 0
        %4699 = vmatpush1.bf16.xpose.msra.mxu0 0
        %4700 = vmatprep.subr.bf16.mxu0 0
        %4701 = vmatpush1.bf16.xpose.msra.mxu0 0
        %4702 = vmatprep.subr.bf16.mxu0 0
        %4703 = vmatpush1.bf16.xpose.msra.mxu0 0
        %4704 = vmatprep.subr.bf16.mxu0 0
        %4705 = vmatpush1.bf16.xpose.msra.mxu0 0
        %4706 = vmatprep.subr.bf16.mxu0 0
        %4707 = vmatpush1.bf16.xpose.msra.mxu0 0
        %4708 = vmatprep.subr.bf16.mxu0 0
        %4709 = vmatpush1.bf16.xpose.msra.mxu0 0
        %4710 = vmatprep.subr.bf16.mxu0 0
        %4711 = vmatpush1.bf16.xpose.msra.mxu0 0
        %4712 = vmatprep.mubr.bf16.mxu0 0
        %4713 = vmatmul.mubr.bf16.gmra.mrb[0].mxu0 %v4675
        %v4714 = vpop.f32.mrb[0].mxu0
        %v4715 = vadd.f32 0.0, %v4714
        %v4716 = vpop.f32.mrb[0].mxu0
        %v4717 = vpop.f32.mrb[0].mxu0
        %v4718 = vpop.f32.mrb[0].mxu0
        %4719 = vdwg.mxu0
        %v4720 = vsel %vm2297, %v4562, -inf
        %4721 = vmax.xlane.f32.xlu0 %v4720
        %v4722 = vpop.xlane.xlu0 %4721
        %v4723 = vsel %vm2297, %v4613, -inf
        %4724 = vmax.xlane.f32.xlu0 %v4723
        %v4725 = vpop.xlane.xlu0 %4724
        %v4726 = vsel %vm2297, %v4664, -inf
        %4727 = vmax.xlane.f32.xlu0 %v4726
        %v4728 = vpop.xlane.xlu0 %4727
        %v4729 = vsel %vm2297, %v4715, -inf
        %4730 = vmax.xlane.f32.xlu0 %v4729
        %v4731 = vpop.xlane.xlu0 %4730
        %v4732 = vsub.f32 %v4562, %v4722
        %v4733 = vsub.f32 %v4613, %v4725
        %v4734 = vsub.f32 %v4664, %v4728
        %v4735 = vsub.f32 %v4715, %v4731
        %v4736 = vmul.f32 %v4732, 1.442695
        %v4737 = vpow.pop %v4736
        %v4738 = vmul.f32 %v4733, 1.442695
        %v4739 = vpow.pop %v4738
        %v4740 = vmul.f32 %v4734, 1.442695
        %v4741 = vpow.pop %v4740
        %v4742 = vmul.f32 %v4735, 1.442695
        %v4743 = vpow.pop %v4742
        %v4744 = vsel %vm2297, %v4737, 0.0
        %4745 = vadd.xlane.f32.xlu0 %v4744
        %v4746 = vpop.xlane.xlu0 %4745
        %v4747 = vsel %vm2297, %v4739, 0.0
        %4748 = vadd.xlane.f32.xlu0 %v4747
        %v4749 = vpop.xlane.xlu0 %4748
        %v4750 = vsel %vm2297, %v4741, 0.0
        %4751 = vadd.xlane.f32.xlu0 %v4750
        %v4752 = vpop.xlane.xlu0 %4751
        %v4753 = vsel %vm2297, %v4743, 0.0
        %4754 = vadd.xlane.f32.xlu0 %v4753
        %v4755 = vpop.xlane.xlu0 %4754
        %v4756 = vrcp.pop %v4746
        %v4757 = vrcp.pop %v4749
        %v4758 = vrcp.pop %v4752
        %v4759 = vrcp.pop %v4755
        %v4760 = vmul.f32 %v4737, %v4756
        %v4761 = vmul.f32 %v4739, %v4757
        %v4762 = vmul.f32 %v4741, %v4758
        %v4763 = vmul.f32 %v4743, %v4759
        %v4764 = vpack.c.bf16 %v4760, %v4760
        %v4765 = vpack.c.bf16 %v4761, %v4761
        %v4766 = vpack.c.bf16 %v4762, %v4762
        %v4767 = vpack.c.bf16 %v4763, %v4763
        %4768 = vrot.lane.b32.xlu0 %v3863, 104
        %v4769 = vpop.permute.xlu0 %4768
        %v4771 = vsel %vm2297, %v4764, 0
        %v4774 = vsel %vm2537, %v4769, 0
        %4776 = vmatprep.subr.bf16.mxu0 0
        %4777 = vmatpush1.bf16.msra.mxu0 %v4774
        %4778 = vmatprep.subr.bf16.mxu0 0
        %4779 = vmatpush1.bf16.msra.mxu0 0
        %4780 = vmatprep.subr.bf16.mxu0 0
        %4781 = vmatpush1.bf16.msra.mxu0 0
        %4782 = vmatprep.subr.bf16.mxu0 0
        %4783 = vmatpush1.bf16.msra.mxu0 0
        %4784 = vmatprep.subr.bf16.mxu0 0
        %4785 = vmatpush1.bf16.msra.mxu0 0
        %4786 = vmatprep.subr.bf16.mxu0 0
        %4787 = vmatpush1.bf16.msra.mxu0 0
        %4788 = vmatprep.subr.bf16.mxu0 0
        %4789 = vmatpush1.bf16.msra.mxu0 0
        %4790 = vmatprep.subr.bf16.mxu0 0
        %4791 = vmatpush1.bf16.msra.mxu0 0
        %4792 = vmatprep.subr.bf16.mxu0 0
        %4793 = vmatpush1.bf16.msra.mxu0 0
        %4794 = vmatprep.subr.bf16.mxu0 0
        %4795 = vmatpush1.bf16.msra.mxu0 0
        %4796 = vmatprep.subr.bf16.mxu0 0
        %4797 = vmatpush1.bf16.msra.mxu0 0
        %4798 = vmatprep.subr.bf16.mxu0 0
        %4799 = vmatpush1.bf16.msra.mxu0 0
        %4800 = vmatprep.subr.bf16.mxu0 0
        %4801 = vmatpush1.bf16.msra.mxu0 0
        %4802 = vmatprep.subr.bf16.mxu0 0
        %4803 = vmatpush1.bf16.msra.mxu0 0
        %4804 = vmatprep.subr.bf16.mxu0 0
        %4805 = vmatpush1.bf16.msra.mxu0 0
        %4806 = vmatprep.subr.bf16.mxu0 0
        %4807 = vmatpush1.bf16.msra.mxu0 0
        %4808 = vmatprep.mubr.bf16.mxu0 0
        %4809 = vmatmul.mubr.bf16.gmra.mrb[0].mxu0 %v4771
        %v4810 = vpop.f32.mrb[0].mxu0
        %v4811 = vadd.f32 0.0, %v4810
        %v4812 = vpop.f32.mrb[0].mxu0
        %v4813 = vpop.f32.mrb[0].mxu0
        %v4814 = vpop.f32.mrb[0].mxu0
        %4815 = vdwg.mxu0
        %4816 = vrot.lane.b32.xlu0 %v3864, 104
        %v4817 = vpop.permute.xlu0 %4816
        %v4819 = vsel %vm2297, %v4765, 0
        %v4822 = vsel %vm2537, %v4817, 0
        %4824 = vmatprep.subr.bf16.mxu0 0
        %4825 = vmatpush1.bf16.msra.mxu0 %v4822
        %4826 = vmatprep.subr.bf16.mxu0 0
        %4827 = vmatpush1.bf16.msra.mxu0 0
        %4828 = vmatprep.subr.bf16.mxu0 0
        %4829 = vmatpush1.bf16.msra.mxu0 0
        %4830 = vmatprep.subr.bf16.mxu0 0
        %4831 = vmatpush1.bf16.msra.mxu0 0
        %4832 = vmatprep.subr.bf16.mxu0 0
        %4833 = vmatpush1.bf16.msra.mxu0 0
        %4834 = vmatprep.subr.bf16.mxu0 0
        %4835 = vmatpush1.bf16.msra.mxu0 0
        %4836 = vmatprep.subr.bf16.mxu0 0
        %4837 = vmatpush1.bf16.msra.mxu0 0
        %4838 = vmatprep.subr.bf16.mxu0 0
        %4839 = vmatpush1.bf16.msra.mxu0 0
        %4840 = vmatprep.subr.bf16.mxu0 0
        %4841 = vmatpush1.bf16.msra.mxu0 0
        %4842 = vmatprep.subr.bf16.mxu0 0
        %4843 = vmatpush1.bf16.msra.mxu0 0
        %4844 = vmatprep.subr.bf16.mxu0 0
        %4845 = vmatpush1.bf16.msra.mxu0 0
        %4846 = vmatprep.subr.bf16.mxu0 0
        %4847 = vmatpush1.bf16.msra.mxu0 0
        %4848 = vmatprep.subr.bf16.mxu0 0
        %4849 = vmatpush1.bf16.msra.mxu0 0
        %4850 = vmatprep.subr.bf16.mxu0 0
        %4851 = vmatpush1.bf16.msra.mxu0 0
        %4852 = vmatprep.subr.bf16.mxu0 0
        %4853 = vmatpush1.bf16.msra.mxu0 0
        %4854 = vmatprep.subr.bf16.mxu0 0
        %4855 = vmatpush1.bf16.msra.mxu0 0
        %4856 = vmatprep.mubr.bf16.mxu0 0
        %4857 = vmatmul.mubr.bf16.gmra.mrb[0].mxu0 %v4819
        %v4858 = vpop.f32.mrb[0].mxu0
        %v4859 = vadd.f32 0.0, %v4858
        %v4860 = vpop.f32.mrb[0].mxu0
        %v4861 = vpop.f32.mrb[0].mxu0
        %v4862 = vpop.f32.mrb[0].mxu0
        %4863 = vdwg.mxu0
        %4864 = vrot.lane.b32.xlu0 %v3865, 104
        %v4865 = vpop.permute.xlu0 %4864
        %v4867 = vsel %vm2297, %v4766, 0
        %v4870 = vsel %vm2537, %v4865, 0
        %4872 = vmatprep.subr.bf16.mxu0 0
        %4873 = vmatpush1.bf16.msra.mxu0 %v4870
        %4874 = vmatprep.subr.bf16.mxu0 0
        %4875 = vmatpush1.bf16.msra.mxu0 0
        %4876 = vmatprep.subr.bf16.mxu0 0
        %4877 = vmatpush1.bf16.msra.mxu0 0
        %4878 = vmatprep.subr.bf16.mxu0 0
        %4879 = vmatpush1.bf16.msra.mxu0 0
        %4880 = vmatprep.subr.bf16.mxu0 0
        %4881 = vmatpush1.bf16.msra.mxu0 0
        %4882 = vmatprep.subr.bf16.mxu0 0
        %4883 = vmatpush1.bf16.msra.mxu0 0
        %4884 = vmatprep.subr.bf16.mxu0 0
        %4885 = vmatpush1.bf16.msra.mxu0 0
        %4886 = vmatprep.subr.bf16.mxu0 0
        %4887 = vmatpush1.bf16.msra.mxu0 0
        %4888 = vmatprep.subr.bf16.mxu0 0
        %4889 = vmatpush1.bf16.msra.mxu0 0
        %4890 = vmatprep.subr.bf16.mxu0 0
        %4891 = vmatpush1.bf16.msra.mxu0 0
        %4892 = vmatprep.subr.bf16.mxu0 0
        %4893 = vmatpush1.bf16.msra.mxu0 0
        %4894 = vmatprep.subr.bf16.mxu0 0
        %4895 = vmatpush1.bf16.msra.mxu0 0
        %4896 = vmatprep.subr.bf16.mxu0 0
        %4897 = vmatpush1.bf16.msra.mxu0 0
        %4898 = vmatprep.subr.bf16.mxu0 0
        %4899 = vmatpush1.bf16.msra.mxu0 0
        %4900 = vmatprep.subr.bf16.mxu0 0
        %4901 = vmatpush1.bf16.msra.mxu0 0
        %4902 = vmatprep.subr.bf16.mxu0 0
        %4903 = vmatpush1.bf16.msra.mxu0 0
        %4904 = vmatprep.mubr.bf16.mxu0 0
        %4905 = vmatmul.mubr.bf16.gmra.mrb[0].mxu0 %v4867
        %v4906 = vpop.f32.mrb[0].mxu0
        %v4907 = vadd.f32 0.0, %v4906
        %v4908 = vpop.f32.mrb[0].mxu0
        %v4909 = vpop.f32.mrb[0].mxu0
        %v4910 = vpop.f32.mrb[0].mxu0
        %4911 = vdwg.mxu0
        %4912 = vrot.lane.b32.xlu0 %v3866, 104
        %v4913 = vpop.permute.xlu0 %4912
        %v4915 = vsel %vm2297, %v4767, 0
        %v4918 = vsel %vm2537, %v4913, 0
        %4920 = vmatprep.subr.bf16.mxu0 0
        %4921 = vmatpush1.bf16.msra.mxu0 %v4918
        %4922 = vmatprep.subr.bf16.mxu0 0
        %4923 = vmatpush1.bf16.msra.mxu0 0
        %4924 = vmatprep.subr.bf16.mxu0 0
        %4925 = vmatpush1.bf16.msra.mxu0 0
        %4926 = vmatprep.subr.bf16.mxu0 0
        %4927 = vmatpush1.bf16.msra.mxu0 0
        %4928 = vmatprep.subr.bf16.mxu0 0
        %4929 = vmatpush1.bf16.msra.mxu0 0
        %4930 = vmatprep.subr.bf16.mxu0 0
        %4931 = vmatpush1.bf16.msra.mxu0 0
        %4932 = vmatprep.subr.bf16.mxu0 0
        %4933 = vmatpush1.bf16.msra.mxu0 0
        %4934 = vmatprep.subr.bf16.mxu0 0
        %4935 = vmatpush1.bf16.msra.mxu0 0
        %4936 = vmatprep.subr.bf16.mxu0 0
        %4937 = vmatpush1.bf16.msra.mxu0 0
        %4938 = vmatprep.subr.bf16.mxu0 0
        %4939 = vmatpush1.bf16.msra.mxu0 0
        %4940 = vmatprep.subr.bf16.mxu0 0
        %4941 = vmatpush1.bf16.msra.mxu0 0
        %4942 = vmatprep.subr.bf16.mxu0 0
        %4943 = vmatpush1.bf16.msra.mxu0 0
        %4944 = vmatprep.subr.bf16.mxu0 0
        %4945 = vmatpush1.bf16.msra.mxu0 0
        %4946 = vmatprep.subr.bf16.mxu0 0
        %4947 = vmatpush1.bf16.msra.mxu0 0
        %4948 = vmatprep.subr.bf16.mxu0 0
        %4949 = vmatpush1.bf16.msra.mxu0 0
        %4950 = vmatprep.subr.bf16.mxu0 0
        %4951 = vmatpush1.bf16.msra.mxu0 0
        %4952 = vmatprep.mubr.bf16.mxu0 0
        %4953 = vmatmul.mubr.bf16.gmra.mrb[0].mxu0 %v4915
        %v4954 = vpop.f32.mrb[0].mxu0
        %v4955 = vadd.f32 0.0, %v4954
        %v4956 = vpop.f32.mrb[0].mxu0
        %v4957 = vpop.f32.mrb[0].mxu0
        %v4958 = vpop.f32.mrb[0].mxu0
        %4959 = vdwg.mxu0
        %v4960 = vpack.c.bf16 %v4811, %v4811
        %v4961 = vpack.c.bf16 %v4859, %v4859
        %v4962 = vpack.c.bf16 %v4907, %v4907
        %v4963 = vpack.c.bf16 %v4955, %v4955
        %v4965 = vsel %vm2297, %v4960, 0
        %v4968 = vsel %vm2537, %v4510, 0
        %4970 = vmatprep.subr.bf16.mxu0 0
        %4971 = vmatpush1.bf16.msra.mxu0 %v4968
        %4972 = vmatprep.subr.bf16.mxu0 0
        %4973 = vmatpush1.bf16.msra.mxu0 0
        %4974 = vmatprep.subr.bf16.mxu0 0
        %4975 = vmatpush1.bf16.msra.mxu0 0
        %4976 = vmatprep.subr.bf16.mxu0 0
        %4977 = vmatpush1.bf16.msra.mxu0 0
        %4978 = vmatprep.subr.bf16.mxu0 0
        %4979 = vmatpush1.bf16.msra.mxu0 0
        %4980 = vmatprep.subr.bf16.mxu0 0
        %4981 = vmatpush1.bf16.msra.mxu0 0
        %4982 = vmatprep.subr.bf16.mxu0 0
        %4983 = vmatpush1.bf16.msra.mxu0 0
        %4984 = vmatprep.subr.bf16.mxu0 0
        %4985 = vmatpush1.bf16.msra.mxu0 0
        %4986 = vmatprep.subr.bf16.mxu0 0
        %4987 = vmatpush1.bf16.msra.mxu0 0
        %4988 = vmatprep.subr.bf16.mxu0 0
        %4989 = vmatpush1.bf16.msra.mxu0 0
        %4990 = vmatprep.subr.bf16.mxu0 0
        %4991 = vmatpush1.bf16.msra.mxu0 0
        %4992 = vmatprep.subr.bf16.mxu0 0
        %4993 = vmatpush1.bf16.msra.mxu0 0
        %4994 = vmatprep.subr.bf16.mxu0 0
        %4995 = vmatpush1.bf16.msra.mxu0 0
        %4996 = vmatprep.subr.bf16.mxu0 0
        %4997 = vmatpush1.bf16.msra.mxu0 0
        %4998 = vmatprep.subr.bf16.mxu0 0
        %4999 = vmatpush1.bf16.msra.mxu0 0
        %5000 = vmatprep.subr.bf16.mxu0 0
        %5001 = vmatpush1.bf16.msra.mxu0 0
        %5002 = vmatprep.mubr.bf16.mxu0 0
        %5003 = vmatmul.mubr.bf16.gmra.mrb[0].mxu0 %v4965
        %v5004 = vpop.f32.mrb[0].mxu0
        %v5005 = vadd.f32 0.0, %v5004
        %v5006 = vpop.f32.mrb[0].mxu0
        %v5007 = vpop.f32.mrb[0].mxu0
        %v5008 = vpop.f32.mrb[0].mxu0
        %5009 = vdwg.mxu0
        %v5011 = vsel %vm2297, %v4961, 0
        %v5014 = vsel %vm2537, %v4511, 0
        %5016 = vmatprep.subr.bf16.mxu0 0
        %5017 = vmatpush1.bf16.msra.mxu0 %v5014
        %5018 = vmatprep.subr.bf16.mxu0 0
        %5019 = vmatpush1.bf16.msra.mxu0 0
        %5020 = vmatprep.subr.bf16.mxu0 0
        %5021 = vmatpush1.bf16.msra.mxu0 0
        %5022 = vmatprep.subr.bf16.mxu0 0
        %5023 = vmatpush1.bf16.msra.mxu0 0
        %5024 = vmatprep.subr.bf16.mxu0 0
        %5025 = vmatpush1.bf16.msra.mxu0 0
        %5026 = vmatprep.subr.bf16.mxu0 0
        %5027 = vmatpush1.bf16.msra.mxu0 0
        %5028 = vmatprep.subr.bf16.mxu0 0
        %5029 = vmatpush1.bf16.msra.mxu0 0
        %5030 = vmatprep.subr.bf16.mxu0 0
        %5031 = vmatpush1.bf16.msra.mxu0 0
        %5032 = vmatprep.subr.bf16.mxu0 0
        %5033 = vmatpush1.bf16.msra.mxu0 0
        %5034 = vmatprep.subr.bf16.mxu0 0
        %5035 = vmatpush1.bf16.msra.mxu0 0
        %5036 = vmatprep.subr.bf16.mxu0 0
        %5037 = vmatpush1.bf16.msra.mxu0 0
        %5038 = vmatprep.subr.bf16.mxu0 0
        %5039 = vmatpush1.bf16.msra.mxu0 0
        %5040 = vmatprep.subr.bf16.mxu0 0
        %5041 = vmatpush1.bf16.msra.mxu0 0
        %5042 = vmatprep.subr.bf16.mxu0 0
        %5043 = vmatpush1.bf16.msra.mxu0 0
        %5044 = vmatprep.subr.bf16.mxu0 0
        %5045 = vmatpush1.bf16.msra.mxu0 0
        %5046 = vmatprep.subr.bf16.mxu0 0
        %5047 = vmatpush1.bf16.msra.mxu0 0
        %5048 = vmatprep.mubr.bf16.mxu0 0
        %5049 = vmatmul.mubr.bf16.gmra.mrb[0].mxu0 %v5011
        %v5050 = vpop.f32.mrb[0].mxu0
        %v5051 = vadd.f32 0.0, %v5050
        %v5052 = vpop.f32.mrb[0].mxu0
        %v5053 = vpop.f32.mrb[0].mxu0
        %v5054 = vpop.f32.mrb[0].mxu0
        %5055 = vdwg.mxu0
        %v5057 = vsel %vm2297, %v4962, 0
        %v5060 = vsel %vm2537, %v4512, 0
        %5062 = vmatprep.subr.bf16.mxu0 0
        %5063 = vmatpush1.bf16.msra.mxu0 %v5060
        %5064 = vmatprep.subr.bf16.mxu0 0
        %5065 = vmatpush1.bf16.msra.mxu0 0
        %5066 = vmatprep.subr.bf16.mxu0 0
        %5067 = vmatpush1.bf16.msra.mxu0 0
        %5068 = vmatprep.subr.bf16.mxu0 0
        %5069 = vmatpush1.bf16.msra.mxu0 0
        %5070 = vmatprep.subr.bf16.mxu0 0
        %5071 = vmatpush1.bf16.msra.mxu0 0
        %5072 = vmatprep.subr.bf16.mxu0 0
        %5073 = vmatpush1.bf16.msra.mxu0 0
        %5074 = vmatprep.subr.bf16.mxu0 0
        %5075 = vmatpush1.bf16.msra.mxu0 0
        %5076 = vmatprep.subr.bf16.mxu0 0
        %5077 = vmatpush1.bf16.msra.mxu0 0
        %5078 = vmatprep.subr.bf16.mxu0 0
        %5079 = vmatpush1.bf16.msra.mxu0 0
        %5080 = vmatprep.subr.bf16.mxu0 0
        %5081 = vmatpush1.bf16.msra.mxu0 0
        %5082 = vmatprep.subr.bf16.mxu0 0
        %5083 = vmatpush1.bf16.msra.mxu0 0
        %5084 = vmatprep.subr.bf16.mxu0 0
        %5085 = vmatpush1.bf16.msra.mxu0 0
        %5086 = vmatprep.subr.bf16.mxu0 0
        %5087 = vmatpush1.bf16.msra.mxu0 0
        %5088 = vmatprep.subr.bf16.mxu0 0
        %5089 = vmatpush1.bf16.msra.mxu0 0
        %5090 = vmatprep.subr.bf16.mxu0 0
        %5091 = vmatpush1.bf16.msra.mxu0 0
        %5092 = vmatprep.subr.bf16.mxu0 0
        %5093 = vmatpush1.bf16.msra.mxu0 0
        %5094 = vmatprep.mubr.bf16.mxu0 0
        %5095 = vmatmul.mubr.bf16.gmra.mrb[0].mxu0 %v5057
        %v5096 = vpop.f32.mrb[0].mxu0
        %v5097 = vadd.f32 0.0, %v5096
        %v5098 = vpop.f32.mrb[0].mxu0
        %v5099 = vpop.f32.mrb[0].mxu0
        %v5100 = vpop.f32.mrb[0].mxu0
        %5101 = vdwg.mxu0
        %v5103 = vsel %vm2297, %v4963, 0
        %v5106 = vsel %vm2537, %v4513, 0
        %5108 = vmatprep.subr.bf16.mxu0 0
        %5109 = vmatpush1.bf16.msra.mxu0 %v5106
        %5110 = vmatprep.subr.bf16.mxu0 0
        %5111 = vmatpush1.bf16.msra.mxu0 0
        %5112 = vmatprep.subr.bf16.mxu0 0
        %5113 = vmatpush1.bf16.msra.mxu0 0
        %5114 = vmatprep.subr.bf16.mxu0 0
        %5115 = vmatpush1.bf16.msra.mxu0 0
        %5116 = vmatprep.subr.bf16.mxu0 0
        %5117 = vmatpush1.bf16.msra.mxu0 0
        %5118 = vmatprep.subr.bf16.mxu0 0
        %5119 = vmatpush1.bf16.msra.mxu0 0
        %5120 = vmatprep.subr.bf16.mxu0 0
        %5121 = vmatpush1.bf16.msra.mxu0 0
        %5122 = vmatprep.subr.bf16.mxu0 0
        %5123 = vmatpush1.bf16.msra.mxu0 0
        %5124 = vmatprep.subr.bf16.mxu0 0
        %5125 = vmatpush1.bf16.msra.mxu0 0
        %5126 = vmatprep.subr.bf16.mxu0 0
        %5127 = vmatpush1.bf16.msra.mxu0 0
        %5128 = vmatprep.subr.bf16.mxu0 0
        %5129 = vmatpush1.bf16.msra.mxu0 0
        %5130 = vmatprep.subr.bf16.mxu0 0
        %5131 = vmatpush1.bf16.msra.mxu0 0
        %5132 = vmatprep.subr.bf16.mxu0 0
        %5133 = vmatpush1.bf16.msra.mxu0 0
        %5134 = vmatprep.subr.bf16.mxu0 0
        %5135 = vmatpush1.bf16.msra.mxu0 0
        %5136 = vmatprep.subr.bf16.mxu0 0
        %5137 = vmatpush1.bf16.msra.mxu0 0
        %5138 = vmatprep.subr.bf16.mxu0 0
        %5139 = vmatpush1.bf16.msra.mxu0 0
        %5140 = vmatprep.mubr.bf16.mxu0 0
        %5141 = vmatmul.mubr.bf16.gmra.mrb[0].mxu0 %v5103
        %v5142 = vpop.f32.mrb[0].mxu0
        %v5143 = vadd.f32 0.0, %v5142
        %v5144 = vpop.f32.mrb[0].mxu0
        %v5145 = vpop.f32.mrb[0].mxu0
        %v5146 = vpop.f32.mrb[0].mxu0
        %5147 = vdwg.mxu0
        %v5148 = vsel %vm903, %v5005, 0.0
        %v5149 = vsel %vm903, %v5051, 0.0
        %v5150 = vadd.f32 %v5148, %v5149
        %v5151 = vsel %vm903, %v5097, 0.0
        %v5152 = vadd.f32 %v5150, %v5151
        %v5153 = vsel %vm903, %v5143, 0.0
        %v5154 = vadd.f32 %v5152, %v5153
        %v5156 = vlaneseq
        %v5157 = vshrl.u32 %v5156, 7
        %v5158 = vsub.s32 0, %v5157
        %v5159 = vrot.slane %v4515, %v5158
        %v5161 = vadd.f32 %v5154, %v5159
        %v5162 = vadd.f32 %v898, %v4508
        %v5163 = vadd.f32 %v899, %v5161
        %v5164 = vsel %vm903, %v5162, 0.0
        %5165 = vadd.xlane.f32.xlu0 %v5164
        %v5166 = vpop.xlane.xlu0 %5165
        %v5167 = vmul.f32 %v5166, %v907
        %v5168 = vsub.f32 %v5162, %v5167
        %v5169 = vmul.f32 %v5168, %v5168
        %v5170 = vsel %vm903, %v5169, 0.0
        %5171 = vadd.xlane.f32.xlu0 %v5170
        %v5172 = vpop.xlane.xlu0 %5171
        %v5173 = vmul.f32 %v5172, %v907
        %v5174 = vadd.f32 %v5173, 1e-05
        %v5175 = vrsqrt.pop %v5174
        %v5176 = vmul.f32 %v5168, %v5175
        %s5177 = scalar_lea.vmem %s5, 4
        %v5178 = vld [vmem:[%s5177] sm:$0x1]
        %v5180 = vlaneseq
        %v5181 = vshrl.u32 %v5180, 7
        %v5182 = vsub.s32 0, %v5181
        %v5183 = vrot.slane %v5178, %v5182
        %v5185 = vmul.f32 %v5176, %v5183
        %s5186 = scalar_lea.vmem %s6, 4
        %v5187 = vld [vmem:[%s5186] sm:$0x1]
        %v5189 = vlaneseq
        %v5190 = vshrl.u32 %v5189, 7
        %v5191 = vsub.s32 0, %v5190
        %v5192 = vrot.slane %v5187, %v5191
        %v5194 = vadd.f32 %v5185, %v5192
        %v5195 = vpack.c.bf16 %v5194, %v5194
        %v5196 = vld [vmem:[%s21] sm:$0xf]
        %v5197 = vld [vmem:[%s21 + $0x4] sm:$0xf]
        %v5198 = vld [vmem:[%s21 + $0x8] sm:$0xf]
        %v5199 = vld [vmem:[%s21 + $0xc] sm:$0xf]
        %v5200 = vld [vmem:[%s22] sm:$0x1]
        %v5202 = vlaneseq
        %v5203 = vshrl.u32 %v5202, 7
        %v5204 = vsub.s32 0, %v5203
        %v5205 = vrot.slane %v5200, %v5204
        %v5211 = vunpack.c.l.b16 %v5196
        %v5212 = vunpack.c.l.b16 %v5197
        %v5213 = vunpack.c.l.b16 %v5198
        %v5214 = vunpack.c.l.b16 %v5199
        %v5215 = vpack.c.b16 %v5212, %v5211
        %v5216 = vpack.c.b16 %v5214, %v5213
        %v5220 = vsel %vm903, %v5195, 0
        %5222 = vmatprep.subr.bf16.mxu0 0
        %5223 = vmatpush1.bf16.msra.mxu0 %v5215
        %5224 = vmatprep.subr.bf16.mxu0 0
        %5225 = vmatpush1.bf16.msra.mxu0 %v5216
        %5226 = vmatprep.subr.bf16.mxu0 0
        %5227 = vmatpush1.bf16.msra.mxu0 0
        %5228 = vmatprep.subr.bf16.mxu0 0
        %5229 = vmatpush1.bf16.msra.mxu0 0
        %5230 = vmatprep.subr.bf16.mxu0 0
        %5231 = vmatpush1.bf16.msra.mxu0 0
        %5232 = vmatprep.subr.bf16.mxu0 0
        %5233 = vmatpush1.bf16.msra.mxu0 0
        %5234 = vmatprep.subr.bf16.mxu0 0
        %5235 = vmatpush1.bf16.msra.mxu0 0
        %5236 = vmatprep.subr.bf16.mxu0 0
        %5237 = vmatpush1.bf16.msra.mxu0 0
        %5238 = vmatprep.subr.bf16.mxu0 0
        %5239 = vmatpush1.bf16.msra.mxu0 0
        %5240 = vmatprep.subr.bf16.mxu0 0
        %5241 = vmatpush1.bf16.msra.mxu0 0
        %5242 = vmatprep.subr.bf16.mxu0 0
        %5243 = vmatpush1.bf16.msra.mxu0 0
        %5244 = vmatprep.subr.bf16.mxu0 0
        %5245 = vmatpush1.bf16.msra.mxu0 0
        %5246 = vmatprep.subr.bf16.mxu0 0
        %5247 = vmatpush1.bf16.msra.mxu0 0
        %5248 = vmatprep.subr.bf16.mxu0 0
        %5249 = vmatpush1.bf16.msra.mxu0 0
        %5250 = vmatprep.subr.bf16.mxu0 0
        %5251 = vmatpush1.bf16.msra.mxu0 0
        %5252 = vmatprep.subr.bf16.mxu0 0
        %5253 = vmatpush1.bf16.msra.mxu0 0
        %5254 = vmatprep.mubr.bf16.mxu0 0
        %5255 = vmatmul.mubr.bf16.gmra.mrb[0].mxu0 %v5220
        %v5256 = vpop.f32.mrb[0].mxu0
        %v5257 = vadd.f32 %v5205, %v5256
        %v5258 = vpop.f32.mrb[0].mxu0
        %v5259 = vpop.f32.mrb[0].mxu0
        %v5260 = vpop.f32.mrb[0].mxu0
        %5261 = vdwg.mxu0
        %v5262 = vmax.f32 %v5257, 0.0
        %v5263 = vpack.c.bf16 %v5262, %v5262
        %v5264 = vld [vmem:[%s23] sm:$0xf]
        %v5265 = vld [vmem:[%s23 + $0x4] sm:$0xf]
        %v5266 = vld [vmem:[%s23 + $0x8] sm:$0xf]
        %v5267 = vld [vmem:[%s23 + $0xc] sm:$0xf]
        %v5268 = vld [vmem:[%s23 + $0x10] sm:$0xf]
        %v5269 = vld [vmem:[%s23 + $0x14] sm:$0xf]
        %v5270 = vld [vmem:[%s23 + $0x18] sm:$0xf]
        %v5271 = vld [vmem:[%s23 + $0x1c] sm:$0xf]
        %v5272 = vld [vmem:[%s23 + $0x20] sm:$0xf]
        %v5273 = vld [vmem:[%s23 + $0x24] sm:$0xf]
        %v5274 = vld [vmem:[%s23 + $0x28] sm:$0xf]
        %v5275 = vld [vmem:[%s23 + $0x2c] sm:$0xf]
        %v5276 = vld [vmem:[%s23 + $0x30] sm:$0xf]
        %v5277 = vld [vmem:[%s23 + $0x34] sm:$0xf]
        %v5278 = vld [vmem:[%s23 + $0x38] sm:$0xf]
        %v5279 = vld [vmem:[%s23 + $0x3c] sm:$0xf]
        %v5280 = vld [vmem:[%s24] sm:$0x1]
        %v5282 = vlaneseq
        %v5283 = vshrl.u32 %v5282, 7
        %v5284 = vsub.s32 0, %v5283
        %v5285 = vrot.slane %v5280, %v5284
        %v5303 = vunpack.c.l.b16 %v5264
        %v5304 = vunpack.c.l.b16 %v5265
        %v5305 = vunpack.c.l.b16 %v5266
        %v5306 = vunpack.c.l.b16 %v5267
        %v5307 = vunpack.c.l.b16 %v5268
        %v5308 = vunpack.c.l.b16 %v5269
        %v5309 = vunpack.c.l.b16 %v5270
        %v5310 = vunpack.c.l.b16 %v5271
        %v5311 = vunpack.c.l.b16 %v5272
        %v5312 = vunpack.c.l.b16 %v5273
        %v5313 = vunpack.c.l.b16 %v5274
        %v5314 = vunpack.c.l.b16 %v5275
        %v5315 = vunpack.c.l.b16 %v5276
        %v5316 = vunpack.c.l.b16 %v5277
        %v5317 = vunpack.c.l.b16 %v5278
        %v5318 = vunpack.c.l.b16 %v5279
        %v5319 = vpack.c.b16 %v5304, %v5303
        %v5320 = vpack.c.b16 %v5306, %v5305
        %v5321 = vpack.c.b16 %v5308, %v5307
        %v5322 = vpack.c.b16 %v5310, %v5309
        %v5323 = vpack.c.b16 %v5312, %v5311
        %v5324 = vpack.c.b16 %v5314, %v5313
        %v5325 = vpack.c.b16 %v5316, %v5315
        %v5326 = vpack.c.b16 %v5318, %v5317
        %5335 = vmatprep.subr.bf16.mxu0 0
        %5336 = vmatpush1.bf16.msra.mxu0 %v5319
        %5337 = vmatprep.subr.bf16.mxu0 0
        %5338 = vmatpush1.bf16.msra.mxu0 %v5320
        %5339 = vmatprep.subr.bf16.mxu0 0
        %5340 = vmatpush1.bf16.msra.mxu0 %v5321
        %5341 = vmatprep.subr.bf16.mxu0 0
        %5342 = vmatpush1.bf16.msra.mxu0 %v5322
        %5343 = vmatprep.subr.bf16.mxu0 0
        %5344 = vmatpush1.bf16.msra.mxu0 %v5323
        %5345 = vmatprep.subr.bf16.mxu0 0
        %5346 = vmatpush1.bf16.msra.mxu0 %v5324
        %5347 = vmatprep.subr.bf16.mxu0 0
        %5348 = vmatpush1.bf16.msra.mxu0 %v5325
        %5349 = vmatprep.subr.bf16.mxu0 0
        %5350 = vmatpush1.bf16.msra.mxu0 %v5326
        %5351 = vmatprep.subr.bf16.mxu0 0
        %5352 = vmatpush1.bf16.msra.mxu0 0
        %5353 = vmatprep.subr.bf16.mxu0 0
        %5354 = vmatpush1.bf16.msra.mxu0 0
        %5355 = vmatprep.subr.bf16.mxu0 0
        %5356 = vmatpush1.bf16.msra.mxu0 0
        %5357 = vmatprep.subr.bf16.mxu0 0
        %5358 = vmatpush1.bf16.msra.mxu0 0
        %5359 = vmatprep.subr.bf16.mxu0 0
        %5360 = vmatpush1.bf16.msra.mxu0 0
        %5361 = vmatprep.subr.bf16.mxu0 0
        %5362 = vmatpush1.bf16.msra.mxu0 0
        %5363 = vmatprep.subr.bf16.mxu0 0
        %5364 = vmatpush1.bf16.msra.mxu0 0
        %5365 = vmatprep.subr.bf16.mxu0 0
        %5366 = vmatpush1.bf16.msra.mxu0 0
        %5367 = vmatprep.mubr.bf16.mxu0 0
        %5368 = vmatmul.mubr.bf16.gmra.mrb[0].mxu0 %v5263
        %v5369 = vpop.f32.mrb[0].mxu0
        %v5370 = vadd.f32 %v5285, %v5369
        %v5371 = vpop.f32.mrb[0].mxu0
        %v5372 = vpop.f32.mrb[0].mxu0
        %v5373 = vpop.f32.mrb[0].mxu0
        %5374 = vdwg.mxu0
        %v5375 = vadd.f32 %v5162, %v5370
        %5376 = vst.msk [vmem:[%s863] sm:$0xff] %vm903, %v5375
        %v5377 = vsel %vm903, %v5163, 0.0
        %5378 = vadd.xlane.f32.xlu0 %v5377
        %v5379 = vpop.xlane.xlu0 %5378
        %v5380 = vmul.f32 %v5379, %v907
        %v5381 = vsub.f32 %v5163, %v5380
        %v5382 = vmul.f32 %v5381, %v5381
        %v5383 = vsel %vm903, %v5382, 0.0
        %5384 = vadd.xlane.f32.xlu0 %v5383
        %v5385 = vpop.xlane.xlu0 %5384
        %v5386 = vmul.f32 %v5385, %v907
        %v5387 = vadd.f32 %v5386, 1e-05
        %v5388 = vrsqrt.pop %v5387
        %v5389 = vmul.f32 %v5381, %v5388
        %s5390 = scalar_lea.vmem %s5, 5
        %v5391 = vld [vmem:[%s5390] sm:$0x1]
        %v5393 = vlaneseq
        %v5394 = vshrl.u32 %v5393, 7
        %v5395 = vsub.s32 0, %v5394
        %v5396 = vrot.slane %v5391, %v5395
        %v5398 = vmul.f32 %v5389, %v5396
        %s5399 = scalar_lea.vmem %s6, 5
        %v5400 = vld [vmem:[%s5399] sm:$0x1]
        %v5402 = vlaneseq
        %v5403 = vshrl.u32 %v5402, 7
        %v5404 = vsub.s32 0, %v5403
        %v5405 = vrot.slane %v5400, %v5404
        %v5407 = vadd.f32 %v5398, %v5405
        %v5408 = vpack.c.bf16 %v5407, %v5407
        %s5409 = scalar_lea.vmem %s21, 16
        %v5410 = vld [vmem:[%s5409] sm:$0xf]
        %v5411 = vld [vmem:[%s5409 + $0x4] sm:$0xf]
        %v5412 = vld [vmem:[%s5409 + $0x8] sm:$0xf]
        %v5413 = vld [vmem:[%s5409 + $0xc] sm:$0xf]
        %s5414 = scalar_lea.vmem %s22, 1
        %v5415 = vld [vmem:[%s5414] sm:$0x1]
        %v5417 = vlaneseq
        %v5418 = vshrl.u32 %v5417, 7
        %v5419 = vsub.s32 0, %v5418
        %v5420 = vrot.slane %v5415, %v5419
        %v5426 = vunpack.c.l.b16 %v5410
        %v5427 = vunpack.c.l.b16 %v5411
        %v5428 = vunpack.c.l.b16 %v5412
        %v5429 = vunpack.c.l.b16 %v5413
        %v5430 = vpack.c.b16 %v5427, %v5426
        %v5431 = vpack.c.b16 %v5429, %v5428
        %v5435 = vsel %vm903, %v5408, 0
        %5437 = vmatprep.subr.bf16.mxu0 0
        %5438 = vmatpush1.bf16.msra.mxu0 %v5430
        %5439 = vmatprep.subr.bf16.mxu0 0
        %5440 = vmatpush1.bf16.msra.mxu0 %v5431
        %5441 = vmatprep.subr.bf16.mxu0 0
        %5442 = vmatpush1.bf16.msra.mxu0 0
        %5443 = vmatprep.subr.bf16.mxu0 0
        %5444 = vmatpush1.bf16.msra.mxu0 0
        %5445 = vmatprep.subr.bf16.mxu0 0
        %5446 = vmatpush1.bf16.msra.mxu0 0
        %5447 = vmatprep.subr.bf16.mxu0 0
        %5448 = vmatpush1.bf16.msra.mxu0 0
        %5449 = vmatprep.subr.bf16.mxu0 0
        %5450 = vmatpush1.bf16.msra.mxu0 0
        %5451 = vmatprep.subr.bf16.mxu0 0
        %5452 = vmatpush1.bf16.msra.mxu0 0
        %5453 = vmatprep.subr.bf16.mxu0 0
        %5454 = vmatpush1.bf16.msra.mxu0 0
        %5455 = vmatprep.subr.bf16.mxu0 0
        %5456 = vmatpush1.bf16.msra.mxu0 0
        %5457 = vmatprep.subr.bf16.mxu0 0
        %5458 = vmatpush1.bf16.msra.mxu0 0
        %5459 = vmatprep.subr.bf16.mxu0 0
        %5460 = vmatpush1.bf16.msra.mxu0 0
        %5461 = vmatprep.subr.bf16.mxu0 0
        %5462 = vmatpush1.bf16.msra.mxu0 0
        %5463 = vmatprep.subr.bf16.mxu0 0
        %5464 = vmatpush1.bf16.msra.mxu0 0
        %5465 = vmatprep.subr.bf16.mxu0 0
        %5466 = vmatpush1.bf16.msra.mxu0 0
        %5467 = vmatprep.subr.bf16.mxu0 0
        %5468 = vmatpush1.bf16.msra.mxu0 0
        %5469 = vmatprep.mubr.bf16.mxu0 0
        %5470 = vmatmul.mubr.bf16.gmra.mrb[0].mxu0 %v5435
        %v5471 = vpop.f32.mrb[0].mxu0
        %v5472 = vadd.f32 %v5420, %v5471
        %v5473 = vpop.f32.mrb[0].mxu0
        %v5474 = vpop.f32.mrb[0].mxu0
        %v5475 = vpop.f32.mrb[0].mxu0
        %5476 = vdwg.mxu0
        %v5477 = vmax.f32 %v5472, 0.0
        %v5478 = vpack.c.bf16 %v5477, %v5477
        %s5479 = scalar_lea.vmem %s23, 64
        %v5480 = vld [vmem:[%s5479] sm:$0xf]
        %v5481 = vld [vmem:[%s5479 + $0x4] sm:$0xf]
        %v5482 = vld [vmem:[%s5479 + $0x8] sm:$0xf]
        %v5483 = vld [vmem:[%s5479 + $0xc] sm:$0xf]
        %v5484 = vld [vmem:[%s5479 + $0x10] sm:$0xf]
        %v5485 = vld [vmem:[%s5479 + $0x14] sm:$0xf]
        %v5486 = vld [vmem:[%s5479 + $0x18] sm:$0xf]
        %v5487 = vld [vmem:[%s5479 + $0x1c] sm:$0xf]
        %v5488 = vld [vmem:[%s5479 + $0x20] sm:$0xf]
        %v5489 = vld [vmem:[%s5479 + $0x24] sm:$0xf]
        %v5490 = vld [vmem:[%s5479 + $0x28] sm:$0xf]
        %v5491 = vld [vmem:[%s5479 + $0x2c] sm:$0xf]
        %v5492 = vld [vmem:[%s5479 + $0x30] sm:$0xf]
        %v5493 = vld [vmem:[%s5479 + $0x34] sm:$0xf]
        %v5494 = vld [vmem:[%s5479 + $0x38] sm:$0xf]
        %v5495 = vld [vmem:[%s5479 + $0x3c] sm:$0xf]
        %s5496 = scalar_lea.vmem %s24, 1
        %v5497 = vld [vmem:[%s5496] sm:$0x1]
        %v5499 = vlaneseq
        %v5500 = vshrl.u32 %v5499, 7
        %v5501 = vsub.s32 0, %v5500
        %v5502 = vrot.slane %v5497, %v5501
        %v5520 = vunpack.c.l.b16 %v5480
        %v5521 = vunpack.c.l.b16 %v5481
        %v5522 = vunpack.c.l.b16 %v5482
        %v5523 = vunpack.c.l.b16 %v5483
        %v5524 = vunpack.c.l.b16 %v5484
        %v5525 = vunpack.c.l.b16 %v5485
        %v5526 = vunpack.c.l.b16 %v5486
        %v5527 = vunpack.c.l.b16 %v5487
        %v5528 = vunpack.c.l.b16 %v5488
        %v5529 = vunpack.c.l.b16 %v5489
        %v5530 = vunpack.c.l.b16 %v5490
        %v5531 = vunpack.c.l.b16 %v5491
        %v5532 = vunpack.c.l.b16 %v5492
        %v5533 = vunpack.c.l.b16 %v5493
        %v5534 = vunpack.c.l.b16 %v5494
        %v5535 = vunpack.c.l.b16 %v5495
        %v5536 = vpack.c.b16 %v5521, %v5520
        %v5537 = vpack.c.b16 %v5523, %v5522
        %v5538 = vpack.c.b16 %v5525, %v5524
        %v5539 = vpack.c.b16 %v5527, %v5526
        %v5540 = vpack.c.b16 %v5529, %v5528
        %v5541 = vpack.c.b16 %v5531, %v5530
        %v5542 = vpack.c.b16 %v5533, %v5532
        %v5543 = vpack.c.b16 %v5535, %v5534
        %5552 = vmatprep.subr.bf16.mxu0 0
        %5553 = vmatpush1.bf16.msra.mxu0 %v5536
        %5554 = vmatprep.subr.bf16.mxu0 0
        %5555 = vmatpush1.bf16.msra.mxu0 %v5537
        %5556 = vmatprep.subr.bf16.mxu0 0
        %5557 = vmatpush1.bf16.msra.mxu0 %v5538
        %5558 = vmatprep.subr.bf16.mxu0 0
        %5559 = vmatpush1.bf16.msra.mxu0 %v5539
        %5560 = vmatprep.subr.bf16.mxu0 0
        %5561 = vmatpush1.bf16.msra.mxu0 %v5540
        %5562 = vmatprep.subr.bf16.mxu0 0
        %5563 = vmatpush1.bf16.msra.mxu0 %v5541
        %5564 = vmatprep.subr.bf16.mxu0 0
        %5565 = vmatpush1.bf16.msra.mxu0 %v5542
        %5566 = vmatprep.subr.bf16.mxu0 0
        %5567 = vmatpush1.bf16.msra.mxu0 %v5543
        %5568 = vmatprep.subr.bf16.mxu0 0
        %5569 = vmatpush1.bf16.msra.mxu0 0
        %5570 = vmatprep.subr.bf16.mxu0 0
        %5571 = vmatpush1.bf16.msra.mxu0 0
        %5572 = vmatprep.subr.bf16.mxu0 0
        %5573 = vmatpush1.bf16.msra.mxu0 0
        %5574 = vmatprep.subr.bf16.mxu0 0
        %5575 = vmatpush1.bf16.msra.mxu0 0
        %5576 = vmatprep.subr.bf16.mxu0 0
        %5577 = vmatpush1.bf16.msra.mxu0 0
        %5578 = vmatprep.subr.bf16.mxu0 0
        %5579 = vmatpush1.bf16.msra.mxu0 0
        %5580 = vmatprep.subr.bf16.mxu0 0
        %5581 = vmatpush1.bf16.msra.mxu0 0
        %5582 = vmatprep.subr.bf16.mxu0 0
        %5583 = vmatpush1.bf16.msra.mxu0 0
        %5584 = vmatprep.mubr.bf16.mxu0 0
        %5585 = vmatmul.mubr.bf16.gmra.mrb[0].mxu0 %v5478
        %v5586 = vpop.f32.mrb[0].mxu0
        %v5587 = vadd.f32 %v5502, %v5586
        %v5588 = vpop.f32.mrb[0].mxu0
        %v5589 = vpop.f32.mrb[0].mxu0
        %v5590 = vpop.f32.mrb[0].mxu0
        %5591 = vdwg.mxu0
        %v5592 = vadd.f32 %v5163, %v5587
        %5593 = vst.msk [vmem:[%s870] sm:$0xff] %vm903, %v5592
        %s5594 = sand.u32 %s603, 1
        %s5595 = scalar_lea.sflag [#allocation3], %s5594
        %s5596 = sand.u32 %s603, 1
        %s5597 = smul.addr %s5596, 8
        %s5598 = scalar_lea.vmem [#allocation2], %s5597
        %s5599 = sand.u32 %s45, 1
        %s5600 = scalar_lea.sflag [#allocation5], %s5599
        %s5601 = sand.u32 %s629, 1
        %s5602 = smul.addr %s5601, 8
        %s5603 = scalar_lea.vmem [#allocation4], %s5602
        %s5604 = sand.u32 %s45, 1
        %s5605 = scalar_lea.sflag [#allocation5], %s5604
        %s5606 = sand.u32 %s655, 1
        %s5607 = smul.addr %s5606, 8
        %s5608 = scalar_lea.vmem [#allocation6], %s5607
        // Predicated region
        $region121: #{_lambda_.1} parent=119 // pred_check
          %p5609 = pneg %p613
        $region122: #{_lambda_.1} parent=119 // pred_check_branch
          %5611 = sbr.rel (%p5609) target = $region124
        $region123: #{_lambda_.1} parent=119 // pred_region
          %s5613 = ssub.s32 128, 128
          %5614 = vsyncadd %s5595, %s5613
          %s5615 = smul.addr %s45, 128
          %s5616 = scalar_lea.hbm %s25, %s5615
          %s5618 = sshll.u32 %s5598, 4
          %s5619 = int_to_ptr.vmem [resolvable:$true] %s5618
          %5621 = dma.vmem_to_hbm [thread:$0]  %s5619, 128, %s5616, %s5595
        $region124: #{_lambda_.1} parent=119 // pred_fallthru
          _
        // Predicated region
        $region125: #{_lambda_.1} parent=119 // pred_check
          %p5622 = pneg %p639
        $region126: #{_lambda_.1} parent=119 // pred_check_branch
          %5624 = sbr.rel (%p5622) target = $region128
        $region127: #{_lambda_.1} parent=119 // pred_region
          %s5626 = ssub.s32 128, 128
          %5627 = vsyncadd %s5600, %s5626
          %s5628 = smul.addr %s45, 128
          %s5629 = scalar_lea.hbm %s26, %s5628
          %s5631 = sshll.u32 %s5603, 4
          %s5632 = int_to_ptr.vmem [resolvable:$true] %s5631
          %5634 = dma.vmem_to_hbm [thread:$0]  %s5632, 128, %s5629, %s5600
        $region128: #{_lambda_.1} parent=119 // pred_fallthru
          _
        // Predicated region
        $region129: #{_lambda_.1} parent=119 // pred_check
          %p5635 = pneg %p665
        $region130: #{_lambda_.1} parent=119 // pred_check_branch
          %5637 = sbr.rel (%p5635) target = $region132
        $region131: #{_lambda_.1} parent=119 // pred_region
          %s5639 = ssub.s32 128, 128
          %5640 = vsyncadd %s5605, %s5639
          %s5641 = smul.addr %s45, 128
          %s5642 = scalar_lea.hbm %s27, %s5641
          %s5644 = sshll.u32 %s5608, 4
          %s5645 = int_to_ptr.vmem [resolvable:$true] %s5644
          %5647 = dma.vmem_to_hbm [thread:$0]  %s5645, 128, %s5642, %s5605
        $region132: #{_lambda_.1} parent=119 // pred_fallthru
          _
      $region120: #{_lambda_.1} parent=5 // pred_fallthru
        _
      %p5648 = scmp.le.s32.totalorder 2, %s40
      // Predicated region
      $region133: #{_lambda_.1} parent=5 // pred_check
        %p5649 = pneg %p5648
      $region134: #{_lambda_.1} parent=5 // pred_check_branch
        %5651 = sbr.rel (%p5649) target = $region136
      $region135: #{_lambda_.1} parent=5 // pred_region
        %s5652 = ssub.s32 %s40, 2
        // Predicated region
        $region137: #{_lambda_.1} parent=135 // pred_check
          %p5653 = pneg %p619
        $region138: #{_lambda_.1} parent=135 // pred_check_branch
          %5655 = sbr.rel (%p5653) target = $region140
        $region139: #{_lambda_.1} parent=135 // pred_region
          %s5656 = sand.u32 %s604, 1
          %s5657 = scalar_lea.sflag [#allocation3], %s5656
          %s5658 = sand.u32 %s604, 1
          %s5659 = smul.addr %s5658, 8
          %s5660 = scalar_lea.vmem [#allocation2], %s5659
          %5661 = dma.done %s5657, 128
        $region140: #{_lambda_.1} parent=135 // pred_fallthru
          _
        // Predicated region
        $region141: #{_lambda_.1} parent=135 // pred_check
          %p5662 = pneg %p645
        $region142: #{_lambda_.1} parent=135 // pred_check_branch
          %5664 = sbr.rel (%p5662) target = $region144
        $region143: #{_lambda_.1} parent=135 // pred_region
          %s5665 = sand.u32 %s46, 1
          %s5666 = scalar_lea.sflag [#allocation5], %s5665
          %s5667 = sand.u32 %s630, 1
          %s5668 = smul.addr %s5667, 8
          %s5669 = scalar_lea.vmem [#allocation4], %s5668
          %5670 = dma.done %s5666, 128
        $region144: #{_lambda_.1} parent=135 // pred_fallthru
          _
        // Predicated region
        $region145: #{_lambda_.1} parent=135 // pred_check
          %p5671 = pneg %p671
        $region146: #{_lambda_.1} parent=135 // pred_check_branch
          %5673 = sbr.rel (%p5671) target = $region148
        $region147: #{_lambda_.1} parent=135 // pred_region
          %s5674 = sand.u32 %s46, 1
          %s5675 = scalar_lea.sflag [#allocation5], %s5674
          %s5676 = sand.u32 %s656, 1
          %s5677 = smul.addr %s5676, 8
          %s5678 = scalar_lea.vmem [#allocation6], %s5677
          %5679 = dma.done %s5675, 128
        $region148: #{_lambda_.1} parent=135 // pred_fallthru
          _
      $region136: #{_lambda_.1} parent=5 // pred_fallthru
        _
    $region6: #{_lambda_.1} parent=1 // loop_footer
      %s44 = sadd.s32 1, %s40
    $region7: #{_lambda_.1} parent=1 // loop_footer_branch
      %39 = sbr.rel target = $region3
    $region8: #{_lambda_.1} parent=1 // loop_exit
      _
    %5680 = vsyncpa [#allocation3], 1
    %s5681 = scalar_lea.sflag [#allocation3], 1
    %5682 = vsyncpa %s5681, 1
    %5683 = vsyncpa [#allocation5], 1
    %s5684 = scalar_lea.sflag [#allocation5], 1
    %5685 = vsyncpa %s5684, 1

</llo_original>
